<compile_context>
chip_gen: v6e
topology: v6e:2x2x1
jax: 0.10.0
libtpu: 0.0.40
codegen_flags: <defaults>
</compile_context>

<pallas_src>
import functools

import numpy as np
import jax
import jax.numpy as jnp
from jax import lax
from jax.experimental import pallas as pl
from jax.experimental.pallas import tpu as pltpu

COUT_PAD_FINAL = 128           # lane-pad the final 1-channel conv (lane-dense store)
SE_HIDDEN_PAD = 128            # zero-pad the SE hidden dim to a full lane width (exact)
VMEM_LIMIT = 32 * 1024 * 1024  # scoped-VMEM cap, safe on v5e / v6e / v7x


# --------------------------- im2col gather matrices --------------------------

def _build_gather_np(hi, wi, stride):
    """(9, Ho*Wo, Hi*Wi) 0/1 matrices: one exact row-gather per 3x3 tap (pad=1).

    G[t] @ A (A = (Hi*Wi, C) row-major activation) yields, for tap t=(dy,dx),
    the (Ho*Wo, C) matrix of input pixels that tap reads (all-zero rows where
    the tap falls in the zero padding), so the conv becomes im2col + one
    fat-K matmul.  Entries are 0/1 -> the gather is exact in bf16.
    """
    ho = (hi - 1) // stride + 1
    wo = (wi - 1) // stride + 1
    mo, li = ho * wo, hi * wi
    g = np.zeros((9, mo, li), np.float32)
    for dy in range(3):
        for dx in range(3):
            t = dy * 3 + dx
            for i in range(ho):
                yy = stride * i + dy - 1
                if not 0 <= yy < hi:
                    continue
                for j in range(wo):
                    xx = stride * j + dx - 1
                    if 0 <= xx < wi:
                        g[t, i * wo + j, yy * wi + xx] = 1.0
    return g, ho, wo


# ------------------------------- fused kernel --------------------------------

def _fused_disc_kernel(*refs, cfg):
    """Whole NLayerDiscriminatorSN forward for one batch element.

    Per layer: (a) 9 exact 0/1 gather matmuls build the im2col matrix in a
    VMEM scratch, (b) one fat-K MXU dot (M, 9*Cin) @ (9*Cin, Cout) -> f32,
    (c) f32 epilogue (bias + LeakyReLU as a single vmax), (d) fused
    SqueezeExcitation (GAP + two tiny matmuls + sigmoid); the resulting gate
    is applied once to the next layer's compact activation.
    """
    it = iter(refs)
    x_ref = next(it)
    layers = []
    for lc in cfg:
        g_ref, w_ref, b_ref = next(it), next(it), next(it)
        se_refs = (next(it), next(it), next(it), next(it)) if lc["se"] else None
        layers.append((g_ref, w_ref, b_ref, se_refs))
    out_ref = next(it)
    xc_refs = [next(it) for _ in cfg]

    a = x_ref[0]                                          # (H*W, Cin) bf16
    scale = None
    y = None
    for lc, (g_ref, w_ref, b_ref, se_refs), xc_ref in zip(cfg, layers, xc_refs):
        ci = lc["ci"]
        if scale is not None:
            # Previous layer's SE gate, applied ONCE to the compact activation
            # (hoisted: not repeated per tap).
            a = (a * scale).astype(jnp.bfloat16)

        # im2col by MXU: 9 exact row-gather dots -> lane-blocked VMEM scratch.
        for t in range(9):
            tap = jnp.dot(g_ref[t], a, preferred_element_type=jnp.float32)
            xc_ref[:, t * ci:(t + 1) * ci] = tap.astype(jnp.bfloat16)

        # The conv itself: a single fat-K (M, 9*Cin) @ (9*Cin, Cout) MXU dot.
        y = jnp.dot(xc_ref[...], w_ref[...], preferred_element_type=jnp.float32)
        y = y + b_ref[...]                                # f32 epilogue (VPU)
        if lc["leaky"]:
            y = jnp.maximum(y, 0.2 * y)                   # LeakyReLU(0.2), one vmax

        if se_refs is not None:                           # fused SqueezeExcitation
            w1_ref, b1_ref, w2_ref, b2_ref = se_refs
            gap = jnp.mean(y, axis=0, keepdims=True)      # (1, C) global avg pool
            gap8 = jnp.broadcast_to(gap, (8, lc["co"]))   # avoid M=1 MXU dots
            h = jnp.dot(gap8, w1_ref[...], preferred_element_type=jnp.float32)
            h = jnp.maximum(h + b1_ref[...], 0.0)
            z = jnp.dot(h, w2_ref[...], preferred_element_type=jnp.float32)
            z = z + b2_ref[...]
            scale = (1.0 / (1.0 + jnp.exp(-z)))[0:1, :]   # sigmoid -> (1, C) gate
        else:
            scale = None

        a = y.astype(jnp.bfloat16)                        # next layer's input

    out_ref[0] = y.astype(out_ref.dtype)


# ------------------------------- forward pass --------------------------------

def discriminator_forward(x_nchw, params):
    N, cin, H, W = x_nchw.shape
    convs, ses = params["convs"], params["ses"]
    n_convs = len(convs)

    # Only runtime wrapper op: NCHW -> (N, H*W, Cin) bf16.
    operands = [jnp.transpose(x_nchw, (0, 2, 3, 1)).astype(jnp.bfloat16)
                .reshape(N, H * W, cin)]
    in_specs = [pl.BlockSpec((1, H * W, cin), lambda n: (n, 0, 0))]

    cfg = []
    hi, wi = H, W
    se_idx = 0
    for li, c in enumerate(convs):
        ci, co = c["w"].shape[2], c["w"].shape[3]
        g_np, ho, wo = _build_gather_np(hi, wi, c["stride"])
        mo, lin = ho * wo, hi * wi
        is_last = li == n_convs - 1
        co_k = COUT_PAD_FINAL if is_last else co

        wc = c["w"].astype(jnp.bfloat16).reshape(9 * ci, co)
        bias = c["b"].astype(jnp.float32).reshape(1, co)
        if is_last:                                       # lane-dense final store
            wc = jnp.pad(wc, ((0, 0), (0, co_k - co)))
            bias = jnp.pad(bias, ((0, 0), (0, co_k - co)))
        has_se = 1 <= li <= n_convs - 2

        operands += [jnp.asarray(g_np, jnp.bfloat16), wc, bias]
        in_specs += [
            pl.BlockSpec((9, mo, lin), lambda n: (0, 0, 0)),
            pl.BlockSpec((9 * ci, co_k), lambda n: (0, 0)),
            pl.BlockSpec((1, co_k), lambda n: (0, 0)),
        ]
        if has_se:
            p = ses[se_idx]
            se_idx += 1
            cr = int(p["w1"].shape[1])
            hp = max(SE_HIDDEN_PAD, cr)                   # zero-padding is exact
            operands += [
                jnp.pad(p["w1"].astype(jnp.float32), ((0, 0), (0, hp - cr))),
                jnp.pad(p["b1"].astype(jnp.float32), ((0, 0), (0, hp - cr))),
                jnp.pad(p["w2"].astype(jnp.float32), ((0, hp - cr), (0, 0))),
                p["b2"].astype(jnp.float32),
            ]
            in_specs += [
                pl.BlockSpec((co, hp), lambda n: (0, 0)),
                pl.BlockSpec((1, hp), lambda n: (0, 0)),
                pl.BlockSpec((hp, co), lambda n: (0, 0)),
                pl.BlockSpec((1, co), lambda n: (0, 0)),
            ]
        cfg.append(dict(ci=ci, co=co_k, mo=mo, lin=lin,
                        leaky=c["leaky"], se=has_se))
        hi, wi = ho, wo

    mo_last, co_last = cfg[-1]["mo"], cfg[-1]["co"]
    scratch = [pltpu.VMEM((lc["mo"], 9 * lc["ci"]), jnp.bfloat16) for lc in cfg]

    flops = 2 * N * sum(9 * lc["mo"] * lc["lin"] * lc["ci"]
                        + lc["mo"] * 9 * lc["ci"] * lc["co"] for lc in cfg)
    bytes_in = sum(int(np.prod(o.shape)) * o.dtype.itemsize for o in operands)
    cost = pl.CostEstimate(
        flops=int(flops),
        transcendentals=int(N * sum(lc["co"] for lc in cfg if lc["se"])),
        bytes_accessed=int(bytes_in + N * mo_last * co_last * 4))

    y = pl.pallas_call(
        functools.partial(_fused_disc_kernel, cfg=tuple(cfg)),
        grid=(N,),
        in_specs=in_specs,
        out_specs=pl.BlockSpec((1, mo_last, co_last), lambda n: (n, 0, 0)),
        out_shape=jax.ShapeDtypeStruct((N, mo_last, co_last), jnp.float32),
        scratch_shapes=scratch,
        compiler_params=pltpu.CompilerParams(
            dimension_semantics=("parallel",),
            vmem_limit_bytes=VMEM_LIMIT),
        cost_estimate=cost,
    )(*operands)

    # Slice the real output channel; row-major (i*Wo + j) -> NCHW (N, 1, Ho, Wo).
    return y[:, :, 0].reshape(N, hi, wi)[:, None, :, :]


def se_gate(gap, p):
    """(N, C) -> (N, C) SqueezeExcitation gate (reference path, f32)."""
    h = jnp.maximum(
        jnp.dot(gap, p["w1"], precision=lax.Precision.HIGHEST) + p["b1"], 0.0)
    z = jnp.dot(h, p["w2"], precision=lax.Precision.HIGHEST) + p["b2"]
    return jax.nn.sigmoid(z)


# ----------------------------- parameter setup ------------------------------

def spectral_normalize(w_oihw, key, n_iter=1, eps=1e-12):
    """PyTorch-style spectral norm: sigma of weight viewed as (Cout, -1)."""
    cout = w_oihw.shape[0]
    wm = w_oihw.reshape(cout, -1)
    u = jax.random.normal(key, (cout,), jnp.float32)
    u = u / (jnp.linalg.norm(u) + eps)
    v = None
    for _ in range(n_iter):
        v = wm.T @ u
        v = v / (jnp.linalg.norm(v) + eps)
        u = wm @ v
        u = u / (jnp.linalg.norm(u) + eps)
    sigma = u @ (wm @ v)
    return w_oihw / sigma


def init_conv(key, cin, cout):
    kw, kb, ku = jax.random.split(key, 3)
    w = jax.random.normal(kw, (cout, cin, 3, 3), jnp.float32) * 0.1   # torch OIHW
    b = jax.random.normal(kb, (cout,), jnp.float32) * 0.1
    w = spectral_normalize(w, ku)
    return jnp.transpose(w, (2, 3, 1, 0)), b                          # (3,3,Cin,Cout)


def init_se(key, c, reduction):
    cr = max(c // reduction, 1)
    k1, k2, k3, k4 = jax.random.split(key, 4)
    w1 = jax.random.normal(k1, (cr, c), jnp.float32) * 0.1   # torch (cr, c, 1, 1)
    b1 = jax.random.normal(k2, (cr,), jnp.float32) * 0.1
    w2 = jax.random.normal(k3, (c, cr), jnp.float32) * 0.1   # torch (c, cr, 1, 1)
    b2 = jax.random.normal(k4, (c,), jnp.float32) * 0.1
    return dict(w1=w1.T, b1=b1.reshape(1, cr), w2=w2.T, b2=b2.reshape(1, c))


def init_params(key, input_nc, ndf, n_layers, reduction):
    # channel progression exactly as in NLayerDiscriminatorSN.__init__
    chans = [input_nc, ndf]
    for n in range(1, n_layers):
        chans.append(ndf * min(2 ** n, 8))
    chans.append(ndf * min(2 ** n_layers, 8))
    chans.append(1)
    strides = [2] * n_layers + [1, 1]

    n_convs = len(chans) - 1
    n_ses = n_convs - 2                 # SE after every conv except first/last
    keys = jax.random.split(key, n_convs + n_ses)

    convs, ses, ki = [], [], 0
    for li in range(n_convs):
        w_hwio, b = init_conv(keys[ki], chans[li], chans[li + 1])
        ki += 1
        convs.append(dict(w=w_hwio, b=b, stride=strides[li],
                          leaky=(li < n_convs - 1)))
    for li in range(1, n_convs - 1):
        ses.append(init_se(keys[ki], chans[li + 1], reduction))
        ki += 1
    return dict(convs=convs, ses=ses)


# ------------------------------ pure-JAX reference ---------------------------

def reference_forward(x_nchw, params):
    """Pure-JAX reference (lax.conv) at the same bf16 matmul precision."""
    x = jnp.transpose(x_nchw, (0, 2, 3, 1)).astype(jnp.bfloat16)
    convs, ses = params["convs"], params["ses"]
    n_convs = len(convs)
    scale = None
    out = None
    for li, c in enumerate(convs):
        is_last = li == n_convs - 1
        need_gap = 1 <= li <= n_convs - 2
        xin = x if scale is None else (x * scale[:, None, None, :]).astype(
            jnp.bfloat16)
        y = lax.conv_general_dilated(
            xin, c["w"].astype(jnp.bfloat16),
            (c["stride"], c["stride"]), ((1, 1), (1, 1)),
            dimension_numbers=("NHWC", "HWIO", "NHWC"),
            preferred_element_type=jnp.float32)
        y = y + c["b"].reshape(1, 1, 1, -1)
        if c["leaky"]:
            y = jnp.where(y >= 0.0, y, 0.2 * y)
        if need_gap:
            gap = jnp.mean(y, axis=(1, 2))
            scale = se_gate(gap, ses[li - 1])
        else:
            scale = None
        if is_last:
            out = y
        else:
            x = y.astype(jnp.bfloat16)
    return jnp.transpose(out, (0, 3, 1, 2))


# --------------------------------- main -------------------------------------

if __name__ == "__main__":
    INPUT_NC, NDF, N_LAYERS, REDUCTION = 4, 16, 3, 16
    N, H, W = 2, 16, 16

    key = jax.random.PRNGKey(0)
    kx, kp = jax.random.split(key)
    x = jax.random.normal(kx, (N, INPUT_NC, H, W), jnp.float32)   # NCHW like PyTorch
    params = init_params(kp, INPUT_NC, NDF, N_LAYERS, REDUCTION)

    fwd = jax.jit(functools.partial(discriminator_forward, params=params))
    out = jax.block_until_ready(fwd(x))

    ref = reference_forward(x, params)
    np.testing.assert_allclose(np.asarray(out), np.asarray(ref),
                               rtol=2e-2, atol=2e-3)
    assert out.shape == (N, 1, 2, 2), out.shape

    print("KERNEL_OK")
</pallas_src>

<mosaic_0001>
module attributes {stable_mosaic.version = 11 : i64} {
  func.func @_fused_disc_kernel(%arg0: i32, %arg1: memref<1x256x4xbf16, #tpu.memory_space<vmem>>, %arg2: memref<9x64x256xbf16, #tpu.memory_space<vmem>>, %arg3: memref<36x16xbf16, #tpu.memory_space<vmem>>, %arg4: memref<1x16xf32, #tpu.memory_space<vmem>>, %arg5: memref<9x16x64xbf16, #tpu.memory_space<vmem>>, %arg6: memref<144x32xbf16, #tpu.memory_space<vmem>>, %arg7: memref<1x32xf32, #tpu.memory_space<vmem>>, %arg8: memref<32x128xf32, #tpu.memory_space<vmem>>, %arg9: memref<1x128xf32, #tpu.memory_space<vmem>>, %arg10: memref<128x32xf32, #tpu.memory_space<vmem>>, %arg11: memref<1x32xf32, #tpu.memory_space<vmem>>, %arg12: memref<9x4x16xbf16, #tpu.memory_space<vmem>>, %arg13: memref<288x64xbf16, #tpu.memory_space<vmem>>, %arg14: memref<1x64xf32, #tpu.memory_space<vmem>>, %arg15: memref<64x128xf32, #tpu.memory_space<vmem>>, %arg16: memref<1x128xf32, #tpu.memory_space<vmem>>, %arg17: memref<128x64xf32, #tpu.memory_space<vmem>>, %arg18: memref<1x64xf32, #tpu.memory_space<vmem>>, %arg19: memref<9x4x4xbf16, #tpu.memory_space<vmem>>, %arg20: memref<576x128xbf16, #tpu.memory_space<vmem>>, %arg21: memref<1x128xf32, #tpu.memory_space<vmem>>, %arg22: memref<128x128xf32, #tpu.memory_space<vmem>>, %arg23: memref<1x128xf32, #tpu.memory_space<vmem>>, %arg24: memref<128x128xf32, #tpu.memory_space<vmem>>, %arg25: memref<1x128xf32, #tpu.memory_space<vmem>>, %arg26: memref<9x4x4xbf16, #tpu.memory_space<vmem>>, %arg27: memref<1152x128xbf16, #tpu.memory_space<vmem>>, %arg28: memref<1x128xf32, #tpu.memory_space<vmem>>, %arg29: memref<1x4x128xf32, #tpu.memory_space<vmem>>, %arg30: memref<64x36xbf16, #tpu.memory_space<vmem>>, %arg31: memref<16x144xbf16, #tpu.memory_space<vmem>>, %arg32: memref<4x288xbf16, #tpu.memory_space<vmem>>, %arg33: memref<4x576xbf16, #tpu.memory_space<vmem>>, %arg34: memref<4x1152xbf16, #tpu.memory_space<vmem>>) attributes {dimension_semantics = [#tpu.dimension_semantics<parallel>], iteration_bounds = array<i64: 2>, scalar_prefetch = 0 : i64, scratch_operands = 5 : i64, tpu.core_type = #tpu.core_type<tc>, window_params = [{transform_indices = @transform_0, window_bounds = array<i64: 1, 256, 4>}, {pipeline_mode = #tpu.pipeline_mode<synchronous>, transform_indices = @transform_1, window_bounds = array<i64: 9, 64, 256>}, {pipeline_mode = #tpu.pipeline_mode<synchronous>, transform_indices = @transform_2, window_bounds = array<i64: 36, 16>}, {pipeline_mode = #tpu.pipeline_mode<synchronous>, transform_indices = @transform_3, window_bounds = array<i64: 1, 16>}, {pipeline_mode = #tpu.pipeline_mode<synchronous>, transform_indices = @transform_4, window_bounds = array<i64: 9, 16, 64>}, {pipeline_mode = #tpu.pipeline_mode<synchronous>, transform_indices = @transform_5, window_bounds = array<i64: 144, 32>}, {pipeline_mode = #tpu.pipeline_mode<synchronous>, transform_indices = @transform_6, window_bounds = array<i64: 1, 32>}, {pipeline_mode = #tpu.pipeline_mode<synchronous>, transform_indices = @transform_7, window_bounds = array<i64: 32, 128>}, {pipeline_mode = #tpu.pipeline_mode<synchronous>, transform_indices = @transform_8, window_bounds = array<i64: 1, 128>}, {pipeline_mode = #tpu.pipeline_mode<synchronous>, transform_indices = @transform_9, window_bounds = array<i64: 128, 32>}, {pipeline_mode = #tpu.pipeline_mode<synchronous>, transform_indices = @transform_10, window_bounds = array<i64: 1, 32>}, {pipeline_mode = #tpu.pipeline_mode<synchronous>, transform_indices = @transform_11, window_bounds = array<i64: 9, 4, 16>}, {pipeline_mode = #tpu.pipeline_mode<synchronous>, transform_indices = @transform_12, window_bounds = array<i64: 288, 64>}, {pipeline_mode = #tpu.pipeline_mode<synchronous>, transform_indices = @transform_13, window_bounds = array<i64: 1, 64>}, {pipeline_mode = #tpu.pipeline_mode<synchronous>, transform_indices = @transform_14, window_bounds = array<i64: 64, 128>}, {pipeline_mode = #tpu.pipeline_mode<synchronous>, transform_indices = @transform_15, window_bounds = array<i64: 1, 128>}, {pipeline_mode = #tpu.pipeline_mode<synchronous>, transform_indices = @transform_16, window_bounds = array<i64: 128, 64>}, {pipeline_mode = #tpu.pipeline_mode<synchronous>, transform_indices = @transform_17, window_bounds = array<i64: 1, 64>}, {pipeline_mode = #tpu.pipeline_mode<synchronous>, transform_indices = @transform_18, window_bounds = array<i64: 9, 4, 4>}, {pipeline_mode = #tpu.pipeline_mode<synchronous>, transform_indices = @transform_19, window_bounds = array<i64: 576, 128>}, {pipeline_mode = #tpu.pipeline_mode<synchronous>, transform_indices = @transform_20, window_bounds = array<i64: 1, 128>}, {pipeline_mode = #tpu.pipeline_mode<synchronous>, transform_indices = @transform_21, window_bounds = array<i64: 128, 128>}, {pipeline_mode = #tpu.pipeline_mode<synchronous>, transform_indices = @transform_22, window_bounds = array<i64: 1, 128>}, {pipeline_mode = #tpu.pipeline_mode<synchronous>, transform_indices = @transform_23, window_bounds = array<i64: 128, 128>}, {pipeline_mode = #tpu.pipeline_mode<synchronous>, transform_indices = @transform_24, window_bounds = array<i64: 1, 128>}, {pipeline_mode = #tpu.pipeline_mode<synchronous>, transform_indices = @transform_25, window_bounds = array<i64: 9, 4, 4>}, {pipeline_mode = #tpu.pipeline_mode<synchronous>, transform_indices = @transform_26, window_bounds = array<i64: 1152, 128>}, {pipeline_mode = #tpu.pipeline_mode<synchronous>, transform_indices = @transform_27, window_bounds = array<i64: 1, 128>}, {transform_indices = @transform_28, window_bounds = array<i64: 1, 4, 128>}]} {
    %c0 = arith.constant 0 : index
    %c0_0 = arith.constant 0 : index
    %c0_1 = arith.constant 0 : index
    %0 = vector.load %arg1[%c0, %c0_0, %c0_1] : memref<1x256x4xbf16, #tpu.memory_space<vmem>>, vector<1x256x4xbf16>
    %1 = vector.shape_cast %0 : vector<1x256x4xbf16> to vector<256x4xbf16>
    %c0_2 = arith.constant 0 : index
    %c0_3 = arith.constant 0 : index
    %c0_4 = arith.constant 0 : index
    %2 = vector.load %arg2[%c0_2, %c0_3, %c0_4] : memref<9x64x256xbf16, #tpu.memory_space<vmem>>, vector<1x64x256xbf16>
    %3 = vector.shape_cast %2 : vector<1x64x256xbf16> to vector<64x256xbf16>
    %cst = arith.constant dense<0.000000e+00> : vector<64x4xf32>
    %4 = tpu.matmul %3, %1, %cst {dimension_numbers = #tpu.dot_dimension_numbers<[1], [0], [0], [1], [0, 0, 1, 1], [], []>} : vector<64x256xbf16>, vector<256x4xbf16>, vector<64x4xf32> -> vector<64x4xf32>
    %5 = arith.truncf %4 : vector<64x4xf32> to vector<64x4xbf16>
    %c0_5 = arith.constant 0 : index
    %c0_6 = arith.constant 0 : index
    %6 = vector.load %arg30[%c0_5, %c0_6] : memref<64x36xbf16, #tpu.memory_space<vmem>>, vector<64x4xbf16>
    tpu.vector_store %arg30[%c0_5, %c0_6], %5 {strides = array<i32>} : memref<64x36xbf16, #tpu.memory_space<vmem>>, vector<64x4xbf16>,
    %c1 = arith.constant 1 : index
    %c0_7 = arith.constant 0 : index
    %c0_8 = arith.constant 0 : index
    %7 = vector.load %arg2[%c1, %c0_7, %c0_8] : memref<9x64x256xbf16, #tpu.memory_space<vmem>>, vector<1x64x256xbf16>
    %8 = vector.shape_cast %7 : vector<1x64x256xbf16> to vector<64x256xbf16>
    %cst_9 = arith.constant dense<0.000000e+00> : vector<64x4xf32>
    %9 = tpu.matmul %8, %1, %cst_9 {dimension_numbers = #tpu.dot_dimension_numbers<[1], [0], [0], [1], [0, 0, 1, 1], [], []>} : vector<64x256xbf16>, vector<256x4xbf16>, vector<64x4xf32> -> vector<64x4xf32>
    %10 = arith.truncf %9 : vector<64x4xf32> to vector<64x4xbf16>
    %c0_10 = arith.constant 0 : index
    %c4 = arith.constant 4 : index
    %11 = vector.load %arg30[%c0_10, %c4] : memref<64x36xbf16, #tpu.memory_space<vmem>>, vector<64x4xbf16>
    tpu.vector_store %arg30[%c0_10, %c4], %10 {strides = array<i32>} : memref<64x36xbf16, #tpu.memory_space<vmem>>, vector<64x4xbf16>,
    %c2 = arith.constant 2 : index
    %c0_11 = arith.constant 0 : index
    %c0_12 = arith.constant 0 : index
    %12 = vector.load %arg2[%c2, %c0_11, %c0_12] : memref<9x64x256xbf16, #tpu.memory_space<vmem>>, vector<1x64x256xbf16>
    %13 = vector.shape_cast %12 : vector<1x64x256xbf16> to vector<64x256xbf16>
    %cst_13 = arith.constant dense<0.000000e+00> : vector<64x4xf32>
    %14 = tpu.matmul %13, %1, %cst_13 {dimension_numbers = #tpu.dot_dimension_numbers<[1], [0], [0], [1], [0, 0, 1, 1], [], []>} : vector<64x256xbf16>, vector<256x4xbf16>, vector<64x4xf32> -> vector<64x4xf32>
    %15 = arith.truncf %14 : vector<64x4xf32> to vector<64x4xbf16>
    %c0_14 = arith.constant 0 : index
    %c8 = arith.constant 8 : index
    %16 = vector.load %arg30[%c0_14, %c8] : memref<64x36xbf16, #tpu.memory_space<vmem>>, vector<64x4xbf16>
    tpu.vector_store %arg30[%c0_14, %c8], %15 {strides = array<i32>} : memref<64x36xbf16, #tpu.memory_space<vmem>>, vector<64x4xbf16>,
    %c3 = arith.constant 3 : index
    %c0_15 = arith.constant 0 : index
    %c0_16 = arith.constant 0 : index
    %17 = vector.load %arg2[%c3, %c0_15, %c0_16] : memref<9x64x256xbf16, #tpu.memory_space<vmem>>, vector<1x64x256xbf16>
    %18 = vector.shape_cast %17 : vector<1x64x256xbf16> to vector<64x256xbf16>
    %cst_17 = arith.constant dense<0.000000e+00> : vector<64x4xf32>
    %19 = tpu.matmul %18, %1, %cst_17 {dimension_numbers = #tpu.dot_dimension_numbers<[1], [0], [0], [1], [0, 0, 1, 1], [], []>} : vector<64x256xbf16>, vector<256x4xbf16>, vector<64x4xf32> -> vector<64x4xf32>
    %20 = arith.truncf %19 : vector<64x4xf32> to vector<64x4xbf16>
    %c0_18 = arith.constant 0 : index
    %c12 = arith.constant 12 : index
    %21 = vector.load %arg30[%c0_18, %c12] : memref<64x36xbf16, #tpu.memory_space<vmem>>, vector<64x4xbf16>
    tpu.vector_store %arg30[%c0_18, %c12], %20 {strides = array<i32>} : memref<64x36xbf16, #tpu.memory_space<vmem>>, vector<64x4xbf16>,
    %c4_19 = arith.constant 4 : index
    %c0_20 = arith.constant 0 : index
    %c0_21 = arith.constant 0 : index
    %22 = vector.load %arg2[%c4_19, %c0_20, %c0_21] : memref<9x64x256xbf16, #tpu.memory_space<vmem>>, vector<1x64x256xbf16>
    %23 = vector.shape_cast %22 : vector<1x64x256xbf16> to vector<64x256xbf16>
    %cst_22 = arith.constant dense<0.000000e+00> : vector<64x4xf32>
    %24 = tpu.matmul %23, %1, %cst_22 {dimension_numbers = #tpu.dot_dimension_numbers<[1], [0], [0], [1], [0, 0, 1, 1], [], []>} : vector<64x256xbf16>, vector<256x4xbf16>, vector<64x4xf32> -> vector<64x4xf32>
    %25 = arith.truncf %24 : vector<64x4xf32> to vector<64x4xbf16>
    %c0_23 = arith.constant 0 : index
    %c16 = arith.constant 16 : index
    %26 = vector.load %arg30[%c0_23, %c16] : memref<64x36xbf16, #tpu.memory_space<vmem>>, vector<64x4xbf16>
    tpu.vector_store %arg30[%c0_23, %c16], %25 {strides = array<i32>} : memref<64x36xbf16, #tpu.memory_space<vmem>>, vector<64x4xbf16>,
    %c5 = arith.constant 5 : index
    %c0_24 = arith.constant 0 : index
    %c0_25 = arith.constant 0 : index
    %27 = vector.load %arg2[%c5, %c0_24, %c0_25] : memref<9x64x256xbf16, #tpu.memory_space<vmem>>, vector<1x64x256xbf16>
    %28 = vector.shape_cast %27 : vector<1x64x256xbf16> to vector<64x256xbf16>
    %cst_26 = arith.constant dense<0.000000e+00> : vector<64x4xf32>
    %29 = tpu.matmul %28, %1, %cst_26 {dimension_numbers = #tpu.dot_dimension_numbers<[1], [0], [0], [1], [0, 0, 1, 1], [], []>} : vector<64x256xbf16>, vector<256x4xbf16>, vector<64x4xf32> -> vector<64x4xf32>
    %30 = arith.truncf %29 : vector<64x4xf32> to vector<64x4xbf16>
    %c0_27 = arith.constant 0 : index
    %c20 = arith.constant 20 : index
    %31 = vector.load %arg30[%c0_27, %c20] : memref<64x36xbf16, #tpu.memory_space<vmem>>, vector<64x4xbf16>
    tpu.vector_store %arg30[%c0_27, %c20], %30 {strides = array<i32>} : memref<64x36xbf16, #tpu.memory_space<vmem>>, vector<64x4xbf16>,
    %c6 = arith.constant 6 : index
    %c0_28 = arith.constant 0 : index
    %c0_29 = arith.constant 0 : index
    %32 = vector.load %arg2[%c6, %c0_28, %c0_29] : memref<9x64x256xbf16, #tpu.memory_space<vmem>>, vector<1x64x256xbf16>
    %33 = vector.shape_cast %32 : vector<1x64x256xbf16> to vector<64x256xbf16>
    %cst_30 = arith.constant dense<0.000000e+00> : vector<64x4xf32>
    %34 = tpu.matmul %33, %1, %cst_30 {dimension_numbers = #tpu.dot_dimension_numbers<[1], [0], [0], [1], [0, 0, 1, 1], [], []>} : vector<64x256xbf16>, vector<256x4xbf16>, vector<64x4xf32> -> vector<64x4xf32>
    %35 = arith.truncf %34 : vector<64x4xf32> to vector<64x4xbf16>
    %c0_31 = arith.constant 0 : index
    %c24 = arith.constant 24 : index
    %36 = vector.load %arg30[%c0_31, %c24] : memref<64x36xbf16, #tpu.memory_space<vmem>>, vector<64x4xbf16>
    tpu.vector_store %arg30[%c0_31, %c24], %35 {strides = array<i32>} : memref<64x36xbf16, #tpu.memory_space<vmem>>, vector<64x4xbf16>,
    %c7 = arith.constant 7 : index
    %c0_32 = arith.constant 0 : index
    %c0_33 = arith.constant 0 : index
    %37 = vector.load %arg2[%c7, %c0_32, %c0_33] : memref<9x64x256xbf16, #tpu.memory_space<vmem>>, vector<1x64x256xbf16>
    %38 = vector.shape_cast %37 : vector<1x64x256xbf16> to vector<64x256xbf16>
    %cst_34 = arith.constant dense<0.000000e+00> : vector<64x4xf32>
    %39 = tpu.matmul %38, %1, %cst_34 {dimension_numbers = #tpu.dot_dimension_numbers<[1], [0], [0], [1], [0, 0, 1, 1], [], []>} : vector<64x256xbf16>, vector<256x4xbf16>, vector<64x4xf32> -> vector<64x4xf32>
    %40 = arith.truncf %39 : vector<64x4xf32> to vector<64x4xbf16>
    %c0_35 = arith.constant 0 : index
    %c28 = arith.constant 28 : index
    %41 = vector.load %arg30[%c0_35, %c28] : memref<64x36xbf16, #tpu.memory_space<vmem>>, vector<64x4xbf16>
    tpu.vector_store %arg30[%c0_35, %c28], %40 {strides = array<i32>} : memref<64x36xbf16, #tpu.memory_space<vmem>>, vector<64x4xbf16>,
    %c8_36 = arith.constant 8 : index
    %c0_37 = arith.constant 0 : index
    %c0_38 = arith.constant 0 : index
    %42 = vector.load %arg2[%c8_36, %c0_37, %c0_38] : memref<9x64x256xbf16, #tpu.memory_space<vmem>>, vector<1x64x256xbf16>
    %43 = vector.shape_cast %42 : vector<1x64x256xbf16> to vector<64x256xbf16>
    %cst_39 = arith.constant dense<0.000000e+00> : vector<64x4xf32>
    %44 = tpu.matmul %43, %1, %cst_39 {dimension_numbers = #tpu.dot_dimension_numbers<[1], [0], [0], [1], [0, 0, 1, 1], [], []>} : vector<64x256xbf16>, vector<256x4xbf16>, vector<64x4xf32> -> vector<64x4xf32>
    %45 = arith.truncf %44 : vector<64x4xf32> to vector<64x4xbf16>
    %c0_40 = arith.constant 0 : index
    %c32 = arith.constant 32 : index
    %46 = vector.load %arg30[%c0_40, %c32] : memref<64x36xbf16, #tpu.memory_space<vmem>>, vector<64x4xbf16>
    tpu.vector_store %arg30[%c0_40, %c32], %45 {strides = array<i32>} : memref<64x36xbf16, #tpu.memory_space<vmem>>, vector<64x4xbf16>,
    %c0_41 = arith.constant 0 : index
    %c0_42 = arith.constant 0 : index
    %47 = vector.load %arg30[%c0_41, %c0_42] : memref<64x36xbf16, #tpu.memory_space<vmem>>, vector<64x36xbf16>
    %c0_43 = arith.constant 0 : index
    %c0_44 = arith.constant 0 : index
    %48 = vector.load %arg3[%c0_43, %c0_44] : memref<36x16xbf16, #tpu.memory_space<vmem>>, vector<36x16xbf16>
    %cst_45 = arith.constant dense<0.000000e+00> : vector<64x16xf32>
    %49 = tpu.matmul %47, %48, %cst_45 {dimension_numbers = #tpu.dot_dimension_numbers<[1], [0], [0], [1], [0, 0, 1, 1], [], []>} : vector<64x36xbf16>, vector<36x16xbf16>, vector<64x16xf32> -> vector<64x16xf32>
    %c0_46 = arith.constant 0 : index
    %c0_47 = arith.constant 0 : index
    %50 = vector.load %arg4[%c0_46, %c0_47] : memref<1x16xf32, #tpu.memory_space<vmem>>, vector<1x16xf32>
    %51 = vector.broadcast %50 : vector<1x16xf32> to vector<64x16xf32>
    %52 = arith.addf %49, %51 : vector<64x16xf32>
    %cst_48 = arith.constant 2.000000e-01 : f32
    %53 = vector.broadcast %cst_48 : f32 to vector<64x16xf32>
    %54 = arith.mulf %53, %52 : vector<64x16xf32>
    %55 = arith.maximumf %52, %54 : vector<64x16xf32>
    %56 = arith.truncf %55 : vector<64x16xf32> to vector<64x16xbf16>
    %c0_49 = arith.constant 0 : index
    %c0_50 = arith.constant 0 : index
    %c0_51 = arith.constant 0 : index
    %57 = vector.load %arg5[%c0_49, %c0_50, %c0_51] : memref<9x16x64xbf16, #tpu.memory_space<vmem>>, vector<1x16x64xbf16>
    %58 = vector.shape_cast %57 : vector<1x16x64xbf16> to vector<16x64xbf16>
    %cst_52 = arith.constant dense<0.000000e+00> : vector<16x16xf32>
    %59 = tpu.matmul %58, %56, %cst_52 {dimension_numbers = #tpu.dot_dimension_numbers<[1], [0], [0], [1], [0, 0, 1, 1], [], []>} : vector<16x64xbf16>, vector<64x16xbf16>, vector<16x16xf32> -> vector<16x16xf32>
    %60 = arith.truncf %59 : vector<16x16xf32> to vector<16x16xbf16>
    %c0_53 = arith.constant 0 : index
    %c0_54 = arith.constant 0 : index
    %61 = vector.load %arg31[%c0_53, %c0_54] : memref<16x144xbf16, #tpu.memory_space<vmem>>, vector<16x16xbf16>
    tpu.vector_store %arg31[%c0_53, %c0_54], %60 {strides = array<i32>} : memref<16x144xbf16, #tpu.memory_space<vmem>>, vector<16x16xbf16>,
    %c1_55 = arith.constant 1 : index
    %c0_56 = arith.constant 0 : index
    %c0_57 = arith.constant 0 : index
    %62 = vector.load %arg5[%c1_55, %c0_56, %c0_57] : memref<9x16x64xbf16, #tpu.memory_space<vmem>>, vector<1x16x64xbf16>
    %63 = vector.shape_cast %62 : vector<1x16x64xbf16> to vector<16x64xbf16>
    %cst_58 = arith.constant dense<0.000000e+00> : vector<16x16xf32>
    %64 = tpu.matmul %63, %56, %cst_58 {dimension_numbers = #tpu.dot_dimension_numbers<[1], [0], [0], [1], [0, 0, 1, 1], [], []>} : vector<16x64xbf16>, vector<64x16xbf16>, vector<16x16xf32> -> vector<16x16xf32>
    %65 = arith.truncf %64 : vector<16x16xf32> to vector<16x16xbf16>
    %c0_59 = arith.constant 0 : index
    %c16_60 = arith.constant 16 : index
    %66 = vector.load %arg31[%c0_59, %c16_60] : memref<16x144xbf16, #tpu.memory_space<vmem>>, vector<16x16xbf16>
    tpu.vector_store %arg31[%c0_59, %c16_60], %65 {strides = array<i32>} : memref<16x144xbf16, #tpu.memory_space<vmem>>, vector<16x16xbf16>,
    %c2_61 = arith.constant 2 : index
    %c0_62 = arith.constant 0 : index
    %c0_63 = arith.constant 0 : index
    %67 = vector.load %arg5[%c2_61, %c0_62, %c0_63] : memref<9x16x64xbf16, #tpu.memory_space<vmem>>, vector<1x16x64xbf16>
    %68 = vector.shape_cast %67 : vector<1x16x64xbf16> to vector<16x64xbf16>
    %cst_64 = arith.constant dense<0.000000e+00> : vector<16x16xf32>
    %69 = tpu.matmul %68, %56, %cst_64 {dimension_numbers = #tpu.dot_dimension_numbers<[1], [0], [0], [1], [0, 0, 1, 1], [], []>} : vector<16x64xbf16>, vector<64x16xbf16>, vector<16x16xf32> -> vector<16x16xf32>
    %70 = arith.truncf %69 : vector<16x16xf32> to vector<16x16xbf16>
    %c0_65 = arith.constant 0 : index
    %c32_66 = arith.constant 32 : index
    %71 = vector.load %arg31[%c0_65, %c32_66] : memref<16x144xbf16, #tpu.memory_space<vmem>>, vector<16x16xbf16>
    tpu.vector_store %arg31[%c0_65, %c32_66], %70 {strides = array<i32>} : memref<16x144xbf16, #tpu.memory_space<vmem>>, vector<16x16xbf16>,
    %c3_67 = arith.constant 3 : index
    %c0_68 = arith.constant 0 : index
    %c0_69 = arith.constant 0 : index
    %72 = vector.load %arg5[%c3_67, %c0_68, %c0_69] : memref<9x16x64xbf16, #tpu.memory_space<vmem>>, vector<1x16x64xbf16>
    %73 = vector.shape_cast %72 : vector<1x16x64xbf16> to vector<16x64xbf16>
    %cst_70 = arith.constant dense<0.000000e+00> : vector<16x16xf32>
    %74 = tpu.matmul %73, %56, %cst_70 {dimension_numbers = #tpu.dot_dimension_numbers<[1], [0], [0], [1], [0, 0, 1, 1], [], []>} : vector<16x64xbf16>, vector<64x16xbf16>, vector<16x16xf32> -> vector<16x16xf32>
    %75 = arith.truncf %74 : vector<16x16xf32> to vector<16x16xbf16>
    %c0_71 = arith.constant 0 : index
    %c48 = arith.constant 48 : index
    %76 = vector.load %arg31[%c0_71, %c48] : memref<16x144xbf16, #tpu.memory_space<vmem>>, vector<16x16xbf16>
    tpu.vector_store %arg31[%c0_71, %c48], %75 {strides = array<i32>} : memref<16x144xbf16, #tpu.memory_space<vmem>>, vector<16x16xbf16>,
    %c4_72 = arith.constant 4 : index
    %c0_73 = arith.constant 0 : index
    %c0_74 = arith.constant 0 : index
    %77 = vector.load %arg5[%c4_72, %c0_73, %c0_74] : memref<9x16x64xbf16, #tpu.memory_space<vmem>>, vector<1x16x64xbf16>
    %78 = vector.shape_cast %77 : vector<1x16x64xbf16> to vector<16x64xbf16>
    %cst_75 = arith.constant dense<0.000000e+00> : vector<16x16xf32>
    %79 = tpu.matmul %78, %56, %cst_75 {dimension_numbers = #tpu.dot_dimension_numbers<[1], [0], [0], [1], [0, 0, 1, 1], [], []>} : vector<16x64xbf16>, vector<64x16xbf16>, vector<16x16xf32> -> vector<16x16xf32>
    %80 = arith.truncf %79 : vector<16x16xf32> to vector<16x16xbf16>
    %c0_76 = arith.constant 0 : index
    %c64 = arith.constant 64 : index
    %81 = vector.load %arg31[%c0_76, %c64] : memref<16x144xbf16, #tpu.memory_space<vmem>>, vector<16x16xbf16>
    tpu.vector_store %arg31[%c0_76, %c64], %80 {strides = array<i32>} : memref<16x144xbf16, #tpu.memory_space<vmem>>, vector<16x16xbf16>,
    %c5_77 = arith.constant 5 : index
    %c0_78 = arith.constant 0 : index
    %c0_79 = arith.constant 0 : index
    %82 = vector.load %arg5[%c5_77, %c0_78, %c0_79] : memref<9x16x64xbf16, #tpu.memory_space<vmem>>, vector<1x16x64xbf16>
    %83 = vector.shape_cast %82 : vector<1x16x64xbf16> to vector<16x64xbf16>
    %cst_80 = arith.constant dense<0.000000e+00> : vector<16x16xf32>
    %84 = tpu.matmul %83, %56, %cst_80 {dimension_numbers = #tpu.dot_dimension_numbers<[1], [0], [0], [1], [0, 0, 1, 1], [], []>} : vector<16x64xbf16>, vector<64x16xbf16>, vector<16x16xf32> -> vector<16x16xf32>
    %85 = arith.truncf %84 : vector<16x16xf32> to vector<16x16xbf16>
    %c0_81 = arith.constant 0 : index
    %c80 = arith.constant 80 : index
    %86 = vector.load %arg31[%c0_81, %c80] : memref<16x144xbf16, #tpu.memory_space<vmem>>, vector<16x16xbf16>
    tpu.vector_store %arg31[%c0_81, %c80], %85 {strides = array<i32>} : memref<16x144xbf16, #tpu.memory_space<vmem>>, vector<16x16xbf16>,
    %c6_82 = arith.constant 6 : index
    %c0_83 = arith.constant 0 : index
    %c0_84 = arith.constant 0 : index
    %87 = vector.load %arg5[%c6_82, %c0_83, %c0_84] : memref<9x16x64xbf16, #tpu.memory_space<vmem>>, vector<1x16x64xbf16>
    %88 = vector.shape_cast %87 : vector<1x16x64xbf16> to vector<16x64xbf16>
    %cst_85 = arith.constant dense<0.000000e+00> : vector<16x16xf32>
    %89 = tpu.matmul %88, %56, %cst_85 {dimension_numbers = #tpu.dot_dimension_numbers<[1], [0], [0], [1], [0, 0, 1, 1], [], []>} : vector<16x64xbf16>, vector<64x16xbf16>, vector<16x16xf32> -> vector<16x16xf32>
    %90 = arith.truncf %89 : vector<16x16xf32> to vector<16x16xbf16>
    %c0_86 = arith.constant 0 : index
    %c96 = arith.constant 96 : index
    %91 = vector.load %arg31[%c0_86, %c96] : memref<16x144xbf16, #tpu.memory_space<vmem>>, vector<16x16xbf16>
    tpu.vector_store %arg31[%c0_86, %c96], %90 {strides = array<i32>} : memref<16x144xbf16, #tpu.memory_space<vmem>>, vector<16x16xbf16>,
    %c7_87 = arith.constant 7 : index
    %c0_88 = arith.constant 0 : index
    %c0_89 = arith.constant 0 : index
    %92 = vector.load %arg5[%c7_87, %c0_88, %c0_89] : memref<9x16x64xbf16, #tpu.memory_space<vmem>>, vector<1x16x64xbf16>
    %93 = vector.shape_cast %92 : vector<1x16x64xbf16> to vector<16x64xbf16>
    %cst_90 = arith.constant dense<0.000000e+00> : vector<16x16xf32>
    %94 = tpu.matmul %93, %56, %cst_90 {dimension_numbers = #tpu.dot_dimension_numbers<[1], [0], [0], [1], [0, 0, 1, 1], [], []>} : vector<16x64xbf16>, vector<64x16xbf16>, vector<16x16xf32> -> vector<16x16xf32>
    %95 = arith.truncf %94 : vector<16x16xf32> to vector<16x16xbf16>
    %c0_91 = arith.constant 0 : index
    %c112 = arith.constant 112 : index
    %96 = vector.load %arg31[%c0_91, %c112] : memref<16x144xbf16, #tpu.memory_space<vmem>>, vector<16x16xbf16>
    tpu.vector_store %arg31[%c0_91, %c112], %95 {strides = array<i32>} : memref<16x144xbf16, #tpu.memory_space<vmem>>, vector<16x16xbf16>,
    %c8_92 = arith.constant 8 : index
    %c0_93 = arith.constant 0 : index
    %c0_94 = arith.constant 0 : index
    %97 = vector.load %arg5[%c8_92, %c0_93, %c0_94] : memref<9x16x64xbf16, #tpu.memory_space<vmem>>, vector<1x16x64xbf16>
    %98 = vector.shape_cast %97 : vector<1x16x64xbf16> to vector<16x64xbf16>
    %cst_95 = arith.constant dense<0.000000e+00> : vector<16x16xf32>
    %99 = tpu.matmul %98, %56, %cst_95 {dimension_numbers = #tpu.dot_dimension_numbers<[1], [0], [0], [1], [0, 0, 1, 1], [], []>} : vector<16x64xbf16>, vector<64x16xbf16>, vector<16x16xf32> -> vector<16x16xf32>
    %100 = arith.truncf %99 : vector<16x16xf32> to vector<16x16xbf16>
    %c0_96 = arith.constant 0 : index
    %c128 = arith.constant 128 : index
    %101 = vector.load %arg31[%c0_96, %c128] : memref<16x144xbf16, #tpu.memory_space<vmem>>, vector<16x16xbf16>
    tpu.vector_store %arg31[%c0_96, %c128], %100 {strides = array<i32>} : memref<16x144xbf16, #tpu.memory_space<vmem>>, vector<16x16xbf16>,
    %c0_97 = arith.constant 0 : index
    %c0_98 = arith.constant 0 : index
    %102 = vector.load %arg31[%c0_97, %c0_98] : memref<16x144xbf16, #tpu.memory_space<vmem>>, vector<16x144xbf16>
    %c0_99 = arith.constant 0 : index
    %c0_100 = arith.constant 0 : index
    %103 = vector.load %arg6[%c0_99, %c0_100] : memref<144x32xbf16, #tpu.memory_space<vmem>>, vector<144x32xbf16>
    %cst_101 = arith.constant dense<0.000000e+00> : vector<16x32xf32>
    %104 = tpu.matmul %102, %103, %cst_101 {dimension_numbers = #tpu.dot_dimension_numbers<[1], [0], [0], [1], [0, 0, 1, 1], [], []>} : vector<16x144xbf16>, vector<144x32xbf16>, vector<16x32xf32> -> vector<16x32xf32>
    %c0_102 = arith.constant 0 : index
    %c0_103 = arith.constant 0 : index
    %105 = vector.load %arg7[%c0_102, %c0_103] : memref<1x32xf32, #tpu.memory_space<vmem>>, vector<1x32xf32>
    %106 = vector.broadcast %105 : vector<1x32xf32> to vector<16x32xf32>
    %107 = arith.addf %104, %106 : vector<16x32xf32>
    %cst_104 = arith.constant 2.000000e-01 : f32
    %108 = vector.broadcast %cst_104 : f32 to vector<16x32xf32>
    %109 = arith.mulf %108, %107 : vector<16x32xf32>
    %110 = arith.maximumf %107, %109 : vector<16x32xf32>
    %cst_105 = arith.constant dense<0.000000e+00> : vector<32xf32>
    %111 = vector.multi_reduction <add>, %110, %cst_105 [0] : vector<16x32xf32> to vector<32xf32>
    %112 = vector.shape_cast %111 : vector<32xf32> to vector<1x32xf32>
    %cst_106 = arith.constant 1.600000e+01 : f32
    %113 = vector.broadcast %cst_106 : f32 to vector<1x32xf32>
    %114 = arith.divf %112, %113 : vector<1x32xf32>
    %115 = vector.shape_cast %114 : vector<1x32xf32> to vector<1x32xf32>
    %116 = vector.broadcast %115 : vector<1x32xf32> to vector<8x32xf32>
    %c0_107 = arith.constant 0 : index
    %c0_108 = arith.constant 0 : index
    %117 = vector.load %arg8[%c0_107, %c0_108] : memref<32x128xf32, #tpu.memory_space<vmem>>, vector<32x128xf32>
    %cst_109 = arith.constant dense<0.000000e+00> : vector<8x128xf32>
    %118 = tpu.matmul %116, %117, %cst_109 {dimension_numbers = #tpu.dot_dimension_numbers<[1], [0], [0], [1], [0, 0, 1, 1], [], []>} : vector<8x32xf32>, vector<32x128xf32>, vector<8x128xf32> -> vector<8x128xf32>
    %c0_110 = arith.constant 0 : index
    %c0_111 = arith.constant 0 : index
    %119 = vector.load %arg9[%c0_110, %c0_111] : memref<1x128xf32, #tpu.memory_space<vmem>>, vector<1x128xf32>
    %120 = vector.broadcast %119 : vector<1x128xf32> to vector<8x128xf32>
    %121 = arith.addf %118, %120 : vector<8x128xf32>
    %cst_112 = arith.constant 0.000000e+00 : f32
    %122 = vector.broadcast %cst_112 : f32 to vector<8x128xf32>
    %123 = arith.maximumf %121, %122 : vector<8x128xf32>
    %c0_113 = arith.constant 0 : index
    %c0_114 = arith.constant 0 : index
    %124 = vector.load %arg10[%c0_113, %c0_114] : memref<128x32xf32, #tpu.memory_space<vmem>>, vector<128x32xf32>
    %cst_115 = arith.constant dense<0.000000e+00> : vector<8x32xf32>
    %125 = tpu.matmul %123, %124, %cst_115 {dimension_numbers = #tpu.dot_dimension_numbers<[1], [0], [0], [1], [0, 0, 1, 1], [], []>} : vector<8x128xf32>, vector<128x32xf32>, vector<8x32xf32> -> vector<8x32xf32>
    %c0_116 = arith.constant 0 : index
    %c0_117 = arith.constant 0 : index
    %126 = vector.load %arg11[%c0_116, %c0_117] : memref<1x32xf32, #tpu.memory_space<vmem>>, vector<1x32xf32>
    %127 = vector.broadcast %126 : vector<1x32xf32> to vector<8x32xf32>
    %128 = arith.addf %125, %127 : vector<8x32xf32>
    %cst_118 = arith.constant 0.000000e+00 : f32
    %129 = vector.broadcast %cst_118 : f32 to vector<8x32xf32>
    %130 = arith.subf %129, %128 : vector<8x32xf32>
    %131 = math.exp %130 : vector<8x32xf32>
    %cst_119 = arith.constant 1.000000e+00 : f32
    %132 = vector.broadcast %cst_119 : f32 to vector<8x32xf32>
    %133 = arith.addf %132, %131 : vector<8x32xf32>
    %cst_120 = arith.constant 1.000000e+00 : f32
    %134 = vector.broadcast %cst_120 : f32 to vector<8x32xf32>
    %135 = arith.divf %134, %133 : vector<8x32xf32>
    %136 = vector.extract_strided_slice %135 {offsets = [0, 0], sizes = [1, 32], strides = [1, 1]} : vector<8x32xf32> to vector<1x32xf32>
    %137 = arith.truncf %110 : vector<16x32xf32> to vector<16x32xbf16>
    %138 = arith.extf %137 : vector<16x32xbf16> to vector<16x32xf32>
    %139 = vector.broadcast %136 : vector<1x32xf32> to vector<16x32xf32>
    %140 = arith.mulf %138, %139 : vector<16x32xf32>
    %141 = arith.truncf %140 : vector<16x32xf32> to vector<16x32xbf16>
    %c0_121 = arith.constant 0 : index
    %c0_122 = arith.constant 0 : index
    %c0_123 = arith.constant 0 : index
    %142 = vector.load %arg12[%c0_121, %c0_122, %c0_123] : memref<9x4x16xbf16, #tpu.memory_space<vmem>>, vector<1x4x16xbf16>
    %143 = vector.shape_cast %142 : vector<1x4x16xbf16> to vector<4x16xbf16>
    %cst_124 = arith.constant dense<0.000000e+00> : vector<4x32xf32>
    %144 = tpu.matmul %143, %141, %cst_124 {dimension_numbers = #tpu.dot_dimension_numbers<[1], [0], [0], [1], [0, 0, 1, 1], [], []>} : vector<4x16xbf16>, vector<16x32xbf16>, vector<4x32xf32> -> vector<4x32xf32>
    %145 = arith.truncf %144 : vector<4x32xf32> to vector<4x32xbf16>
    %c0_125 = arith.constant 0 : index
    %c0_126 = arith.constant 0 : index
    %146 = vector.load %arg32[%c0_125, %c0_126] : memref<4x288xbf16, #tpu.memory_space<vmem>>, vector<4x32xbf16>
    tpu.vector_store %arg32[%c0_125, %c0_126], %145 {strides = array<i32>} : memref<4x288xbf16, #tpu.memory_space<vmem>>, vector<4x32xbf16>,
    %c1_127 = arith.constant 1 : index
    %c0_128 = arith.constant 0 : index
    %c0_129 = arith.constant 0 : index
    %147 = vector.load %arg12[%c1_127, %c0_128, %c0_129] : memref<9x4x16xbf16, #tpu.memory_space<vmem>>, vector<1x4x16xbf16>
    %148 = vector.shape_cast %147 : vector<1x4x16xbf16> to vector<4x16xbf16>
    %cst_130 = arith.constant dense<0.000000e+00> : vector<4x32xf32>
    %149 = tpu.matmul %148, %141, %cst_130 {dimension_numbers = #tpu.dot_dimension_numbers<[1], [0], [0], [1], [0, 0, 1, 1], [], []>} : vector<4x16xbf16>, vector<16x32xbf16>, vector<4x32xf32> -> vector<4x32xf32>
    %150 = arith.truncf %149 : vector<4x32xf32> to vector<4x32xbf16>
    %c0_131 = arith.constant 0 : index
    %c32_132 = arith.constant 32 : index
    %151 = vector.load %arg32[%c0_131, %c32_132] : memref<4x288xbf16, #tpu.memory_space<vmem>>, vector<4x32xbf16>
    tpu.vector_store %arg32[%c0_131, %c32_132], %150 {strides = array<i32>} : memref<4x288xbf16, #tpu.memory_space<vmem>>, vector<4x32xbf16>,
    %c2_133 = arith.constant 2 : index
    %c0_134 = arith.constant 0 : index
    %c0_135 = arith.constant 0 : index
    %152 = vector.load %arg12[%c2_133, %c0_134, %c0_135] : memref<9x4x16xbf16, #tpu.memory_space<vmem>>, vector<1x4x16xbf16>
    %153 = vector.shape_cast %152 : vector<1x4x16xbf16> to vector<4x16xbf16>
    %cst_136 = arith.constant dense<0.000000e+00> : vector<4x32xf32>
    %154 = tpu.matmul %153, %141, %cst_136 {dimension_numbers = #tpu.dot_dimension_numbers<[1], [0], [0], [1], [0, 0, 1, 1], [], []>} : vector<4x16xbf16>, vector<16x32xbf16>, vector<4x32xf32> -> vector<4x32xf32>
    %155 = arith.truncf %154 : vector<4x32xf32> to vector<4x32xbf16>
    %c0_137 = arith.constant 0 : index
    %c64_138 = arith.constant 64 : index
    %156 = vector.load %arg32[%c0_137, %c64_138] : memref<4x288xbf16, #tpu.memory_space<vmem>>, vector<4x32xbf16>
    tpu.vector_store %arg32[%c0_137, %c64_138], %155 {strides = array<i32>} : memref<4x288xbf16, #tpu.memory_space<vmem>>, vector<4x32xbf16>,
    %c3_139 = arith.constant 3 : index
    %c0_140 = arith.constant 0 : index
    %c0_141 = arith.constant 0 : index
    %157 = vector.load %arg12[%c3_139, %c0_140, %c0_141] : memref<9x4x16xbf16, #tpu.memory_space<vmem>>, vector<1x4x16xbf16>
    %158 = vector.shape_cast %157 : vector<1x4x16xbf16> to vector<4x16xbf16>
    %cst_142 = arith.constant dense<0.000000e+00> : vector<4x32xf32>
    %159 = tpu.matmul %158, %141, %cst_142 {dimension_numbers = #tpu.dot_dimension_numbers<[1], [0], [0], [1], [0, 0, 1, 1], [], []>} : vector<4x16xbf16>, vector<16x32xbf16>, vector<4x32xf32> -> vector<4x32xf32>
    %160 = arith.truncf %159 : vector<4x32xf32> to vector<4x32xbf16>
    %c0_143 = arith.constant 0 : index
    %c96_144 = arith.constant 96 : index
    %161 = vector.load %arg32[%c0_143, %c96_144] : memref<4x288xbf16, #tpu.memory_space<vmem>>, vector<4x32xbf16>
    tpu.vector_store %arg32[%c0_143, %c96_144], %160 {strides = array<i32>} : memref<4x288xbf16, #tpu.memory_space<vmem>>, vector<4x32xbf16>,
    %c4_145 = arith.constant 4 : index
    %c0_146 = arith.constant 0 : index
    %c0_147 = arith.constant 0 : index
    %162 = vector.load %arg12[%c4_145, %c0_146, %c0_147] : memref<9x4x16xbf16, #tpu.memory_space<vmem>>, vector<1x4x16xbf16>
    %163 = vector.shape_cast %162 : vector<1x4x16xbf16> to vector<4x16xbf16>
    %cst_148 = arith.constant dense<0.000000e+00> : vector<4x32xf32>
    %164 = tpu.matmul %163, %141, %cst_148 {dimension_numbers = #tpu.dot_dimension_numbers<[1], [0], [0], [1], [0, 0, 1, 1], [], []>} : vector<4x16xbf16>, vector<16x32xbf16>, vector<4x32xf32> -> vector<4x32xf32>
    %165 = arith.truncf %164 : vector<4x32xf32> to vector<4x32xbf16>
    %c0_149 = arith.constant 0 : index
    %c128_150 = arith.constant 128 : index
    %166 = vector.load %arg32[%c0_149, %c128_150] : memref<4x288xbf16, #tpu.memory_space<vmem>>, vector<4x32xbf16>
    tpu.vector_store %arg32[%c0_149, %c128_150], %165 {strides = array<i32>} : memref<4x288xbf16, #tpu.memory_space<vmem>>, vector<4x32xbf16>,
    %c5_151 = arith.constant 5 : index
    %c0_152 = arith.constant 0 : index
    %c0_153 = arith.constant 0 : index
    %167 = vector.load %arg12[%c5_151, %c0_152, %c0_153] : memref<9x4x16xbf16, #tpu.memory_space<vmem>>, vector<1x4x16xbf16>
    %168 = vector.shape_cast %167 : vector<1x4x16xbf16> to vector<4x16xbf16>
    %cst_154 = arith.constant dense<0.000000e+00> : vector<4x32xf32>
    %169 = tpu.matmul %168, %141, %cst_154 {dimension_numbers = #tpu.dot_dimension_numbers<[1], [0], [0], [1], [0, 0, 1, 1], [], []>} : vector<4x16xbf16>, vector<16x32xbf16>, vector<4x32xf32> -> vector<4x32xf32>
    %170 = arith.truncf %169 : vector<4x32xf32> to vector<4x32xbf16>
    %c0_155 = arith.constant 0 : index
    %c160 = arith.constant 160 : index
    %171 = vector.load %arg32[%c0_155, %c160] : memref<4x288xbf16, #tpu.memory_space<vmem>>, vector<4x32xbf16>
    tpu.vector_store %arg32[%c0_155, %c160], %170 {strides = array<i32>} : memref<4x288xbf16, #tpu.memory_space<vmem>>, vector<4x32xbf16>,
    %c6_156 = arith.constant 6 : index
    %c0_157 = arith.constant 0 : index
    %c0_158 = arith.constant 0 : index
    %172 = vector.load %arg12[%c6_156, %c0_157, %c0_158] : memref<9x4x16xbf16, #tpu.memory_space<vmem>>, vector<1x4x16xbf16>
    %173 = vector.shape_cast %172 : vector<1x4x16xbf16> to vector<4x16xbf16>
    %cst_159 = arith.constant dense<0.000000e+00> : vector<4x32xf32>
    %174 = tpu.matmul %173, %141, %cst_159 {dimension_numbers = #tpu.dot_dimension_numbers<[1], [0], [0], [1], [0, 0, 1, 1], [], []>} : vector<4x16xbf16>, vector<16x32xbf16>, vector<4x32xf32> -> vector<4x32xf32>
    %175 = arith.truncf %174 : vector<4x32xf32> to vector<4x32xbf16>
    %c0_160 = arith.constant 0 : index
    %c192 = arith.constant 192 : index
    %176 = vector.load %arg32[%c0_160, %c192] : memref<4x288xbf16, #tpu.memory_space<vmem>>, vector<4x32xbf16>
    tpu.vector_store %arg32[%c0_160, %c192], %175 {strides = array<i32>} : memref<4x288xbf16, #tpu.memory_space<vmem>>, vector<4x32xbf16>,
    %c7_161 = arith.constant 7 : index
    %c0_162 = arith.constant 0 : index
    %c0_163 = arith.constant 0 : index
    %177 = vector.load %arg12[%c7_161, %c0_162, %c0_163] : memref<9x4x16xbf16, #tpu.memory_space<vmem>>, vector<1x4x16xbf16>
    %178 = vector.shape_cast %177 : vector<1x4x16xbf16> to vector<4x16xbf16>
    %cst_164 = arith.constant dense<0.000000e+00> : vector<4x32xf32>
    %179 = tpu.matmul %178, %141, %cst_164 {dimension_numbers = #tpu.dot_dimension_numbers<[1], [0], [0], [1], [0, 0, 1, 1], [], []>} : vector<4x16xbf16>, vector<16x32xbf16>, vector<4x32xf32> -> vector<4x32xf32>
    %180 = arith.truncf %179 : vector<4x32xf32> to vector<4x32xbf16>
    %c0_165 = arith.constant 0 : index
    %c224 = arith.constant 224 : index
    %181 = vector.load %arg32[%c0_165, %c224] : memref<4x288xbf16, #tpu.memory_space<vmem>>, vector<4x32xbf16>
    tpu.vector_store %arg32[%c0_165, %c224], %180 {strides = array<i32>} : memref<4x288xbf16, #tpu.memory_space<vmem>>, vector<4x32xbf16>,
    %c8_166 = arith.constant 8 : index
    %c0_167 = arith.constant 0 : index
    %c0_168 = arith.constant 0 : index
    %182 = vector.load %arg12[%c8_166, %c0_167, %c0_168] : memref<9x4x16xbf16, #tpu.memory_space<vmem>>, vector<1x4x16xbf16>
    %183 = vector.shape_cast %182 : vector<1x4x16xbf16> to vector<4x16xbf16>
    %cst_169 = arith.constant dense<0.000000e+00> : vector<4x32xf32>
    %184 = tpu.matmul %183, %141, %cst_169 {dimension_numbers = #tpu.dot_dimension_numbers<[1], [0], [0], [1], [0, 0, 1, 1], [], []>} : vector<4x16xbf16>, vector<16x32xbf16>, vector<4x32xf32> -> vector<4x32xf32>
    %185 = arith.truncf %184 : vector<4x32xf32> to vector<4x32xbf16>
    %c0_170 = arith.constant 0 : index
    %c256 = arith.constant 256 : index
    %186 = vector.load %arg32[%c0_170, %c256] : memref<4x288xbf16, #tpu.memory_space<vmem>>, vector<4x32xbf16>
    tpu.vector_store %arg32[%c0_170, %c256], %185 {strides = array<i32>} : memref<4x288xbf16, #tpu.memory_space<vmem>>, vector<4x32xbf16>,
    %c0_171 = arith.constant 0 : index
    %c0_172 = arith.constant 0 : index
    %187 = vector.load %arg32[%c0_171, %c0_172] : memref<4x288xbf16, #tpu.memory_space<vmem>>, vector<4x288xbf16>
    %c0_173 = arith.constant 0 : index
    %c0_174 = arith.constant 0 : index
    %188 = vector.load %arg13[%c0_173, %c0_174] : memref<288x64xbf16, #tpu.memory_space<vmem>>, vector<288x64xbf16>
    %cst_175 = arith.constant dense<0.000000e+00> : vector<4x64xf32>
    %189 = tpu.matmul %187, %188, %cst_175 {dimension_numbers = #tpu.dot_dimension_numbers<[1], [0], [0], [1], [0, 0, 1, 1], [], []>} : vector<4x288xbf16>, vector<288x64xbf16>, vector<4x64xf32> -> vector<4x64xf32>
    %c0_176 = arith.constant 0 : index
    %c0_177 = arith.constant 0 : index
    %190 = vector.load %arg14[%c0_176, %c0_177] : memref<1x64xf32, #tpu.memory_space<vmem>>, vector<1x64xf32>
    %191 = vector.broadcast %190 : vector<1x64xf32> to vector<4x64xf32>
    %192 = arith.addf %189, %191 : vector<4x64xf32>
    %cst_178 = arith.constant 2.000000e-01 : f32
    %193 = vector.broadcast %cst_178 : f32 to vector<4x64xf32>
    %194 = arith.mulf %193, %192 : vector<4x64xf32>
    %195 = arith.maximumf %192, %194 : vector<4x64xf32>
    %cst_179 = arith.constant dense<0.000000e+00> : vector<64xf32>
    %196 = vector.multi_reduction <add>, %195, %cst_179 [0] : vector<4x64xf32> to vector<64xf32>
    %197 = vector.shape_cast %196 : vector<64xf32> to vector<1x64xf32>
    %cst_180 = arith.constant 4.000000e+00 : f32
    %198 = vector.broadcast %cst_180 : f32 to vector<1x64xf32>
    %199 = arith.divf %197, %198 : vector<1x64xf32>
    %200 = vector.shape_cast %199 : vector<1x64xf32> to vector<1x64xf32>
    %201 = vector.broadcast %200 : vector<1x64xf32> to vector<8x64xf32>
    %c0_181 = arith.constant 0 : index
    %c0_182 = arith.constant 0 : index
    %202 = vector.load %arg15[%c0_181, %c0_182] : memref<64x128xf32, #tpu.memory_space<vmem>>, vector<64x128xf32>
    %cst_183 = arith.constant dense<0.000000e+00> : vector<8x128xf32>
    %203 = tpu.matmul %201, %202, %cst_183 {dimension_numbers = #tpu.dot_dimension_numbers<[1], [0], [0], [1], [0, 0, 1, 1], [], []>} : vector<8x64xf32>, vector<64x128xf32>, vector<8x128xf32> -> vector<8x128xf32>
    %c0_184 = arith.constant 0 : index
    %c0_185 = arith.constant 0 : index
    %204 = vector.load %arg16[%c0_184, %c0_185] : memref<1x128xf32, #tpu.memory_space<vmem>>, vector<1x128xf32>
    %205 = vector.broadcast %204 : vector<1x128xf32> to vector<8x128xf32>
    %206 = arith.addf %203, %205 : vector<8x128xf32>
    %cst_186 = arith.constant 0.000000e+00 : f32
    %207 = vector.broadcast %cst_186 : f32 to vector<8x128xf32>
    %208 = arith.maximumf %206, %207 : vector<8x128xf32>
    %c0_187 = arith.constant 0 : index
    %c0_188 = arith.constant 0 : index
    %209 = vector.load %arg17[%c0_187, %c0_188] : memref<128x64xf32, #tpu.memory_space<vmem>>, vector<128x64xf32>
    %cst_189 = arith.constant dense<0.000000e+00> : vector<8x64xf32>
    %210 = tpu.matmul %208, %209, %cst_189 {dimension_numbers = #tpu.dot_dimension_numbers<[1], [0], [0], [1], [0, 0, 1, 1], [], []>} : vector<8x128xf32>, vector<128x64xf32>, vector<8x64xf32> -> vector<8x64xf32>
    %c0_190 = arith.constant 0 : index
    %c0_191 = arith.constant 0 : index
    %211 = vector.load %arg18[%c0_190, %c0_191] : memref<1x64xf32, #tpu.memory_space<vmem>>, vector<1x64xf32>
    %212 = vector.broadcast %211 : vector<1x64xf32> to vector<8x64xf32>
    %213 = arith.addf %210, %212 : vector<8x64xf32>
    %cst_192 = arith.constant 0.000000e+00 : f32
    %214 = vector.broadcast %cst_192 : f32 to vector<8x64xf32>
    %215 = arith.subf %214, %213 : vector<8x64xf32>
    %216 = math.exp %215 : vector<8x64xf32>
    %cst_193 = arith.constant 1.000000e+00 : f32
    %217 = vector.broadcast %cst_193 : f32 to vector<8x64xf32>
    %218 = arith.addf %217, %216 : vector<8x64xf32>
    %cst_194 = arith.constant 1.000000e+00 : f32
    %219 = vector.broadcast %cst_194 : f32 to vector<8x64xf32>
    %220 = arith.divf %219, %218 : vector<8x64xf32>
    %221 = vector.extract_strided_slice %220 {offsets = [0, 0], sizes = [1, 64], strides = [1, 1]} : vector<8x64xf32> to vector<1x64xf32>
    %222 = arith.truncf %195 : vector<4x64xf32> to vector<4x64xbf16>
    %223 = arith.extf %222 : vector<4x64xbf16> to vector<4x64xf32>
    %224 = vector.broadcast %221 : vector<1x64xf32> to vector<4x64xf32>
    %225 = arith.mulf %223, %224 : vector<4x64xf32>
    %226 = arith.truncf %225 : vector<4x64xf32> to vector<4x64xbf16>
    %c0_195 = arith.constant 0 : index
    %c0_196 = arith.constant 0 : index
    %c0_197 = arith.constant 0 : index
    %227 = vector.load %arg19[%c0_195, %c0_196, %c0_197] : memref<9x4x4xbf16, #tpu.memory_space<vmem>>, vector<1x4x4xbf16>
    %228 = vector.shape_cast %227 : vector<1x4x4xbf16> to vector<4x4xbf16>
    %cst_198 = arith.constant dense<0.000000e+00> : vector<4x64xf32>
    %229 = tpu.matmul %228, %226, %cst_198 {dimension_numbers = #tpu.dot_dimension_numbers<[1], [0], [0], [1], [0, 0, 1, 1], [], []>} : vector<4x4xbf16>, vector<4x64xbf16>, vector<4x64xf32> -> vector<4x64xf32>
    %230 = arith.truncf %229 : vector<4x64xf32> to vector<4x64xbf16>
    %c0_199 = arith.constant 0 : index
    %c0_200 = arith.constant 0 : index
    %231 = vector.load %arg33[%c0_199, %c0_200] : memref<4x576xbf16, #tpu.memory_space<vmem>>, vector<4x64xbf16>
    tpu.vector_store %arg33[%c0_199, %c0_200], %230 {strides = array<i32>} : memref<4x576xbf16, #tpu.memory_space<vmem>>, vector<4x64xbf16>,
    %c1_201 = arith.constant 1 : index
    %c0_202 = arith.constant 0 : index
    %c0_203 = arith.constant 0 : index
    %232 = vector.load %arg19[%c1_201, %c0_202, %c0_203] : memref<9x4x4xbf16, #tpu.memory_space<vmem>>, vector<1x4x4xbf16>
    %233 = vector.shape_cast %232 : vector<1x4x4xbf16> to vector<4x4xbf16>
    %cst_204 = arith.constant dense<0.000000e+00> : vector<4x64xf32>
    %234 = tpu.matmul %233, %226, %cst_204 {dimension_numbers = #tpu.dot_dimension_numbers<[1], [0], [0], [1], [0, 0, 1, 1], [], []>} : vector<4x4xbf16>, vector<4x64xbf16>, vector<4x64xf32> -> vector<4x64xf32>
    %235 = arith.truncf %234 : vector<4x64xf32> to vector<4x64xbf16>
    %c0_205 = arith.constant 0 : index
    %c64_206 = arith.constant 64 : index
    %236 = vector.load %arg33[%c0_205, %c64_206] : memref<4x576xbf16, #tpu.memory_space<vmem>>, vector<4x64xbf16>
    tpu.vector_store %arg33[%c0_205, %c64_206], %235 {strides = array<i32>} : memref<4x576xbf16, #tpu.memory_space<vmem>>, vector<4x64xbf16>,
    %c2_207 = arith.constant 2 : index
    %c0_208 = arith.constant 0 : index
    %c0_209 = arith.constant 0 : index
    %237 = vector.load %arg19[%c2_207, %c0_208, %c0_209] : memref<9x4x4xbf16, #tpu.memory_space<vmem>>, vector<1x4x4xbf16>
    %238 = vector.shape_cast %237 : vector<1x4x4xbf16> to vector<4x4xbf16>
    %cst_210 = arith.constant dense<0.000000e+00> : vector<4x64xf32>
    %239 = tpu.matmul %238, %226, %cst_210 {dimension_numbers = #tpu.dot_dimension_numbers<[1], [0], [0], [1], [0, 0, 1, 1], [], []>} : vector<4x4xbf16>, vector<4x64xbf16>, vector<4x64xf32> -> vector<4x64xf32>
    %240 = arith.truncf %239 : vector<4x64xf32> to vector<4x64xbf16>
    %c0_211 = arith.constant 0 : index
    %c128_212 = arith.constant 128 : index
    %241 = vector.load %arg33[%c0_211, %c128_212] : memref<4x576xbf16, #tpu.memory_space<vmem>>, vector<4x64xbf16>
    tpu.vector_store %arg33[%c0_211, %c128_212], %240 {strides = array<i32>} : memref<4x576xbf16, #tpu.memory_space<vmem>>, vector<4x64xbf16>,
    %c3_213 = arith.constant 3 : index
    %c0_214 = arith.constant 0 : index
    %c0_215 = arith.constant 0 : index
    %242 = vector.load %arg19[%c3_213, %c0_214, %c0_215] : memref<9x4x4xbf16, #tpu.memory_space<vmem>>, vector<1x4x4xbf16>
    %243 = vector.shape_cast %242 : vector<1x4x4xbf16> to vector<4x4xbf16>
    %cst_216 = arith.constant dense<0.000000e+00> : vector<4x64xf32>
    %244 = tpu.matmul %243, %226, %cst_216 {dimension_numbers = #tpu.dot_dimension_numbers<[1], [0], [0], [1], [0, 0, 1, 1], [], []>} : vector<4x4xbf16>, vector<4x64xbf16>, vector<4x64xf32> -> vector<4x64xf32>
    %245 = arith.truncf %244 : vector<4x64xf32> to vector<4x64xbf16>
    %c0_217 = arith.constant 0 : index
    %c192_218 = arith.constant 192 : index
    %246 = vector.load %arg33[%c0_217, %c192_218] : memref<4x576xbf16, #tpu.memory_space<vmem>>, vector<4x64xbf16>
    tpu.vector_store %arg33[%c0_217, %c192_218], %245 {strides = array<i32>} : memref<4x576xbf16, #tpu.memory_space<vmem>>, vector<4x64xbf16>,
    %c4_219 = arith.constant 4 : index
    %c0_220 = arith.constant 0 : index
    %c0_221 = arith.constant 0 : index
    %247 = vector.load %arg19[%c4_219, %c0_220, %c0_221] : memref<9x4x4xbf16, #tpu.memory_space<vmem>>, vector<1x4x4xbf16>
    %248 = vector.shape_cast %247 : vector<1x4x4xbf16> to vector<4x4xbf16>
    %cst_222 = arith.constant dense<0.000000e+00> : vector<4x64xf32>
    %249 = tpu.matmul %248, %226, %cst_222 {dimension_numbers = #tpu.dot_dimension_numbers<[1], [0], [0], [1], [0, 0, 1, 1], [], []>} : vector<4x4xbf16>, vector<4x64xbf16>, vector<4x64xf32> -> vector<4x64xf32>
    %250 = arith.truncf %249 : vector<4x64xf32> to vector<4x64xbf16>
    %c0_223 = arith.constant 0 : index
    %c256_224 = arith.constant 256 : index
    %251 = vector.load %arg33[%c0_223, %c256_224] : memref<4x576xbf16, #tpu.memory_space<vmem>>, vector<4x64xbf16>
    tpu.vector_store %arg33[%c0_223, %c256_224], %250 {strides = array<i32>} : memref<4x576xbf16, #tpu.memory_space<vmem>>, vector<4x64xbf16>,
    %c5_225 = arith.constant 5 : index
    %c0_226 = arith.constant 0 : index
    %c0_227 = arith.constant 0 : index
    %252 = vector.load %arg19[%c5_225, %c0_226, %c0_227] : memref<9x4x4xbf16, #tpu.memory_space<vmem>>, vector<1x4x4xbf16>
    %253 = vector.shape_cast %252 : vector<1x4x4xbf16> to vector<4x4xbf16>
    %cst_228 = arith.constant dense<0.000000e+00> : vector<4x64xf32>
    %254 = tpu.matmul %253, %226, %cst_228 {dimension_numbers = #tpu.dot_dimension_numbers<[1], [0], [0], [1], [0, 0, 1, 1], [], []>} : vector<4x4xbf16>, vector<4x64xbf16>, vector<4x64xf32> -> vector<4x64xf32>
    %255 = arith.truncf %254 : vector<4x64xf32> to vector<4x64xbf16>
    %c0_229 = arith.constant 0 : index
    %c320 = arith.constant 320 : index
    %256 = vector.load %arg33[%c0_229, %c320] : memref<4x576xbf16, #tpu.memory_space<vmem>>, vector<4x64xbf16>
    tpu.vector_store %arg33[%c0_229, %c320], %255 {strides = array<i32>} : memref<4x576xbf16, #tpu.memory_space<vmem>>, vector<4x64xbf16>,
    %c6_230 = arith.constant 6 : index
    %c0_231 = arith.constant 0 : index
    %c0_232 = arith.constant 0 : index
    %257 = vector.load %arg19[%c6_230, %c0_231, %c0_232] : memref<9x4x4xbf16, #tpu.memory_space<vmem>>, vector<1x4x4xbf16>
    %258 = vector.shape_cast %257 : vector<1x4x4xbf16> to vector<4x4xbf16>
    %cst_233 = arith.constant dense<0.000000e+00> : vector<4x64xf32>
    %259 = tpu.matmul %258, %226, %cst_233 {dimension_numbers = #tpu.dot_dimension_numbers<[1], [0], [0], [1], [0, 0, 1, 1], [], []>} : vector<4x4xbf16>, vector<4x64xbf16>, vector<4x64xf32> -> vector<4x64xf32>
    %260 = arith.truncf %259 : vector<4x64xf32> to vector<4x64xbf16>
    %c0_234 = arith.constant 0 : index
    %c384 = arith.constant 384 : index
    %261 = vector.load %arg33[%c0_234, %c384] : memref<4x576xbf16, #tpu.memory_space<vmem>>, vector<4x64xbf16>
    tpu.vector_store %arg33[%c0_234, %c384], %260 {strides = array<i32>} : memref<4x576xbf16, #tpu.memory_space<vmem>>, vector<4x64xbf16>,
    %c7_235 = arith.constant 7 : index
    %c0_236 = arith.constant 0 : index
    %c0_237 = arith.constant 0 : index
    %262 = vector.load %arg19[%c7_235, %c0_236, %c0_237] : memref<9x4x4xbf16, #tpu.memory_space<vmem>>, vector<1x4x4xbf16>
    %263 = vector.shape_cast %262 : vector<1x4x4xbf16> to vector<4x4xbf16>
    %cst_238 = arith.constant dense<0.000000e+00> : vector<4x64xf32>
    %264 = tpu.matmul %263, %226, %cst_238 {dimension_numbers = #tpu.dot_dimension_numbers<[1], [0], [0], [1], [0, 0, 1, 1], [], []>} : vector<4x4xbf16>, vector<4x64xbf16>, vector<4x64xf32> -> vector<4x64xf32>
    %265 = arith.truncf %264 : vector<4x64xf32> to vector<4x64xbf16>
    %c0_239 = arith.constant 0 : index
    %c448 = arith.constant 448 : index
    %266 = vector.load %arg33[%c0_239, %c448] : memref<4x576xbf16, #tpu.memory_space<vmem>>, vector<4x64xbf16>
    tpu.vector_store %arg33[%c0_239, %c448], %265 {strides = array<i32>} : memref<4x576xbf16, #tpu.memory_space<vmem>>, vector<4x64xbf16>,
    %c8_240 = arith.constant 8 : index
    %c0_241 = arith.constant 0 : index
    %c0_242 = arith.constant 0 : index
    %267 = vector.load %arg19[%c8_240, %c0_241, %c0_242] : memref<9x4x4xbf16, #tpu.memory_space<vmem>>, vector<1x4x4xbf16>
    %268 = vector.shape_cast %267 : vector<1x4x4xbf16> to vector<4x4xbf16>
    %cst_243 = arith.constant dense<0.000000e+00> : vector<4x64xf32>
    %269 = tpu.matmul %268, %226, %cst_243 {dimension_numbers = #tpu.dot_dimension_numbers<[1], [0], [0], [1], [0, 0, 1, 1], [], []>} : vector<4x4xbf16>, vector<4x64xbf16>, vector<4x64xf32> -> vector<4x64xf32>
    %270 = arith.truncf %269 : vector<4x64xf32> to vector<4x64xbf16>
    %c0_244 = arith.constant 0 : index
    %c512 = arith.constant 512 : index
    %271 = vector.load %arg33[%c0_244, %c512] : memref<4x576xbf16, #tpu.memory_space<vmem>>, vector<4x64xbf16>
    tpu.vector_store %arg33[%c0_244, %c512], %270 {strides = array<i32>} : memref<4x576xbf16, #tpu.memory_space<vmem>>, vector<4x64xbf16>,
    %c0_245 = arith.constant 0 : index
    %c0_246 = arith.constant 0 : index
    %272 = vector.load %arg33[%c0_245, %c0_246] : memref<4x576xbf16, #tpu.memory_space<vmem>>, vector<4x576xbf16>
    %c0_247 = arith.constant 0 : index
    %c0_248 = arith.constant 0 : index
    %273 = vector.load %arg20[%c0_247, %c0_248] : memref<576x128xbf16, #tpu.memory_space<vmem>>, vector<576x128xbf16>
    %cst_249 = arith.constant dense<0.000000e+00> : vector<4x128xf32>
    %274 = tpu.matmul %272, %273, %cst_249 {dimension_numbers = #tpu.dot_dimension_numbers<[1], [0], [0], [1], [0, 0, 1, 1], [], []>} : vector<4x576xbf16>, vector<576x128xbf16>, vector<4x128xf32> -> vector<4x128xf32>
    %c0_250 = arith.constant 0 : index
    %c0_251 = arith.constant 0 : index
    %275 = vector.load %arg21[%c0_250, %c0_251] : memref<1x128xf32, #tpu.memory_space<vmem>>, vector<1x128xf32>
    %276 = vector.broadcast %275 : vector<1x128xf32> to vector<4x128xf32>
    %277 = arith.addf %274, %276 : vector<4x128xf32>
    %cst_252 = arith.constant 2.000000e-01 : f32
    %278 = vector.broadcast %cst_252 : f32 to vector<4x128xf32>
    %279 = arith.mulf %278, %277 : vector<4x128xf32>
    %280 = arith.maximumf %277, %279 : vector<4x128xf32>
    %cst_253 = arith.constant dense<0.000000e+00> : vector<128xf32>
    %281 = vector.multi_reduction <add>, %280, %cst_253 [0] : vector<4x128xf32> to vector<128xf32>
    %282 = vector.shape_cast %281 : vector<128xf32> to vector<1x128xf32>
    %cst_254 = arith.constant 4.000000e+00 : f32
    %283 = vector.broadcast %cst_254 : f32 to vector<1x128xf32>
    %284 = arith.divf %282, %283 : vector<1x128xf32>
    %285 = vector.shape_cast %284 : vector<1x128xf32> to vector<1x128xf32>
    %286 = vector.broadcast %285 : vector<1x128xf32> to vector<8x128xf32>
    %c0_255 = arith.constant 0 : index
    %c0_256 = arith.constant 0 : index
    %287 = vector.load %arg22[%c0_255, %c0_256] : memref<128x128xf32, #tpu.memory_space<vmem>>, vector<128x128xf32>
    %cst_257 = arith.constant dense<0.000000e+00> : vector<8x128xf32>
    %288 = tpu.matmul %286, %287, %cst_257 {dimension_numbers = #tpu.dot_dimension_numbers<[1], [0], [0], [1], [0, 0, 1, 1], [], []>} : vector<8x128xf32>, vector<128x128xf32>, vector<8x128xf32> -> vector<8x128xf32>
    %c0_258 = arith.constant 0 : index
    %c0_259 = arith.constant 0 : index
    %289 = vector.load %arg23[%c0_258, %c0_259] : memref<1x128xf32, #tpu.memory_space<vmem>>, vector<1x128xf32>
    %290 = vector.broadcast %289 : vector<1x128xf32> to vector<8x128xf32>
    %291 = arith.addf %288, %290 : vector<8x128xf32>
    %cst_260 = arith.constant 0.000000e+00 : f32
    %292 = vector.broadcast %cst_260 : f32 to vector<8x128xf32>
    %293 = arith.maximumf %291, %292 : vector<8x128xf32>
    %c0_261 = arith.constant 0 : index
    %c0_262 = arith.constant 0 : index
    %294 = vector.load %arg24[%c0_261, %c0_262] : memref<128x128xf32, #tpu.memory_space<vmem>>, vector<128x128xf32>
    %cst_263 = arith.constant dense<0.000000e+00> : vector<8x128xf32>
    %295 = tpu.matmul %293, %294, %cst_263 {dimension_numbers = #tpu.dot_dimension_numbers<[1], [0], [0], [1], [0, 0, 1, 1], [], []>} : vector<8x128xf32>, vector<128x128xf32>, vector<8x128xf32> -> vector<8x128xf32>
    %c0_264 = arith.constant 0 : index
    %c0_265 = arith.constant 0 : index
    %296 = vector.load %arg25[%c0_264, %c0_265] : memref<1x128xf32, #tpu.memory_space<vmem>>, vector<1x128xf32>
    %297 = vector.broadcast %296 : vector<1x128xf32> to vector<8x128xf32>
    %298 = arith.addf %295, %297 : vector<8x128xf32>
    %cst_266 = arith.constant 0.000000e+00 : f32
    %299 = vector.broadcast %cst_266 : f32 to vector<8x128xf32>
    %300 = arith.subf %299, %298 : vector<8x128xf32>
    %301 = math.exp %300 : vector<8x128xf32>
    %cst_267 = arith.constant 1.000000e+00 : f32
    %302 = vector.broadcast %cst_267 : f32 to vector<8x128xf32>
    %303 = arith.addf %302, %301 : vector<8x128xf32>
    %cst_268 = arith.constant 1.000000e+00 : f32
    %304 = vector.broadcast %cst_268 : f32 to vector<8x128xf32>
    %305 = arith.divf %304, %303 : vector<8x128xf32>
    %306 = vector.extract_strided_slice %305 {offsets = [0, 0], sizes = [1, 128], strides = [1, 1]} : vector<8x128xf32> to vector<1x128xf32>
    %307 = arith.truncf %280 : vector<4x128xf32> to vector<4x128xbf16>
    %308 = arith.extf %307 : vector<4x128xbf16> to vector<4x128xf32>
    %309 = vector.broadcast %306 : vector<1x128xf32> to vector<4x128xf32>
    %310 = arith.mulf %308, %309 : vector<4x128xf32>
    %311 = arith.truncf %310 : vector<4x128xf32> to vector<4x128xbf16>
    %c0_269 = arith.constant 0 : index
    %c0_270 = arith.constant 0 : index
    %c0_271 = arith.constant 0 : index
    %312 = vector.load %arg26[%c0_269, %c0_270, %c0_271] : memref<9x4x4xbf16, #tpu.memory_space<vmem>>, vector<1x4x4xbf16>
    %313 = vector.shape_cast %312 : vector<1x4x4xbf16> to vector<4x4xbf16>
    %cst_272 = arith.constant dense<0.000000e+00> : vector<4x128xf32>
    %314 = tpu.matmul %313, %311, %cst_272 {dimension_numbers = #tpu.dot_dimension_numbers<[1], [0], [0], [1], [0, 0, 1, 1], [], []>} : vector<4x4xbf16>, vector<4x128xbf16>, vector<4x128xf32> -> vector<4x128xf32>
    %315 = arith.truncf %314 : vector<4x128xf32> to vector<4x128xbf16>
    %c0_273 = arith.constant 0 : index
    %c0_274 = arith.constant 0 : index
    %316 = vector.load %arg34[%c0_273, %c0_274] : memref<4x1152xbf16, #tpu.memory_space<vmem>>, vector<4x128xbf16>
    tpu.vector_store %arg34[%c0_273, %c0_274], %315 {strides = array<i32>} : memref<4x1152xbf16, #tpu.memory_space<vmem>>, vector<4x128xbf16>,
    %c1_275 = arith.constant 1 : index
    %c0_276 = arith.constant 0 : index
    %c0_277 = arith.constant 0 : index
    %317 = vector.load %arg26[%c1_275, %c0_276, %c0_277] : memref<9x4x4xbf16, #tpu.memory_space<vmem>>, vector<1x4x4xbf16>
    %318 = vector.shape_cast %317 : vector<1x4x4xbf16> to vector<4x4xbf16>
    %cst_278 = arith.constant dense<0.000000e+00> : vector<4x128xf32>
    %319 = tpu.matmul %318, %311, %cst_278 {dimension_numbers = #tpu.dot_dimension_numbers<[1], [0], [0], [1], [0, 0, 1, 1], [], []>} : vector<4x4xbf16>, vector<4x128xbf16>, vector<4x128xf32> -> vector<4x128xf32>
    %320 = arith.truncf %319 : vector<4x128xf32> to vector<4x128xbf16>
    %c0_279 = arith.constant 0 : index
    %c128_280 = arith.constant 128 : index
    %321 = vector.load %arg34[%c0_279, %c128_280] : memref<4x1152xbf16, #tpu.memory_space<vmem>>, vector<4x128xbf16>
    tpu.vector_store %arg34[%c0_279, %c128_280], %320 {strides = array<i32>} : memref<4x1152xbf16, #tpu.memory_space<vmem>>, vector<4x128xbf16>,
    %c2_281 = arith.constant 2 : index
    %c0_282 = arith.constant 0 : index
    %c0_283 = arith.constant 0 : index
    %322 = vector.load %arg26[%c2_281, %c0_282, %c0_283] : memref<9x4x4xbf16, #tpu.memory_space<vmem>>, vector<1x4x4xbf16>
    %323 = vector.shape_cast %322 : vector<1x4x4xbf16> to vector<4x4xbf16>
    %cst_284 = arith.constant dense<0.000000e+00> : vector<4x128xf32>
    %324 = tpu.matmul %323, %311, %cst_284 {dimension_numbers = #tpu.dot_dimension_numbers<[1], [0], [0], [1], [0, 0, 1, 1], [], []>} : vector<4x4xbf16>, vector<4x128xbf16>, vector<4x128xf32> -> vector<4x128xf32>
    %325 = arith.truncf %324 : vector<4x128xf32> to vector<4x128xbf16>
    %c0_285 = arith.constant 0 : index
    %c256_286 = arith.constant 256 : index
    %326 = vector.load %arg34[%c0_285, %c256_286] : memref<4x1152xbf16, #tpu.memory_space<vmem>>, vector<4x128xbf16>
    tpu.vector_store %arg34[%c0_285, %c256_286], %325 {strides = array<i32>} : memref<4x1152xbf16, #tpu.memory_space<vmem>>, vector<4x128xbf16>,
    %c3_287 = arith.constant 3 : index
    %c0_288 = arith.constant 0 : index
    %c0_289 = arith.constant 0 : index
    %327 = vector.load %arg26[%c3_287, %c0_288, %c0_289] : memref<9x4x4xbf16, #tpu.memory_space<vmem>>, vector<1x4x4xbf16>
    %328 = vector.shape_cast %327 : vector<1x4x4xbf16> to vector<4x4xbf16>
    %cst_290 = arith.constant dense<0.000000e+00> : vector<4x128xf32>
    %329 = tpu.matmul %328, %311, %cst_290 {dimension_numbers = #tpu.dot_dimension_numbers<[1], [0], [0], [1], [0, 0, 1, 1], [], []>} : vector<4x4xbf16>, vector<4x128xbf16>, vector<4x128xf32> -> vector<4x128xf32>
    %330 = arith.truncf %329 : vector<4x128xf32> to vector<4x128xbf16>
    %c0_291 = arith.constant 0 : index
    %c384_292 = arith.constant 384 : index
    %331 = vector.load %arg34[%c0_291, %c384_292] : memref<4x1152xbf16, #tpu.memory_space<vmem>>, vector<4x128xbf16>
    tpu.vector_store %arg34[%c0_291, %c384_292], %330 {strides = array<i32>} : memref<4x1152xbf16, #tpu.memory_space<vmem>>, vector<4x128xbf16>,
    %c4_293 = arith.constant 4 : index
    %c0_294 = arith.constant 0 : index
    %c0_295 = arith.constant 0 : index
    %332 = vector.load %arg26[%c4_293, %c0_294, %c0_295] : memref<9x4x4xbf16, #tpu.memory_space<vmem>>, vector<1x4x4xbf16>
    %333 = vector.shape_cast %332 : vector<1x4x4xbf16> to vector<4x4xbf16>
    %cst_296 = arith.constant dense<0.000000e+00> : vector<4x128xf32>
    %334 = tpu.matmul %333, %311, %cst_296 {dimension_numbers = #tpu.dot_dimension_numbers<[1], [0], [0], [1], [0, 0, 1, 1], [], []>} : vector<4x4xbf16>, vector<4x128xbf16>, vector<4x128xf32> -> vector<4x128xf32>
    %335 = arith.truncf %334 : vector<4x128xf32> to vector<4x128xbf16>
    %c0_297 = arith.constant 0 : index
    %c512_298 = arith.constant 512 : index
    %336 = vector.load %arg34[%c0_297, %c512_298] : memref<4x1152xbf16, #tpu.memory_space<vmem>>, vector<4x128xbf16>
    tpu.vector_store %arg34[%c0_297, %c512_298], %335 {strides = array<i32>} : memref<4x1152xbf16, #tpu.memory_space<vmem>>, vector<4x128xbf16>,
    %c5_299 = arith.constant 5 : index
    %c0_300 = arith.constant 0 : index
    %c0_301 = arith.constant 0 : index
    %337 = vector.load %arg26[%c5_299, %c0_300, %c0_301] : memref<9x4x4xbf16, #tpu.memory_space<vmem>>, vector<1x4x4xbf16>
    %338 = vector.shape_cast %337 : vector<1x4x4xbf16> to vector<4x4xbf16>
    %cst_302 = arith.constant dense<0.000000e+00> : vector<4x128xf32>
    %339 = tpu.matmul %338, %311, %cst_302 {dimension_numbers = #tpu.dot_dimension_numbers<[1], [0], [0], [1], [0, 0, 1, 1], [], []>} : vector<4x4xbf16>, vector<4x128xbf16>, vector<4x128xf32> -> vector<4x128xf32>
    %340 = arith.truncf %339 : vector<4x128xf32> to vector<4x128xbf16>
    %c0_303 = arith.constant 0 : index
    %c640 = arith.constant 640 : index
    %341 = vector.load %arg34[%c0_303, %c640] : memref<4x1152xbf16, #tpu.memory_space<vmem>>, vector<4x128xbf16>
    tpu.vector_store %arg34[%c0_303, %c640], %340 {strides = array<i32>} : memref<4x1152xbf16, #tpu.memory_space<vmem>>, vector<4x128xbf16>,
    %c6_304 = arith.constant 6 : index
    %c0_305 = arith.constant 0 : index
    %c0_306 = arith.constant 0 : index
    %342 = vector.load %arg26[%c6_304, %c0_305, %c0_306] : memref<9x4x4xbf16, #tpu.memory_space<vmem>>, vector<1x4x4xbf16>
    %343 = vector.shape_cast %342 : vector<1x4x4xbf16> to vector<4x4xbf16>
    %cst_307 = arith.constant dense<0.000000e+00> : vector<4x128xf32>
    %344 = tpu.matmul %343, %311, %cst_307 {dimension_numbers = #tpu.dot_dimension_numbers<[1], [0], [0], [1], [0, 0, 1, 1], [], []>} : vector<4x4xbf16>, vector<4x128xbf16>, vector<4x128xf32> -> vector<4x128xf32>
    %345 = arith.truncf %344 : vector<4x128xf32> to vector<4x128xbf16>
    %c0_308 = arith.constant 0 : index
    %c768 = arith.constant 768 : index
    %346 = vector.load %arg34[%c0_308, %c768] : memref<4x1152xbf16, #tpu.memory_space<vmem>>, vector<4x128xbf16>
    tpu.vector_store %arg34[%c0_308, %c768], %345 {strides = array<i32>} : memref<4x1152xbf16, #tpu.memory_space<vmem>>, vector<4x128xbf16>,
    %c7_309 = arith.constant 7 : index
    %c0_310 = arith.constant 0 : index
    %c0_311 = arith.constant 0 : index
    %347 = vector.load %arg26[%c7_309, %c0_310, %c0_311] : memref<9x4x4xbf16, #tpu.memory_space<vmem>>, vector<1x4x4xbf16>
    %348 = vector.shape_cast %347 : vector<1x4x4xbf16> to vector<4x4xbf16>
    %cst_312 = arith.constant dense<0.000000e+00> : vector<4x128xf32>
    %349 = tpu.matmul %348, %311, %cst_312 {dimension_numbers = #tpu.dot_dimension_numbers<[1], [0], [0], [1], [0, 0, 1, 1], [], []>} : vector<4x4xbf16>, vector<4x128xbf16>, vector<4x128xf32> -> vector<4x128xf32>
    %350 = arith.truncf %349 : vector<4x128xf32> to vector<4x128xbf16>
    %c0_313 = arith.constant 0 : index
    %c896 = arith.constant 896 : index
    %351 = vector.load %arg34[%c0_313, %c896] : memref<4x1152xbf16, #tpu.memory_space<vmem>>, vector<4x128xbf16>
    tpu.vector_store %arg34[%c0_313, %c896], %350 {strides = array<i32>} : memref<4x1152xbf16, #tpu.memory_space<vmem>>, vector<4x128xbf16>,
    %c8_314 = arith.constant 8 : index
    %c0_315 = arith.constant 0 : index
    %c0_316 = arith.constant 0 : index
    %352 = vector.load %arg26[%c8_314, %c0_315, %c0_316] : memref<9x4x4xbf16, #tpu.memory_space<vmem>>, vector<1x4x4xbf16>
    %353 = vector.shape_cast %352 : vector<1x4x4xbf16> to vector<4x4xbf16>
    %cst_317 = arith.constant dense<0.000000e+00> : vector<4x128xf32>
    %354 = tpu.matmul %353, %311, %cst_317 {dimension_numbers = #tpu.dot_dimension_numbers<[1], [0], [0], [1], [0, 0, 1, 1], [], []>} : vector<4x4xbf16>, vector<4x128xbf16>, vector<4x128xf32> -> vector<4x128xf32>
    %355 = arith.truncf %354 : vector<4x128xf32> to vector<4x128xbf16>
    %c0_318 = arith.constant 0 : index
    %c1024 = arith.constant 1024 : index
    %356 = vector.load %arg34[%c0_318, %c1024] : memref<4x1152xbf16, #tpu.memory_space<vmem>>, vector<4x128xbf16>
    tpu.vector_store %arg34[%c0_318, %c1024], %355 {strides = array<i32>} : memref<4x1152xbf16, #tpu.memory_space<vmem>>, vector<4x128xbf16>,
    %c0_319 = arith.constant 0 : index
    %c0_320 = arith.constant 0 : index
    %357 = vector.load %arg34[%c0_319, %c0_320] : memref<4x1152xbf16, #tpu.memory_space<vmem>>, vector<4x1152xbf16>
    %c0_321 = arith.constant 0 : index
    %c0_322 = arith.constant 0 : index
    %358 = vector.load %arg27[%c0_321, %c0_322] : memref<1152x128xbf16, #tpu.memory_space<vmem>>, vector<1152x128xbf16>
    %cst_323 = arith.constant dense<0.000000e+00> : vector<4x128xf32>
    %359 = tpu.matmul %357, %358, %cst_323 {dimension_numbers = #tpu.dot_dimension_numbers<[1], [0], [0], [1], [0, 0, 1, 1], [], []>} : vector<4x1152xbf16>, vector<1152x128xbf16>, vector<4x128xf32> -> vector<4x128xf32>
    %c0_324 = arith.constant 0 : index
    %c0_325 = arith.constant 0 : index
    %360 = vector.load %arg28[%c0_324, %c0_325] : memref<1x128xf32, #tpu.memory_space<vmem>>, vector<1x128xf32>
    %361 = vector.broadcast %360 : vector<1x128xf32> to vector<4x128xf32>
    %362 = arith.addf %359, %361 : vector<4x128xf32>
    %c0_326 = arith.constant 0 : index
    %c0_327 = arith.constant 0 : index
    %c0_328 = arith.constant 0 : index
    %363 = vector.load %arg29[%c0_326, %c0_327, %c0_328] : memref<1x4x128xf32, #tpu.memory_space<vmem>>, vector<1x4x128xf32>
    %364 = vector.shape_cast %363 : vector<1x4x128xf32> to vector<4x128xf32>
    %365 = vector.shape_cast %362 : vector<4x128xf32> to vector<1x4x128xf32>
    tpu.vector_store %arg29[%c0_326, %c0_327, %c0_328], %365 {strides = array<i32>} : memref<1x4x128xf32, #tpu.memory_space<vmem>>, vector<1x4x128xf32>,
    return
  }
  func.func @transform_0(%arg0: i32) -> (i32, i32, i32) {
    %c0_i32 = arith.constant 0 : i32
    %c0_i32_0 = arith.constant 0 : i32
    %c0_i32_1 = arith.constant 0 : i32
    return %arg0, %c0_i32, %c0_i32_0 : i32, i32, i32
  }
  func.func @transform_1(%arg0: i32) -> (i32, i32, i32) {
    %c0_i32 = arith.constant 0 : i32
    %c0_i32_0 = arith.constant 0 : i32
    %c0_i32_1 = arith.constant 0 : i32
    %c0_i32_2 = arith.constant 0 : i32
    return %c0_i32, %c0_i32_0, %c0_i32_1 : i32, i32, i32
  }
  func.func @transform_2(%arg0: i32) -> (i32, i32) {
    %c0_i32 = arith.constant 0 : i32
    %c0_i32_0 = arith.constant 0 : i32
    %c0_i32_1 = arith.constant 0 : i32
    return %c0_i32, %c0_i32_0 : i32, i32
  }
  func.func @transform_3(%arg0: i32) -> (i32, i32) {
    %c0_i32 = arith.constant 0 : i32
    %c0_i32_0 = arith.constant 0 : i32
    %c0_i32_1 = arith.constant 0 : i32
    return %c0_i32, %c0_i32_0 : i32, i32
  }
  func.func @transform_4(%arg0: i32) -> (i32, i32, i32) {
    %c0_i32 = arith.constant 0 : i32
    %c0_i32_0 = arith.constant 0 : i32
    %c0_i32_1 = arith.constant 0 : i32
    %c0_i32_2 = arith.constant 0 : i32
    return %c0_i32, %c0_i32_0, %c0_i32_1 : i32, i32, i32
  }
  func.func @transform_5(%arg0: i32) -> (i32, i32) {
    %c0_i32 = arith.constant 0 : i32
    %c0_i32_0 = arith.constant 0 : i32
    %c0_i32_1 = arith.constant 0 : i32
    return %c0_i32, %c0_i32_0 : i32, i32
  }
  func.func @transform_6(%arg0: i32) -> (i32, i32) {
    %c0_i32 = arith.constant 0 : i32
    %c0_i32_0 = arith.constant 0 : i32
    %c0_i32_1 = arith.constant 0 : i32
    return %c0_i32, %c0_i32_0 : i32, i32
  }
  func.func @transform_7(%arg0: i32) -> (i32, i32) {
    %c0_i32 = arith.constant 0 : i32
    %c0_i32_0 = arith.constant 0 : i32
    %c0_i32_1 = arith.constant 0 : i32
    return %c0_i32, %c0_i32_0 : i32, i32
  }
  func.func @transform_8(%arg0: i32) -> (i32, i32) {
    %c0_i32 = arith.constant 0 : i32
    %c0_i32_0 = arith.constant 0 : i32
    %c0_i32_1 = arith.constant 0 : i32
    return %c0_i32, %c0_i32_0 : i32, i32
  }
  func.func @transform_9(%arg0: i32) -> (i32, i32) {
    %c0_i32 = arith.constant 0 : i32
    %c0_i32_0 = arith.constant 0 : i32
    %c0_i32_1 = arith.constant 0 : i32
    return %c0_i32, %c0_i32_0 : i32, i32
  }
  func.func @transform_10(%arg0: i32) -> (i32, i32) {
    %c0_i32 = arith.constant 0 : i32
    %c0_i32_0 = arith.constant 0 : i32
    %c0_i32_1 = arith.constant 0 : i32
    return %c0_i32, %c0_i32_0 : i32, i32
  }
  func.func @transform_11(%arg0: i32) -> (i32, i32, i32) {
    %c0_i32 = arith.constant 0 : i32
    %c0_i32_0 = arith.constant 0 : i32
    %c0_i32_1 = arith.constant 0 : i32
    %c0_i32_2 = arith.constant 0 : i32
    return %c0_i32, %c0_i32_0, %c0_i32_1 : i32, i32, i32
  }
  func.func @transform_12(%arg0: i32) -> (i32, i32) {
    %c0_i32 = arith.constant 0 : i32
    %c0_i32_0 = arith.constant 0 : i32
    %c0_i32_1 = arith.constant 0 : i32
    return %c0_i32, %c0_i32_0 : i32, i32
  }
  func.func @transform_13(%arg0: i32) -> (i32, i32) {
    %c0_i32 = arith.constant 0 : i32
    %c0_i32_0 = arith.constant 0 : i32
    %c0_i32_1 = arith.constant 0 : i32
    return %c0_i32, %c0_i32_0 : i32, i32
  }
  func.func @transform_14(%arg0: i32) -> (i32, i32) {
    %c0_i32 = arith.constant 0 : i32
    %c0_i32_0 = arith.constant 0 : i32
    %c0_i32_1 = arith.constant 0 : i32
    return %c0_i32, %c0_i32_0 : i32, i32
  }
  func.func @transform_15(%arg0: i32) -> (i32, i32) {
    %c0_i32 = arith.constant 0 : i32
    %c0_i32_0 = arith.constant 0 : i32
    %c0_i32_1 = arith.constant 0 : i32
    return %c0_i32, %c0_i32_0 : i32, i32
  }
  func.func @transform_16(%arg0: i32) -> (i32, i32) {
    %c0_i32 = arith.constant 0 : i32
    %c0_i32_0 = arith.constant 0 : i32
    %c0_i32_1 = arith.constant 0 : i32
    return %c0_i32, %c0_i32_0 : i32, i32
  }
  func.func @transform_17(%arg0: i32) -> (i32, i32) {
    %c0_i32 = arith.constant 0 : i32
    %c0_i32_0 = arith.constant 0 : i32
    %c0_i32_1 = arith.constant 0 : i32
    return %c0_i32, %c0_i32_0 : i32, i32
  }
  func.func @transform_18(%arg0: i32) -> (i32, i32, i32) {
    %c0_i32 = arith.constant 0 : i32
    %c0_i32_0 = arith.constant 0 : i32
    %c0_i32_1 = arith.constant 0 : i32
    %c0_i32_2 = arith.constant 0 : i32
    return %c0_i32, %c0_i32_0, %c0_i32_1 : i32, i32, i32
  }
  func.func @transform_19(%arg0: i32) -> (i32, i32) {
    %c0_i32 = arith.constant 0 : i32
    %c0_i32_0 = arith.constant 0 : i32
    %c0_i32_1 = arith.constant 0 : i32
    return %c0_i32, %c0_i32_0 : i32, i32
  }
  func.func @transform_20(%arg0: i32) -> (i32, i32) {
    %c0_i32 = arith.constant 0 : i32
    %c0_i32_0 = arith.constant 0 : i32
    %c0_i32_1 = arith.constant 0 : i32
    return %c0_i32, %c0_i32_0 : i32, i32
  }
  func.func @transform_21(%arg0: i32) -> (i32, i32) {
    %c0_i32 = arith.constant 0 : i32
    %c0_i32_0 = arith.constant 0 : i32
    %c0_i32_1 = arith.constant 0 : i32
    return %c0_i32, %c0_i32_0 : i32, i32
  }
  func.func @transform_22(%arg0: i32) -> (i32, i32) {
    %c0_i32 = arith.constant 0 : i32
    %c0_i32_0 = arith.constant 0 : i32
    %c0_i32_1 = arith.constant 0 : i32
    return %c0_i32, %c0_i32_0 : i32, i32
  }
  func.func @transform_23(%arg0: i32) -> (i32, i32) {
    %c0_i32 = arith.constant 0 : i32
    %c0_i32_0 = arith.constant 0 : i32
    %c0_i32_1 = arith.constant 0 : i32
    return %c0_i32, %c0_i32_0 : i32, i32
  }
  func.func @transform_24(%arg0: i32) -> (i32, i32) {
    %c0_i32 = arith.constant 0 : i32
    %c0_i32_0 = arith.constant 0 : i32
    %c0_i32_1 = arith.constant 0 : i32
    return %c0_i32, %c0_i32_0 : i32, i32
  }
  func.func @transform_25(%arg0: i32) -> (i32, i32, i32) {
    %c0_i32 = arith.constant 0 : i32
    %c0_i32_0 = arith.constant 0 : i32
    %c0_i32_1 = arith.constant 0 : i32
    %c0_i32_2 = arith.constant 0 : i32
    return %c0_i32, %c0_i32_0, %c0_i32_1 : i32, i32, i32
  }
  func.func @transform_26(%arg0: i32) -> (i32, i32) {
    %c0_i32 = arith.constant 0 : i32
    %c0_i32_0 = arith.constant 0 : i32
    %c0_i32_1 = arith.constant 0 : i32
    return %c0_i32, %c0_i32_0 : i32, i32
  }
  func.func @transform_27(%arg0: i32) -> (i32, i32) {
    %c0_i32 = arith.constant 0 : i32
    %c0_i32_0 = arith.constant 0 : i32
    %c0_i32_1 = arith.constant 0 : i32
    return %c0_i32, %c0_i32_0 : i32, i32
  }
  func.func @transform_28(%arg0: i32) -> (i32, i32, i32) {
    %c0_i32 = arith.constant 0 : i32
    %c0_i32_0 = arith.constant 0 : i32
    %c0_i32_1 = arith.constant 0 : i32
    return %arg0, %c0_i32, %c0_i32_0 : i32, i32, i32
  }
}

</mosaic_0001>

<llo_original>
// kernel: squeeze.1
$region0: #{squeeze.1}
  %s0 = inlined_call_operand.vmem [shape: f32[2,4], index: 0, kind: input, shape index: {}]
  %s1 = inlined_call_operand.hbm [shape: f32[2,1,2,2], index: 1, kind: output, shape index: {}]
  $region1: #{squeeze.1} parent=0
    #allocation0 [shape = 'u8[2048]{0}', space=vmem, size = 0x800, scoped, tag = 'operand span for operand 1']
    #allocation1 [shape = 's32[1]{0}', space=sflag, size = 0x4, scoped, tag = 'scoped memory for squeeze.1']
    #allocation2 [shape = 'u8[8192]{0}', space=vmem, size = 0x2000, scoped, tag = 'scoped mem for output reshape']
    #allocation3 [shape = 'u8[4096]{0}', space=vmem, size = 0x1000, scoped, tag = 'scoped mem for input reshape']
    %2 = vsyncpa [#allocation1], 0
    %s4 = sshll.u32 1, 2
    %s5 = ssub.s32 %s4, 1
    %v6 = vld [vmem:[%s0] sm:%s5]
    %7 = vst [vmem:[#allocation3] sm:%s5] %v6
    %v8 = vld [vmem:[#allocation3] sm:$0x3]
    %vm9 = vcmask 15360
    %10 = vst.msk [vmem:[#allocation2] ss:$8 sm:$0x3] %vm9, %v8
    %v11 = vld [vmem:[#allocation3] sm:$0x3]
    %12 = vrot.lane.b32.xlu0 %v11, 126
    %v13 = vpop.permute.xlu0 %12
    %vm14 = vcmask 15360
    %s15 = scalar_lea.vmem [#allocation2], 1
    %16 = vst.msk [vmem:[%s15] ss:$8 sm:$0x3] %vm14, %v13
    %s18 = sshll.u32 1, 2
    %s19 = ssub.s32 %s18, 1
    %v21 = vld [vmem:[#allocation2] sm:%s19]
    %s22 = sshll.u32 1, 2
    %s23 = ssub.s32 %s22, 1
    %24 = vst [vmem:[#allocation0] sm:%s23] %v21
    %s25 = scalar_lea.vmem [#allocation2], 8
    %v26 = vld [vmem:[%s25] sm:%s19]
    %s27 = sshll.u32 1, 2
    %s28 = ssub.s32 %s27, 1
    %s29 = scalar_lea.vmem [#allocation0], 2
    %30 = vst [vmem:[%s29] sm:%s28] %v26
    %s32 = ssub.s32 64, 64
    %33 = vsyncadd [#allocation1], %s32
    %s35 = sshll.u32 [#allocation0], 4
    %s36 = int_to_ptr.vmem [resolvable:$true] %s35
    %38 = dma.vmem_to_hbm [thread:$0]  %s36, 64, %s1, [#allocation1]
    %39 = dma.done [#allocation1], 64
    %40 = vsyncpa [#allocation1], 1

// kernel: discriminator_forward.1
$region0: #{discriminator_forward.1}
  #allocation0 [shape = 'u32[]', space=smem, size = 0x4, offset = 0x4, fixed_abs, tag = 'smem constant byte address 0x4 - core index']
  #allocation1 [shape = 'u32[144,128]{1,0:T(1,128)}', space=vmem, size = 0x12000, scoped, tag = 'internal scratch']
  #allocation2 [shape = 'bf16[64,36]{1,0:T(8,128)(2,1)}', space=vmem, size = 0x4000, scoped, tag = 'scratch operand']
  #allocation3 [shape = 'bf16[16,144]{1,0:T(8,128)(2,1)}', space=vmem, size = 0x2000, scoped, tag = 'scratch operand']
  #allocation4 [shape = 'bf16[4,288]{1,0:T(4,128)(2,1)}', space=vmem, size = 0xc00, scoped, tag = 'scratch operand']
  #allocation5 [shape = 'bf16[4,576]{1,0:T(4,128)(2,1)}', space=vmem, size = 0x1400, scoped, tag = 'scratch operand']
  #allocation6 [shape = 'bf16[4,1152]{1,0:T(4,128)(2,1)}', space=vmem, size = 0x2400, scoped, tag = 'scratch operand']
  %s0 = inlined_call_operand.vmem [shape: bf16[2,256,4], index: 0, kind: input, shape index: {}]
  %s1 = inlined_call_operand.hbm [shape: bf16[9,64,256], index: 1, kind: input, shape index: {}]
  %s2 = inlined_call_operand.vmem [shape: bf16[36,16], index: 2, kind: input, shape index: {}]
  %s3 = inlined_call_operand.vmem [shape: f32[1,16], index: 3, kind: input, shape index: {}]
  %s4 = inlined_call_operand.vmem [shape: bf16[9,16,64], index: 4, kind: input, shape index: {}]
  %s5 = inlined_call_operand.hbm [shape: bf16[144,32], index: 5, kind: input, shape index: {}]
  %s6 = inlined_call_operand.vmem [shape: f32[1,32], index: 6, kind: input, shape index: {}]
  %s7 = inlined_call_operand.hbm [shape: f32[32,128], index: 7, kind: input, shape index: {}]
  %s8 = inlined_call_operand.vmem [shape: f32[1,128], index: 8, kind: input, shape index: {}]
  %s9 = inlined_call_operand.hbm [shape: f32[128,32], index: 9, kind: input, shape index: {}]
  %s10 = inlined_call_operand.vmem [shape: f32[1,32], index: 10, kind: input, shape index: {}]
  %s11 = inlined_call_operand.hbm [shape: bf16[9,4,16], index: 11, kind: input, shape index: {}]
  %s12 = inlined_call_operand.vmem [shape: bf16[288,64], index: 12, kind: input, shape index: {}]
  %s13 = inlined_call_operand.vmem [shape: f32[1,64], index: 13, kind: input, shape index: {}]
  %s14 = inlined_call_operand.hbm [shape: f32[64,128], index: 14, kind: input, shape index: {}]
  %s15 = inlined_call_operand.vmem [shape: f32[1,128], index: 15, kind: input, shape index: {}]
  %s16 = inlined_call_operand.hbm [shape: f32[128,64], index: 16, kind: input, shape index: {}]
  %s17 = inlined_call_operand.vmem [shape: f32[1,64], index: 17, kind: input, shape index: {}]
  %s18 = inlined_call_operand.vmem [shape: bf16[9,4,4], index: 18, kind: input, shape index: {}, may-alias: {18,25}]
  %s19 = inlined_call_operand.vmem [shape: bf16[576,128], index: 19, kind: input, shape index: {}]
  %s20 = inlined_call_operand.hbm [shape: f32[1,128], index: 20, kind: input, shape index: {}]
  %s21 = inlined_call_operand.hbm [shape: f32[128,128], index: 21, kind: input, shape index: {}]
  %s22 = inlined_call_operand.vmem [shape: f32[1,128], index: 22, kind: input, shape index: {}]
  %s23 = inlined_call_operand.hbm [shape: f32[128,128], index: 23, kind: input, shape index: {}]
  %s24 = inlined_call_operand.vmem [shape: f32[1,128], index: 24, kind: input, shape index: {}]
  %s25 = inlined_call_operand.vmem [shape: bf16[9,4,4], index: 25, kind: input, shape index: {}, may-alias: {18,25}]
  %s26 = inlined_call_operand.hbm [shape: bf16[1152,128], index: 26, kind: input, shape index: {}]
  %s27 = inlined_call_operand.vmem [shape: f32[1,128], index: 27, kind: input, shape index: {}]
  %s28 = inlined_call_operand.vmem [shape: f32[2,4,128], index: 28, kind: output, shape index: {}]
  %s29 = sld [smem:[#allocation0]]
  $region189: #{discriminator_forward.1} parent=0
    _
  %s31 = ssub.s32 1, %s29
  %s32 = scalar_select 0, %s31, %s29
  $region1: #{discriminator_forward.1} parent=0
    #allocation7 [shape = 'u8[294912]{0}', space=vmem, size = 0x48000, scoped, tag = 'input window, operand 1, single buffered']
    #allocation8 [shape = 's32[2]{0}', space=sflag, size = 0x8, scoped, tag = 'scoped memory for discriminator_forward.1']
    #allocation9 [shape = 'u8[36864]{0}', space=vmem, size = 0x9000, scoped, tag = 'input window, operand 5, single buffered']
    #allocation10 [shape = 's32[1]{0}', space=sflag, size = 0x4, scoped, tag = 'scoped memory for discriminator_forward.1']
    #allocation11 [shape = 'u8[16384]{0}', space=vmem, size = 0x4000, scoped, tag = 'input window, operand 7, single buffered']
    #allocation12 [shape = 'u8[65536]{0}', space=vmem, size = 0x10000, scoped, tag = 'input window, operand 9, single buffered']
    #allocation13 [shape = 's32[1]{0}', space=sflag, size = 0x4, scoped, tag = 'scoped memory for discriminator_forward.1']
    #allocation14 [shape = 'u8[9216]{0}', space=vmem, size = 0x2400, scoped, tag = 'input window, operand 11, single buffered']
    #allocation15 [shape = 'u8[32768]{0}', space=vmem, size = 0x8000, scoped, tag = 'input window, operand 14, single buffered']
    #allocation16 [shape = 's32[1]{0}', space=sflag, size = 0x4, scoped, tag = 'scoped memory for discriminator_forward.1']
    #allocation17 [shape = 'u8[65536]{0}', space=vmem, size = 0x10000, scoped, tag = 'input window, operand 16, single buffered']
    #allocation18 [shape = 'u8[512]{0}', space=vmem, size = 0x400, scoped, tag = 'input window, operand 20, single buffered']
    #allocation19 [shape = 's32[1]{0}', space=sflag, size = 0x4, scoped, tag = 'scoped memory for discriminator_forward.1']
    #allocation20 [shape = 'u8[65536]{0}', space=vmem, size = 0x10000, scoped, tag = 'input window, operand 21, single buffered']
    #allocation21 [shape = 'u8[65536]{0}', space=vmem, size = 0x10000, scoped, tag = 'input window, operand 23, single buffered']
    #allocation22 [shape = 's32[1]{0}', space=sflag, size = 0x4, scoped, tag = 'scoped memory for discriminator_forward.1']
    #allocation23 [shape = 'u8[294912]{0}', space=vmem, size = 0x48000, scoped, tag = 'input window, operand 26, single buffered']
    %33 = vsyncpa [#allocation8], 0
    %34 = vsyncpa [#allocation10], 0
    %35 = vsyncpa [#allocation13], 0
    %36 = vsyncpa [#allocation16], 0
    %37 = vsyncpa [#allocation19], 0
    %38 = vsyncpa [#allocation22], 0
    loop: start=0, step=1, limit=4
    $region2: #{discriminator_forward.1} parent=1 // loop_pre_header
      _
    $region3: #{discriminator_forward.1} parent=1 // loop_header
      %s40 = sphi 0, %s44
      %p41 = scmp.ge.s32.totalorder %s40, 4
      %s50 = sphi 0, %s52
      %s53 = sphi 0, %s50
      %s54 = sphi 0, %s53
      %s70 = sphi 0, %s54
      %s74 = sphi 0, %s74
      %s76 = sphi 0, %s74
      %s77 = sphi 0, %s76
      %s91 = sphi 0, %s77
      %s95 = sphi 0, %s95
      %s97 = sphi 0, %s95
      %s98 = sphi 0, %s97
      %s112 = sphi 0, %s98
      %s116 = sphi 0, %s116
      %s118 = sphi 0, %s116
      %s119 = sphi 0, %s118
      %s133 = sphi 0, %s119
      %s137 = sphi 0, %s137
      %s139 = sphi 0, %s137
      %s140 = sphi 0, %s139
      %s154 = sphi 0, %s140
      %s158 = sphi 0, %s158
      %s160 = sphi 0, %s158
      %s161 = sphi 0, %s160
      %s175 = sphi 0, %s161
      %s179 = sphi 0, %s179
      %s181 = sphi 0, %s179
      %s182 = sphi 0, %s181
      %s196 = sphi 0, %s182
      %s200 = sphi 0, %s200
      %s202 = sphi 0, %s200
      %s203 = sphi 0, %s202
      %s217 = sphi 0, %s203
      %s221 = sphi 0, %s221
      %s223 = sphi 0, %s221
      %s224 = sphi 0, %s223
      %s238 = sphi 0, %s224
      %s242 = sphi 0, %s242
      %s244 = sphi 0, %s242
      %s245 = sphi 0, %s244
      %s259 = sphi 0, %s245
      %s263 = sphi 0, %s263
      %s265 = sphi 0, %s263
      %s266 = sphi 0, %s265
      %s280 = sphi 0, %s266
      %s284 = sphi 0, %s284
      %s286 = sphi 0, %s284
      %s287 = sphi 0, %s286
      %s301 = sphi 0, %s287
      %s305 = sphi 0, %s305
      %s307 = sphi 0, %s305
      %s308 = sphi 0, %s307
      %s322 = sphi 0, %s308
      %s326 = sphi 0, %s326
      %s328 = sphi 0, %s326
      %s329 = sphi 0, %s328
      %s343 = sphi 0, %s329
      %s347 = sphi 0, %s347
      %s349 = sphi 0, %s347
      %s350 = sphi 0, %s349
      %s364 = sphi 0, %s350
      %s368 = sphi 0, %s368
      %s370 = sphi 0, %s368
      %s371 = sphi 0, %s370
      %s385 = sphi 0, %s371
      %s389 = sphi 0, %s389
      %s391 = sphi 0, %s389
      %s392 = sphi 0, %s391
      %s406 = sphi 0, %s392
      %s410 = sphi 0, %s410
      %s412 = sphi 0, %s410
      %s413 = sphi 0, %s412
      %s427 = sphi 0, %s413
      %s431 = sphi 0, %s431
      %s433 = sphi 0, %s431
      %s434 = sphi 0, %s433
      %s448 = sphi 0, %s434
      %s452 = sphi 0, %s452
      %s454 = sphi 0, %s452
      %s455 = sphi 0, %s454
      %s469 = sphi 0, %s455
      %s473 = sphi 0, %s473
      %s475 = sphi 0, %s473
      %s476 = sphi 0, %s475
      %s490 = sphi 0, %s476
      %s494 = sphi 0, %s494
      %s496 = sphi 0, %s494
      %s497 = sphi 0, %s496
      %s511 = sphi 0, %s497
      %s515 = sphi 0, %s515
      %s517 = sphi 0, %s515
      %s518 = sphi 0, %s517
      %s532 = sphi 0, %s518
      %s536 = sphi 0, %s536
      %s538 = sphi 0, %s536
      %s539 = sphi 0, %s538
      %s553 = sphi 0, %s539
      %s557 = sphi 0, %s557
      %s559 = sphi 0, %s557
      %s560 = sphi 0, %s559
      %s574 = sphi 0, %s560
      %s578 = sphi 0, %s578
      %s580 = sphi 0, %s578
      %s581 = sphi 0, %s580
      %s595 = sphi 0, %s581
      %s599 = sphi 0, %s599
      %s601 = sphi 0, %s599
      %s602 = sphi 0, %s601
      %s616 = sphi 0, %s602
      %s620 = sphi 0, %s620
      %s622 = sphi 0, %s620
      %s623 = sphi 0, %s622
      %s637 = sphi 0, %s623
      %s643 = sphi 0, %s645
      %s646 = sphi 0, %s643
      %s647 = sphi 0, %s646
      %s663 = sphi 0, %s647
    $region4: #{discriminator_forward.1} parent=1 // loop_header_branch
      %43 = sbr.rel (%p41) target = $region8
    $region5: #{discriminator_forward.1} parent=1 // loop_body
      %s45 = ssub.s32 %s40, 1
      %s46 = ssub.s32 %s40, 2
      %s47 = sadd.s32 %s40, 1
      %s48 = ssub.s32 %s40, %s47
      %p49 = scmp.eq.s32.totalorder %s48, 0
      %s51 = sadd.s32 %s50, 1
      %s52 = scalar_select %p49, %s50, %s51
      %p55 = pneg %p49
      %p56 = scmp.eq.s32.totalorder %s40, 1
      %p57 = por %p55, %p56
      %p58 = scmp.ne.s32.totalorder %s50, %s53
      %p59 = scmp.eq.s32.totalorder %s40, 0
      %p60 = por %p58, %p59
      %p61 = scmp.ne.s32.totalorder %s50, %s53
      %p62 = scmp.eq.s32.totalorder %s45, 1
      %p63 = por %p61, %p62
      %p64 = scmp.ne.s32.totalorder %s53, %s54
      %p65 = scmp.eq.s32.totalorder %s45, 0
      %p66 = por %p64, %p65
      %p67 = scmp.ne.s32.totalorder %s53, %s54
      %p68 = scmp.eq.s32.totalorder %s46, 1
      %p69 = por %p67, %p68
      %p71 = scmp.ne.s32.totalorder %s54, %s70
      %p72 = scmp.eq.s32.totalorder %s46, 0
      %p73 = por %p71, %p72
      %s75 = sadd.s32 %s74, 1
      %p78 = scmp.eq.s32.totalorder %s40, 1
      %p79 = scmp.ne.s32.totalorder %s74, %s76
      %p80 = scmp.eq.s32.totalorder %s40, 0
      %p81 = por %p79, %p80
      %p82 = scmp.ne.s32.totalorder %s74, %s76
      %p83 = scmp.eq.s32.totalorder %s45, 1
      %p84 = por %p82, %p83
      %p85 = scmp.ne.s32.totalorder %s76, %s77
      %p86 = scmp.eq.s32.totalorder %s45, 0
      %p87 = por %p85, %p86
      %p88 = scmp.ne.s32.totalorder %s76, %s77
      %p89 = scmp.eq.s32.totalorder %s46, 1
      %p90 = por %p88, %p89
      %p92 = scmp.ne.s32.totalorder %s77, %s91
      %p93 = scmp.eq.s32.totalorder %s46, 0
      %p94 = por %p92, %p93
      %s96 = sadd.s32 %s95, 1
      %p99 = scmp.eq.s32.totalorder %s40, 1
      %p100 = scmp.ne.s32.totalorder %s95, %s97
      %p101 = scmp.eq.s32.totalorder %s40, 0
      %p102 = por %p100, %p101
      %p103 = scmp.ne.s32.totalorder %s95, %s97
      %p104 = scmp.eq.s32.totalorder %s45, 1
      %p105 = por %p103, %p104
      %p106 = scmp.ne.s32.totalorder %s97, %s98
      %p107 = scmp.eq.s32.totalorder %s45, 0
      %p108 = por %p106, %p107
      %p109 = scmp.ne.s32.totalorder %s97, %s98
      %p110 = scmp.eq.s32.totalorder %s46, 1
      %p111 = por %p109, %p110
      %p113 = scmp.ne.s32.totalorder %s98, %s112
      %p114 = scmp.eq.s32.totalorder %s46, 0
      %p115 = por %p113, %p114
      %s117 = sadd.s32 %s116, 1
      %p120 = scmp.eq.s32.totalorder %s40, 1
      %p121 = scmp.ne.s32.totalorder %s116, %s118
      %p122 = scmp.eq.s32.totalorder %s40, 0
      %p123 = por %p121, %p122
      %p124 = scmp.ne.s32.totalorder %s116, %s118
      %p125 = scmp.eq.s32.totalorder %s45, 1
      %p126 = por %p124, %p125
      %p127 = scmp.ne.s32.totalorder %s118, %s119
      %p128 = scmp.eq.s32.totalorder %s45, 0
      %p129 = por %p127, %p128
      %p130 = scmp.ne.s32.totalorder %s118, %s119
      %p131 = scmp.eq.s32.totalorder %s46, 1
      %p132 = por %p130, %p131
      %p134 = scmp.ne.s32.totalorder %s119, %s133
      %p135 = scmp.eq.s32.totalorder %s46, 0
      %p136 = por %p134, %p135
      %s138 = sadd.s32 %s137, 1
      %p141 = scmp.eq.s32.totalorder %s40, 1
      %p142 = scmp.ne.s32.totalorder %s137, %s139
      %p143 = scmp.eq.s32.totalorder %s40, 0
      %p144 = por %p142, %p143
      %p145 = scmp.ne.s32.totalorder %s137, %s139
      %p146 = scmp.eq.s32.totalorder %s45, 1
      %p147 = por %p145, %p146
      %p148 = scmp.ne.s32.totalorder %s139, %s140
      %p149 = scmp.eq.s32.totalorder %s45, 0
      %p150 = por %p148, %p149
      %p151 = scmp.ne.s32.totalorder %s139, %s140
      %p152 = scmp.eq.s32.totalorder %s46, 1
      %p153 = por %p151, %p152
      %p155 = scmp.ne.s32.totalorder %s140, %s154
      %p156 = scmp.eq.s32.totalorder %s46, 0
      %p157 = por %p155, %p156
      %s159 = sadd.s32 %s158, 1
      %p162 = scmp.eq.s32.totalorder %s40, 1
      %p163 = scmp.ne.s32.totalorder %s158, %s160
      %p164 = scmp.eq.s32.totalorder %s40, 0
      %p165 = por %p163, %p164
      %p166 = scmp.ne.s32.totalorder %s158, %s160
      %p167 = scmp.eq.s32.totalorder %s45, 1
      %p168 = por %p166, %p167
      %p169 = scmp.ne.s32.totalorder %s160, %s161
      %p170 = scmp.eq.s32.totalorder %s45, 0
      %p171 = por %p169, %p170
      %p172 = scmp.ne.s32.totalorder %s160, %s161
      %p173 = scmp.eq.s32.totalorder %s46, 1
      %p174 = por %p172, %p173
      %p176 = scmp.ne.s32.totalorder %s161, %s175
      %p177 = scmp.eq.s32.totalorder %s46, 0
      %p178 = por %p176, %p177
      %s180 = sadd.s32 %s179, 1
      %p183 = scmp.eq.s32.totalorder %s40, 1
      %p184 = scmp.ne.s32.totalorder %s179, %s181
      %p185 = scmp.eq.s32.totalorder %s40, 0
      %p186 = por %p184, %p185
      %p187 = scmp.ne.s32.totalorder %s179, %s181
      %p188 = scmp.eq.s32.totalorder %s45, 1
      %p189 = por %p187, %p188
      %p190 = scmp.ne.s32.totalorder %s181, %s182
      %p191 = scmp.eq.s32.totalorder %s45, 0
      %p192 = por %p190, %p191
      %p193 = scmp.ne.s32.totalorder %s181, %s182
      %p194 = scmp.eq.s32.totalorder %s46, 1
      %p195 = por %p193, %p194
      %p197 = scmp.ne.s32.totalorder %s182, %s196
      %p198 = scmp.eq.s32.totalorder %s46, 0
      %p199 = por %p197, %p198
      %s201 = sadd.s32 %s200, 1
      %p204 = scmp.eq.s32.totalorder %s40, 1
      %p205 = scmp.ne.s32.totalorder %s200, %s202
      %p206 = scmp.eq.s32.totalorder %s40, 0
      %p207 = por %p205, %p206
      %p208 = scmp.ne.s32.totalorder %s200, %s202
      %p209 = scmp.eq.s32.totalorder %s45, 1
      %p210 = por %p208, %p209
      %p211 = scmp.ne.s32.totalorder %s202, %s203
      %p212 = scmp.eq.s32.totalorder %s45, 0
      %p213 = por %p211, %p212
      %p214 = scmp.ne.s32.totalorder %s202, %s203
      %p215 = scmp.eq.s32.totalorder %s46, 1
      %p216 = por %p214, %p215
      %p218 = scmp.ne.s32.totalorder %s203, %s217
      %p219 = scmp.eq.s32.totalorder %s46, 0
      %p220 = por %p218, %p219
      %s222 = sadd.s32 %s221, 1
      %p225 = scmp.eq.s32.totalorder %s40, 1
      %p226 = scmp.ne.s32.totalorder %s221, %s223
      %p227 = scmp.eq.s32.totalorder %s40, 0
      %p228 = por %p226, %p227
      %p229 = scmp.ne.s32.totalorder %s221, %s223
      %p230 = scmp.eq.s32.totalorder %s45, 1
      %p231 = por %p229, %p230
      %p232 = scmp.ne.s32.totalorder %s223, %s224
      %p233 = scmp.eq.s32.totalorder %s45, 0
      %p234 = por %p232, %p233
      %p235 = scmp.ne.s32.totalorder %s223, %s224
      %p236 = scmp.eq.s32.totalorder %s46, 1
      %p237 = por %p235, %p236
      %p239 = scmp.ne.s32.totalorder %s224, %s238
      %p240 = scmp.eq.s32.totalorder %s46, 0
      %p241 = por %p239, %p240
      %s243 = sadd.s32 %s242, 1
      %p246 = scmp.eq.s32.totalorder %s40, 1
      %p247 = scmp.ne.s32.totalorder %s242, %s244
      %p248 = scmp.eq.s32.totalorder %s40, 0
      %p249 = por %p247, %p248
      %p250 = scmp.ne.s32.totalorder %s242, %s244
      %p251 = scmp.eq.s32.totalorder %s45, 1
      %p252 = por %p250, %p251
      %p253 = scmp.ne.s32.totalorder %s244, %s245
      %p254 = scmp.eq.s32.totalorder %s45, 0
      %p255 = por %p253, %p254
      %p256 = scmp.ne.s32.totalorder %s244, %s245
      %p257 = scmp.eq.s32.totalorder %s46, 1
      %p258 = por %p256, %p257
      %p260 = scmp.ne.s32.totalorder %s245, %s259
      %p261 = scmp.eq.s32.totalorder %s46, 0
      %p262 = por %p260, %p261
      %s264 = sadd.s32 %s263, 1
      %p267 = scmp.eq.s32.totalorder %s40, 1
      %p268 = scmp.ne.s32.totalorder %s263, %s265
      %p269 = scmp.eq.s32.totalorder %s40, 0
      %p270 = por %p268, %p269
      %p271 = scmp.ne.s32.totalorder %s263, %s265
      %p272 = scmp.eq.s32.totalorder %s45, 1
      %p273 = por %p271, %p272
      %p274 = scmp.ne.s32.totalorder %s265, %s266
      %p275 = scmp.eq.s32.totalorder %s45, 0
      %p276 = por %p274, %p275
      %p277 = scmp.ne.s32.totalorder %s265, %s266
      %p278 = scmp.eq.s32.totalorder %s46, 1
      %p279 = por %p277, %p278
      %p281 = scmp.ne.s32.totalorder %s266, %s280
      %p282 = scmp.eq.s32.totalorder %s46, 0
      %p283 = por %p281, %p282
      %s285 = sadd.s32 %s284, 1
      %p288 = scmp.eq.s32.totalorder %s40, 1
      %p289 = scmp.ne.s32.totalorder %s284, %s286
      %p290 = scmp.eq.s32.totalorder %s40, 0
      %p291 = por %p289, %p290
      %p292 = scmp.ne.s32.totalorder %s284, %s286
      %p293 = scmp.eq.s32.totalorder %s45, 1
      %p294 = por %p292, %p293
      %p295 = scmp.ne.s32.totalorder %s286, %s287
      %p296 = scmp.eq.s32.totalorder %s45, 0
      %p297 = por %p295, %p296
      %p298 = scmp.ne.s32.totalorder %s286, %s287
      %p299 = scmp.eq.s32.totalorder %s46, 1
      %p300 = por %p298, %p299
      %p302 = scmp.ne.s32.totalorder %s287, %s301
      %p303 = scmp.eq.s32.totalorder %s46, 0
      %p304 = por %p302, %p303
      %s306 = sadd.s32 %s305, 1
      %p309 = scmp.eq.s32.totalorder %s40, 1
      %p310 = scmp.ne.s32.totalorder %s305, %s307
      %p311 = scmp.eq.s32.totalorder %s40, 0
      %p312 = por %p310, %p311
      %p313 = scmp.ne.s32.totalorder %s305, %s307
      %p314 = scmp.eq.s32.totalorder %s45, 1
      %p315 = por %p313, %p314
      %p316 = scmp.ne.s32.totalorder %s307, %s308
      %p317 = scmp.eq.s32.totalorder %s45, 0
      %p318 = por %p316, %p317
      %p319 = scmp.ne.s32.totalorder %s307, %s308
      %p320 = scmp.eq.s32.totalorder %s46, 1
      %p321 = por %p319, %p320
      %p323 = scmp.ne.s32.totalorder %s308, %s322
      %p324 = scmp.eq.s32.totalorder %s46, 0
      %p325 = por %p323, %p324
      %s327 = sadd.s32 %s326, 1
      %p330 = scmp.eq.s32.totalorder %s40, 1
      %p331 = scmp.ne.s32.totalorder %s326, %s328
      %p332 = scmp.eq.s32.totalorder %s40, 0
      %p333 = por %p331, %p332
      %p334 = scmp.ne.s32.totalorder %s326, %s328
      %p335 = scmp.eq.s32.totalorder %s45, 1
      %p336 = por %p334, %p335
      %p337 = scmp.ne.s32.totalorder %s328, %s329
      %p338 = scmp.eq.s32.totalorder %s45, 0
      %p339 = por %p337, %p338
      %p340 = scmp.ne.s32.totalorder %s328, %s329
      %p341 = scmp.eq.s32.totalorder %s46, 1
      %p342 = por %p340, %p341
      %p344 = scmp.ne.s32.totalorder %s329, %s343
      %p345 = scmp.eq.s32.totalorder %s46, 0
      %p346 = por %p344, %p345
      %s348 = sadd.s32 %s347, 1
      %p351 = scmp.eq.s32.totalorder %s40, 1
      %p352 = scmp.ne.s32.totalorder %s347, %s349
      %p353 = scmp.eq.s32.totalorder %s40, 0
      %p354 = por %p352, %p353
      %p355 = scmp.ne.s32.totalorder %s347, %s349
      %p356 = scmp.eq.s32.totalorder %s45, 1
      %p357 = por %p355, %p356
      %p358 = scmp.ne.s32.totalorder %s349, %s350
      %p359 = scmp.eq.s32.totalorder %s45, 0
      %p360 = por %p358, %p359
      %p361 = scmp.ne.s32.totalorder %s349, %s350
      %p362 = scmp.eq.s32.totalorder %s46, 1
      %p363 = por %p361, %p362
      %p365 = scmp.ne.s32.totalorder %s350, %s364
      %p366 = scmp.eq.s32.totalorder %s46, 0
      %p367 = por %p365, %p366
      %s369 = sadd.s32 %s368, 1
      %p372 = scmp.eq.s32.totalorder %s40, 1
      %p373 = scmp.ne.s32.totalorder %s368, %s370
      %p374 = scmp.eq.s32.totalorder %s40, 0
      %p375 = por %p373, %p374
      %p376 = scmp.ne.s32.totalorder %s368, %s370
      %p377 = scmp.eq.s32.totalorder %s45, 1
      %p378 = por %p376, %p377
      %p379 = scmp.ne.s32.totalorder %s370, %s371
      %p380 = scmp.eq.s32.totalorder %s45, 0
      %p381 = por %p379, %p380
      %p382 = scmp.ne.s32.totalorder %s370, %s371
      %p383 = scmp.eq.s32.totalorder %s46, 1
      %p384 = por %p382, %p383
      %p386 = scmp.ne.s32.totalorder %s371, %s385
      %p387 = scmp.eq.s32.totalorder %s46, 0
      %p388 = por %p386, %p387
      %s390 = sadd.s32 %s389, 1
      %p393 = scmp.eq.s32.totalorder %s40, 1
      %p394 = scmp.ne.s32.totalorder %s389, %s391
      %p395 = scmp.eq.s32.totalorder %s40, 0
      %p396 = por %p394, %p395
      %p397 = scmp.ne.s32.totalorder %s389, %s391
      %p398 = scmp.eq.s32.totalorder %s45, 1
      %p399 = por %p397, %p398
      %p400 = scmp.ne.s32.totalorder %s391, %s392
      %p401 = scmp.eq.s32.totalorder %s45, 0
      %p402 = por %p400, %p401
      %p403 = scmp.ne.s32.totalorder %s391, %s392
      %p404 = scmp.eq.s32.totalorder %s46, 1
      %p405 = por %p403, %p404
      %p407 = scmp.ne.s32.totalorder %s392, %s406
      %p408 = scmp.eq.s32.totalorder %s46, 0
      %p409 = por %p407, %p408
      %s411 = sadd.s32 %s410, 1
      %p414 = scmp.eq.s32.totalorder %s40, 1
      %p415 = scmp.ne.s32.totalorder %s410, %s412
      %p416 = scmp.eq.s32.totalorder %s40, 0
      %p417 = por %p415, %p416
      %p418 = scmp.ne.s32.totalorder %s410, %s412
      %p419 = scmp.eq.s32.totalorder %s45, 1
      %p420 = por %p418, %p419
      %p421 = scmp.ne.s32.totalorder %s412, %s413
      %p422 = scmp.eq.s32.totalorder %s45, 0
      %p423 = por %p421, %p422
      %p424 = scmp.ne.s32.totalorder %s412, %s413
      %p425 = scmp.eq.s32.totalorder %s46, 1
      %p426 = por %p424, %p425
      %p428 = scmp.ne.s32.totalorder %s413, %s427
      %p429 = scmp.eq.s32.totalorder %s46, 0
      %p430 = por %p428, %p429
      %s432 = sadd.s32 %s431, 1
      %p435 = scmp.eq.s32.totalorder %s40, 1
      %p436 = scmp.ne.s32.totalorder %s431, %s433
      %p437 = scmp.eq.s32.totalorder %s40, 0
      %p438 = por %p436, %p437
      %p439 = scmp.ne.s32.totalorder %s431, %s433
      %p440 = scmp.eq.s32.totalorder %s45, 1
      %p441 = por %p439, %p440
      %p442 = scmp.ne.s32.totalorder %s433, %s434
      %p443 = scmp.eq.s32.totalorder %s45, 0
      %p444 = por %p442, %p443
      %p445 = scmp.ne.s32.totalorder %s433, %s434
      %p446 = scmp.eq.s32.totalorder %s46, 1
      %p447 = por %p445, %p446
      %p449 = scmp.ne.s32.totalorder %s434, %s448
      %p450 = scmp.eq.s32.totalorder %s46, 0
      %p451 = por %p449, %p450
      %s453 = sadd.s32 %s452, 1
      %p456 = scmp.eq.s32.totalorder %s40, 1
      %p457 = scmp.ne.s32.totalorder %s452, %s454
      %p458 = scmp.eq.s32.totalorder %s40, 0
      %p459 = por %p457, %p458
      %p460 = scmp.ne.s32.totalorder %s452, %s454
      %p461 = scmp.eq.s32.totalorder %s45, 1
      %p462 = por %p460, %p461
      %p463 = scmp.ne.s32.totalorder %s454, %s455
      %p464 = scmp.eq.s32.totalorder %s45, 0
      %p465 = por %p463, %p464
      %p466 = scmp.ne.s32.totalorder %s454, %s455
      %p467 = scmp.eq.s32.totalorder %s46, 1
      %p468 = por %p466, %p467
      %p470 = scmp.ne.s32.totalorder %s455, %s469
      %p471 = scmp.eq.s32.totalorder %s46, 0
      %p472 = por %p470, %p471
      %s474 = sadd.s32 %s473, 1
      %p477 = scmp.eq.s32.totalorder %s40, 1
      %p478 = scmp.ne.s32.totalorder %s473, %s475
      %p479 = scmp.eq.s32.totalorder %s40, 0
      %p480 = por %p478, %p479
      %p481 = scmp.ne.s32.totalorder %s473, %s475
      %p482 = scmp.eq.s32.totalorder %s45, 1
      %p483 = por %p481, %p482
      %p484 = scmp.ne.s32.totalorder %s475, %s476
      %p485 = scmp.eq.s32.totalorder %s45, 0
      %p486 = por %p484, %p485
      %p487 = scmp.ne.s32.totalorder %s475, %s476
      %p488 = scmp.eq.s32.totalorder %s46, 1
      %p489 = por %p487, %p488
      %p491 = scmp.ne.s32.totalorder %s476, %s490
      %p492 = scmp.eq.s32.totalorder %s46, 0
      %p493 = por %p491, %p492
      %s495 = sadd.s32 %s494, 1
      %p498 = scmp.eq.s32.totalorder %s40, 1
      %p499 = scmp.ne.s32.totalorder %s494, %s496
      %p500 = scmp.eq.s32.totalorder %s40, 0
      %p501 = por %p499, %p500
      %p502 = scmp.ne.s32.totalorder %s494, %s496
      %p503 = scmp.eq.s32.totalorder %s45, 1
      %p504 = por %p502, %p503
      %p505 = scmp.ne.s32.totalorder %s496, %s497
      %p506 = scmp.eq.s32.totalorder %s45, 0
      %p507 = por %p505, %p506
      %p508 = scmp.ne.s32.totalorder %s496, %s497
      %p509 = scmp.eq.s32.totalorder %s46, 1
      %p510 = por %p508, %p509
      %p512 = scmp.ne.s32.totalorder %s497, %s511
      %p513 = scmp.eq.s32.totalorder %s46, 0
      %p514 = por %p512, %p513
      %s516 = sadd.s32 %s515, 1
      %p519 = scmp.eq.s32.totalorder %s40, 1
      %p520 = scmp.ne.s32.totalorder %s515, %s517
      %p521 = scmp.eq.s32.totalorder %s40, 0
      %p522 = por %p520, %p521
      %p523 = scmp.ne.s32.totalorder %s515, %s517
      %p524 = scmp.eq.s32.totalorder %s45, 1
      %p525 = por %p523, %p524
      %p526 = scmp.ne.s32.totalorder %s517, %s518
      %p527 = scmp.eq.s32.totalorder %s45, 0
      %p528 = por %p526, %p527
      %p529 = scmp.ne.s32.totalorder %s517, %s518
      %p530 = scmp.eq.s32.totalorder %s46, 1
      %p531 = por %p529, %p530
      %p533 = scmp.ne.s32.totalorder %s518, %s532
      %p534 = scmp.eq.s32.totalorder %s46, 0
      %p535 = por %p533, %p534
      %s537 = sadd.s32 %s536, 1
      %p540 = scmp.eq.s32.totalorder %s40, 1
      %p541 = scmp.ne.s32.totalorder %s536, %s538
      %p542 = scmp.eq.s32.totalorder %s40, 0
      %p543 = por %p541, %p542
      %p544 = scmp.ne.s32.totalorder %s536, %s538
      %p545 = scmp.eq.s32.totalorder %s45, 1
      %p546 = por %p544, %p545
      %p547 = scmp.ne.s32.totalorder %s538, %s539
      %p548 = scmp.eq.s32.totalorder %s45, 0
      %p549 = por %p547, %p548
      %p550 = scmp.ne.s32.totalorder %s538, %s539
      %p551 = scmp.eq.s32.totalorder %s46, 1
      %p552 = por %p550, %p551
      %p554 = scmp.ne.s32.totalorder %s539, %s553
      %p555 = scmp.eq.s32.totalorder %s46, 0
      %p556 = por %p554, %p555
      %s558 = sadd.s32 %s557, 1
      %p561 = scmp.eq.s32.totalorder %s40, 1
      %p562 = scmp.ne.s32.totalorder %s557, %s559
      %p563 = scmp.eq.s32.totalorder %s40, 0
      %p564 = por %p562, %p563
      %p565 = scmp.ne.s32.totalorder %s557, %s559
      %p566 = scmp.eq.s32.totalorder %s45, 1
      %p567 = por %p565, %p566
      %p568 = scmp.ne.s32.totalorder %s559, %s560
      %p569 = scmp.eq.s32.totalorder %s45, 0
      %p570 = por %p568, %p569
      %p571 = scmp.ne.s32.totalorder %s559, %s560
      %p572 = scmp.eq.s32.totalorder %s46, 1
      %p573 = por %p571, %p572
      %p575 = scmp.ne.s32.totalorder %s560, %s574
      %p576 = scmp.eq.s32.totalorder %s46, 0
      %p577 = por %p575, %p576
      %s579 = sadd.s32 %s578, 1
      %p582 = scmp.eq.s32.totalorder %s40, 1
      %p583 = scmp.ne.s32.totalorder %s578, %s580
      %p584 = scmp.eq.s32.totalorder %s40, 0
      %p585 = por %p583, %p584
      %p586 = scmp.ne.s32.totalorder %s578, %s580
      %p587 = scmp.eq.s32.totalorder %s45, 1
      %p588 = por %p586, %p587
      %p589 = scmp.ne.s32.totalorder %s580, %s581
      %p590 = scmp.eq.s32.totalorder %s45, 0
      %p591 = por %p589, %p590
      %p592 = scmp.ne.s32.totalorder %s580, %s581
      %p593 = scmp.eq.s32.totalorder %s46, 1
      %p594 = por %p592, %p593
      %p596 = scmp.ne.s32.totalorder %s581, %s595
      %p597 = scmp.eq.s32.totalorder %s46, 0
      %p598 = por %p596, %p597
      %s600 = sadd.s32 %s599, 1
      %p603 = scmp.eq.s32.totalorder %s40, 1
      %p604 = scmp.ne.s32.totalorder %s599, %s601
      %p605 = scmp.eq.s32.totalorder %s40, 0
      %p606 = por %p604, %p605
      %p607 = scmp.ne.s32.totalorder %s599, %s601
      %p608 = scmp.eq.s32.totalorder %s45, 1
      %p609 = por %p607, %p608
      %p610 = scmp.ne.s32.totalorder %s601, %s602
      %p611 = scmp.eq.s32.totalorder %s45, 0
      %p612 = por %p610, %p611
      %p613 = scmp.ne.s32.totalorder %s601, %s602
      %p614 = scmp.eq.s32.totalorder %s46, 1
      %p615 = por %p613, %p614
      %p617 = scmp.ne.s32.totalorder %s602, %s616
      %p618 = scmp.eq.s32.totalorder %s46, 0
      %p619 = por %p617, %p618
      %s621 = sadd.s32 %s620, 1
      %p624 = scmp.eq.s32.totalorder %s40, 1
      %p625 = scmp.ne.s32.totalorder %s620, %s622
      %p626 = scmp.eq.s32.totalorder %s40, 0
      %p627 = por %p625, %p626
      %p628 = scmp.ne.s32.totalorder %s620, %s622
      %p629 = scmp.eq.s32.totalorder %s45, 1
      %p630 = por %p628, %p629
      %p631 = scmp.ne.s32.totalorder %s622, %s623
      %p632 = scmp.eq.s32.totalorder %s45, 0
      %p633 = por %p631, %p632
      %p634 = scmp.ne.s32.totalorder %s622, %s623
      %p635 = scmp.eq.s32.totalorder %s46, 1
      %p636 = por %p634, %p635
      %p638 = scmp.ne.s32.totalorder %s623, %s637
      %p639 = scmp.eq.s32.totalorder %s46, 0
      %p640 = por %p638, %p639
      %s641 = ssub.s32 %s40, %s47
      %p642 = scmp.eq.s32.totalorder %s641, 0
      %s644 = sadd.s32 %s643, 1
      %s645 = scalar_select %p642, %s643, %s644
      %p648 = pneg %p642
      %p649 = scmp.eq.s32.totalorder %s40, 1
      %p650 = por %p648, %p649
      %p651 = scmp.ne.s32.totalorder %s643, %s646
      %p652 = scmp.eq.s32.totalorder %s40, 0
      %p653 = por %p651, %p652
      %p654 = scmp.ne.s32.totalorder %s643, %s646
      %p655 = scmp.eq.s32.totalorder %s45, 1
      %p656 = por %p654, %p655
      %p657 = scmp.ne.s32.totalorder %s646, %s647
      %p658 = scmp.eq.s32.totalorder %s45, 0
      %p659 = por %p657, %p658
      %p660 = scmp.ne.s32.totalorder %s646, %s647
      %p661 = scmp.eq.s32.totalorder %s46, 1
      %p662 = por %p660, %p661
      %p664 = scmp.ne.s32.totalorder %s647, %s663
      %p665 = scmp.eq.s32.totalorder %s46, 0
      %p666 = por %p664, %p665
      %p667 = scmp.le.s32.totalorder 1, %s40
      %p668 = scmp.lt.s32.totalorder %s40, 3
      %p669 = pnand %p667, %p668
      %p670 = pneg %p669
      // Predicated region
      $region9: #{discriminator_forward.1} parent=5 // pred_check
        _
      $region10: #{discriminator_forward.1} parent=5 // pred_check_branch
        %672 = sbr.rel (%p669) target = $region12
      $region11: #{discriminator_forward.1} parent=5 // pred_region
        %s673 = ssub.s32 %s40, 1
        // Predicated region
        $region13: #{discriminator_forward.1} parent=11 // pred_check
          %p674 = pneg %p87
        $region14: #{discriminator_forward.1} parent=11 // pred_check_branch
          %676 = sbr.rel (%p674) target = $region16
        $region15: #{discriminator_forward.1} parent=11 // pred_region
          %s678 = ssub.s32 9216, 9216
          %679 = vsyncadd [#allocation8], %s678
          %s680 = sshll.u32 [#allocation7], 4
          %s681 = int_to_ptr.vmem [resolvable:$true] %s680
          %686 = dma.hbm_to_vmem [thread:$0]  %s1, 9216, %s681, [#allocation8], 128, 128, 8
        $region16: #{discriminator_forward.1} parent=11 // pred_fallthru
          _
        // Predicated region
        $region17: #{discriminator_forward.1} parent=11 // pred_check
          %p687 = pneg %p108
        $region18: #{discriminator_forward.1} parent=11 // pred_check_branch
          %689 = sbr.rel (%p687) target = $region20
        $region19: #{discriminator_forward.1} parent=11 // pred_region
          _
        $region20: #{discriminator_forward.1} parent=11 // pred_fallthru
          _
        // Predicated region
        $region21: #{discriminator_forward.1} parent=11 // pred_check
          %p690 = pneg %p129
        $region22: #{discriminator_forward.1} parent=11 // pred_check_branch
          %692 = sbr.rel (%p690) target = $region24
        $region23: #{discriminator_forward.1} parent=11 // pred_region
          _
        $region24: #{discriminator_forward.1} parent=11 // pred_fallthru
          _
        // Predicated region
        $region25: #{discriminator_forward.1} parent=11 // pred_check
          %p693 = pneg %p150
        $region26: #{discriminator_forward.1} parent=11 // pred_check_branch
          %695 = sbr.rel (%p693) target = $region28
        $region27: #{discriminator_forward.1} parent=11 // pred_region
          _
        $region28: #{discriminator_forward.1} parent=11 // pred_fallthru
          _
        // Predicated region
        $region29: #{discriminator_forward.1} parent=11 // pred_check
          %p696 = pneg %p171
        $region30: #{discriminator_forward.1} parent=11 // pred_check_branch
          %698 = sbr.rel (%p696) target = $region32
        $region31: #{discriminator_forward.1} parent=11 // pred_region
          %s700 = ssub.s32 1152, 1152
          %701 = vsyncadd [#allocation10], %s700
          %s702 = sshll.u32 [#allocation9], 4
          %s703 = int_to_ptr.vmem [resolvable:$true] %s702
          %708 = dma.hbm_to_vmem [thread:$0]  %s5, 1152, %s703, [#allocation10], 64, 64, 4
        $region32: #{discriminator_forward.1} parent=11 // pred_fallthru
          _
        // Predicated region
        $region33: #{discriminator_forward.1} parent=11 // pred_check
          %p709 = pneg %p192
        $region34: #{discriminator_forward.1} parent=11 // pred_check_branch
          %711 = sbr.rel (%p709) target = $region36
        $region35: #{discriminator_forward.1} parent=11 // pred_region
          _
        $region36: #{discriminator_forward.1} parent=11 // pred_fallthru
          _
        // Predicated region
        $region37: #{discriminator_forward.1} parent=11 // pred_check
          %p712 = pneg %p213
        $region38: #{discriminator_forward.1} parent=11 // pred_check_branch
          %714 = sbr.rel (%p712) target = $region40
        $region39: #{discriminator_forward.1} parent=11 // pred_region
          %s716 = ssub.s32 512, 512
          %717 = vsyncadd [#allocation10], %s716
          %s718 = sshll.u32 [#allocation11], 4
          %s719 = int_to_ptr.vmem [resolvable:$true] %s718
          %724 = dma.hbm_to_vmem [thread:$0]  %s7, 512, %s719, [#allocation10], 128, 128, 8
        $region40: #{discriminator_forward.1} parent=11 // pred_fallthru
          _
        // Predicated region
        $region41: #{discriminator_forward.1} parent=11 // pred_check
          %p725 = pneg %p234
        $region42: #{discriminator_forward.1} parent=11 // pred_check_branch
          %727 = sbr.rel (%p725) target = $region44
        $region43: #{discriminator_forward.1} parent=11 // pred_region
          _
        $region44: #{discriminator_forward.1} parent=11 // pred_fallthru
          _
        // Predicated region
        $region45: #{discriminator_forward.1} parent=11 // pred_check
          %p728 = pneg %p255
        $region46: #{discriminator_forward.1} parent=11 // pred_check_branch
          %730 = sbr.rel (%p728) target = $region48
        $region47: #{discriminator_forward.1} parent=11 // pred_region
          %s732 = ssub.s32 2048, 2048
          %733 = vsyncadd [#allocation13], %s732
          %s734 = sshll.u32 [#allocation12], 4
          %s735 = int_to_ptr.vmem [resolvable:$true] %s734
          %740 = dma.hbm_to_vmem [thread:$0]  %s9, 2048, %s735, [#allocation13], 128, 128, 8
        $region48: #{discriminator_forward.1} parent=11 // pred_fallthru
          _
        // Predicated region
        $region49: #{discriminator_forward.1} parent=11 // pred_check
          %p741 = pneg %p276
        $region50: #{discriminator_forward.1} parent=11 // pred_check_branch
          %743 = sbr.rel (%p741) target = $region52
        $region51: #{discriminator_forward.1} parent=11 // pred_region
          _
        $region52: #{discriminator_forward.1} parent=11 // pred_fallthru
          _
        // Predicated region
        $region53: #{discriminator_forward.1} parent=11 // pred_check
          %p744 = pneg %p297
        $region54: #{discriminator_forward.1} parent=11 // pred_check_branch
          %746 = sbr.rel (%p744) target = $region56
        $region55: #{discriminator_forward.1} parent=11 // pred_region
          %s748 = ssub.s32 288, 288
          %749 = vsyncadd [#allocation13], %s748
          %s750 = sshll.u32 [#allocation14], 4
          %s751 = int_to_ptr.vmem [resolvable:$true] %s750
          %756 = dma.hbm_to_vmem [thread:$0]  %s11, 288, %s751, [#allocation13], 32, 32, 2
        $region56: #{discriminator_forward.1} parent=11 // pred_fallthru
          _
        // Predicated region
        $region57: #{discriminator_forward.1} parent=11 // pred_check
          %p757 = pneg %p318
        $region58: #{discriminator_forward.1} parent=11 // pred_check_branch
          %759 = sbr.rel (%p757) target = $region60
        $region59: #{discriminator_forward.1} parent=11 // pred_region
          _
        $region60: #{discriminator_forward.1} parent=11 // pred_fallthru
          _
        // Predicated region
        $region61: #{discriminator_forward.1} parent=11 // pred_check
          %p760 = pneg %p339
        $region62: #{discriminator_forward.1} parent=11 // pred_check_branch
          %762 = sbr.rel (%p760) target = $region64
        $region63: #{discriminator_forward.1} parent=11 // pred_region
          _
        $region64: #{discriminator_forward.1} parent=11 // pred_fallthru
          _
        // Predicated region
        $region65: #{discriminator_forward.1} parent=11 // pred_check
          %p763 = pneg %p360
        $region66: #{discriminator_forward.1} parent=11 // pred_check_branch
          %765 = sbr.rel (%p763) target = $region68
        $region67: #{discriminator_forward.1} parent=11 // pred_region
          %s767 = ssub.s32 1024, 1024
          %768 = vsyncadd [#allocation16], %s767
          %s769 = sshll.u32 [#allocation15], 4
          %s770 = int_to_ptr.vmem [resolvable:$true] %s769
          %775 = dma.hbm_to_vmem [thread:$0]  %s14, 1024, %s770, [#allocation16], 128, 128, 8
        $region68: #{discriminator_forward.1} parent=11 // pred_fallthru
          _
        // Predicated region
        $region69: #{discriminator_forward.1} parent=11 // pred_check
          %p776 = pneg %p381
        $region70: #{discriminator_forward.1} parent=11 // pred_check_branch
          %778 = sbr.rel (%p776) target = $region72
        $region71: #{discriminator_forward.1} parent=11 // pred_region
          _
        $region72: #{discriminator_forward.1} parent=11 // pred_fallthru
          _
        // Predicated region
        $region73: #{discriminator_forward.1} parent=11 // pred_check
          %p779 = pneg %p402
        $region74: #{discriminator_forward.1} parent=11 // pred_check_branch
          %781 = sbr.rel (%p779) target = $region76
        $region75: #{discriminator_forward.1} parent=11 // pred_region
          %s783 = ssub.s32 2048, 2048
          %784 = vsyncadd [#allocation16], %s783
          %s785 = sshll.u32 [#allocation17], 4
          %s786 = int_to_ptr.vmem [resolvable:$true] %s785
          %791 = dma.hbm_to_vmem [thread:$0]  %s16, 2048, %s786, [#allocation16], 128, 128, 8
        $region76: #{discriminator_forward.1} parent=11 // pred_fallthru
          _
        // Predicated region
        $region77: #{discriminator_forward.1} parent=11 // pred_check
          %p792 = pneg %p423
        $region78: #{discriminator_forward.1} parent=11 // pred_check_branch
          %794 = sbr.rel (%p792) target = $region80
        $region79: #{discriminator_forward.1} parent=11 // pred_region
          _
        $region80: #{discriminator_forward.1} parent=11 // pred_fallthru
          _
        // Predicated region
        $region81: #{discriminator_forward.1} parent=11 // pred_check
          %p795 = pneg %p444
        $region82: #{discriminator_forward.1} parent=11 // pred_check_branch
          %797 = sbr.rel (%p795) target = $region84
        $region83: #{discriminator_forward.1} parent=11 // pred_region
          _
        $region84: #{discriminator_forward.1} parent=11 // pred_fallthru
          _
        // Predicated region
        $region85: #{discriminator_forward.1} parent=11 // pred_check
          %p798 = pneg %p465
        $region86: #{discriminator_forward.1} parent=11 // pred_check_branch
          %800 = sbr.rel (%p798) target = $region88
        $region87: #{discriminator_forward.1} parent=11 // pred_region
          _
        $region88: #{discriminator_forward.1} parent=11 // pred_fallthru
          _
        // Predicated region
        $region89: #{discriminator_forward.1} parent=11 // pred_check
          %p801 = pneg %p486
        $region90: #{discriminator_forward.1} parent=11 // pred_check_branch
          %803 = sbr.rel (%p801) target = $region92
        $region91: #{discriminator_forward.1} parent=11 // pred_region
          %s805 = ssub.s32 16, 16
          %806 = vsyncadd [#allocation19], %s805
          %s808 = sshll.u32 [#allocation18], 4
          %s809 = int_to_ptr.vmem [resolvable:$true] %s808
          %811 = dma.hbm_to_vmem [thread:$0]  %s20, 16, %s809, [#allocation19]
        $region92: #{discriminator_forward.1} parent=11 // pred_fallthru
          _
        // Predicated region
        $region93: #{discriminator_forward.1} parent=11 // pred_check
          %p812 = pneg %p507
        $region94: #{discriminator_forward.1} parent=11 // pred_check_branch
          %814 = sbr.rel (%p812) target = $region96
        $region95: #{discriminator_forward.1} parent=11 // pred_region
          %s816 = ssub.s32 2048, 2048
          %817 = vsyncadd [#allocation19], %s816
          %s818 = sshll.u32 [#allocation20], 4
          %s819 = int_to_ptr.vmem [resolvable:$true] %s818
          %824 = dma.hbm_to_vmem [thread:$0]  %s21, 2048, %s819, [#allocation19], 128, 128, 8
        $region96: #{discriminator_forward.1} parent=11 // pred_fallthru
          _
        // Predicated region
        $region97: #{discriminator_forward.1} parent=11 // pred_check
          %p825 = pneg %p528
        $region98: #{discriminator_forward.1} parent=11 // pred_check_branch
          %827 = sbr.rel (%p825) target = $region100
        $region99: #{discriminator_forward.1} parent=11 // pred_region
          _
        $region100: #{discriminator_forward.1} parent=11 // pred_fallthru
          _
        // Predicated region
        $region101: #{discriminator_forward.1} parent=11 // pred_check
          %p828 = pneg %p549
        $region102: #{discriminator_forward.1} parent=11 // pred_check_branch
          %830 = sbr.rel (%p828) target = $region104
        $region103: #{discriminator_forward.1} parent=11 // pred_region
          %s832 = ssub.s32 2048, 2048
          %833 = vsyncadd [#allocation22], %s832
          %s834 = sshll.u32 [#allocation21], 4
          %s835 = int_to_ptr.vmem [resolvable:$true] %s834
          %840 = dma.hbm_to_vmem [thread:$0]  %s23, 2048, %s835, [#allocation22], 128, 128, 8
        $region104: #{discriminator_forward.1} parent=11 // pred_fallthru
          _
        // Predicated region
        $region105: #{discriminator_forward.1} parent=11 // pred_check
          %p841 = pneg %p570
        $region106: #{discriminator_forward.1} parent=11 // pred_check_branch
          %843 = sbr.rel (%p841) target = $region108
        $region107: #{discriminator_forward.1} parent=11 // pred_region
          _
        $region108: #{discriminator_forward.1} parent=11 // pred_fallthru
          _
        // Predicated region
        $region109: #{discriminator_forward.1} parent=11 // pred_check
          %p844 = pneg %p591
        $region110: #{discriminator_forward.1} parent=11 // pred_check_branch
          %846 = sbr.rel (%p844) target = $region112
        $region111: #{discriminator_forward.1} parent=11 // pred_region
          _
        $region112: #{discriminator_forward.1} parent=11 // pred_fallthru
          _
        // Predicated region
        $region113: #{discriminator_forward.1} parent=11 // pred_check
          %p847 = pneg %p612
        $region114: #{discriminator_forward.1} parent=11 // pred_check_branch
          %849 = sbr.rel (%p847) target = $region116
        $region115: #{discriminator_forward.1} parent=11 // pred_region
          %s851 = ssub.s32 9216, 9216
          %852 = vsyncadd [#allocation22], %s851
          %s853 = sshll.u32 [#allocation23], 4
          %s854 = int_to_ptr.vmem [resolvable:$true] %s853
          %859 = dma.hbm_to_vmem [thread:$0]  %s26, 9216, %s854, [#allocation22], 64, 64, 4
        $region116: #{discriminator_forward.1} parent=11 // pred_fallthru
          _
        // Predicated region
        $region117: #{discriminator_forward.1} parent=11 // pred_check
          %p860 = pneg %p633
        $region118: #{discriminator_forward.1} parent=11 // pred_check_branch
          %862 = sbr.rel (%p860) target = $region120
        $region119: #{discriminator_forward.1} parent=11 // pred_region
          _
        $region120: #{discriminator_forward.1} parent=11 // pred_fallthru
          _
      $region12: #{discriminator_forward.1} parent=5 // pred_fallthru
        _
      %p863 = scmp.lt.s32.totalorder %s40, 2
      // Predicated region
      $region121: #{discriminator_forward.1} parent=5 // pred_check
        %p864 = pneg %p863
      $region122: #{discriminator_forward.1} parent=5 // pred_check_branch
        %866 = sbr.rel (%p864) target = $region124
      $region123: #{discriminator_forward.1} parent=5 // pred_region
        // Predicated region
        $region125: #{discriminator_forward.1} parent=123 // pred_check
          %p867 = pneg %p60
        $region126: #{discriminator_forward.1} parent=123 // pred_check_branch
          %869 = sbr.rel (%p867) target = $region128
        $region127: #{discriminator_forward.1} parent=123 // pred_region
          %p870 = scmp.lt.s32.totalorder %s40, 1
          %s871 = scalar_select %p870, %s40, 1
          %s872 = smul.addr %s871, 32
          %s873 = smul.addr %s872, 4
          %s874 = scalar_lea.vmem %s0, %s873
        $region128: #{discriminator_forward.1} parent=123 // pred_fallthru
          _
      $region124: #{discriminator_forward.1} parent=5 // pred_fallthru
        _
      %p875 = scmp.le.s32.totalorder 1, %s40
      %p876 = scmp.lt.s32.totalorder %s40, 3
      %p877 = pnand %p875, %p876
      %p878 = pneg %p877
      // Predicated region
      $region129: #{discriminator_forward.1} parent=5 // pred_check
        _
      $region130: #{discriminator_forward.1} parent=5 // pred_check_branch
        %880 = sbr.rel (%p877) target = $region132
      $region131: #{discriminator_forward.1} parent=5 // pred_region
        %s881 = ssub.s32 %s40, 1
        // Predicated region
        $region133: #{discriminator_forward.1} parent=131 // pred_check
          %p882 = pneg %p87
        $region134: #{discriminator_forward.1} parent=131 // pred_check_branch
          %884 = sbr.rel (%p882) target = $region136
        $region135: #{discriminator_forward.1} parent=131 // pred_region
          %885 = dma.done [#allocation8], 9216
        $region136: #{discriminator_forward.1} parent=131 // pred_fallthru
          _
        // Predicated region
        $region137: #{discriminator_forward.1} parent=131 // pred_check
          %p886 = pneg %p171
        $region138: #{discriminator_forward.1} parent=131 // pred_check_branch
          %888 = sbr.rel (%p886) target = $region140
        $region139: #{discriminator_forward.1} parent=131 // pred_region
          %889 = dma.done [#allocation10], 1152
        $region140: #{discriminator_forward.1} parent=131 // pred_fallthru
          _
        // Predicated region
        $region141: #{discriminator_forward.1} parent=131 // pred_check
          %p890 = pneg %p213
        $region142: #{discriminator_forward.1} parent=131 // pred_check_branch
          %892 = sbr.rel (%p890) target = $region144
        $region143: #{discriminator_forward.1} parent=131 // pred_region
          %893 = dma.done [#allocation10], 512
        $region144: #{discriminator_forward.1} parent=131 // pred_fallthru
          _
        // Predicated region
        $region145: #{discriminator_forward.1} parent=131 // pred_check
          %p894 = pneg %p255
        $region146: #{discriminator_forward.1} parent=131 // pred_check_branch
          %896 = sbr.rel (%p894) target = $region148
        $region147: #{discriminator_forward.1} parent=131 // pred_region
          %897 = dma.done [#allocation13], 2048
        $region148: #{discriminator_forward.1} parent=131 // pred_fallthru
          _
        // Predicated region
        $region149: #{discriminator_forward.1} parent=131 // pred_check
          %p898 = pneg %p297
        $region150: #{discriminator_forward.1} parent=131 // pred_check_branch
          %900 = sbr.rel (%p898) target = $region152
        $region151: #{discriminator_forward.1} parent=131 // pred_region
          %901 = dma.done [#allocation13], 288
        $region152: #{discriminator_forward.1} parent=131 // pred_fallthru
          _
        // Predicated region
        $region153: #{discriminator_forward.1} parent=131 // pred_check
          %p902 = pneg %p360
        $region154: #{discriminator_forward.1} parent=131 // pred_check_branch
          %904 = sbr.rel (%p902) target = $region156
        $region155: #{discriminator_forward.1} parent=131 // pred_region
          %905 = dma.done [#allocation16], 1024
        $region156: #{discriminator_forward.1} parent=131 // pred_fallthru
          _
        // Predicated region
        $region157: #{discriminator_forward.1} parent=131 // pred_check
          %p906 = pneg %p402
        $region158: #{discriminator_forward.1} parent=131 // pred_check_branch
          %908 = sbr.rel (%p906) target = $region160
        $region159: #{discriminator_forward.1} parent=131 // pred_region
          %909 = dma.done [#allocation16], 2048
        $region160: #{discriminator_forward.1} parent=131 // pred_fallthru
          _
        // Predicated region
        $region161: #{discriminator_forward.1} parent=131 // pred_check
          %p910 = pneg %p486
        $region162: #{discriminator_forward.1} parent=131 // pred_check_branch
          %912 = sbr.rel (%p910) target = $region164
        $region163: #{discriminator_forward.1} parent=131 // pred_region
          %913 = dma.done [#allocation19], 16
        $region164: #{discriminator_forward.1} parent=131 // pred_fallthru
          _
        // Predicated region
        $region165: #{discriminator_forward.1} parent=131 // pred_check
          %p914 = pneg %p507
        $region166: #{discriminator_forward.1} parent=131 // pred_check_branch
          %916 = sbr.rel (%p914) target = $region168
        $region167: #{discriminator_forward.1} parent=131 // pred_region
          %917 = dma.done [#allocation19], 2048
        $region168: #{discriminator_forward.1} parent=131 // pred_fallthru
          _
        // Predicated region
        $region169: #{discriminator_forward.1} parent=131 // pred_check
          %p918 = pneg %p549
        $region170: #{discriminator_forward.1} parent=131 // pred_check_branch
          %920 = sbr.rel (%p918) target = $region172
        $region171: #{discriminator_forward.1} parent=131 // pred_region
          %921 = dma.done [#allocation22], 2048
        $region172: #{discriminator_forward.1} parent=131 // pred_fallthru
          _
        // Predicated region
        $region173: #{discriminator_forward.1} parent=131 // pred_check
          %p922 = pneg %p612
        $region174: #{discriminator_forward.1} parent=131 // pred_check_branch
          %924 = sbr.rel (%p922) target = $region176
        $region175: #{discriminator_forward.1} parent=131 // pred_region
          %925 = dma.done [#allocation22], 9216
        $region176: #{discriminator_forward.1} parent=131 // pred_fallthru
          _
        %p926 = scmp.lt.s32.totalorder %s45, 1
        %s927 = scalar_select %p926, %s45, 1
        %s928 = smul.addr %s927, 32
        %s929 = smul.addr %s928, 4
        %s930 = scalar_lea.vmem %s0, %s929
        %p931 = pneg %p66
        %p932 = pneg %p63
        %p933 = pneg %p87
        %p934 = pneg %p84
        %p935 = pneg %p108
        %p936 = pneg %p105
        %p937 = pneg %p129
        %p938 = pneg %p126
        %p939 = pneg %p150
        %p940 = pneg %p147
        %p941 = pneg %p171
        %p942 = pneg %p168
        %p943 = pneg %p192
        %p944 = pneg %p189
        %p945 = pneg %p213
        %p946 = pneg %p210
        %p947 = pneg %p234
        %p948 = pneg %p231
        %p949 = pneg %p255
        %p950 = pneg %p252
        %p951 = pneg %p276
        %p952 = pneg %p273
        %p953 = pneg %p297
        %p954 = pneg %p294
        %p955 = pneg %p318
        %p956 = pneg %p315
        %p957 = pneg %p339
        %p958 = pneg %p336
        %p959 = pneg %p360
        %p960 = pneg %p357
        %p961 = pneg %p381
        %p962 = pneg %p378
        %p963 = pneg %p402
        %p964 = pneg %p399
        %p965 = pneg %p423
        %p966 = pneg %p420
        %p967 = pneg %p444
        %p968 = pneg %p441
        %p969 = pneg %p465
        %p970 = pneg %p462
        %p971 = pneg %p486
        %p972 = pneg %p483
        %p973 = pneg %p507
        %p974 = pneg %p504
        %p975 = pneg %p528
        %p976 = pneg %p525
        %p977 = pneg %p549
        %p978 = pneg %p546
        %p979 = pneg %p570
        %p980 = pneg %p567
        %p981 = pneg %p591
        %p982 = pneg %p588
        %p983 = pneg %p612
        %p984 = pneg %p609
        %p985 = pneg %p633
        %p986 = pneg %p630
        %p987 = pneg %p659
        %p988 = pneg %p656
        %p989 = scmp.lt.s32.totalorder %s45, 1
        %s990 = scalar_select %p989, %s45, 1
        %s991 = smul.addr %s990, 4
        %s992 = scalar_lea.vmem %s28, %s991
        %p993 = scmp.lt.s32.totalorder %s45, 1
        %s994 = scalar_select %p993, %s45, 1
        %s995 = smul.addr %s994, 32
        %s996 = smul.addr %s995, 4
        %s997 = scalar_lea.vmem %s0, %s996
        %p998 = scmp.lt.s32.totalorder %s45, 1
        %s999 = scalar_select %p998, %s45, 1
        %s1000 = smul.addr %s999, 4
        %s1001 = scalar_lea.vmem %s28, %s1000
        %v1003 = vld [vmem:[%s997] sm:$0xf]
        %v1004 = vld [vmem:[%s997 + $0x4] sm:$0xf]
        %v1005 = vld [vmem:[%s997 + $0x8] sm:$0xf]
        %v1006 = vld [vmem:[%s997 + $0xc] sm:$0xf]
        %v1007 = vld [vmem:[%s997 + $0x10] sm:$0xf]
        %v1008 = vld [vmem:[%s997 + $0x14] sm:$0xf]
        %v1009 = vld [vmem:[%s997 + $0x18] sm:$0xf]
        %v1010 = vld [vmem:[%s997 + $0x1c] sm:$0xf]
        %v1011 = vld [vmem:[%s997 + $0x20] sm:$0xf]
        %v1012 = vld [vmem:[%s997 + $0x24] sm:$0xf]
        %v1013 = vld [vmem:[%s997 + $0x28] sm:$0xf]
        %v1014 = vld [vmem:[%s997 + $0x2c] sm:$0xf]
        %v1015 = vld [vmem:[%s997 + $0x30] sm:$0xf]
        %v1016 = vld [vmem:[%s997 + $0x34] sm:$0xf]
        %v1017 = vld [vmem:[%s997 + $0x38] sm:$0xf]
        %v1018 = vld [vmem:[%s997 + $0x3c] sm:$0xf]
        %v1019 = vld [vmem:[%s997 + $0x40] sm:$0xf]
        %v1020 = vld [vmem:[%s997 + $0x44] sm:$0xf]
        %v1021 = vld [vmem:[%s997 + $0x48] sm:$0xf]
        %v1022 = vld [vmem:[%s997 + $0x4c] sm:$0xf]
        %v1023 = vld [vmem:[%s997 + $0x50] sm:$0xf]
        %v1024 = vld [vmem:[%s997 + $0x54] sm:$0xf]
        %v1025 = vld [vmem:[%s997 + $0x58] sm:$0xf]
        %v1026 = vld [vmem:[%s997 + $0x5c] sm:$0xf]
        %v1027 = vld [vmem:[%s997 + $0x60] sm:$0xf]
        %v1028 = vld [vmem:[%s997 + $0x64] sm:$0xf]
        %v1029 = vld [vmem:[%s997 + $0x68] sm:$0xf]
        %v1030 = vld [vmem:[%s997 + $0x6c] sm:$0xf]
        %v1031 = vld [vmem:[%s997 + $0x70] sm:$0xf]
        %v1032 = vld [vmem:[%s997 + $0x74] sm:$0xf]
        %v1033 = vld [vmem:[%s997 + $0x78] sm:$0xf]
        %v1034 = vld [vmem:[%s997 + $0x7c] sm:$0xf]
        %v1035 = vld [vmem:[#allocation7] sm:$0xff]
        %v1036 = vld [vmem:[#allocation7 + $0x8] sm:$0xff]
        %v1037 = vld [vmem:[#allocation7 + $0x10] sm:$0xff]
        %v1038 = vld [vmem:[#allocation7 + $0x18] sm:$0xff]
        %v1039 = vld [vmem:[#allocation7 + $0x20] sm:$0xff]
        %v1040 = vld [vmem:[#allocation7 + $0x28] sm:$0xff]
        %v1041 = vld [vmem:[#allocation7 + $0x30] sm:$0xff]
        %v1042 = vld [vmem:[#allocation7 + $0x38] sm:$0xff]
        %v1051 = vunpack.c.l.b16 %v1035
        %v1052 = vunpack.c.h.b16 %v1035
        %v1053 = vunpack.c.l.b16 %v1036
        %v1054 = vunpack.c.h.b16 %v1036
        %v1055 = vunpack.c.l.b16 %v1037
        %v1056 = vunpack.c.h.b16 %v1037
        %v1057 = vunpack.c.l.b16 %v1038
        %v1058 = vunpack.c.h.b16 %v1038
        %v1059 = vunpack.c.l.b16 %v1039
        %v1060 = vunpack.c.h.b16 %v1039
        %v1061 = vunpack.c.l.b16 %v1040
        %v1062 = vunpack.c.h.b16 %v1040
        %v1063 = vunpack.c.l.b16 %v1041
        %v1064 = vunpack.c.h.b16 %v1041
        %v1065 = vunpack.c.l.b16 %v1042
        %v1066 = vunpack.c.h.b16 %v1042
        %v1067 = vpack.c.b16 %v1053, %v1051
        %v1068 = vpack.c.b16 %v1054, %v1052
        %v1069 = vpack.c.b16 %v1057, %v1055
        %v1070 = vpack.c.b16 %v1058, %v1056
        %v1071 = vpack.c.b16 %v1061, %v1059
        %v1072 = vpack.c.b16 %v1062, %v1060
        %v1073 = vpack.c.b16 %v1065, %v1063
        %v1074 = vpack.c.b16 %v1066, %v1064
        %v1115 = vunpack.c.l.b16 %v1003
        %v1116 = vunpack.c.l.b16 %v1004
        %v1117 = vunpack.c.l.b16 %v1005
        %v1118 = vunpack.c.l.b16 %v1006
        %v1119 = vunpack.c.l.b16 %v1007
        %v1120 = vunpack.c.l.b16 %v1008
        %v1121 = vunpack.c.l.b16 %v1009
        %v1122 = vunpack.c.l.b16 %v1010
        %v1123 = vunpack.c.l.b16 %v1011
        %v1124 = vunpack.c.l.b16 %v1012
        %v1125 = vunpack.c.l.b16 %v1013
        %v1126 = vunpack.c.l.b16 %v1014
        %v1127 = vunpack.c.l.b16 %v1015
        %v1128 = vunpack.c.l.b16 %v1016
        %v1129 = vunpack.c.l.b16 %v1017
        %v1130 = vunpack.c.l.b16 %v1018
        %v1131 = vunpack.c.l.b16 %v1019
        %v1132 = vunpack.c.l.b16 %v1020
        %v1133 = vunpack.c.l.b16 %v1021
        %v1134 = vunpack.c.l.b16 %v1022
        %v1135 = vunpack.c.l.b16 %v1023
        %v1136 = vunpack.c.l.b16 %v1024
        %v1137 = vunpack.c.l.b16 %v1025
        %v1138 = vunpack.c.l.b16 %v1026
        %v1139 = vunpack.c.l.b16 %v1027
        %v1140 = vunpack.c.l.b16 %v1028
        %v1141 = vunpack.c.l.b16 %v1029
        %v1142 = vunpack.c.l.b16 %v1030
        %v1143 = vunpack.c.l.b16 %v1031
        %v1144 = vunpack.c.l.b16 %v1032
        %v1145 = vunpack.c.l.b16 %v1033
        %v1146 = vunpack.c.l.b16 %v1034
        %v1147 = vpack.c.b16 %v1116, %v1115
        %v1148 = vpack.c.b16 %v1118, %v1117
        %v1149 = vpack.c.b16 %v1120, %v1119
        %v1150 = vpack.c.b16 %v1122, %v1121
        %v1151 = vpack.c.b16 %v1124, %v1123
        %v1152 = vpack.c.b16 %v1126, %v1125
        %v1153 = vpack.c.b16 %v1128, %v1127
        %v1154 = vpack.c.b16 %v1130, %v1129
        %v1155 = vpack.c.b16 %v1132, %v1131
        %v1156 = vpack.c.b16 %v1134, %v1133
        %v1157 = vpack.c.b16 %v1136, %v1135
        %v1158 = vpack.c.b16 %v1138, %v1137
        %v1159 = vpack.c.b16 %v1140, %v1139
        %v1160 = vpack.c.b16 %v1142, %v1141
        %v1161 = vpack.c.b16 %v1144, %v1143
        %v1162 = vpack.c.b16 %v1146, %v1145
        %1179 = vmatprep.subr.bf16.mxu0 0
        %1180 = vmatpush1.bf16.msra.mxu0 %v1154
        %1181 = vmatprep.subr.bf16.mxu0 0
        %1182 = vmatpush1.bf16.msra.mxu0 %v1153
        %1183 = vmatprep.subr.bf16.mxu0 0
        %1184 = vmatpush1.bf16.msra.mxu0 %v1152
        %1185 = vmatprep.subr.bf16.mxu0 0
        %1186 = vmatpush1.bf16.msra.mxu0 %v1151
        %1187 = vmatprep.subr.bf16.mxu0 0
        %1188 = vmatpush1.bf16.msra.mxu0 %v1150
        %1189 = vmatprep.subr.bf16.mxu0 0
        %1190 = vmatpush1.bf16.msra.mxu0 %v1149
        %1191 = vmatprep.subr.bf16.mxu0 0
        %1192 = vmatpush1.bf16.msra.mxu0 %v1148
        %1193 = vmatprep.subr.bf16.mxu0 0
        %1194 = vmatpush1.bf16.msra.mxu0 %v1147
        %1195 = vmatprep.subr.bf16.mxu0 0
        %1196 = vmatpush2.bf16.msra.mxu0 %v1162
        %1197 = vmatprep.subr.bf16.mxu0 0
        %1198 = vmatpush2.bf16.msra.mxu0 %v1161
        %1199 = vmatprep.subr.bf16.mxu0 0
        %1200 = vmatpush2.bf16.msra.mxu0 %v1160
        %1201 = vmatprep.subr.bf16.mxu0 0
        %1202 = vmatpush2.bf16.msra.mxu0 %v1159
        %1203 = vmatprep.subr.bf16.mxu0 0
        %1204 = vmatpush2.bf16.msra.mxu0 %v1158
        %1205 = vmatprep.subr.bf16.mxu0 0
        %1206 = vmatpush2.bf16.msra.mxu0 %v1157
        %1207 = vmatprep.subr.bf16.mxu0 0
        %1208 = vmatpush2.bf16.msra.mxu0 %v1156
        %1209 = vmatprep.subr.bf16.mxu0 0
        %1210 = vmatpush2.bf16.msra.mxu0 %v1155
        %1211 = vmatprep.mubr.bf16.mxu0 %v1068
        %1212 = vmatmul.mubr.bf16.gmra.mxu0 %v1067
        %v1213 = vpop.f32.mrf.mxu0
        %v1214 = vadd.f32 0.0, %v1213
        %v1215 = vpop.f32.mrf.mxu0
        %v1216 = vpop.f32.mrf.mxu0
        %v1217 = vadd.f32 0.0, %v1216
        %v1218 = vpop.f32.mrf.mxu0
        %1219 = vmatprep.mubr.bf16.mxu0 %v1070
        %1220 = vmatmul.mubr.bf16.gmra.mxu0 %v1069
        %v1221 = vpop.f32.mrf.mxu0
        %v1222 = vadd.f32 0.0, %v1221
        %v1223 = vpop.f32.mrf.mxu0
        %v1224 = vpop.f32.mrf.mxu0
        %v1225 = vadd.f32 0.0, %v1224
        %v1226 = vpop.f32.mrf.mxu0
        %1227 = vmatprep.mubr.bf16.mxu0 %v1072
        %1228 = vmatmul.mubr.bf16.gmra.mxu0 %v1071
        %v1229 = vpop.f32.mrf.mxu0
        %v1230 = vadd.f32 0.0, %v1229
        %v1231 = vpop.f32.mrf.mxu0
        %v1232 = vpop.f32.mrf.mxu0
        %v1233 = vadd.f32 0.0, %v1232
        %v1234 = vpop.f32.mrf.mxu0
        %1235 = vmatprep.mubr.bf16.mxu0 %v1074
        %1236 = vmatmul.mubr.bf16.gmra.mxu0 %v1073
        %v1237 = vpop.f32.mrf.mxu0
        %v1238 = vadd.f32 0.0, %v1237
        %v1239 = vpop.f32.mrf.mxu0
        %v1240 = vpop.f32.mrf.mxu0
        %v1241 = vadd.f32 0.0, %v1240
        %v1242 = vpop.f32.mrf.mxu0
        %1243 = vdwg.mxu0
        %v1244 = vpack.c.bf16 %v1217, %v1214
        %v1245 = vpack.c.bf16 %v1225, %v1222
        %v1246 = vpack.c.bf16 %v1233, %v1230
        %v1247 = vpack.c.bf16 %v1241, %v1238
        %v1252 = vunpack.c.l.b16 %v1244
        %v1253 = vunpack.c.h.b16 %v1244
        %v1254 = vunpack.c.l.b16 %v1245
        %v1255 = vunpack.c.h.b16 %v1245
        %v1256 = vunpack.c.l.b16 %v1246
        %v1257 = vunpack.c.h.b16 %v1246
        %v1258 = vunpack.c.l.b16 %v1247
        %v1259 = vunpack.c.h.b16 %v1247
        %v1260 = vpack.c.b16 %v1252, %v1252
        %v1261 = vpack.c.b16 %v1253, %v1253
        %v1262 = vpack.c.b16 %v1254, %v1254
        %v1263 = vpack.c.b16 %v1255, %v1255
        %v1264 = vpack.c.b16 %v1256, %v1256
        %v1265 = vpack.c.b16 %v1257, %v1257
        %v1266 = vpack.c.b16 %v1258, %v1258
        %v1267 = vpack.c.b16 %v1259, %v1259
        %vm1276 = vcmask 27648
        %1277 = vst.msk [vmem:[#allocation2] sm:$0xf] %vm1276, %v1260
        %1278 = vst.msk [vmem:[#allocation2 + $0x4] sm:$0xf] %vm1276, %v1261
        %1279 = vst.msk [vmem:[#allocation2 + $0x8] sm:$0xf] %vm1276, %v1262
        %1280 = vst.msk [vmem:[#allocation2 + $0xc] sm:$0xf] %vm1276, %v1263
        %1281 = vst.msk [vmem:[#allocation2 + $0x10] sm:$0xf] %vm1276, %v1264
        %1282 = vst.msk [vmem:[#allocation2 + $0x14] sm:$0xf] %vm1276, %v1265
        %1283 = vst.msk [vmem:[#allocation2 + $0x18] sm:$0xf] %vm1276, %v1266
        %1284 = vst.msk [vmem:[#allocation2 + $0x1c] sm:$0xf] %vm1276, %v1267
        %s1285 = scalar_lea.vmem [#allocation7], 64
        %v1286 = vld [vmem:[%s1285] sm:$0xff]
        %v1287 = vld [vmem:[%s1285 + $0x8] sm:$0xff]
        %v1288 = vld [vmem:[%s1285 + $0x10] sm:$0xff]
        %v1289 = vld [vmem:[%s1285 + $0x18] sm:$0xff]
        %v1290 = vld [vmem:[%s1285 + $0x20] sm:$0xff]
        %v1291 = vld [vmem:[%s1285 + $0x28] sm:$0xff]
        %v1292 = vld [vmem:[%s1285 + $0x30] sm:$0xff]
        %v1293 = vld [vmem:[%s1285 + $0x38] sm:$0xff]
        %v1302 = vunpack.c.l.b16 %v1286
        %v1303 = vunpack.c.h.b16 %v1286
        %v1304 = vunpack.c.l.b16 %v1287
        %v1305 = vunpack.c.h.b16 %v1287
        %v1306 = vunpack.c.l.b16 %v1288
        %v1307 = vunpack.c.h.b16 %v1288
        %v1308 = vunpack.c.l.b16 %v1289
        %v1309 = vunpack.c.h.b16 %v1289
        %v1310 = vunpack.c.l.b16 %v1290
        %v1311 = vunpack.c.h.b16 %v1290
        %v1312 = vunpack.c.l.b16 %v1291
        %v1313 = vunpack.c.h.b16 %v1291
        %v1314 = vunpack.c.l.b16 %v1292
        %v1315 = vunpack.c.h.b16 %v1292
        %v1316 = vunpack.c.l.b16 %v1293
        %v1317 = vunpack.c.h.b16 %v1293
        %v1318 = vpack.c.b16 %v1304, %v1302
        %v1319 = vpack.c.b16 %v1305, %v1303
        %v1320 = vpack.c.b16 %v1308, %v1306
        %v1321 = vpack.c.b16 %v1309, %v1307
        %v1322 = vpack.c.b16 %v1312, %v1310
        %v1323 = vpack.c.b16 %v1313, %v1311
        %v1324 = vpack.c.b16 %v1316, %v1314
        %v1325 = vpack.c.b16 %v1317, %v1315
        %1334 = vmatprep.subr.bf16.mxu0 0
        %1335 = vmatpush1.bf16.msra.mxu0 %v1154
        %1336 = vmatprep.subr.bf16.mxu0 0
        %1337 = vmatpush1.bf16.msra.mxu0 %v1153
        %1338 = vmatprep.subr.bf16.mxu0 0
        %1339 = vmatpush1.bf16.msra.mxu0 %v1152
        %1340 = vmatprep.subr.bf16.mxu0 0
        %1341 = vmatpush1.bf16.msra.mxu0 %v1151
        %1342 = vmatprep.subr.bf16.mxu0 0
        %1343 = vmatpush1.bf16.msra.mxu0 %v1150
        %1344 = vmatprep.subr.bf16.mxu0 0
        %1345 = vmatpush1.bf16.msra.mxu0 %v1149
        %1346 = vmatprep.subr.bf16.mxu0 0
        %1347 = vmatpush1.bf16.msra.mxu0 %v1148
        %1348 = vmatprep.subr.bf16.mxu0 0
        %1349 = vmatpush1.bf16.msra.mxu0 %v1147
        %1350 = vmatprep.subr.bf16.mxu0 0
        %1351 = vmatpush2.bf16.msra.mxu0 %v1162
        %1352 = vmatprep.subr.bf16.mxu0 0
        %1353 = vmatpush2.bf16.msra.mxu0 %v1161
        %1354 = vmatprep.subr.bf16.mxu0 0
        %1355 = vmatpush2.bf16.msra.mxu0 %v1160
        %1356 = vmatprep.subr.bf16.mxu0 0
        %1357 = vmatpush2.bf16.msra.mxu0 %v1159
        %1358 = vmatprep.subr.bf16.mxu0 0
        %1359 = vmatpush2.bf16.msra.mxu0 %v1158
        %1360 = vmatprep.subr.bf16.mxu0 0
        %1361 = vmatpush2.bf16.msra.mxu0 %v1157
        %1362 = vmatprep.subr.bf16.mxu0 0
        %1363 = vmatpush2.bf16.msra.mxu0 %v1156
        %1364 = vmatprep.subr.bf16.mxu0 0
        %1365 = vmatpush2.bf16.msra.mxu0 %v1155
        %1366 = vmatprep.mubr.bf16.mxu0 %v1319
        %1367 = vmatmul.mubr.bf16.gmra.mxu0 %v1318
        %v1368 = vpop.f32.mrf.mxu0
        %v1369 = vadd.f32 0.0, %v1368
        %v1370 = vpop.f32.mrf.mxu0
        %v1371 = vpop.f32.mrf.mxu0
        %v1372 = vadd.f32 0.0, %v1371
        %v1373 = vpop.f32.mrf.mxu0
        %1374 = vmatprep.mubr.bf16.mxu0 %v1321
        %1375 = vmatmul.mubr.bf16.gmra.mxu0 %v1320
        %v1376 = vpop.f32.mrf.mxu0
        %v1377 = vadd.f32 0.0, %v1376
        %v1378 = vpop.f32.mrf.mxu0
        %v1379 = vpop.f32.mrf.mxu0
        %v1380 = vadd.f32 0.0, %v1379
        %v1381 = vpop.f32.mrf.mxu0
        %1382 = vmatprep.mubr.bf16.mxu0 %v1323
        %1383 = vmatmul.mubr.bf16.gmra.mxu0 %v1322
        %v1384 = vpop.f32.mrf.mxu0
        %v1385 = vadd.f32 0.0, %v1384
        %v1386 = vpop.f32.mrf.mxu0
        %v1387 = vpop.f32.mrf.mxu0
        %v1388 = vadd.f32 0.0, %v1387
        %v1389 = vpop.f32.mrf.mxu0
        %1390 = vmatprep.mubr.bf16.mxu0 %v1325
        %1391 = vmatmul.mubr.bf16.gmra.mxu0 %v1324
        %v1392 = vpop.f32.mrf.mxu0
        %v1393 = vadd.f32 0.0, %v1392
        %v1394 = vpop.f32.mrf.mxu0
        %v1395 = vpop.f32.mrf.mxu0
        %v1396 = vadd.f32 0.0, %v1395
        %v1397 = vpop.f32.mrf.mxu0
        %1398 = vdwg.mxu0
        %v1399 = vpack.c.bf16 %v1372, %v1369
        %v1400 = vpack.c.bf16 %v1380, %v1377
        %v1401 = vpack.c.bf16 %v1388, %v1385
        %v1402 = vpack.c.bf16 %v1396, %v1393
        %v1407 = vunpack.c.l.b16 %v1399
        %v1408 = vunpack.c.h.b16 %v1399
        %v1409 = vunpack.c.l.b16 %v1400
        %v1410 = vunpack.c.h.b16 %v1400
        %v1411 = vunpack.c.l.b16 %v1401
        %v1412 = vunpack.c.h.b16 %v1401
        %v1413 = vunpack.c.l.b16 %v1402
        %v1414 = vunpack.c.h.b16 %v1402
        %v1415 = vpack.c.b16 %v1407, %v1407
        %v1416 = vpack.c.b16 %v1408, %v1408
        %v1417 = vpack.c.b16 %v1409, %v1409
        %v1418 = vpack.c.b16 %v1410, %v1410
        %v1419 = vpack.c.b16 %v1411, %v1411
        %v1420 = vpack.c.b16 %v1412, %v1412
        %v1421 = vpack.c.b16 %v1413, %v1413
        %v1422 = vpack.c.b16 %v1414, %v1414
        %1423 = vrot.lane.b32.xlu0 %v1415, 4
        %v1424 = vpop.permute.xlu0 %1423
        %1425 = vrot.lane.b32.xlu0 %v1416, 4
        %v1426 = vpop.permute.xlu0 %1425
        %1427 = vrot.lane.b32.xlu0 %v1417, 4
        %v1428 = vpop.permute.xlu0 %1427
        %1429 = vrot.lane.b32.xlu0 %v1418, 4
        %v1430 = vpop.permute.xlu0 %1429
        %1431 = vrot.lane.b32.xlu0 %v1419, 4
        %v1432 = vpop.permute.xlu0 %1431
        %1433 = vrot.lane.b32.xlu0 %v1420, 4
        %v1434 = vpop.permute.xlu0 %1433
        %1435 = vrot.lane.b32.xlu0 %v1421, 4
        %v1436 = vpop.permute.xlu0 %1435
        %1437 = vrot.lane.b32.xlu0 %v1422, 4
        %v1438 = vpop.permute.xlu0 %1437
        %vm1447 = vcmask 60448
        %1448 = vst.msk [vmem:[#allocation2] sm:$0xf] %vm1447, %v1424
        %1449 = vst.msk [vmem:[#allocation2 + $0x4] sm:$0xf] %vm1447, %v1426
        %1450 = vst.msk [vmem:[#allocation2 + $0x8] sm:$0xf] %vm1447, %v1428
        %1451 = vst.msk [vmem:[#allocation2 + $0xc] sm:$0xf] %vm1447, %v1430
        %1452 = vst.msk [vmem:[#allocation2 + $0x10] sm:$0xf] %vm1447, %v1432
        %1453 = vst.msk [vmem:[#allocation2 + $0x14] sm:$0xf] %vm1447, %v1434
        %1454 = vst.msk [vmem:[#allocation2 + $0x18] sm:$0xf] %vm1447, %v1436
        %1455 = vst.msk [vmem:[#allocation2 + $0x1c] sm:$0xf] %vm1447, %v1438
        %s1456 = scalar_lea.vmem [#allocation7], 128
        %v1457 = vld [vmem:[%s1456] sm:$0xff]
        %v1458 = vld [vmem:[%s1456 + $0x8] sm:$0xff]
        %v1459 = vld [vmem:[%s1456 + $0x10] sm:$0xff]
        %v1460 = vld [vmem:[%s1456 + $0x18] sm:$0xff]
        %v1461 = vld [vmem:[%s1456 + $0x20] sm:$0xff]
        %v1462 = vld [vmem:[%s1456 + $0x28] sm:$0xff]
        %v1463 = vld [vmem:[%s1456 + $0x30] sm:$0xff]
        %v1464 = vld [vmem:[%s1456 + $0x38] sm:$0xff]
        %v1473 = vunpack.c.l.b16 %v1457
        %v1474 = vunpack.c.h.b16 %v1457
        %v1475 = vunpack.c.l.b16 %v1458
        %v1476 = vunpack.c.h.b16 %v1458
        %v1477 = vunpack.c.l.b16 %v1459
        %v1478 = vunpack.c.h.b16 %v1459
        %v1479 = vunpack.c.l.b16 %v1460
        %v1480 = vunpack.c.h.b16 %v1460
        %v1481 = vunpack.c.l.b16 %v1461
        %v1482 = vunpack.c.h.b16 %v1461
        %v1483 = vunpack.c.l.b16 %v1462
        %v1484 = vunpack.c.h.b16 %v1462
        %v1485 = vunpack.c.l.b16 %v1463
        %v1486 = vunpack.c.h.b16 %v1463
        %v1487 = vunpack.c.l.b16 %v1464
        %v1488 = vunpack.c.h.b16 %v1464
        %v1489 = vpack.c.b16 %v1475, %v1473
        %v1490 = vpack.c.b16 %v1476, %v1474
        %v1491 = vpack.c.b16 %v1479, %v1477
        %v1492 = vpack.c.b16 %v1480, %v1478
        %v1493 = vpack.c.b16 %v1483, %v1481
        %v1494 = vpack.c.b16 %v1484, %v1482
        %v1495 = vpack.c.b16 %v1487, %v1485
        %v1496 = vpack.c.b16 %v1488, %v1486
        %1505 = vmatprep.subr.bf16.mxu0 0
        %1506 = vmatpush1.bf16.msra.mxu0 %v1154
        %1507 = vmatprep.subr.bf16.mxu0 0
        %1508 = vmatpush1.bf16.msra.mxu0 %v1153
        %1509 = vmatprep.subr.bf16.mxu0 0
        %1510 = vmatpush1.bf16.msra.mxu0 %v1152
        %1511 = vmatprep.subr.bf16.mxu0 0
        %1512 = vmatpush1.bf16.msra.mxu0 %v1151
        %1513 = vmatprep.subr.bf16.mxu0 0
        %1514 = vmatpush1.bf16.msra.mxu0 %v1150
        %1515 = vmatprep.subr.bf16.mxu0 0
        %1516 = vmatpush1.bf16.msra.mxu0 %v1149
        %1517 = vmatprep.subr.bf16.mxu0 0
        %1518 = vmatpush1.bf16.msra.mxu0 %v1148
        %1519 = vmatprep.subr.bf16.mxu0 0
        %1520 = vmatpush1.bf16.msra.mxu0 %v1147
        %1521 = vmatprep.subr.bf16.mxu0 0
        %1522 = vmatpush2.bf16.msra.mxu0 %v1162
        %1523 = vmatprep.subr.bf16.mxu0 0
        %1524 = vmatpush2.bf16.msra.mxu0 %v1161
        %1525 = vmatprep.subr.bf16.mxu0 0
        %1526 = vmatpush2.bf16.msra.mxu0 %v1160
        %1527 = vmatprep.subr.bf16.mxu0 0
        %1528 = vmatpush2.bf16.msra.mxu0 %v1159
        %1529 = vmatprep.subr.bf16.mxu0 0
        %1530 = vmatpush2.bf16.msra.mxu0 %v1158
        %1531 = vmatprep.subr.bf16.mxu0 0
        %1532 = vmatpush2.bf16.msra.mxu0 %v1157
        %1533 = vmatprep.subr.bf16.mxu0 0
        %1534 = vmatpush2.bf16.msra.mxu0 %v1156
        %1535 = vmatprep.subr.bf16.mxu0 0
        %1536 = vmatpush2.bf16.msra.mxu0 %v1155
        %1537 = vmatprep.mubr.bf16.mxu0 %v1490
        %1538 = vmatmul.mubr.bf16.gmra.mxu0 %v1489
        %v1539 = vpop.f32.mrf.mxu0
        %v1540 = vadd.f32 0.0, %v1539
        %v1541 = vpop.f32.mrf.mxu0
        %v1542 = vpop.f32.mrf.mxu0
        %v1543 = vadd.f32 0.0, %v1542
        %v1544 = vpop.f32.mrf.mxu0
        %1545 = vmatprep.mubr.bf16.mxu0 %v1492
        %1546 = vmatmul.mubr.bf16.gmra.mxu0 %v1491
        %v1547 = vpop.f32.mrf.mxu0
        %v1548 = vadd.f32 0.0, %v1547
        %v1549 = vpop.f32.mrf.mxu0
        %v1550 = vpop.f32.mrf.mxu0
        %v1551 = vadd.f32 0.0, %v1550
        %v1552 = vpop.f32.mrf.mxu0
        %1553 = vmatprep.mubr.bf16.mxu0 %v1494
        %1554 = vmatmul.mubr.bf16.gmra.mxu0 %v1493
        %v1555 = vpop.f32.mrf.mxu0
        %v1556 = vadd.f32 0.0, %v1555
        %v1557 = vpop.f32.mrf.mxu0
        %v1558 = vpop.f32.mrf.mxu0
        %v1559 = vadd.f32 0.0, %v1558
        %v1560 = vpop.f32.mrf.mxu0
        %1561 = vmatprep.mubr.bf16.mxu0 %v1496
        %1562 = vmatmul.mubr.bf16.gmra.mxu0 %v1495
        %v1563 = vpop.f32.mrf.mxu0
        %v1564 = vadd.f32 0.0, %v1563
        %v1565 = vpop.f32.mrf.mxu0
        %v1566 = vpop.f32.mrf.mxu0
        %v1567 = vadd.f32 0.0, %v1566
        %v1568 = vpop.f32.mrf.mxu0
        %1569 = vdwg.mxu0
        %v1570 = vpack.c.bf16 %v1543, %v1540
        %v1571 = vpack.c.bf16 %v1551, %v1548
        %v1572 = vpack.c.bf16 %v1559, %v1556
        %v1573 = vpack.c.bf16 %v1567, %v1564
        %v1578 = vunpack.c.l.b16 %v1570
        %v1579 = vunpack.c.h.b16 %v1570
        %v1580 = vunpack.c.l.b16 %v1571
        %v1581 = vunpack.c.h.b16 %v1571
        %v1582 = vunpack.c.l.b16 %v1572
        %v1583 = vunpack.c.h.b16 %v1572
        %v1584 = vunpack.c.l.b16 %v1573
        %v1585 = vunpack.c.h.b16 %v1573
        %v1586 = vpack.c.b16 %v1578, %v1578
        %v1587 = vpack.c.b16 %v1579, %v1579
        %v1588 = vpack.c.b16 %v1580, %v1580
        %v1589 = vpack.c.b16 %v1581, %v1581
        %v1590 = vpack.c.b16 %v1582, %v1582
        %v1591 = vpack.c.b16 %v1583, %v1583
        %v1592 = vpack.c.b16 %v1584, %v1584
        %v1593 = vpack.c.b16 %v1585, %v1585
        %1594 = vrot.lane.b32.xlu0 %v1586, 8
        %v1595 = vpop.permute.xlu0 %1594
        %1596 = vrot.lane.b32.xlu0 %v1587, 8
        %v1597 = vpop.permute.xlu0 %1596
        %1598 = vrot.lane.b32.xlu0 %v1588, 8
        %v1599 = vpop.permute.xlu0 %1598
        %1600 = vrot.lane.b32.xlu0 %v1589, 8
        %v1601 = vpop.permute.xlu0 %1600
        %1602 = vrot.lane.b32.xlu0 %v1590, 8
        %v1603 = vpop.permute.xlu0 %1602
        %1604 = vrot.lane.b32.xlu0 %v1591, 8
        %v1605 = vpop.permute.xlu0 %1604
        %1606 = vrot.lane.b32.xlu0 %v1592, 8
        %v1607 = vpop.permute.xlu0 %1606
        %1608 = vrot.lane.b32.xlu0 %v1593, 8
        %v1609 = vpop.permute.xlu0 %1608
        %vm1618 = vcmask 93248
        %1619 = vst.msk [vmem:[#allocation2] sm:$0xf] %vm1618, %v1595
        %1620 = vst.msk [vmem:[#allocation2 + $0x4] sm:$0xf] %vm1618, %v1597
        %1621 = vst.msk [vmem:[#allocation2 + $0x8] sm:$0xf] %vm1618, %v1599
        %1622 = vst.msk [vmem:[#allocation2 + $0xc] sm:$0xf] %vm1618, %v1601
        %1623 = vst.msk [vmem:[#allocation2 + $0x10] sm:$0xf] %vm1618, %v1603
        %1624 = vst.msk [vmem:[#allocation2 + $0x14] sm:$0xf] %vm1618, %v1605
        %1625 = vst.msk [vmem:[#allocation2 + $0x18] sm:$0xf] %vm1618, %v1607
        %1626 = vst.msk [vmem:[#allocation2 + $0x1c] sm:$0xf] %vm1618, %v1609
        %s1627 = scalar_lea.vmem [#allocation7], 192
        %v1628 = vld [vmem:[%s1627] sm:$0xff]
        %v1629 = vld [vmem:[%s1627 + $0x8] sm:$0xff]
        %v1630 = vld [vmem:[%s1627 + $0x10] sm:$0xff]
        %v1631 = vld [vmem:[%s1627 + $0x18] sm:$0xff]
        %v1632 = vld [vmem:[%s1627 + $0x20] sm:$0xff]
        %v1633 = vld [vmem:[%s1627 + $0x28] sm:$0xff]
        %v1634 = vld [vmem:[%s1627 + $0x30] sm:$0xff]
        %v1635 = vld [vmem:[%s1627 + $0x38] sm:$0xff]
        %v1644 = vunpack.c.l.b16 %v1628
        %v1645 = vunpack.c.h.b16 %v1628
        %v1646 = vunpack.c.l.b16 %v1629
        %v1647 = vunpack.c.h.b16 %v1629
        %v1648 = vunpack.c.l.b16 %v1630
        %v1649 = vunpack.c.h.b16 %v1630
        %v1650 = vunpack.c.l.b16 %v1631
        %v1651 = vunpack.c.h.b16 %v1631
        %v1652 = vunpack.c.l.b16 %v1632
        %v1653 = vunpack.c.h.b16 %v1632
        %v1654 = vunpack.c.l.b16 %v1633
        %v1655 = vunpack.c.h.b16 %v1633
        %v1656 = vunpack.c.l.b16 %v1634
        %v1657 = vunpack.c.h.b16 %v1634
        %v1658 = vunpack.c.l.b16 %v1635
        %v1659 = vunpack.c.h.b16 %v1635
        %v1660 = vpack.c.b16 %v1646, %v1644
        %v1661 = vpack.c.b16 %v1647, %v1645
        %v1662 = vpack.c.b16 %v1650, %v1648
        %v1663 = vpack.c.b16 %v1651, %v1649
        %v1664 = vpack.c.b16 %v1654, %v1652
        %v1665 = vpack.c.b16 %v1655, %v1653
        %v1666 = vpack.c.b16 %v1658, %v1656
        %v1667 = vpack.c.b16 %v1659, %v1657
        %1676 = vmatprep.subr.bf16.mxu0 0
        %1677 = vmatpush1.bf16.msra.mxu0 %v1154
        %1678 = vmatprep.subr.bf16.mxu0 0
        %1679 = vmatpush1.bf16.msra.mxu0 %v1153
        %1680 = vmatprep.subr.bf16.mxu0 0
        %1681 = vmatpush1.bf16.msra.mxu0 %v1152
        %1682 = vmatprep.subr.bf16.mxu0 0
        %1683 = vmatpush1.bf16.msra.mxu0 %v1151
        %1684 = vmatprep.subr.bf16.mxu0 0
        %1685 = vmatpush1.bf16.msra.mxu0 %v1150
        %1686 = vmatprep.subr.bf16.mxu0 0
        %1687 = vmatpush1.bf16.msra.mxu0 %v1149
        %1688 = vmatprep.subr.bf16.mxu0 0
        %1689 = vmatpush1.bf16.msra.mxu0 %v1148
        %1690 = vmatprep.subr.bf16.mxu0 0
        %1691 = vmatpush1.bf16.msra.mxu0 %v1147
        %1692 = vmatprep.subr.bf16.mxu0 0
        %1693 = vmatpush2.bf16.msra.mxu0 %v1162
        %1694 = vmatprep.subr.bf16.mxu0 0
        %1695 = vmatpush2.bf16.msra.mxu0 %v1161
        %1696 = vmatprep.subr.bf16.mxu0 0
        %1697 = vmatpush2.bf16.msra.mxu0 %v1160
        %1698 = vmatprep.subr.bf16.mxu0 0
        %1699 = vmatpush2.bf16.msra.mxu0 %v1159
        %1700 = vmatprep.subr.bf16.mxu0 0
        %1701 = vmatpush2.bf16.msra.mxu0 %v1158
        %1702 = vmatprep.subr.bf16.mxu0 0
        %1703 = vmatpush2.bf16.msra.mxu0 %v1157
        %1704 = vmatprep.subr.bf16.mxu0 0
        %1705 = vmatpush2.bf16.msra.mxu0 %v1156
        %1706 = vmatprep.subr.bf16.mxu0 0
        %1707 = vmatpush2.bf16.msra.mxu0 %v1155
        %1708 = vmatprep.mubr.bf16.mxu0 %v1661
        %1709 = vmatmul.mubr.bf16.gmra.mxu0 %v1660
        %v1710 = vpop.f32.mrf.mxu0
        %v1711 = vadd.f32 0.0, %v1710
        %v1712 = vpop.f32.mrf.mxu0
        %v1713 = vpop.f32.mrf.mxu0
        %v1714 = vadd.f32 0.0, %v1713
        %v1715 = vpop.f32.mrf.mxu0
        %1716 = vmatprep.mubr.bf16.mxu0 %v1663
        %1717 = vmatmul.mubr.bf16.gmra.mxu0 %v1662
        %v1718 = vpop.f32.mrf.mxu0
        %v1719 = vadd.f32 0.0, %v1718
        %v1720 = vpop.f32.mrf.mxu0
        %v1721 = vpop.f32.mrf.mxu0
        %v1722 = vadd.f32 0.0, %v1721
        %v1723 = vpop.f32.mrf.mxu0
        %1724 = vmatprep.mubr.bf16.mxu0 %v1665
        %1725 = vmatmul.mubr.bf16.gmra.mxu0 %v1664
        %v1726 = vpop.f32.mrf.mxu0
        %v1727 = vadd.f32 0.0, %v1726
        %v1728 = vpop.f32.mrf.mxu0
        %v1729 = vpop.f32.mrf.mxu0
        %v1730 = vadd.f32 0.0, %v1729
        %v1731 = vpop.f32.mrf.mxu0
        %1732 = vmatprep.mubr.bf16.mxu0 %v1667
        %1733 = vmatmul.mubr.bf16.gmra.mxu0 %v1666
        %v1734 = vpop.f32.mrf.mxu0
        %v1735 = vadd.f32 0.0, %v1734
        %v1736 = vpop.f32.mrf.mxu0
        %v1737 = vpop.f32.mrf.mxu0
        %v1738 = vadd.f32 0.0, %v1737
        %v1739 = vpop.f32.mrf.mxu0
        %1740 = vdwg.mxu0
        %v1741 = vpack.c.bf16 %v1714, %v1711
        %v1742 = vpack.c.bf16 %v1722, %v1719
        %v1743 = vpack.c.bf16 %v1730, %v1727
        %v1744 = vpack.c.bf16 %v1738, %v1735
        %v1749 = vunpack.c.l.b16 %v1741
        %v1750 = vunpack.c.h.b16 %v1741
        %v1751 = vunpack.c.l.b16 %v1742
        %v1752 = vunpack.c.h.b16 %v1742
        %v1753 = vunpack.c.l.b16 %v1743
        %v1754 = vunpack.c.h.b16 %v1743
        %v1755 = vunpack.c.l.b16 %v1744
        %v1756 = vunpack.c.h.b16 %v1744
        %v1757 = vpack.c.b16 %v1749, %v1749
        %v1758 = vpack.c.b16 %v1750, %v1750
        %v1759 = vpack.c.b16 %v1751, %v1751
        %v1760 = vpack.c.b16 %v1752, %v1752
        %v1761 = vpack.c.b16 %v1753, %v1753
        %v1762 = vpack.c.b16 %v1754, %v1754
        %v1763 = vpack.c.b16 %v1755, %v1755
        %v1764 = vpack.c.b16 %v1756, %v1756
        %1765 = vrot.lane.b32.xlu0 %v1757, 12
        %v1766 = vpop.permute.xlu0 %1765
        %1767 = vrot.lane.b32.xlu0 %v1758, 12
        %v1768 = vpop.permute.xlu0 %1767
        %1769 = vrot.lane.b32.xlu0 %v1759, 12
        %v1770 = vpop.permute.xlu0 %1769
        %1771 = vrot.lane.b32.xlu0 %v1760, 12
        %v1772 = vpop.permute.xlu0 %1771
        %1773 = vrot.lane.b32.xlu0 %v1761, 12
        %v1774 = vpop.permute.xlu0 %1773
        %1775 = vrot.lane.b32.xlu0 %v1762, 12
        %v1776 = vpop.permute.xlu0 %1775
        %1777 = vrot.lane.b32.xlu0 %v1763, 12
        %v1778 = vpop.permute.xlu0 %1777
        %1779 = vrot.lane.b32.xlu0 %v1764, 12
        %v1780 = vpop.permute.xlu0 %1779
        %vm1789 = vcmask 126048
        %1790 = vst.msk [vmem:[#allocation2] sm:$0xf] %vm1789, %v1766
        %1791 = vst.msk [vmem:[#allocation2 + $0x4] sm:$0xf] %vm1789, %v1768
        %1792 = vst.msk [vmem:[#allocation2 + $0x8] sm:$0xf] %vm1789, %v1770
        %1793 = vst.msk [vmem:[#allocation2 + $0xc] sm:$0xf] %vm1789, %v1772
        %1794 = vst.msk [vmem:[#allocation2 + $0x10] sm:$0xf] %vm1789, %v1774
        %1795 = vst.msk [vmem:[#allocation2 + $0x14] sm:$0xf] %vm1789, %v1776
        %1796 = vst.msk [vmem:[#allocation2 + $0x18] sm:$0xf] %vm1789, %v1778
        %1797 = vst.msk [vmem:[#allocation2 + $0x1c] sm:$0xf] %vm1789, %v1780
        %s1798 = scalar_lea.vmem [#allocation7], 256
        %v1799 = vld [vmem:[%s1798] sm:$0xff]
        %v1800 = vld [vmem:[%s1798 + $0x8] sm:$0xff]
        %v1801 = vld [vmem:[%s1798 + $0x10] sm:$0xff]
        %v1802 = vld [vmem:[%s1798 + $0x18] sm:$0xff]
        %v1803 = vld [vmem:[%s1798 + $0x20] sm:$0xff]
        %v1804 = vld [vmem:[%s1798 + $0x28] sm:$0xff]
        %v1805 = vld [vmem:[%s1798 + $0x30] sm:$0xff]
        %v1806 = vld [vmem:[%s1798 + $0x38] sm:$0xff]
        %v1815 = vunpack.c.l.b16 %v1799
        %v1816 = vunpack.c.h.b16 %v1799
        %v1817 = vunpack.c.l.b16 %v1800
        %v1818 = vunpack.c.h.b16 %v1800
        %v1819 = vunpack.c.l.b16 %v1801
        %v1820 = vunpack.c.h.b16 %v1801
        %v1821 = vunpack.c.l.b16 %v1802
        %v1822 = vunpack.c.h.b16 %v1802
        %v1823 = vunpack.c.l.b16 %v1803
        %v1824 = vunpack.c.h.b16 %v1803
        %v1825 = vunpack.c.l.b16 %v1804
        %v1826 = vunpack.c.h.b16 %v1804
        %v1827 = vunpack.c.l.b16 %v1805
        %v1828 = vunpack.c.h.b16 %v1805
        %v1829 = vunpack.c.l.b16 %v1806
        %v1830 = vunpack.c.h.b16 %v1806
        %v1831 = vpack.c.b16 %v1817, %v1815
        %v1832 = vpack.c.b16 %v1818, %v1816
        %v1833 = vpack.c.b16 %v1821, %v1819
        %v1834 = vpack.c.b16 %v1822, %v1820
        %v1835 = vpack.c.b16 %v1825, %v1823
        %v1836 = vpack.c.b16 %v1826, %v1824
        %v1837 = vpack.c.b16 %v1829, %v1827
        %v1838 = vpack.c.b16 %v1830, %v1828
        %1847 = vmatprep.subr.bf16.mxu0 0
        %1848 = vmatpush1.bf16.msra.mxu0 %v1154
        %1849 = vmatprep.subr.bf16.mxu0 0
        %1850 = vmatpush1.bf16.msra.mxu0 %v1153
        %1851 = vmatprep.subr.bf16.mxu0 0
        %1852 = vmatpush1.bf16.msra.mxu0 %v1152
        %1853 = vmatprep.subr.bf16.mxu0 0
        %1854 = vmatpush1.bf16.msra.mxu0 %v1151
        %1855 = vmatprep.subr.bf16.mxu0 0
        %1856 = vmatpush1.bf16.msra.mxu0 %v1150
        %1857 = vmatprep.subr.bf16.mxu0 0
        %1858 = vmatpush1.bf16.msra.mxu0 %v1149
        %1859 = vmatprep.subr.bf16.mxu0 0
        %1860 = vmatpush1.bf16.msra.mxu0 %v1148
        %1861 = vmatprep.subr.bf16.mxu0 0
        %1862 = vmatpush1.bf16.msra.mxu0 %v1147
        %1863 = vmatprep.subr.bf16.mxu0 0
        %1864 = vmatpush2.bf16.msra.mxu0 %v1162
        %1865 = vmatprep.subr.bf16.mxu0 0
        %1866 = vmatpush2.bf16.msra.mxu0 %v1161
        %1867 = vmatprep.subr.bf16.mxu0 0
        %1868 = vmatpush2.bf16.msra.mxu0 %v1160
        %1869 = vmatprep.subr.bf16.mxu0 0
        %1870 = vmatpush2.bf16.msra.mxu0 %v1159
        %1871 = vmatprep.subr.bf16.mxu0 0
        %1872 = vmatpush2.bf16.msra.mxu0 %v1158
        %1873 = vmatprep.subr.bf16.mxu0 0
        %1874 = vmatpush2.bf16.msra.mxu0 %v1157
        %1875 = vmatprep.subr.bf16.mxu0 0
        %1876 = vmatpush2.bf16.msra.mxu0 %v1156
        %1877 = vmatprep.subr.bf16.mxu0 0
        %1878 = vmatpush2.bf16.msra.mxu0 %v1155
        %1879 = vmatprep.mubr.bf16.mxu0 %v1832
        %1880 = vmatmul.mubr.bf16.gmra.mxu0 %v1831
        %v1881 = vpop.f32.mrf.mxu0
        %v1882 = vadd.f32 0.0, %v1881
        %v1883 = vpop.f32.mrf.mxu0
        %v1884 = vpop.f32.mrf.mxu0
        %v1885 = vadd.f32 0.0, %v1884
        %v1886 = vpop.f32.mrf.mxu0
        %1887 = vmatprep.mubr.bf16.mxu0 %v1834
        %1888 = vmatmul.mubr.bf16.gmra.mxu0 %v1833
        %v1889 = vpop.f32.mrf.mxu0
        %v1890 = vadd.f32 0.0, %v1889
        %v1891 = vpop.f32.mrf.mxu0
        %v1892 = vpop.f32.mrf.mxu0
        %v1893 = vadd.f32 0.0, %v1892
        %v1894 = vpop.f32.mrf.mxu0
        %1895 = vmatprep.mubr.bf16.mxu0 %v1836
        %1896 = vmatmul.mubr.bf16.gmra.mxu0 %v1835
        %v1897 = vpop.f32.mrf.mxu0
        %v1898 = vadd.f32 0.0, %v1897
        %v1899 = vpop.f32.mrf.mxu0
        %v1900 = vpop.f32.mrf.mxu0
        %v1901 = vadd.f32 0.0, %v1900
        %v1902 = vpop.f32.mrf.mxu0
        %1903 = vmatprep.mubr.bf16.mxu0 %v1838
        %1904 = vmatmul.mubr.bf16.gmra.mxu0 %v1837
        %v1905 = vpop.f32.mrf.mxu0
        %v1906 = vadd.f32 0.0, %v1905
        %v1907 = vpop.f32.mrf.mxu0
        %v1908 = vpop.f32.mrf.mxu0
        %v1909 = vadd.f32 0.0, %v1908
        %v1910 = vpop.f32.mrf.mxu0
        %1911 = vdwg.mxu0
        %v1912 = vpack.c.bf16 %v1885, %v1882
        %v1913 = vpack.c.bf16 %v1893, %v1890
        %v1914 = vpack.c.bf16 %v1901, %v1898
        %v1915 = vpack.c.bf16 %v1909, %v1906
        %v1920 = vunpack.c.l.b16 %v1912
        %v1921 = vunpack.c.h.b16 %v1912
        %v1922 = vunpack.c.l.b16 %v1913
        %v1923 = vunpack.c.h.b16 %v1913
        %v1924 = vunpack.c.l.b16 %v1914
        %v1925 = vunpack.c.h.b16 %v1914
        %v1926 = vunpack.c.l.b16 %v1915
        %v1927 = vunpack.c.h.b16 %v1915
        %v1928 = vpack.c.b16 %v1920, %v1920
        %v1929 = vpack.c.b16 %v1921, %v1921
        %v1930 = vpack.c.b16 %v1922, %v1922
        %v1931 = vpack.c.b16 %v1923, %v1923
        %v1932 = vpack.c.b16 %v1924, %v1924
        %v1933 = vpack.c.b16 %v1925, %v1925
        %v1934 = vpack.c.b16 %v1926, %v1926
        %v1935 = vpack.c.b16 %v1927, %v1927
        %1936 = vrot.lane.b32.xlu0 %v1928, 16
        %v1937 = vpop.permute.xlu0 %1936
        %1938 = vrot.lane.b32.xlu0 %v1929, 16
        %v1939 = vpop.permute.xlu0 %1938
        %1940 = vrot.lane.b32.xlu0 %v1930, 16
        %v1941 = vpop.permute.xlu0 %1940
        %1942 = vrot.lane.b32.xlu0 %v1931, 16
        %v1943 = vpop.permute.xlu0 %1942
        %1944 = vrot.lane.b32.xlu0 %v1932, 16
        %v1945 = vpop.permute.xlu0 %1944
        %1946 = vrot.lane.b32.xlu0 %v1933, 16
        %v1947 = vpop.permute.xlu0 %1946
        %1948 = vrot.lane.b32.xlu0 %v1934, 16
        %v1949 = vpop.permute.xlu0 %1948
        %1950 = vrot.lane.b32.xlu0 %v1935, 16
        %v1951 = vpop.permute.xlu0 %1950
        %vm1960 = vcmask 158848
        %1961 = vst.msk [vmem:[#allocation2] sm:$0xf] %vm1960, %v1937
        %1962 = vst.msk [vmem:[#allocation2 + $0x4] sm:$0xf] %vm1960, %v1939
        %1963 = vst.msk [vmem:[#allocation2 + $0x8] sm:$0xf] %vm1960, %v1941
        %1964 = vst.msk [vmem:[#allocation2 + $0xc] sm:$0xf] %vm1960, %v1943
        %1965 = vst.msk [vmem:[#allocation2 + $0x10] sm:$0xf] %vm1960, %v1945
        %1966 = vst.msk [vmem:[#allocation2 + $0x14] sm:$0xf] %vm1960, %v1947
        %1967 = vst.msk [vmem:[#allocation2 + $0x18] sm:$0xf] %vm1960, %v1949
        %1968 = vst.msk [vmem:[#allocation2 + $0x1c] sm:$0xf] %vm1960, %v1951
        %s1969 = scalar_lea.vmem [#allocation7], 320
        %v1970 = vld [vmem:[%s1969] sm:$0xff]
        %v1971 = vld [vmem:[%s1969 + $0x8] sm:$0xff]
        %v1972 = vld [vmem:[%s1969 + $0x10] sm:$0xff]
        %v1973 = vld [vmem:[%s1969 + $0x18] sm:$0xff]
        %v1974 = vld [vmem:[%s1969 + $0x20] sm:$0xff]
        %v1975 = vld [vmem:[%s1969 + $0x28] sm:$0xff]
        %v1976 = vld [vmem:[%s1969 + $0x30] sm:$0xff]
        %v1977 = vld [vmem:[%s1969 + $0x38] sm:$0xff]
        %v1986 = vunpack.c.l.b16 %v1970
        %v1987 = vunpack.c.h.b16 %v1970
        %v1988 = vunpack.c.l.b16 %v1971
        %v1989 = vunpack.c.h.b16 %v1971
        %v1990 = vunpack.c.l.b16 %v1972
        %v1991 = vunpack.c.h.b16 %v1972
        %v1992 = vunpack.c.l.b16 %v1973
        %v1993 = vunpack.c.h.b16 %v1973
        %v1994 = vunpack.c.l.b16 %v1974
        %v1995 = vunpack.c.h.b16 %v1974
        %v1996 = vunpack.c.l.b16 %v1975
        %v1997 = vunpack.c.h.b16 %v1975
        %v1998 = vunpack.c.l.b16 %v1976
        %v1999 = vunpack.c.h.b16 %v1976
        %v2000 = vunpack.c.l.b16 %v1977
        %v2001 = vunpack.c.h.b16 %v1977
        %v2002 = vpack.c.b16 %v1988, %v1986
        %v2003 = vpack.c.b16 %v1989, %v1987
        %v2004 = vpack.c.b16 %v1992, %v1990
        %v2005 = vpack.c.b16 %v1993, %v1991
        %v2006 = vpack.c.b16 %v1996, %v1994
        %v2007 = vpack.c.b16 %v1997, %v1995
        %v2008 = vpack.c.b16 %v2000, %v1998
        %v2009 = vpack.c.b16 %v2001, %v1999
        %2018 = vmatprep.subr.bf16.mxu0 0
        %2019 = vmatpush1.bf16.msra.mxu0 %v1154
        %2020 = vmatprep.subr.bf16.mxu0 0
        %2021 = vmatpush1.bf16.msra.mxu0 %v1153
        %2022 = vmatprep.subr.bf16.mxu0 0
        %2023 = vmatpush1.bf16.msra.mxu0 %v1152
        %2024 = vmatprep.subr.bf16.mxu0 0
        %2025 = vmatpush1.bf16.msra.mxu0 %v1151
        %2026 = vmatprep.subr.bf16.mxu0 0
        %2027 = vmatpush1.bf16.msra.mxu0 %v1150
        %2028 = vmatprep.subr.bf16.mxu0 0
        %2029 = vmatpush1.bf16.msra.mxu0 %v1149
        %2030 = vmatprep.subr.bf16.mxu0 0
        %2031 = vmatpush1.bf16.msra.mxu0 %v1148
        %2032 = vmatprep.subr.bf16.mxu0 0
        %2033 = vmatpush1.bf16.msra.mxu0 %v1147
        %2034 = vmatprep.subr.bf16.mxu0 0
        %2035 = vmatpush2.bf16.msra.mxu0 %v1162
        %2036 = vmatprep.subr.bf16.mxu0 0
        %2037 = vmatpush2.bf16.msra.mxu0 %v1161
        %2038 = vmatprep.subr.bf16.mxu0 0
        %2039 = vmatpush2.bf16.msra.mxu0 %v1160
        %2040 = vmatprep.subr.bf16.mxu0 0
        %2041 = vmatpush2.bf16.msra.mxu0 %v1159
        %2042 = vmatprep.subr.bf16.mxu0 0
        %2043 = vmatpush2.bf16.msra.mxu0 %v1158
        %2044 = vmatprep.subr.bf16.mxu0 0
        %2045 = vmatpush2.bf16.msra.mxu0 %v1157
        %2046 = vmatprep.subr.bf16.mxu0 0
        %2047 = vmatpush2.bf16.msra.mxu0 %v1156
        %2048 = vmatprep.subr.bf16.mxu0 0
        %2049 = vmatpush2.bf16.msra.mxu0 %v1155
        %2050 = vmatprep.mubr.bf16.mxu0 %v2003
        %2051 = vmatmul.mubr.bf16.gmra.mxu0 %v2002
        %v2052 = vpop.f32.mrf.mxu0
        %v2053 = vadd.f32 0.0, %v2052
        %v2054 = vpop.f32.mrf.mxu0
        %v2055 = vpop.f32.mrf.mxu0
        %v2056 = vadd.f32 0.0, %v2055
        %v2057 = vpop.f32.mrf.mxu0
        %2058 = vmatprep.mubr.bf16.mxu0 %v2005
        %2059 = vmatmul.mubr.bf16.gmra.mxu0 %v2004
        %v2060 = vpop.f32.mrf.mxu0
        %v2061 = vadd.f32 0.0, %v2060
        %v2062 = vpop.f32.mrf.mxu0
        %v2063 = vpop.f32.mrf.mxu0
        %v2064 = vadd.f32 0.0, %v2063
        %v2065 = vpop.f32.mrf.mxu0
        %2066 = vmatprep.mubr.bf16.mxu0 %v2007
        %2067 = vmatmul.mubr.bf16.gmra.mxu0 %v2006
        %v2068 = vpop.f32.mrf.mxu0
        %v2069 = vadd.f32 0.0, %v2068
        %v2070 = vpop.f32.mrf.mxu0
        %v2071 = vpop.f32.mrf.mxu0
        %v2072 = vadd.f32 0.0, %v2071
        %v2073 = vpop.f32.mrf.mxu0
        %2074 = vmatprep.mubr.bf16.mxu0 %v2009
        %2075 = vmatmul.mubr.bf16.gmra.mxu0 %v2008
        %v2076 = vpop.f32.mrf.mxu0
        %v2077 = vadd.f32 0.0, %v2076
        %v2078 = vpop.f32.mrf.mxu0
        %v2079 = vpop.f32.mrf.mxu0
        %v2080 = vadd.f32 0.0, %v2079
        %v2081 = vpop.f32.mrf.mxu0
        %2082 = vdwg.mxu0
        %v2083 = vpack.c.bf16 %v2056, %v2053
        %v2084 = vpack.c.bf16 %v2064, %v2061
        %v2085 = vpack.c.bf16 %v2072, %v2069
        %v2086 = vpack.c.bf16 %v2080, %v2077
        %v2091 = vunpack.c.l.b16 %v2083
        %v2092 = vunpack.c.h.b16 %v2083
        %v2093 = vunpack.c.l.b16 %v2084
        %v2094 = vunpack.c.h.b16 %v2084
        %v2095 = vunpack.c.l.b16 %v2085
        %v2096 = vunpack.c.h.b16 %v2085
        %v2097 = vunpack.c.l.b16 %v2086
        %v2098 = vunpack.c.h.b16 %v2086
        %v2099 = vpack.c.b16 %v2091, %v2091
        %v2100 = vpack.c.b16 %v2092, %v2092
        %v2101 = vpack.c.b16 %v2093, %v2093
        %v2102 = vpack.c.b16 %v2094, %v2094
        %v2103 = vpack.c.b16 %v2095, %v2095
        %v2104 = vpack.c.b16 %v2096, %v2096
        %v2105 = vpack.c.b16 %v2097, %v2097
        %v2106 = vpack.c.b16 %v2098, %v2098
        %2107 = vrot.lane.b32.xlu0 %v2099, 20
        %v2108 = vpop.permute.xlu0 %2107
        %2109 = vrot.lane.b32.xlu0 %v2100, 20
        %v2110 = vpop.permute.xlu0 %2109
        %2111 = vrot.lane.b32.xlu0 %v2101, 20
        %v2112 = vpop.permute.xlu0 %2111
        %2113 = vrot.lane.b32.xlu0 %v2102, 20
        %v2114 = vpop.permute.xlu0 %2113
        %2115 = vrot.lane.b32.xlu0 %v2103, 20
        %v2116 = vpop.permute.xlu0 %2115
        %2117 = vrot.lane.b32.xlu0 %v2104, 20
        %v2118 = vpop.permute.xlu0 %2117
        %2119 = vrot.lane.b32.xlu0 %v2105, 20
        %v2120 = vpop.permute.xlu0 %2119
        %2121 = vrot.lane.b32.xlu0 %v2106, 20
        %v2122 = vpop.permute.xlu0 %2121
        %vm2131 = vcmask 191648
        %2132 = vst.msk [vmem:[#allocation2] sm:$0xf] %vm2131, %v2108
        %2133 = vst.msk [vmem:[#allocation2 + $0x4] sm:$0xf] %vm2131, %v2110
        %2134 = vst.msk [vmem:[#allocation2 + $0x8] sm:$0xf] %vm2131, %v2112
        %2135 = vst.msk [vmem:[#allocation2 + $0xc] sm:$0xf] %vm2131, %v2114
        %2136 = vst.msk [vmem:[#allocation2 + $0x10] sm:$0xf] %vm2131, %v2116
        %2137 = vst.msk [vmem:[#allocation2 + $0x14] sm:$0xf] %vm2131, %v2118
        %2138 = vst.msk [vmem:[#allocation2 + $0x18] sm:$0xf] %vm2131, %v2120
        %2139 = vst.msk [vmem:[#allocation2 + $0x1c] sm:$0xf] %vm2131, %v2122
        %s2140 = scalar_lea.vmem [#allocation7], 384
        %v2141 = vld [vmem:[%s2140] sm:$0xff]
        %v2142 = vld [vmem:[%s2140 + $0x8] sm:$0xff]
        %v2143 = vld [vmem:[%s2140 + $0x10] sm:$0xff]
        %v2144 = vld [vmem:[%s2140 + $0x18] sm:$0xff]
        %v2145 = vld [vmem:[%s2140 + $0x20] sm:$0xff]
        %v2146 = vld [vmem:[%s2140 + $0x28] sm:$0xff]
        %v2147 = vld [vmem:[%s2140 + $0x30] sm:$0xff]
        %v2148 = vld [vmem:[%s2140 + $0x38] sm:$0xff]
        %v2157 = vunpack.c.l.b16 %v2141
        %v2158 = vunpack.c.h.b16 %v2141
        %v2159 = vunpack.c.l.b16 %v2142
        %v2160 = vunpack.c.h.b16 %v2142
        %v2161 = vunpack.c.l.b16 %v2143
        %v2162 = vunpack.c.h.b16 %v2143
        %v2163 = vunpack.c.l.b16 %v2144
        %v2164 = vunpack.c.h.b16 %v2144
        %v2165 = vunpack.c.l.b16 %v2145
        %v2166 = vunpack.c.h.b16 %v2145
        %v2167 = vunpack.c.l.b16 %v2146
        %v2168 = vunpack.c.h.b16 %v2146
        %v2169 = vunpack.c.l.b16 %v2147
        %v2170 = vunpack.c.h.b16 %v2147
        %v2171 = vunpack.c.l.b16 %v2148
        %v2172 = vunpack.c.h.b16 %v2148
        %v2173 = vpack.c.b16 %v2159, %v2157
        %v2174 = vpack.c.b16 %v2160, %v2158
        %v2175 = vpack.c.b16 %v2163, %v2161
        %v2176 = vpack.c.b16 %v2164, %v2162
        %v2177 = vpack.c.b16 %v2167, %v2165
        %v2178 = vpack.c.b16 %v2168, %v2166
        %v2179 = vpack.c.b16 %v2171, %v2169
        %v2180 = vpack.c.b16 %v2172, %v2170
        %2189 = vmatprep.subr.bf16.mxu0 0
        %2190 = vmatpush1.bf16.msra.mxu0 %v1154
        %2191 = vmatprep.subr.bf16.mxu0 0
        %2192 = vmatpush1.bf16.msra.mxu0 %v1153
        %2193 = vmatprep.subr.bf16.mxu0 0
        %2194 = vmatpush1.bf16.msra.mxu0 %v1152
        %2195 = vmatprep.subr.bf16.mxu0 0
        %2196 = vmatpush1.bf16.msra.mxu0 %v1151
        %2197 = vmatprep.subr.bf16.mxu0 0
        %2198 = vmatpush1.bf16.msra.mxu0 %v1150
        %2199 = vmatprep.subr.bf16.mxu0 0
        %2200 = vmatpush1.bf16.msra.mxu0 %v1149
        %2201 = vmatprep.subr.bf16.mxu0 0
        %2202 = vmatpush1.bf16.msra.mxu0 %v1148
        %2203 = vmatprep.subr.bf16.mxu0 0
        %2204 = vmatpush1.bf16.msra.mxu0 %v1147
        %2205 = vmatprep.subr.bf16.mxu0 0
        %2206 = vmatpush2.bf16.msra.mxu0 %v1162
        %2207 = vmatprep.subr.bf16.mxu0 0
        %2208 = vmatpush2.bf16.msra.mxu0 %v1161
        %2209 = vmatprep.subr.bf16.mxu0 0
        %2210 = vmatpush2.bf16.msra.mxu0 %v1160
        %2211 = vmatprep.subr.bf16.mxu0 0
        %2212 = vmatpush2.bf16.msra.mxu0 %v1159
        %2213 = vmatprep.subr.bf16.mxu0 0
        %2214 = vmatpush2.bf16.msra.mxu0 %v1158
        %2215 = vmatprep.subr.bf16.mxu0 0
        %2216 = vmatpush2.bf16.msra.mxu0 %v1157
        %2217 = vmatprep.subr.bf16.mxu0 0
        %2218 = vmatpush2.bf16.msra.mxu0 %v1156
        %2219 = vmatprep.subr.bf16.mxu0 0
        %2220 = vmatpush2.bf16.msra.mxu0 %v1155
        %2221 = vmatprep.mubr.bf16.mxu0 %v2174
        %2222 = vmatmul.mubr.bf16.gmra.mxu0 %v2173
        %v2223 = vpop.f32.mrf.mxu0
        %v2224 = vadd.f32 0.0, %v2223
        %v2225 = vpop.f32.mrf.mxu0
        %v2226 = vpop.f32.mrf.mxu0
        %v2227 = vadd.f32 0.0, %v2226
        %v2228 = vpop.f32.mrf.mxu0
        %2229 = vmatprep.mubr.bf16.mxu0 %v2176
        %2230 = vmatmul.mubr.bf16.gmra.mxu0 %v2175
        %v2231 = vpop.f32.mrf.mxu0
        %v2232 = vadd.f32 0.0, %v2231
        %v2233 = vpop.f32.mrf.mxu0
        %v2234 = vpop.f32.mrf.mxu0
        %v2235 = vadd.f32 0.0, %v2234
        %v2236 = vpop.f32.mrf.mxu0
        %2237 = vmatprep.mubr.bf16.mxu0 %v2178
        %2238 = vmatmul.mubr.bf16.gmra.mxu0 %v2177
        %v2239 = vpop.f32.mrf.mxu0
        %v2240 = vadd.f32 0.0, %v2239
        %v2241 = vpop.f32.mrf.mxu0
        %v2242 = vpop.f32.mrf.mxu0
        %v2243 = vadd.f32 0.0, %v2242
        %v2244 = vpop.f32.mrf.mxu0
        %2245 = vmatprep.mubr.bf16.mxu0 %v2180
        %2246 = vmatmul.mubr.bf16.gmra.mxu0 %v2179
        %v2247 = vpop.f32.mrf.mxu0
        %v2248 = vadd.f32 0.0, %v2247
        %v2249 = vpop.f32.mrf.mxu0
        %v2250 = vpop.f32.mrf.mxu0
        %v2251 = vadd.f32 0.0, %v2250
        %v2252 = vpop.f32.mrf.mxu0
        %2253 = vdwg.mxu0
        %v2254 = vpack.c.bf16 %v2227, %v2224
        %v2255 = vpack.c.bf16 %v2235, %v2232
        %v2256 = vpack.c.bf16 %v2243, %v2240
        %v2257 = vpack.c.bf16 %v2251, %v2248
        %v2262 = vunpack.c.l.b16 %v2254
        %v2263 = vunpack.c.h.b16 %v2254
        %v2264 = vunpack.c.l.b16 %v2255
        %v2265 = vunpack.c.h.b16 %v2255
        %v2266 = vunpack.c.l.b16 %v2256
        %v2267 = vunpack.c.h.b16 %v2256
        %v2268 = vunpack.c.l.b16 %v2257
        %v2269 = vunpack.c.h.b16 %v2257
        %v2270 = vpack.c.b16 %v2262, %v2262
        %v2271 = vpack.c.b16 %v2263, %v2263
        %v2272 = vpack.c.b16 %v2264, %v2264
        %v2273 = vpack.c.b16 %v2265, %v2265
        %v2274 = vpack.c.b16 %v2266, %v2266
        %v2275 = vpack.c.b16 %v2267, %v2267
        %v2276 = vpack.c.b16 %v2268, %v2268
        %v2277 = vpack.c.b16 %v2269, %v2269
        %2278 = vrot.lane.b32.xlu0 %v2270, 24
        %v2279 = vpop.permute.xlu0 %2278
        %2280 = vrot.lane.b32.xlu0 %v2271, 24
        %v2281 = vpop.permute.xlu0 %2280
        %2282 = vrot.lane.b32.xlu0 %v2272, 24
        %v2283 = vpop.permute.xlu0 %2282
        %2284 = vrot.lane.b32.xlu0 %v2273, 24
        %v2285 = vpop.permute.xlu0 %2284
        %2286 = vrot.lane.b32.xlu0 %v2274, 24
        %v2287 = vpop.permute.xlu0 %2286
        %2288 = vrot.lane.b32.xlu0 %v2275, 24
        %v2289 = vpop.permute.xlu0 %2288
        %2290 = vrot.lane.b32.xlu0 %v2276, 24
        %v2291 = vpop.permute.xlu0 %2290
        %2292 = vrot.lane.b32.xlu0 %v2277, 24
        %v2293 = vpop.permute.xlu0 %2292
        %vm2302 = vcmask 224448
        %2303 = vst.msk [vmem:[#allocation2] sm:$0xf] %vm2302, %v2279
        %2304 = vst.msk [vmem:[#allocation2 + $0x4] sm:$0xf] %vm2302, %v2281
        %2305 = vst.msk [vmem:[#allocation2 + $0x8] sm:$0xf] %vm2302, %v2283
        %2306 = vst.msk [vmem:[#allocation2 + $0xc] sm:$0xf] %vm2302, %v2285
        %2307 = vst.msk [vmem:[#allocation2 + $0x10] sm:$0xf] %vm2302, %v2287
        %2308 = vst.msk [vmem:[#allocation2 + $0x14] sm:$0xf] %vm2302, %v2289
        %2309 = vst.msk [vmem:[#allocation2 + $0x18] sm:$0xf] %vm2302, %v2291
        %2310 = vst.msk [vmem:[#allocation2 + $0x1c] sm:$0xf] %vm2302, %v2293
        %s2311 = scalar_lea.vmem [#allocation7], 448
        %v2312 = vld [vmem:[%s2311] sm:$0xff]
        %v2313 = vld [vmem:[%s2311 + $0x8] sm:$0xff]
        %v2314 = vld [vmem:[%s2311 + $0x10] sm:$0xff]
        %v2315 = vld [vmem:[%s2311 + $0x18] sm:$0xff]
        %v2316 = vld [vmem:[%s2311 + $0x20] sm:$0xff]
        %v2317 = vld [vmem:[%s2311 + $0x28] sm:$0xff]
        %v2318 = vld [vmem:[%s2311 + $0x30] sm:$0xff]
        %v2319 = vld [vmem:[%s2311 + $0x38] sm:$0xff]
        %v2328 = vunpack.c.l.b16 %v2312
        %v2329 = vunpack.c.h.b16 %v2312
        %v2330 = vunpack.c.l.b16 %v2313
        %v2331 = vunpack.c.h.b16 %v2313
        %v2332 = vunpack.c.l.b16 %v2314
        %v2333 = vunpack.c.h.b16 %v2314
        %v2334 = vunpack.c.l.b16 %v2315
        %v2335 = vunpack.c.h.b16 %v2315
        %v2336 = vunpack.c.l.b16 %v2316
        %v2337 = vunpack.c.h.b16 %v2316
        %v2338 = vunpack.c.l.b16 %v2317
        %v2339 = vunpack.c.h.b16 %v2317
        %v2340 = vunpack.c.l.b16 %v2318
        %v2341 = vunpack.c.h.b16 %v2318
        %v2342 = vunpack.c.l.b16 %v2319
        %v2343 = vunpack.c.h.b16 %v2319
        %v2344 = vpack.c.b16 %v2330, %v2328
        %v2345 = vpack.c.b16 %v2331, %v2329
        %v2346 = vpack.c.b16 %v2334, %v2332
        %v2347 = vpack.c.b16 %v2335, %v2333
        %v2348 = vpack.c.b16 %v2338, %v2336
        %v2349 = vpack.c.b16 %v2339, %v2337
        %v2350 = vpack.c.b16 %v2342, %v2340
        %v2351 = vpack.c.b16 %v2343, %v2341
        %2360 = vmatprep.subr.bf16.mxu0 0
        %2361 = vmatpush1.bf16.msra.mxu0 %v1154
        %2362 = vmatprep.subr.bf16.mxu0 0
        %2363 = vmatpush1.bf16.msra.mxu0 %v1153
        %2364 = vmatprep.subr.bf16.mxu0 0
        %2365 = vmatpush1.bf16.msra.mxu0 %v1152
        %2366 = vmatprep.subr.bf16.mxu0 0
        %2367 = vmatpush1.bf16.msra.mxu0 %v1151
        %2368 = vmatprep.subr.bf16.mxu0 0
        %2369 = vmatpush1.bf16.msra.mxu0 %v1150
        %2370 = vmatprep.subr.bf16.mxu0 0
        %2371 = vmatpush1.bf16.msra.mxu0 %v1149
        %2372 = vmatprep.subr.bf16.mxu0 0
        %2373 = vmatpush1.bf16.msra.mxu0 %v1148
        %2374 = vmatprep.subr.bf16.mxu0 0
        %2375 = vmatpush1.bf16.msra.mxu0 %v1147
        %2376 = vmatprep.subr.bf16.mxu0 0
        %2377 = vmatpush2.bf16.msra.mxu0 %v1162
        %2378 = vmatprep.subr.bf16.mxu0 0
        %2379 = vmatpush2.bf16.msra.mxu0 %v1161
        %2380 = vmatprep.subr.bf16.mxu0 0
        %2381 = vmatpush2.bf16.msra.mxu0 %v1160
        %2382 = vmatprep.subr.bf16.mxu0 0
        %2383 = vmatpush2.bf16.msra.mxu0 %v1159
        %2384 = vmatprep.subr.bf16.mxu0 0
        %2385 = vmatpush2.bf16.msra.mxu0 %v1158
        %2386 = vmatprep.subr.bf16.mxu0 0
        %2387 = vmatpush2.bf16.msra.mxu0 %v1157
        %2388 = vmatprep.subr.bf16.mxu0 0
        %2389 = vmatpush2.bf16.msra.mxu0 %v1156
        %2390 = vmatprep.subr.bf16.mxu0 0
        %2391 = vmatpush2.bf16.msra.mxu0 %v1155
        %2392 = vmatprep.mubr.bf16.mxu0 %v2345
        %2393 = vmatmul.mubr.bf16.gmra.mxu0 %v2344
        %v2394 = vpop.f32.mrf.mxu0
        %v2395 = vadd.f32 0.0, %v2394
        %v2396 = vpop.f32.mrf.mxu0
        %v2397 = vpop.f32.mrf.mxu0
        %v2398 = vadd.f32 0.0, %v2397
        %v2399 = vpop.f32.mrf.mxu0
        %2400 = vmatprep.mubr.bf16.mxu0 %v2347
        %2401 = vmatmul.mubr.bf16.gmra.mxu0 %v2346
        %v2402 = vpop.f32.mrf.mxu0
        %v2403 = vadd.f32 0.0, %v2402
        %v2404 = vpop.f32.mrf.mxu0
        %v2405 = vpop.f32.mrf.mxu0
        %v2406 = vadd.f32 0.0, %v2405
        %v2407 = vpop.f32.mrf.mxu0
        %2408 = vmatprep.mubr.bf16.mxu0 %v2349
        %2409 = vmatmul.mubr.bf16.gmra.mxu0 %v2348
        %v2410 = vpop.f32.mrf.mxu0
        %v2411 = vadd.f32 0.0, %v2410
        %v2412 = vpop.f32.mrf.mxu0
        %v2413 = vpop.f32.mrf.mxu0
        %v2414 = vadd.f32 0.0, %v2413
        %v2415 = vpop.f32.mrf.mxu0
        %2416 = vmatprep.mubr.bf16.mxu0 %v2351
        %2417 = vmatmul.mubr.bf16.gmra.mxu0 %v2350
        %v2418 = vpop.f32.mrf.mxu0
        %v2419 = vadd.f32 0.0, %v2418
        %v2420 = vpop.f32.mrf.mxu0
        %v2421 = vpop.f32.mrf.mxu0
        %v2422 = vadd.f32 0.0, %v2421
        %v2423 = vpop.f32.mrf.mxu0
        %2424 = vdwg.mxu0
        %v2425 = vpack.c.bf16 %v2398, %v2395
        %v2426 = vpack.c.bf16 %v2406, %v2403
        %v2427 = vpack.c.bf16 %v2414, %v2411
        %v2428 = vpack.c.bf16 %v2422, %v2419
        %v2433 = vunpack.c.l.b16 %v2425
        %v2434 = vunpack.c.h.b16 %v2425
        %v2435 = vunpack.c.l.b16 %v2426
        %v2436 = vunpack.c.h.b16 %v2426
        %v2437 = vunpack.c.l.b16 %v2427
        %v2438 = vunpack.c.h.b16 %v2427
        %v2439 = vunpack.c.l.b16 %v2428
        %v2440 = vunpack.c.h.b16 %v2428
        %v2441 = vpack.c.b16 %v2433, %v2433
        %v2442 = vpack.c.b16 %v2434, %v2434
        %v2443 = vpack.c.b16 %v2435, %v2435
        %v2444 = vpack.c.b16 %v2436, %v2436
        %v2445 = vpack.c.b16 %v2437, %v2437
        %v2446 = vpack.c.b16 %v2438, %v2438
        %v2447 = vpack.c.b16 %v2439, %v2439
        %v2448 = vpack.c.b16 %v2440, %v2440
        %2449 = vrot.lane.b32.xlu0 %v2441, 28
        %v2450 = vpop.permute.xlu0 %2449
        %2451 = vrot.lane.b32.xlu0 %v2442, 28
        %v2452 = vpop.permute.xlu0 %2451
        %2453 = vrot.lane.b32.xlu0 %v2443, 28
        %v2454 = vpop.permute.xlu0 %2453
        %2455 = vrot.lane.b32.xlu0 %v2444, 28
        %v2456 = vpop.permute.xlu0 %2455
        %2457 = vrot.lane.b32.xlu0 %v2445, 28
        %v2458 = vpop.permute.xlu0 %2457
        %2459 = vrot.lane.b32.xlu0 %v2446, 28
        %v2460 = vpop.permute.xlu0 %2459
        %2461 = vrot.lane.b32.xlu0 %v2447, 28
        %v2462 = vpop.permute.xlu0 %2461
        %2463 = vrot.lane.b32.xlu0 %v2448, 28
        %v2464 = vpop.permute.xlu0 %2463
        %vm2473 = vcmask 257248
        %2474 = vst.msk [vmem:[#allocation2] sm:$0xf] %vm2473, %v2450
        %2475 = vst.msk [vmem:[#allocation2 + $0x4] sm:$0xf] %vm2473, %v2452
        %2476 = vst.msk [vmem:[#allocation2 + $0x8] sm:$0xf] %vm2473, %v2454
        %2477 = vst.msk [vmem:[#allocation2 + $0xc] sm:$0xf] %vm2473, %v2456
        %2478 = vst.msk [vmem:[#allocation2 + $0x10] sm:$0xf] %vm2473, %v2458
        %2479 = vst.msk [vmem:[#allocation2 + $0x14] sm:$0xf] %vm2473, %v2460
        %2480 = vst.msk [vmem:[#allocation2 + $0x18] sm:$0xf] %vm2473, %v2462
        %2481 = vst.msk [vmem:[#allocation2 + $0x1c] sm:$0xf] %vm2473, %v2464
        %s2482 = scalar_lea.vmem [#allocation7], 512
        %v2483 = vld [vmem:[%s2482] sm:$0xff]
        %v2484 = vld [vmem:[%s2482 + $0x8] sm:$0xff]
        %v2485 = vld [vmem:[%s2482 + $0x10] sm:$0xff]
        %v2486 = vld [vmem:[%s2482 + $0x18] sm:$0xff]
        %v2487 = vld [vmem:[%s2482 + $0x20] sm:$0xff]
        %v2488 = vld [vmem:[%s2482 + $0x28] sm:$0xff]
        %v2489 = vld [vmem:[%s2482 + $0x30] sm:$0xff]
        %v2490 = vld [vmem:[%s2482 + $0x38] sm:$0xff]
        %v2499 = vunpack.c.l.b16 %v2483
        %v2500 = vunpack.c.h.b16 %v2483
        %v2501 = vunpack.c.l.b16 %v2484
        %v2502 = vunpack.c.h.b16 %v2484
        %v2503 = vunpack.c.l.b16 %v2485
        %v2504 = vunpack.c.h.b16 %v2485
        %v2505 = vunpack.c.l.b16 %v2486
        %v2506 = vunpack.c.h.b16 %v2486
        %v2507 = vunpack.c.l.b16 %v2487
        %v2508 = vunpack.c.h.b16 %v2487
        %v2509 = vunpack.c.l.b16 %v2488
        %v2510 = vunpack.c.h.b16 %v2488
        %v2511 = vunpack.c.l.b16 %v2489
        %v2512 = vunpack.c.h.b16 %v2489
        %v2513 = vunpack.c.l.b16 %v2490
        %v2514 = vunpack.c.h.b16 %v2490
        %v2515 = vpack.c.b16 %v2501, %v2499
        %v2516 = vpack.c.b16 %v2502, %v2500
        %v2517 = vpack.c.b16 %v2505, %v2503
        %v2518 = vpack.c.b16 %v2506, %v2504
        %v2519 = vpack.c.b16 %v2509, %v2507
        %v2520 = vpack.c.b16 %v2510, %v2508
        %v2521 = vpack.c.b16 %v2513, %v2511
        %v2522 = vpack.c.b16 %v2514, %v2512
        %2531 = vmatprep.subr.bf16.mxu0 0
        %2532 = vmatpush1.bf16.msra.mxu0 %v1154
        %2533 = vmatprep.subr.bf16.mxu0 0
        %2534 = vmatpush1.bf16.msra.mxu0 %v1153
        %2535 = vmatprep.subr.bf16.mxu0 0
        %2536 = vmatpush1.bf16.msra.mxu0 %v1152
        %2537 = vmatprep.subr.bf16.mxu0 0
        %2538 = vmatpush1.bf16.msra.mxu0 %v1151
        %2539 = vmatprep.subr.bf16.mxu0 0
        %2540 = vmatpush1.bf16.msra.mxu0 %v1150
        %2541 = vmatprep.subr.bf16.mxu0 0
        %2542 = vmatpush1.bf16.msra.mxu0 %v1149
        %2543 = vmatprep.subr.bf16.mxu0 0
        %2544 = vmatpush1.bf16.msra.mxu0 %v1148
        %2545 = vmatprep.subr.bf16.mxu0 0
        %2546 = vmatpush1.bf16.msra.mxu0 %v1147
        %2547 = vmatprep.subr.bf16.mxu0 0
        %2548 = vmatpush2.bf16.msra.mxu0 %v1162
        %2549 = vmatprep.subr.bf16.mxu0 0
        %2550 = vmatpush2.bf16.msra.mxu0 %v1161
        %2551 = vmatprep.subr.bf16.mxu0 0
        %2552 = vmatpush2.bf16.msra.mxu0 %v1160
        %2553 = vmatprep.subr.bf16.mxu0 0
        %2554 = vmatpush2.bf16.msra.mxu0 %v1159
        %2555 = vmatprep.subr.bf16.mxu0 0
        %2556 = vmatpush2.bf16.msra.mxu0 %v1158
        %2557 = vmatprep.subr.bf16.mxu0 0
        %2558 = vmatpush2.bf16.msra.mxu0 %v1157
        %2559 = vmatprep.subr.bf16.mxu0 0
        %2560 = vmatpush2.bf16.msra.mxu0 %v1156
        %2561 = vmatprep.subr.bf16.mxu0 0
        %2562 = vmatpush2.bf16.msra.mxu0 %v1155
        %2563 = vmatprep.mubr.bf16.mxu0 %v2516
        %2564 = vmatmul.mubr.bf16.gmra.mxu0 %v2515
        %v2565 = vpop.f32.mrf.mxu0
        %v2566 = vadd.f32 0.0, %v2565
        %v2567 = vpop.f32.mrf.mxu0
        %v2568 = vpop.f32.mrf.mxu0
        %v2569 = vadd.f32 0.0, %v2568
        %v2570 = vpop.f32.mrf.mxu0
        %2571 = vmatprep.mubr.bf16.mxu0 %v2518
        %2572 = vmatmul.mubr.bf16.gmra.mxu0 %v2517
        %v2573 = vpop.f32.mrf.mxu0
        %v2574 = vadd.f32 0.0, %v2573
        %v2575 = vpop.f32.mrf.mxu0
        %v2576 = vpop.f32.mrf.mxu0
        %v2577 = vadd.f32 0.0, %v2576
        %v2578 = vpop.f32.mrf.mxu0
        %2579 = vmatprep.mubr.bf16.mxu0 %v2520
        %2580 = vmatmul.mubr.bf16.gmra.mxu0 %v2519
        %v2581 = vpop.f32.mrf.mxu0
        %v2582 = vadd.f32 0.0, %v2581
        %v2583 = vpop.f32.mrf.mxu0
        %v2584 = vpop.f32.mrf.mxu0
        %v2585 = vadd.f32 0.0, %v2584
        %v2586 = vpop.f32.mrf.mxu0
        %2587 = vmatprep.mubr.bf16.mxu0 %v2522
        %2588 = vmatmul.mubr.bf16.gmra.mxu0 %v2521
        %v2589 = vpop.f32.mrf.mxu0
        %v2590 = vadd.f32 0.0, %v2589
        %v2591 = vpop.f32.mrf.mxu0
        %v2592 = vpop.f32.mrf.mxu0
        %v2593 = vadd.f32 0.0, %v2592
        %v2594 = vpop.f32.mrf.mxu0
        %2595 = vdwg.mxu0
        %v2596 = vpack.c.bf16 %v2569, %v2566
        %v2597 = vpack.c.bf16 %v2577, %v2574
        %v2598 = vpack.c.bf16 %v2585, %v2582
        %v2599 = vpack.c.bf16 %v2593, %v2590
        %v2604 = vunpack.c.l.b16 %v2596
        %v2605 = vunpack.c.h.b16 %v2596
        %v2606 = vunpack.c.l.b16 %v2597
        %v2607 = vunpack.c.h.b16 %v2597
        %v2608 = vunpack.c.l.b16 %v2598
        %v2609 = vunpack.c.h.b16 %v2598
        %v2610 = vunpack.c.l.b16 %v2599
        %v2611 = vunpack.c.h.b16 %v2599
        %v2612 = vpack.c.b16 %v2604, %v2604
        %v2613 = vpack.c.b16 %v2605, %v2605
        %v2614 = vpack.c.b16 %v2606, %v2606
        %v2615 = vpack.c.b16 %v2607, %v2607
        %v2616 = vpack.c.b16 %v2608, %v2608
        %v2617 = vpack.c.b16 %v2609, %v2609
        %v2618 = vpack.c.b16 %v2610, %v2610
        %v2619 = vpack.c.b16 %v2611, %v2611
        %2620 = vrot.lane.b32.xlu0 %v2612, 32
        %v2621 = vpop.permute.xlu0 %2620
        %2622 = vrot.lane.b32.xlu0 %v2613, 32
        %v2623 = vpop.permute.xlu0 %2622
        %2624 = vrot.lane.b32.xlu0 %v2614, 32
        %v2625 = vpop.permute.xlu0 %2624
        %2626 = vrot.lane.b32.xlu0 %v2615, 32
        %v2627 = vpop.permute.xlu0 %2626
        %2628 = vrot.lane.b32.xlu0 %v2616, 32
        %v2629 = vpop.permute.xlu0 %2628
        %2630 = vrot.lane.b32.xlu0 %v2617, 32
        %v2631 = vpop.permute.xlu0 %2630
        %2632 = vrot.lane.b32.xlu0 %v2618, 32
        %v2633 = vpop.permute.xlu0 %2632
        %2634 = vrot.lane.b32.xlu0 %v2619, 32
        %v2635 = vpop.permute.xlu0 %2634
        %vm2644 = vcmask 290048
        %2645 = vst.msk [vmem:[#allocation2] sm:$0xf] %vm2644, %v2621
        %2646 = vst.msk [vmem:[#allocation2 + $0x4] sm:$0xf] %vm2644, %v2623
        %2647 = vst.msk [vmem:[#allocation2 + $0x8] sm:$0xf] %vm2644, %v2625
        %2648 = vst.msk [vmem:[#allocation2 + $0xc] sm:$0xf] %vm2644, %v2627
        %2649 = vst.msk [vmem:[#allocation2 + $0x10] sm:$0xf] %vm2644, %v2629
        %2650 = vst.msk [vmem:[#allocation2 + $0x14] sm:$0xf] %vm2644, %v2631
        %2651 = vst.msk [vmem:[#allocation2 + $0x18] sm:$0xf] %vm2644, %v2633
        %2652 = vst.msk [vmem:[#allocation2 + $0x1c] sm:$0xf] %vm2644, %v2635
        %v2653 = vld [vmem:[#allocation2] sm:$0xf]
        %v2654 = vld [vmem:[#allocation2 + $0x4] sm:$0xf]
        %v2655 = vld [vmem:[#allocation2 + $0x8] sm:$0xf]
        %v2656 = vld [vmem:[#allocation2 + $0xc] sm:$0xf]
        %v2657 = vld [vmem:[#allocation2 + $0x10] sm:$0xf]
        %v2658 = vld [vmem:[#allocation2 + $0x14] sm:$0xf]
        %v2659 = vld [vmem:[#allocation2 + $0x18] sm:$0xf]
        %v2660 = vld [vmem:[#allocation2 + $0x1c] sm:$0xf]
        %v2661 = vld [vmem:[%s2] sm:$0xf]
        %v2662 = vld [vmem:[%s2 + $0x4] sm:$0xf]
        %v2663 = vld [vmem:[%s2 + $0x8] sm:$0xf]
        %v2664 = vld [vmem:[%s2 + $0xc] sm:$0xf]
        %v2665 = vld [vmem:[%s2 + $0x10] sm:$0x3]
        %v2666 = vld [vmem:[%s3] sm:$0x1]
        %v2668 = vlaneseq
        %v2669 = vshrl.u32 %v2668, 7
        %v2670 = vsub.s32 0, %v2669
        %v2671 = vrot.slane %v2666, %v2670
        %v2681 = vunpack.c.l.b16 %v2653
        %v2682 = vunpack.c.l.b16 %v2654
        %v2683 = vunpack.c.l.b16 %v2655
        %v2684 = vunpack.c.l.b16 %v2656
        %v2685 = vunpack.c.l.b16 %v2657
        %v2686 = vunpack.c.l.b16 %v2658
        %v2687 = vunpack.c.l.b16 %v2659
        %v2688 = vunpack.c.l.b16 %v2660
        %v2689 = vpack.c.b16 %v2682, %v2681
        %v2690 = vpack.c.b16 %v2684, %v2683
        %v2691 = vpack.c.b16 %v2686, %v2685
        %v2692 = vpack.c.b16 %v2688, %v2687
        %v2698 = vunpack.c.l.b16 %v2661
        %v2699 = vunpack.c.l.b16 %v2662
        %v2700 = vunpack.c.l.b16 %v2663
        %v2701 = vunpack.c.l.b16 %v2664
        %v2702 = vunpack.c.l.b16 %v2665
        %v2703 = vpack.c.b16 %v2699, %v2698
        %v2704 = vpack.c.b16 %v2701, %v2700
        %v2705 = vpack.c.b16 %v2702, %v2702
        %vm2708 = vcmask 293888
        %v2710 = vsel %vm2708, %v2689, 0
        %v2713 = vsel %vm2708, %v2690, 0
        %v2716 = vsel %vm2708, %v2691, 0
        %v2719 = vsel %vm2708, %v2692, 0
        %vm2721 = vcmask 1041408
        %v2723 = vsel %vm2721, %v2705, 0
        %2725 = vmatprep.subr.bf16.mxu0 0
        %2726 = vmatpush1.bf16.msra.mxu0 0
        %2727 = vmatprep.subr.bf16.mxu0 0
        %2728 = vmatpush1.bf16.msra.mxu0 0
        %2729 = vmatprep.subr.bf16.mxu0 0
        %2730 = vmatpush1.bf16.msra.mxu0 0
        %2731 = vmatprep.subr.bf16.mxu0 0
        %2732 = vmatpush1.bf16.msra.mxu0 0
        %2733 = vmatprep.subr.bf16.mxu0 0
        %2734 = vmatpush1.bf16.msra.mxu0 0
        %2735 = vmatprep.subr.bf16.mxu0 0
        %2736 = vmatpush1.bf16.msra.mxu0 %v2723
        %2737 = vmatprep.subr.bf16.mxu0 0
        %2738 = vmatpush1.bf16.msra.mxu0 %v2704
        %2739 = vmatprep.subr.bf16.mxu0 0
        %2740 = vmatpush1.bf16.msra.mxu0 %v2703
        %2741 = vmatprep.subr.bf16.mxu0 0
        %2742 = vmatpush2.bf16.msra.mxu0 0
        %2743 = vmatprep.subr.bf16.mxu0 0
        %2744 = vmatpush2.bf16.msra.mxu0 0
        %2745 = vmatprep.subr.bf16.mxu0 0
        %2746 = vmatpush2.bf16.msra.mxu0 0
        %2747 = vmatprep.subr.bf16.mxu0 0
        %2748 = vmatpush2.bf16.msra.mxu0 0
        %2749 = vmatprep.subr.bf16.mxu0 0
        %2750 = vmatpush2.bf16.msra.mxu0 0
        %2751 = vmatprep.subr.bf16.mxu0 0
        %2752 = vmatpush2.bf16.msra.mxu0 0
        %2753 = vmatprep.subr.bf16.mxu0 0
        %2754 = vmatpush2.bf16.msra.mxu0 0
        %2755 = vmatprep.subr.bf16.mxu0 0
        %2756 = vmatpush2.bf16.msra.mxu0 0
        %2757 = vmatprep.mubr.bf16.mxu0 0
        %2758 = vmatmul.mubr.bf16.gmra.mxu0 %v2710
        %v2759 = vpop.f32.mrf.mxu0
        %v2760 = vadd.f32 %v2671, %v2759
        %v2761 = vpop.f32.mrf.mxu0
        %v2762 = vpop.f32.mrf.mxu0
        %v2763 = vadd.f32 %v2671, %v2762
        %v2764 = vpop.f32.mrf.mxu0
        %2765 = vmatprep.mubr.bf16.mxu0 0
        %2766 = vmatmul.mubr.bf16.gmra.mxu0 %v2713
        %v2767 = vpop.f32.mrf.mxu0
        %v2768 = vadd.f32 %v2671, %v2767
        %v2769 = vpop.f32.mrf.mxu0
        %v2770 = vpop.f32.mrf.mxu0
        %v2771 = vadd.f32 %v2671, %v2770
        %v2772 = vpop.f32.mrf.mxu0
        %2773 = vmatprep.mubr.bf16.mxu0 0
        %2774 = vmatmul.mubr.bf16.gmra.mxu0 %v2716
        %v2775 = vpop.f32.mrf.mxu0
        %v2776 = vadd.f32 %v2671, %v2775
        %v2777 = vpop.f32.mrf.mxu0
        %v2778 = vpop.f32.mrf.mxu0
        %v2779 = vadd.f32 %v2671, %v2778
        %v2780 = vpop.f32.mrf.mxu0
        %2781 = vmatprep.mubr.bf16.mxu0 0
        %2782 = vmatmul.mubr.bf16.gmra.mxu0 %v2719
        %v2783 = vpop.f32.mrf.mxu0
        %v2784 = vadd.f32 %v2671, %v2783
        %v2785 = vpop.f32.mrf.mxu0
        %v2786 = vpop.f32.mrf.mxu0
        %v2787 = vadd.f32 %v2671, %v2786
        %v2788 = vpop.f32.mrf.mxu0
        %2789 = vdwg.mxu0
        %v2790 = vmul.f32 %v2760, 0.2
        %v2791 = vmul.f32 %v2763, 0.2
        %v2792 = vmul.f32 %v2768, 0.2
        %v2793 = vmul.f32 %v2771, 0.2
        %v2794 = vmul.f32 %v2776, 0.2
        %v2795 = vmul.f32 %v2779, 0.2
        %v2796 = vmul.f32 %v2784, 0.2
        %v2797 = vmul.f32 %v2787, 0.2
        %v2798 = vmax.f32 %v2760, %v2790
        %v2799 = vmax.f32 %v2763, %v2791
        %v2800 = vmax.f32 %v2768, %v2792
        %v2801 = vmax.f32 %v2771, %v2793
        %v2802 = vmax.f32 %v2776, %v2794
        %v2803 = vmax.f32 %v2779, %v2795
        %v2804 = vmax.f32 %v2784, %v2796
        %v2805 = vmax.f32 %v2787, %v2797
        %v2806 = vpack.c.bf16 %v2799, %v2798
        %v2807 = vpack.c.bf16 %v2801, %v2800
        %v2808 = vpack.c.bf16 %v2803, %v2802
        %v2809 = vpack.c.bf16 %v2805, %v2804
        %v2810 = vld [vmem:[%s4] sm:$0xf]
        %v2811 = vld [vmem:[%s4 + $0x4] sm:$0xf]
        %v2814 = vunpack.c.l.b16 %v2810
        %v2815 = vunpack.c.l.b16 %v2811
        %v2816 = vpack.c.b16 %v2815, %v2814
        %vm2817 = vcmask 523264
        %v2819 = vsel %vm2817, %v2816, 0
        %2821 = vmatprep.subr.bf16.mxu0 0
        %2822 = vmatpush1.bf16.msra.mxu0 0
        %2823 = vmatprep.subr.bf16.mxu0 0
        %2824 = vmatpush1.bf16.msra.mxu0 0
        %2825 = vmatprep.subr.bf16.mxu0 0
        %2826 = vmatpush1.bf16.msra.mxu0 0
        %2827 = vmatprep.subr.bf16.mxu0 0
        %2828 = vmatpush1.bf16.msra.mxu0 0
        %2829 = vmatprep.subr.bf16.mxu0 0
        %2830 = vmatpush1.bf16.msra.mxu0 %v2809
        %2831 = vmatprep.subr.bf16.mxu0 0
        %2832 = vmatpush1.bf16.msra.mxu0 %v2808
        %2833 = vmatprep.subr.bf16.mxu0 0
        %2834 = vmatpush1.bf16.msra.mxu0 %v2807
        %2835 = vmatprep.subr.bf16.mxu0 0
        %2836 = vmatpush1.bf16.msra.mxu0 %v2806
        %2837 = vmatprep.subr.bf16.mxu0 0
        %2838 = vmatpush2.bf16.msra.mxu0 0
        %2839 = vmatprep.subr.bf16.mxu0 0
        %2840 = vmatpush2.bf16.msra.mxu0 0
        %2841 = vmatprep.subr.bf16.mxu0 0
        %2842 = vmatpush2.bf16.msra.mxu0 0
        %2843 = vmatprep.subr.bf16.mxu0 0
        %2844 = vmatpush2.bf16.msra.mxu0 0
        %2845 = vmatprep.subr.bf16.mxu0 0
        %2846 = vmatpush2.bf16.msra.mxu0 0
        %2847 = vmatprep.subr.bf16.mxu0 0
        %2848 = vmatpush2.bf16.msra.mxu0 0
        %2849 = vmatprep.subr.bf16.mxu0 0
        %2850 = vmatpush2.bf16.msra.mxu0 0
        %2851 = vmatprep.subr.bf16.mxu0 0
        %2852 = vmatpush2.bf16.msra.mxu0 0
        %2853 = vmatprep.mubr.bf16.mxu0 0
        %2854 = vmatmul.mubr.bf16.gmra.mxu0 %v2819
        %v2855 = vpop.f32.mrf.mxu0
        %v2856 = vadd.f32 0.0, %v2855
        %v2857 = vpop.f32.mrf.mxu0
        %v2858 = vpop.f32.mrf.mxu0
        %v2859 = vadd.f32 0.0, %v2858
        %v2860 = vpop.f32.mrf.mxu0
        %2861 = vdwg.mxu0
        %v2862 = vpack.c.bf16 %v2859, %v2856
        %v2864 = vunpack.c.l.b16 %v2862
        %v2865 = vunpack.c.h.b16 %v2862
        %v2866 = vpack.c.b16 %v2864, %v2864
        %v2867 = vpack.c.b16 %v2865, %v2865
        %vm2870 = vcmask 125952
        %2871 = vst.msk [vmem:[#allocation3] sm:$0xf] %vm2870, %v2866
        %2872 = vst.msk [vmem:[#allocation3 + $0x8] sm:$0xf] %vm2870, %v2867
        %s2873 = scalar_lea.vmem %s4, 8
        %v2874 = vld [vmem:[%s2873] sm:$0xf]
        %v2875 = vld [vmem:[%s2873 + $0x4] sm:$0xf]
        %v2878 = vunpack.c.l.b16 %v2874
        %v2879 = vunpack.c.l.b16 %v2875
        %v2880 = vpack.c.b16 %v2879, %v2878
        %v2882 = vsel %vm2817, %v2880, 0
        %2884 = vmatprep.subr.bf16.mxu0 0
        %2885 = vmatpush1.bf16.msra.mxu0 0
        %2886 = vmatprep.subr.bf16.mxu0 0
        %2887 = vmatpush1.bf16.msra.mxu0 0
        %2888 = vmatprep.subr.bf16.mxu0 0
        %2889 = vmatpush1.bf16.msra.mxu0 0
        %2890 = vmatprep.subr.bf16.mxu0 0
        %2891 = vmatpush1.bf16.msra.mxu0 0
        %2892 = vmatprep.subr.bf16.mxu0 0
        %2893 = vmatpush1.bf16.msra.mxu0 %v2809
        %2894 = vmatprep.subr.bf16.mxu0 0
        %2895 = vmatpush1.bf16.msra.mxu0 %v2808
        %2896 = vmatprep.subr.bf16.mxu0 0
        %2897 = vmatpush1.bf16.msra.mxu0 %v2807
        %2898 = vmatprep.subr.bf16.mxu0 0
        %2899 = vmatpush1.bf16.msra.mxu0 %v2806
        %2900 = vmatprep.subr.bf16.mxu0 0
        %2901 = vmatpush2.bf16.msra.mxu0 0
        %2902 = vmatprep.subr.bf16.mxu0 0
        %2903 = vmatpush2.bf16.msra.mxu0 0
        %2904 = vmatprep.subr.bf16.mxu0 0
        %2905 = vmatpush2.bf16.msra.mxu0 0
        %2906 = vmatprep.subr.bf16.mxu0 0
        %2907 = vmatpush2.bf16.msra.mxu0 0
        %2908 = vmatprep.subr.bf16.mxu0 0
        %2909 = vmatpush2.bf16.msra.mxu0 0
        %2910 = vmatprep.subr.bf16.mxu0 0
        %2911 = vmatpush2.bf16.msra.mxu0 0
        %2912 = vmatprep.subr.bf16.mxu0 0
        %2913 = vmatpush2.bf16.msra.mxu0 0
        %2914 = vmatprep.subr.bf16.mxu0 0
        %2915 = vmatpush2.bf16.msra.mxu0 0
        %2916 = vmatprep.mubr.bf16.mxu0 0
        %2917 = vmatmul.mubr.bf16.gmra.mxu0 %v2882
        %v2918 = vpop.f32.mrf.mxu0
        %v2919 = vadd.f32 0.0, %v2918
        %v2920 = vpop.f32.mrf.mxu0
        %v2921 = vpop.f32.mrf.mxu0
        %v2922 = vadd.f32 0.0, %v2921
        %v2923 = vpop.f32.mrf.mxu0
        %2924 = vdwg.mxu0
        %v2925 = vpack.c.bf16 %v2922, %v2919
        %v2927 = vunpack.c.l.b16 %v2925
        %v2928 = vunpack.c.h.b16 %v2925
        %v2929 = vpack.c.b16 %v2927, %v2927
        %v2930 = vpack.c.b16 %v2928, %v2928
        %2931 = vrot.lane.b32.xlu0 %v2929, 16
        %v2932 = vpop.permute.xlu0 %2931
        %2933 = vrot.lane.b32.xlu0 %v2930, 16
        %v2934 = vpop.permute.xlu0 %2933
        %vm2937 = vcmask 257152
        %2938 = vst.msk [vmem:[#allocation3] sm:$0xf] %vm2937, %v2932
        %2939 = vst.msk [vmem:[#allocation3 + $0x8] sm:$0xf] %vm2937, %v2934
        %s2940 = scalar_lea.vmem %s4, 16
        %v2941 = vld [vmem:[%s2940] sm:$0xf]
        %v2942 = vld [vmem:[%s2940 + $0x4] sm:$0xf]
        %v2945 = vunpack.c.l.b16 %v2941
        %v2946 = vunpack.c.l.b16 %v2942
        %v2947 = vpack.c.b16 %v2946, %v2945
        %v2949 = vsel %vm2817, %v2947, 0
        %2951 = vmatprep.subr.bf16.mxu0 0
        %2952 = vmatpush1.bf16.msra.mxu0 0
        %2953 = vmatprep.subr.bf16.mxu0 0
        %2954 = vmatpush1.bf16.msra.mxu0 0
        %2955 = vmatprep.subr.bf16.mxu0 0
        %2956 = vmatpush1.bf16.msra.mxu0 0
        %2957 = vmatprep.subr.bf16.mxu0 0
        %2958 = vmatpush1.bf16.msra.mxu0 0
        %2959 = vmatprep.subr.bf16.mxu0 0
        %2960 = vmatpush1.bf16.msra.mxu0 %v2809
        %2961 = vmatprep.subr.bf16.mxu0 0
        %2962 = vmatpush1.bf16.msra.mxu0 %v2808
        %2963 = vmatprep.subr.bf16.mxu0 0
        %2964 = vmatpush1.bf16.msra.mxu0 %v2807
        %2965 = vmatprep.subr.bf16.mxu0 0
        %2966 = vmatpush1.bf16.msra.mxu0 %v2806
        %2967 = vmatprep.subr.bf16.mxu0 0
        %2968 = vmatpush2.bf16.msra.mxu0 0
        %2969 = vmatprep.subr.bf16.mxu0 0
        %2970 = vmatpush2.bf16.msra.mxu0 0
        %2971 = vmatprep.subr.bf16.mxu0 0
        %2972 = vmatpush2.bf16.msra.mxu0 0
        %2973 = vmatprep.subr.bf16.mxu0 0
        %2974 = vmatpush2.bf16.msra.mxu0 0
        %2975 = vmatprep.subr.bf16.mxu0 0
        %2976 = vmatpush2.bf16.msra.mxu0 0
        %2977 = vmatprep.subr.bf16.mxu0 0
        %2978 = vmatpush2.bf16.msra.mxu0 0
        %2979 = vmatprep.subr.bf16.mxu0 0
        %2980 = vmatpush2.bf16.msra.mxu0 0
        %2981 = vmatprep.subr.bf16.mxu0 0
        %2982 = vmatpush2.bf16.msra.mxu0 0
        %2983 = vmatprep.mubr.bf16.mxu0 0
        %2984 = vmatmul.mubr.bf16.gmra.mxu0 %v2949
        %v2985 = vpop.f32.mrf.mxu0
        %v2986 = vadd.f32 0.0, %v2985
        %v2987 = vpop.f32.mrf.mxu0
        %v2988 = vpop.f32.mrf.mxu0
        %v2989 = vadd.f32 0.0, %v2988
        %v2990 = vpop.f32.mrf.mxu0
        %2991 = vdwg.mxu0
        %v2992 = vpack.c.bf16 %v2989, %v2986
        %v2994 = vunpack.c.l.b16 %v2992
        %v2995 = vunpack.c.h.b16 %v2992
        %v2996 = vpack.c.b16 %v2994, %v2994
        %v2997 = vpack.c.b16 %v2995, %v2995
        %2998 = vrot.lane.b32.xlu0 %v2996, 32
        %v2999 = vpop.permute.xlu0 %2998
        %3000 = vrot.lane.b32.xlu0 %v2997, 32
        %v3001 = vpop.permute.xlu0 %3000
        %vm3004 = vcmask 388352
        %3005 = vst.msk [vmem:[#allocation3] sm:$0xf] %vm3004, %v2999
        %3006 = vst.msk [vmem:[#allocation3 + $0x8] sm:$0xf] %vm3004, %v3001
        %s3007 = scalar_lea.vmem %s4, 24
        %v3008 = vld [vmem:[%s3007] sm:$0xf]
        %v3009 = vld [vmem:[%s3007 + $0x4] sm:$0xf]
        %v3012 = vunpack.c.l.b16 %v3008
        %v3013 = vunpack.c.l.b16 %v3009
        %v3014 = vpack.c.b16 %v3013, %v3012
        %v3016 = vsel %vm2817, %v3014, 0
        %3018 = vmatprep.subr.bf16.mxu0 0
        %3019 = vmatpush1.bf16.msra.mxu0 0
        %3020 = vmatprep.subr.bf16.mxu0 0
        %3021 = vmatpush1.bf16.msra.mxu0 0
        %3022 = vmatprep.subr.bf16.mxu0 0
        %3023 = vmatpush1.bf16.msra.mxu0 0
        %3024 = vmatprep.subr.bf16.mxu0 0
        %3025 = vmatpush1.bf16.msra.mxu0 0
        %3026 = vmatprep.subr.bf16.mxu0 0
        %3027 = vmatpush1.bf16.msra.mxu0 %v2809
        %3028 = vmatprep.subr.bf16.mxu0 0
        %3029 = vmatpush1.bf16.msra.mxu0 %v2808
        %3030 = vmatprep.subr.bf16.mxu0 0
        %3031 = vmatpush1.bf16.msra.mxu0 %v2807
        %3032 = vmatprep.subr.bf16.mxu0 0
        %3033 = vmatpush1.bf16.msra.mxu0 %v2806
        %3034 = vmatprep.subr.bf16.mxu0 0
        %3035 = vmatpush2.bf16.msra.mxu0 0
        %3036 = vmatprep.subr.bf16.mxu0 0
        %3037 = vmatpush2.bf16.msra.mxu0 0
        %3038 = vmatprep.subr.bf16.mxu0 0
        %3039 = vmatpush2.bf16.msra.mxu0 0
        %3040 = vmatprep.subr.bf16.mxu0 0
        %3041 = vmatpush2.bf16.msra.mxu0 0
        %3042 = vmatprep.subr.bf16.mxu0 0
        %3043 = vmatpush2.bf16.msra.mxu0 0
        %3044 = vmatprep.subr.bf16.mxu0 0
        %3045 = vmatpush2.bf16.msra.mxu0 0
        %3046 = vmatprep.subr.bf16.mxu0 0
        %3047 = vmatpush2.bf16.msra.mxu0 0
        %3048 = vmatprep.subr.bf16.mxu0 0
        %3049 = vmatpush2.bf16.msra.mxu0 0
        %3050 = vmatprep.mubr.bf16.mxu0 0
        %3051 = vmatmul.mubr.bf16.gmra.mxu0 %v3016
        %v3052 = vpop.f32.mrf.mxu0
        %v3053 = vadd.f32 0.0, %v3052
        %v3054 = vpop.f32.mrf.mxu0
        %v3055 = vpop.f32.mrf.mxu0
        %v3056 = vadd.f32 0.0, %v3055
        %v3057 = vpop.f32.mrf.mxu0
        %3058 = vdwg.mxu0
        %v3059 = vpack.c.bf16 %v3056, %v3053
        %v3061 = vunpack.c.l.b16 %v3059
        %v3062 = vunpack.c.h.b16 %v3059
        %v3063 = vpack.c.b16 %v3061, %v3061
        %v3064 = vpack.c.b16 %v3062, %v3062
        %3065 = vrot.lane.b32.xlu0 %v3063, 48
        %v3066 = vpop.permute.xlu0 %3065
        %3067 = vrot.lane.b32.xlu0 %v3064, 48
        %v3068 = vpop.permute.xlu0 %3067
        %vm3071 = vcmask 519552
        %3072 = vst.msk [vmem:[#allocation3] sm:$0xf] %vm3071, %v3066
        %3073 = vst.msk [vmem:[#allocation3 + $0x8] sm:$0xf] %vm3071, %v3068
        %s3074 = scalar_lea.vmem %s4, 32
        %v3075 = vld [vmem:[%s3074] sm:$0xf]
        %v3076 = vld [vmem:[%s3074 + $0x4] sm:$0xf]
        %v3079 = vunpack.c.l.b16 %v3075
        %v3080 = vunpack.c.l.b16 %v3076
        %v3081 = vpack.c.b16 %v3080, %v3079
        %v3083 = vsel %vm2817, %v3081, 0
        %3085 = vmatprep.subr.bf16.mxu0 0
        %3086 = vmatpush1.bf16.msra.mxu0 0
        %3087 = vmatprep.subr.bf16.mxu0 0
        %3088 = vmatpush1.bf16.msra.mxu0 0
        %3089 = vmatprep.subr.bf16.mxu0 0
        %3090 = vmatpush1.bf16.msra.mxu0 0
        %3091 = vmatprep.subr.bf16.mxu0 0
        %3092 = vmatpush1.bf16.msra.mxu0 0
        %3093 = vmatprep.subr.bf16.mxu0 0
        %3094 = vmatpush1.bf16.msra.mxu0 %v2809
        %3095 = vmatprep.subr.bf16.mxu0 0
        %3096 = vmatpush1.bf16.msra.mxu0 %v2808
        %3097 = vmatprep.subr.bf16.mxu0 0
        %3098 = vmatpush1.bf16.msra.mxu0 %v2807
        %3099 = vmatprep.subr.bf16.mxu0 0
        %3100 = vmatpush1.bf16.msra.mxu0 %v2806
        %3101 = vmatprep.subr.bf16.mxu0 0
        %3102 = vmatpush2.bf16.msra.mxu0 0
        %3103 = vmatprep.subr.bf16.mxu0 0
        %3104 = vmatpush2.bf16.msra.mxu0 0
        %3105 = vmatprep.subr.bf16.mxu0 0
        %3106 = vmatpush2.bf16.msra.mxu0 0
        %3107 = vmatprep.subr.bf16.mxu0 0
        %3108 = vmatpush2.bf16.msra.mxu0 0
        %3109 = vmatprep.subr.bf16.mxu0 0
        %3110 = vmatpush2.bf16.msra.mxu0 0
        %3111 = vmatprep.subr.bf16.mxu0 0
        %3112 = vmatpush2.bf16.msra.mxu0 0
        %3113 = vmatprep.subr.bf16.mxu0 0
        %3114 = vmatpush2.bf16.msra.mxu0 0
        %3115 = vmatprep.subr.bf16.mxu0 0
        %3116 = vmatpush2.bf16.msra.mxu0 0
        %3117 = vmatprep.mubr.bf16.mxu0 0
        %3118 = vmatmul.mubr.bf16.gmra.mxu0 %v3083
        %v3119 = vpop.f32.mrf.mxu0
        %v3120 = vadd.f32 0.0, %v3119
        %v3121 = vpop.f32.mrf.mxu0
        %v3122 = vpop.f32.mrf.mxu0
        %v3123 = vadd.f32 0.0, %v3122
        %v3124 = vpop.f32.mrf.mxu0
        %3125 = vdwg.mxu0
        %v3126 = vpack.c.bf16 %v3123, %v3120
        %v3128 = vunpack.c.l.b16 %v3126
        %v3129 = vunpack.c.h.b16 %v3126
        %v3130 = vpack.c.b16 %v3128, %v3128
        %v3131 = vpack.c.b16 %v3129, %v3129
        %3132 = vrot.lane.b32.xlu0 %v3130, 64
        %v3133 = vpop.permute.xlu0 %3132
        %3134 = vrot.lane.b32.xlu0 %v3131, 64
        %v3135 = vpop.permute.xlu0 %3134
        %vm3138 = vcmask 650752
        %3139 = vst.msk [vmem:[#allocation3] sm:$0xf] %vm3138, %v3133
        %3140 = vst.msk [vmem:[#allocation3 + $0x8] sm:$0xf] %vm3138, %v3135
        %s3141 = scalar_lea.vmem %s4, 40
        %v3142 = vld [vmem:[%s3141] sm:$0xf]
        %v3143 = vld [vmem:[%s3141 + $0x4] sm:$0xf]
        %v3146 = vunpack.c.l.b16 %v3142
        %v3147 = vunpack.c.l.b16 %v3143
        %v3148 = vpack.c.b16 %v3147, %v3146
        %v3150 = vsel %vm2817, %v3148, 0
        %3152 = vmatprep.subr.bf16.mxu0 0
        %3153 = vmatpush1.bf16.msra.mxu0 0
        %3154 = vmatprep.subr.bf16.mxu0 0
        %3155 = vmatpush1.bf16.msra.mxu0 0
        %3156 = vmatprep.subr.bf16.mxu0 0
        %3157 = vmatpush1.bf16.msra.mxu0 0
        %3158 = vmatprep.subr.bf16.mxu0 0
        %3159 = vmatpush1.bf16.msra.mxu0 0
        %3160 = vmatprep.subr.bf16.mxu0 0
        %3161 = vmatpush1.bf16.msra.mxu0 %v2809
        %3162 = vmatprep.subr.bf16.mxu0 0
        %3163 = vmatpush1.bf16.msra.mxu0 %v2808
        %3164 = vmatprep.subr.bf16.mxu0 0
        %3165 = vmatpush1.bf16.msra.mxu0 %v2807
        %3166 = vmatprep.subr.bf16.mxu0 0
        %3167 = vmatpush1.bf16.msra.mxu0 %v2806
        %3168 = vmatprep.subr.bf16.mxu0 0
        %3169 = vmatpush2.bf16.msra.mxu0 0
        %3170 = vmatprep.subr.bf16.mxu0 0
        %3171 = vmatpush2.bf16.msra.mxu0 0
        %3172 = vmatprep.subr.bf16.mxu0 0
        %3173 = vmatpush2.bf16.msra.mxu0 0
        %3174 = vmatprep.subr.bf16.mxu0 0
        %3175 = vmatpush2.bf16.msra.mxu0 0
        %3176 = vmatprep.subr.bf16.mxu0 0
        %3177 = vmatpush2.bf16.msra.mxu0 0
        %3178 = vmatprep.subr.bf16.mxu0 0
        %3179 = vmatpush2.bf16.msra.mxu0 0
        %3180 = vmatprep.subr.bf16.mxu0 0
        %3181 = vmatpush2.bf16.msra.mxu0 0
        %3182 = vmatprep.subr.bf16.mxu0 0
        %3183 = vmatpush2.bf16.msra.mxu0 0
        %3184 = vmatprep.mubr.bf16.mxu0 0
        %3185 = vmatmul.mubr.bf16.gmra.mxu0 %v3150
        %v3186 = vpop.f32.mrf.mxu0
        %v3187 = vadd.f32 0.0, %v3186
        %v3188 = vpop.f32.mrf.mxu0
        %v3189 = vpop.f32.mrf.mxu0
        %v3190 = vadd.f32 0.0, %v3189
        %v3191 = vpop.f32.mrf.mxu0
        %3192 = vdwg.mxu0
        %v3193 = vpack.c.bf16 %v3190, %v3187
        %v3195 = vunpack.c.l.b16 %v3193
        %v3196 = vunpack.c.h.b16 %v3193
        %v3197 = vpack.c.b16 %v3195, %v3195
        %v3198 = vpack.c.b16 %v3196, %v3196
        %3199 = vrot.lane.b32.xlu0 %v3197, 80
        %v3200 = vpop.permute.xlu0 %3199
        %3201 = vrot.lane.b32.xlu0 %v3198, 80
        %v3202 = vpop.permute.xlu0 %3201
        %vm3205 = vcmask 781952
        %3206 = vst.msk [vmem:[#allocation3] sm:$0xf] %vm3205, %v3200
        %3207 = vst.msk [vmem:[#allocation3 + $0x8] sm:$0xf] %vm3205, %v3202
        %s3208 = scalar_lea.vmem %s4, 48
        %v3209 = vld [vmem:[%s3208] sm:$0xf]
        %v3210 = vld [vmem:[%s3208 + $0x4] sm:$0xf]
        %v3213 = vunpack.c.l.b16 %v3209
        %v3214 = vunpack.c.l.b16 %v3210
        %v3215 = vpack.c.b16 %v3214, %v3213
        %v3217 = vsel %vm2817, %v3215, 0
        %3219 = vmatprep.subr.bf16.mxu0 0
        %3220 = vmatpush1.bf16.msra.mxu0 0
        %3221 = vmatprep.subr.bf16.mxu0 0
        %3222 = vmatpush1.bf16.msra.mxu0 0
        %3223 = vmatprep.subr.bf16.mxu0 0
        %3224 = vmatpush1.bf16.msra.mxu0 0
        %3225 = vmatprep.subr.bf16.mxu0 0
        %3226 = vmatpush1.bf16.msra.mxu0 0
        %3227 = vmatprep.subr.bf16.mxu0 0
        %3228 = vmatpush1.bf16.msra.mxu0 %v2809
        %3229 = vmatprep.subr.bf16.mxu0 0
        %3230 = vmatpush1.bf16.msra.mxu0 %v2808
        %3231 = vmatprep.subr.bf16.mxu0 0
        %3232 = vmatpush1.bf16.msra.mxu0 %v2807
        %3233 = vmatprep.subr.bf16.mxu0 0
        %3234 = vmatpush1.bf16.msra.mxu0 %v2806
        %3235 = vmatprep.subr.bf16.mxu0 0
        %3236 = vmatpush2.bf16.msra.mxu0 0
        %3237 = vmatprep.subr.bf16.mxu0 0
        %3238 = vmatpush2.bf16.msra.mxu0 0
        %3239 = vmatprep.subr.bf16.mxu0 0
        %3240 = vmatpush2.bf16.msra.mxu0 0
        %3241 = vmatprep.subr.bf16.mxu0 0
        %3242 = vmatpush2.bf16.msra.mxu0 0
        %3243 = vmatprep.subr.bf16.mxu0 0
        %3244 = vmatpush2.bf16.msra.mxu0 0
        %3245 = vmatprep.subr.bf16.mxu0 0
        %3246 = vmatpush2.bf16.msra.mxu0 0
        %3247 = vmatprep.subr.bf16.mxu0 0
        %3248 = vmatpush2.bf16.msra.mxu0 0
        %3249 = vmatprep.subr.bf16.mxu0 0
        %3250 = vmatpush2.bf16.msra.mxu0 0
        %3251 = vmatprep.mubr.bf16.mxu0 0
        %3252 = vmatmul.mubr.bf16.gmra.mxu0 %v3217
        %v3253 = vpop.f32.mrf.mxu0
        %v3254 = vadd.f32 0.0, %v3253
        %v3255 = vpop.f32.mrf.mxu0
        %v3256 = vpop.f32.mrf.mxu0
        %v3257 = vadd.f32 0.0, %v3256
        %v3258 = vpop.f32.mrf.mxu0
        %3259 = vdwg.mxu0
        %v3260 = vpack.c.bf16 %v3257, %v3254
        %v3262 = vunpack.c.l.b16 %v3260
        %v3263 = vunpack.c.h.b16 %v3260
        %v3264 = vpack.c.b16 %v3262, %v3262
        %v3265 = vpack.c.b16 %v3263, %v3263
        %3266 = vrot.lane.b32.xlu0 %v3264, 96
        %v3267 = vpop.permute.xlu0 %3266
        %3268 = vrot.lane.b32.xlu0 %v3265, 96
        %v3269 = vpop.permute.xlu0 %3268
        %vm3272 = vcmask 913152
        %3273 = vst.msk [vmem:[#allocation3] sm:$0xf] %vm3272, %v3267
        %3274 = vst.msk [vmem:[#allocation3 + $0x8] sm:$0xf] %vm3272, %v3269
        %s3275 = scalar_lea.vmem %s4, 56
        %v3276 = vld [vmem:[%s3275] sm:$0xf]
        %v3277 = vld [vmem:[%s3275 + $0x4] sm:$0xf]
        %v3280 = vunpack.c.l.b16 %v3276
        %v3281 = vunpack.c.l.b16 %v3277
        %v3282 = vpack.c.b16 %v3281, %v3280
        %v3284 = vsel %vm2817, %v3282, 0
        %3286 = vmatprep.subr.bf16.mxu0 0
        %3287 = vmatpush1.bf16.msra.mxu0 0
        %3288 = vmatprep.subr.bf16.mxu0 0
        %3289 = vmatpush1.bf16.msra.mxu0 0
        %3290 = vmatprep.subr.bf16.mxu0 0
        %3291 = vmatpush1.bf16.msra.mxu0 0
        %3292 = vmatprep.subr.bf16.mxu0 0
        %3293 = vmatpush1.bf16.msra.mxu0 0
        %3294 = vmatprep.subr.bf16.mxu0 0
        %3295 = vmatpush1.bf16.msra.mxu0 %v2809
        %3296 = vmatprep.subr.bf16.mxu0 0
        %3297 = vmatpush1.bf16.msra.mxu0 %v2808
        %3298 = vmatprep.subr.bf16.mxu0 0
        %3299 = vmatpush1.bf16.msra.mxu0 %v2807
        %3300 = vmatprep.subr.bf16.mxu0 0
        %3301 = vmatpush1.bf16.msra.mxu0 %v2806
        %3302 = vmatprep.subr.bf16.mxu0 0
        %3303 = vmatpush2.bf16.msra.mxu0 0
        %3304 = vmatprep.subr.bf16.mxu0 0
        %3305 = vmatpush2.bf16.msra.mxu0 0
        %3306 = vmatprep.subr.bf16.mxu0 0
        %3307 = vmatpush2.bf16.msra.mxu0 0
        %3308 = vmatprep.subr.bf16.mxu0 0
        %3309 = vmatpush2.bf16.msra.mxu0 0
        %3310 = vmatprep.subr.bf16.mxu0 0
        %3311 = vmatpush2.bf16.msra.mxu0 0
        %3312 = vmatprep.subr.bf16.mxu0 0
        %3313 = vmatpush2.bf16.msra.mxu0 0
        %3314 = vmatprep.subr.bf16.mxu0 0
        %3315 = vmatpush2.bf16.msra.mxu0 0
        %3316 = vmatprep.subr.bf16.mxu0 0
        %3317 = vmatpush2.bf16.msra.mxu0 0
        %3318 = vmatprep.mubr.bf16.mxu0 0
        %3319 = vmatmul.mubr.bf16.gmra.mxu0 %v3284
        %v3320 = vpop.f32.mrf.mxu0
        %v3321 = vadd.f32 0.0, %v3320
        %v3322 = vpop.f32.mrf.mxu0
        %v3323 = vpop.f32.mrf.mxu0
        %v3324 = vadd.f32 0.0, %v3323
        %v3325 = vpop.f32.mrf.mxu0
        %3326 = vdwg.mxu0
        %v3327 = vpack.c.bf16 %v3324, %v3321
        %v3329 = vunpack.c.l.b16 %v3327
        %v3330 = vunpack.c.h.b16 %v3327
        %v3331 = vpack.c.b16 %v3329, %v3329
        %v3332 = vpack.c.b16 %v3330, %v3330
        %3333 = vrot.lane.b32.xlu0 %v3331, 112
        %v3334 = vpop.permute.xlu0 %3333
        %3335 = vrot.lane.b32.xlu0 %v3332, 112
        %v3336 = vpop.permute.xlu0 %3335
        %vm3339 = vcmask 1044352
        %3340 = vst.msk [vmem:[#allocation3] sm:$0xf] %vm3339, %v3334
        %3341 = vst.msk [vmem:[#allocation3 + $0x8] sm:$0xf] %vm3339, %v3336
        %s3342 = scalar_lea.vmem %s4, 64
        %v3343 = vld [vmem:[%s3342] sm:$0xf]
        %v3344 = vld [vmem:[%s3342 + $0x4] sm:$0xf]
        %v3347 = vunpack.c.l.b16 %v3343
        %v3348 = vunpack.c.l.b16 %v3344
        %v3349 = vpack.c.b16 %v3348, %v3347
        %v3351 = vsel %vm2817, %v3349, 0
        %3353 = vmatprep.subr.bf16.mxu0 0
        %3354 = vmatpush1.bf16.msra.mxu0 0
        %3355 = vmatprep.subr.bf16.mxu0 0
        %3356 = vmatpush1.bf16.msra.mxu0 0
        %3357 = vmatprep.subr.bf16.mxu0 0
        %3358 = vmatpush1.bf16.msra.mxu0 0
        %3359 = vmatprep.subr.bf16.mxu0 0
        %3360 = vmatpush1.bf16.msra.mxu0 0
        %3361 = vmatprep.subr.bf16.mxu0 0
        %3362 = vmatpush1.bf16.msra.mxu0 %v2809
        %3363 = vmatprep.subr.bf16.mxu0 0
        %3364 = vmatpush1.bf16.msra.mxu0 %v2808
        %3365 = vmatprep.subr.bf16.mxu0 0
        %3366 = vmatpush1.bf16.msra.mxu0 %v2807
        %3367 = vmatprep.subr.bf16.mxu0 0
        %3368 = vmatpush1.bf16.msra.mxu0 %v2806
        %3369 = vmatprep.subr.bf16.mxu0 0
        %3370 = vmatpush2.bf16.msra.mxu0 0
        %3371 = vmatprep.subr.bf16.mxu0 0
        %3372 = vmatpush2.bf16.msra.mxu0 0
        %3373 = vmatprep.subr.bf16.mxu0 0
        %3374 = vmatpush2.bf16.msra.mxu0 0
        %3375 = vmatprep.subr.bf16.mxu0 0
        %3376 = vmatpush2.bf16.msra.mxu0 0
        %3377 = vmatprep.subr.bf16.mxu0 0
        %3378 = vmatpush2.bf16.msra.mxu0 0
        %3379 = vmatprep.subr.bf16.mxu0 0
        %3380 = vmatpush2.bf16.msra.mxu0 0
        %3381 = vmatprep.subr.bf16.mxu0 0
        %3382 = vmatpush2.bf16.msra.mxu0 0
        %3383 = vmatprep.subr.bf16.mxu0 0
        %3384 = vmatpush2.bf16.msra.mxu0 0
        %3385 = vmatprep.mubr.bf16.mxu0 0
        %3386 = vmatmul.mubr.bf16.gmra.mxu0 %v3351
        %v3387 = vpop.f32.mrf.mxu0
        %v3388 = vadd.f32 0.0, %v3387
        %v3389 = vpop.f32.mrf.mxu0
        %v3390 = vpop.f32.mrf.mxu0
        %v3391 = vadd.f32 0.0, %v3390
        %v3392 = vpop.f32.mrf.mxu0
        %3393 = vdwg.mxu0
        %v3394 = vpack.c.bf16 %v3391, %v3388
        %v3396 = vunpack.c.l.b16 %v3394
        %v3397 = vunpack.c.h.b16 %v3394
        %v3398 = vpack.c.b16 %v3396, %v3396
        %v3399 = vpack.c.b16 %v3397, %v3397
        %3402 = vst.msk [vmem:[#allocation3 + $0x4] sm:$0xf] %vm2870, %v3398
        %3403 = vst.msk [vmem:[#allocation3 + $0xc] sm:$0xf] %vm2870, %v3399
        %v3404 = vld [vmem:[#allocation3] sm:$0xff]
        %v3405 = vld [vmem:[#allocation3 + $0x8] sm:$0xff]
        %v3406 = vld [vmem:[#allocation9] sm:$0xf]
        %v3407 = vld [vmem:[#allocation9 + $0x4] sm:$0xf]
        %v3408 = vld [vmem:[#allocation9 + $0x8] sm:$0xf]
        %v3409 = vld [vmem:[#allocation9 + $0xc] sm:$0xf]
        %v3410 = vld [vmem:[#allocation9 + $0x10] sm:$0xf]
        %v3411 = vld [vmem:[#allocation9 + $0x14] sm:$0xf]
        %v3412 = vld [vmem:[#allocation9 + $0x18] sm:$0xf]
        %v3413 = vld [vmem:[#allocation9 + $0x1c] sm:$0xf]
        %v3414 = vld [vmem:[#allocation9 + $0x20] sm:$0xf]
        %v3415 = vld [vmem:[#allocation9 + $0x24] sm:$0xf]
        %v3416 = vld [vmem:[#allocation9 + $0x28] sm:$0xf]
        %v3417 = vld [vmem:[#allocation9 + $0x2c] sm:$0xf]
        %v3418 = vld [vmem:[#allocation9 + $0x30] sm:$0xf]
        %v3419 = vld [vmem:[#allocation9 + $0x34] sm:$0xf]
        %v3420 = vld [vmem:[#allocation9 + $0x38] sm:$0xf]
        %v3421 = vld [vmem:[#allocation9 + $0x3c] sm:$0xf]
        %v3422 = vld [vmem:[#allocation9 + $0x40] sm:$0xf]
        %v3423 = vld [vmem:[#allocation9 + $0x44] sm:$0xf]
        %v3424 = vld [vmem:[%s6] sm:$0x1]
        %v3426 = vlaneseq
        %v3427 = vshrl.u32 %v3426, 7
        %v3428 = vsub.s32 0, %v3427
        %v3429 = vrot.slane %v3424, %v3428
        %v3433 = vunpack.c.l.b16 %v3404
        %v3434 = vunpack.c.h.b16 %v3404
        %v3435 = vunpack.c.l.b16 %v3405
        %v3436 = vunpack.c.h.b16 %v3405
        %v3437 = vpack.c.b16 %v3435, %v3433
        %v3438 = vpack.c.b16 %v3436, %v3434
        %v3458 = vunpack.c.l.b16 %v3406
        %v3459 = vunpack.c.l.b16 %v3407
        %v3460 = vunpack.c.l.b16 %v3408
        %v3461 = vunpack.c.l.b16 %v3409
        %v3462 = vunpack.c.l.b16 %v3410
        %v3463 = vunpack.c.l.b16 %v3411
        %v3464 = vunpack.c.l.b16 %v3412
        %v3465 = vunpack.c.l.b16 %v3413
        %v3466 = vunpack.c.l.b16 %v3414
        %v3467 = vunpack.c.l.b16 %v3415
        %v3468 = vunpack.c.l.b16 %v3416
        %v3469 = vunpack.c.l.b16 %v3417
        %v3470 = vunpack.c.l.b16 %v3418
        %v3471 = vunpack.c.l.b16 %v3419
        %v3472 = vunpack.c.l.b16 %v3420
        %v3473 = vunpack.c.l.b16 %v3421
        %v3474 = vunpack.c.l.b16 %v3422
        %v3475 = vunpack.c.l.b16 %v3423
        %v3476 = vpack.c.b16 %v3459, %v3458
        %v3477 = vpack.c.b16 %v3461, %v3460
        %v3478 = vpack.c.b16 %v3463, %v3462
        %v3479 = vpack.c.b16 %v3465, %v3464
        %v3480 = vpack.c.b16 %v3467, %v3466
        %v3481 = vpack.c.b16 %v3469, %v3468
        %v3482 = vpack.c.b16 %v3471, %v3470
        %v3483 = vpack.c.b16 %v3473, %v3472
        %v3484 = vpack.c.b16 %v3475, %v3474
        %vm3494 = vcmask 130048
        %v3496 = vsel %vm3494, %v3438, 0
        %3498 = vmatprep.subr.bf16.mxu0 0
        %3499 = vmatpush1.bf16.msra.mxu0 %v3483
        %3500 = vmatprep.subr.bf16.mxu0 0
        %3501 = vmatpush1.bf16.msra.mxu0 %v3482
        %3502 = vmatprep.subr.bf16.mxu0 0
        %3503 = vmatpush1.bf16.msra.mxu0 %v3481
        %3504 = vmatprep.subr.bf16.mxu0 0
        %3505 = vmatpush1.bf16.msra.mxu0 %v3480
        %3506 = vmatprep.subr.bf16.mxu0 0
        %3507 = vmatpush1.bf16.msra.mxu0 %v3479
        %3508 = vmatprep.subr.bf16.mxu0 0
        %3509 = vmatpush1.bf16.msra.mxu0 %v3478
        %3510 = vmatprep.subr.bf16.mxu0 0
        %3511 = vmatpush1.bf16.msra.mxu0 %v3477
        %3512 = vmatprep.subr.bf16.mxu0 0
        %3513 = vmatpush1.bf16.msra.mxu0 %v3476
        %3514 = vmatprep.subr.bf16.mxu0 0
        %3515 = vmatpush2.bf16.msra.mxu0 0
        %3516 = vmatprep.subr.bf16.mxu0 0
        %3517 = vmatpush2.bf16.msra.mxu0 0
        %3518 = vmatprep.subr.bf16.mxu0 0
        %3519 = vmatpush2.bf16.msra.mxu0 0
        %3520 = vmatprep.subr.bf16.mxu0 0
        %3521 = vmatpush2.bf16.msra.mxu0 0
        %3522 = vmatprep.subr.bf16.mxu0 0
        %3523 = vmatpush2.bf16.msra.mxu0 0
        %3524 = vmatprep.subr.bf16.mxu0 0
        %3525 = vmatpush2.bf16.msra.mxu0 0
        %3526 = vmatprep.subr.bf16.mxu0 0
        %3527 = vmatpush2.bf16.msra.mxu0 0
        %3528 = vmatprep.subr.bf16.mxu0 0
        %3529 = vmatpush2.bf16.msra.mxu0 %v3484
        %3530 = vmatprep.mubr.bf16.mxu0 %v3496
        %3531 = vmatmul.mubr.bf16.gmra.mxu0 %v3437
        %v3532 = vpop.f32.mrf.mxu0
        %v3533 = vadd.f32 %v3429, %v3532
        %v3534 = vpop.f32.mrf.mxu0
        %v3535 = vpop.f32.mrf.mxu0
        %v3536 = vadd.f32 %v3429, %v3535
        %v3537 = vpop.f32.mrf.mxu0
        %3538 = vdwg.mxu0
        %v3539 = vmul.f32 %v3533, 0.2
        %v3540 = vmul.f32 %v3536, 0.2
        %v3541 = vmax.f32 %v3533, %v3539
        %v3542 = vmax.f32 %v3536, %v3540
        %vm3543 = vcmask 261120
        %v3544 = vsel %vm3543, %v3541, 0.0
        %v3545 = vsel %vm3543, %v3542, 0.0
        %v3546 = vadd.f32 %v3544, %v3545
        %v3547 = vrot.slane %v3546, 4
        %v3548 = vadd.f32 %v3546, %v3547
        %v3549 = vrot.slane %v3548, 2
        %v3550 = vadd.f32 %v3548, %v3549
        %v3551 = vrot.slane %v3550, 1
        %v3552 = vadd.f32 %v3550, %v3551
        %v3553 = vrcp.pop 16.0
        %v3554 = vmul.f32 %v3552, %v3553
        %v3555 = vld [vmem:[#allocation11] sm:$0xff]
        %v3556 = vld [vmem:[#allocation11 + $0x8] sm:$0xff]
        %v3557 = vld [vmem:[#allocation11 + $0x10] sm:$0xff]
        %v3558 = vld [vmem:[#allocation11 + $0x18] sm:$0xff]
        %v3559 = vld [vmem:[%s8] sm:$0x1]
        %v3561 = vlaneseq
        %v3562 = vshrl.u32 %v3561, 7
        %v3563 = vsub.s32 0, %v3562
        %v3564 = vrot.slane %v3559, %v3563
        %v3567 = vsel %vm3543, %v3554, 0
        %3569 = vmatprep.subr.mxu0 0.0
        %3570 = vmatpush1.msra.mxu0 0.0
        %3571 = vmatprep.subr.mxu0 0.0
        %3572 = vmatpush1.msra.mxu0 0.0
        %3573 = vmatprep.subr.mxu0 0.0
        %3574 = vmatpush1.msra.mxu0 0.0
        %3575 = vmatprep.subr.mxu0 0.0
        %3576 = vmatpush1.msra.mxu0 0.0
        %3577 = vmatprep.subr.mxu0 0.0
        %3578 = vmatpush1.msra.mxu0 0.0
        %3579 = vmatprep.subr.mxu0 0.0
        %3580 = vmatpush1.msra.mxu0 0.0
        %3581 = vmatprep.subr.mxu0 0.0
        %3582 = vmatpush1.msra.mxu0 0.0
        %3583 = vmatprep.subr.mxu0 0.0
        %3584 = vmatpush1.msra.mxu0 0.0
        %3585 = vmatprep.subr.mxu0 0.0
        %3586 = vmatpush1.msra.mxu0 0.0
        %3587 = vmatprep.subr.mxu0 0.0
        %3588 = vmatpush1.msra.mxu0 0.0
        %3589 = vmatprep.subr.mxu0 0.0
        %3590 = vmatpush1.msra.mxu0 0.0
        %3591 = vmatprep.subr.mxu0 0.0
        %3592 = vmatpush1.msra.mxu0 0.0
        %3593 = vmatprep.subr.mxu0 0.0
        %3594 = vmatpush1.msra.mxu0 %v3558
        %3595 = vmatprep.subr.mxu0 0.0
        %3596 = vmatpush1.msra.mxu0 %v3557
        %3597 = vmatprep.subr.mxu0 0.0
        %3598 = vmatpush1.msra.mxu0 %v3556
        %3599 = vmatprep.subr.mxu0 0.0
        %3600 = vmatpush1.msra.mxu0 %v3555
        %3601 = vmatprep.subr.mxu0 0.0
        %3602 = vmatpush2.msra.mxu0 0.0
        %3603 = vmatprep.subr.mxu0 0.0
        %3604 = vmatpush2.msra.mxu0 0.0
        %3605 = vmatprep.subr.mxu0 0.0
        %3606 = vmatpush2.msra.mxu0 0.0
        %3607 = vmatprep.subr.mxu0 0.0
        %3608 = vmatpush2.msra.mxu0 0.0
        %3609 = vmatprep.subr.mxu0 0.0
        %3610 = vmatpush2.msra.mxu0 0.0
        %3611 = vmatprep.subr.mxu0 0.0
        %3612 = vmatpush2.msra.mxu0 0.0
        %3613 = vmatprep.subr.mxu0 0.0
        %3614 = vmatpush2.msra.mxu0 0.0
        %3615 = vmatprep.subr.mxu0 0.0
        %3616 = vmatpush2.msra.mxu0 0.0
        %3617 = vmatprep.subr.mxu0 0.0
        %3618 = vmatpush2.msra.mxu0 0.0
        %3619 = vmatprep.subr.mxu0 0.0
        %3620 = vmatpush2.msra.mxu0 0.0
        %3621 = vmatprep.subr.mxu0 0.0
        %3622 = vmatpush2.msra.mxu0 0.0
        %3623 = vmatprep.subr.mxu0 0.0
        %3624 = vmatpush2.msra.mxu0 0.0
        %3625 = vmatprep.subr.mxu0 0.0
        %3626 = vmatpush2.msra.mxu0 0.0
        %3627 = vmatprep.subr.mxu0 0.0
        %3628 = vmatpush2.msra.mxu0 0.0
        %3629 = vmatprep.subr.mxu0 0.0
        %3630 = vmatpush2.msra.mxu0 0.0
        %3631 = vmatprep.subr.mxu0 0.0
        %3632 = vmatpush2.msra.mxu0 0.0
        %3633 = vmatprep.mubr.f32.mxu0 0.0
        %3634 = vmatmul.mubr.f32.gmra.mxu0 %v3567
        %v3635 = vpop.f32.mrf.mxu0
        %v3636 = vadd.f32 %v3564, %v3635
        %v3637 = vpop.f32.mrf.mxu0
        %3638 = vdwg.mxu0
        %v3639 = vmax.f32 %v3636, 0.0
        %v3640 = vld [vmem:[#allocation12] sm:$0xff]
        %v3641 = vld [vmem:[#allocation12 + $0x8] sm:$0xff]
        %v3642 = vld [vmem:[#allocation12 + $0x10] sm:$0xff]
        %v3643 = vld [vmem:[#allocation12 + $0x18] sm:$0xff]
        %v3644 = vld [vmem:[#allocation12 + $0x20] sm:$0xff]
        %v3645 = vld [vmem:[#allocation12 + $0x28] sm:$0xff]
        %v3646 = vld [vmem:[#allocation12 + $0x30] sm:$0xff]
        %v3647 = vld [vmem:[#allocation12 + $0x38] sm:$0xff]
        %v3648 = vld [vmem:[#allocation12 + $0x40] sm:$0xff]
        %v3649 = vld [vmem:[#allocation12 + $0x48] sm:$0xff]
        %v3650 = vld [vmem:[#allocation12 + $0x50] sm:$0xff]
        %v3651 = vld [vmem:[#allocation12 + $0x58] sm:$0xff]
        %v3652 = vld [vmem:[#allocation12 + $0x60] sm:$0xff]
        %v3653 = vld [vmem:[#allocation12 + $0x68] sm:$0xff]
        %v3654 = vld [vmem:[#allocation12 + $0x70] sm:$0xff]
        %v3655 = vld [vmem:[#allocation12 + $0x78] sm:$0xff]
        %v3656 = vld [vmem:[%s10] sm:$0x1]
        %v3658 = vlaneseq
        %v3659 = vshrl.u32 %v3658, 7
        %v3660 = vsub.s32 0, %v3659
        %v3661 = vrot.slane %v3656, %v3660
        %3663 = vmatprep.subr.mxu0 0.0
        %3664 = vmatpush1.msra.mxu0 %v3655
        %3665 = vmatprep.subr.mxu0 0.0
        %3666 = vmatpush1.msra.mxu0 %v3654
        %3667 = vmatprep.subr.mxu0 0.0
        %3668 = vmatpush1.msra.mxu0 %v3653
        %3669 = vmatprep.subr.mxu0 0.0
        %3670 = vmatpush1.msra.mxu0 %v3652
        %3671 = vmatprep.subr.mxu0 0.0
        %3672 = vmatpush1.msra.mxu0 %v3651
        %3673 = vmatprep.subr.mxu0 0.0
        %3674 = vmatpush1.msra.mxu0 %v3650
        %3675 = vmatprep.subr.mxu0 0.0
        %3676 = vmatpush1.msra.mxu0 %v3649
        %3677 = vmatprep.subr.mxu0 0.0
        %3678 = vmatpush1.msra.mxu0 %v3648
        %3679 = vmatprep.subr.mxu0 0.0
        %3680 = vmatpush1.msra.mxu0 %v3647
        %3681 = vmatprep.subr.mxu0 0.0
        %3682 = vmatpush1.msra.mxu0 %v3646
        %3683 = vmatprep.subr.mxu0 0.0
        %3684 = vmatpush1.msra.mxu0 %v3645
        %3685 = vmatprep.subr.mxu0 0.0
        %3686 = vmatpush1.msra.mxu0 %v3644
        %3687 = vmatprep.subr.mxu0 0.0
        %3688 = vmatpush1.msra.mxu0 %v3643
        %3689 = vmatprep.subr.mxu0 0.0
        %3690 = vmatpush1.msra.mxu0 %v3642
        %3691 = vmatprep.subr.mxu0 0.0
        %3692 = vmatpush1.msra.mxu0 %v3641
        %3693 = vmatprep.subr.mxu0 0.0
        %3694 = vmatpush1.msra.mxu0 %v3640
        %3695 = vmatprep.subr.mxu0 0.0
        %3696 = vmatpush2.msra.mxu0 0.0
        %3697 = vmatprep.subr.mxu0 0.0
        %3698 = vmatpush2.msra.mxu0 0.0
        %3699 = vmatprep.subr.mxu0 0.0
        %3700 = vmatpush2.msra.mxu0 0.0
        %3701 = vmatprep.subr.mxu0 0.0
        %3702 = vmatpush2.msra.mxu0 0.0
        %3703 = vmatprep.subr.mxu0 0.0
        %3704 = vmatpush2.msra.mxu0 0.0
        %3705 = vmatprep.subr.mxu0 0.0
        %3706 = vmatpush2.msra.mxu0 0.0
        %3707 = vmatprep.subr.mxu0 0.0
        %3708 = vmatpush2.msra.mxu0 0.0
        %3709 = vmatprep.subr.mxu0 0.0
        %3710 = vmatpush2.msra.mxu0 0.0
        %3711 = vmatprep.subr.mxu0 0.0
        %3712 = vmatpush2.msra.mxu0 0.0
        %3713 = vmatprep.subr.mxu0 0.0
        %3714 = vmatpush2.msra.mxu0 0.0
        %3715 = vmatprep.subr.mxu0 0.0
        %3716 = vmatpush2.msra.mxu0 0.0
        %3717 = vmatprep.subr.mxu0 0.0
        %3718 = vmatpush2.msra.mxu0 0.0
        %3719 = vmatprep.subr.mxu0 0.0
        %3720 = vmatpush2.msra.mxu0 0.0
        %3721 = vmatprep.subr.mxu0 0.0
        %3722 = vmatpush2.msra.mxu0 0.0
        %3723 = vmatprep.subr.mxu0 0.0
        %3724 = vmatpush2.msra.mxu0 0.0
        %3725 = vmatprep.subr.mxu0 0.0
        %3726 = vmatpush2.msra.mxu0 0.0
        %3727 = vmatprep.mubr.f32.mxu0 0.0
        %3728 = vmatmul.mubr.f32.gmra.mxu0 %v3639
        %v3729 = vpop.f32.mrf.mxu0
        %v3730 = vadd.f32 %v3661, %v3729
        %v3731 = vpop.f32.mrf.mxu0
        %3732 = vdwg.mxu0
        %v3733 = vsub.f32 0.0, %v3730
        %v3734 = vmul.f32 %v3733, 1.442695
        %v3735 = vpow.pop %v3734
        %v3736 = vadd.f32 %v3735, 1.0
        %v3737 = vrcp.pop %v3736
        %v3738 = vmul.f32 1.0, %v3737
        %v3739 = vpack.c.bf16 %v3542, %v3541
        %v3740 = vunpack.c.l.bf16 %v3739
        %v3741 = vunpack.c.h.bf16 %v3739
        %v3742 = vlaneseq
        %v3743 = vshrl.u32 %v3742, 7
        %v3744 = vsub.s32 0, %v3743
        %v3745 = vrot.slane %v3738, %v3744
        %v3746 = vmul.f32 %v3740, %v3745
        %v3747 = vmul.f32 %v3741, %v3745
        %v3748 = vpack.c.bf16 %v3747, %v3746
        %v3749 = vld [vmem:[#allocation14] sm:$0x3]
        %v3751 = vsel %vm3494, %v3749, 0
        %3753 = vmatprep.subr.bf16.mxu0 0
        %3754 = vmatpush1.bf16.msra.mxu0 0
        %3755 = vmatprep.subr.bf16.mxu0 0
        %3756 = vmatpush1.bf16.msra.mxu0 0
        %3757 = vmatprep.subr.bf16.mxu0 0
        %3758 = vmatpush1.bf16.msra.mxu0 0
        %3759 = vmatprep.subr.bf16.mxu0 0
        %3760 = vmatpush1.bf16.msra.mxu0 0
        %3761 = vmatprep.subr.bf16.mxu0 0
        %3762 = vmatpush1.bf16.msra.mxu0 0
        %3763 = vmatprep.subr.bf16.mxu0 0
        %3764 = vmatpush1.bf16.msra.mxu0 0
        %3765 = vmatprep.subr.bf16.mxu0 0
        %3766 = vmatpush1.bf16.msra.mxu0 0
        %3767 = vmatprep.subr.bf16.mxu0 0
        %3768 = vmatpush1.bf16.msra.mxu0 %v3748
        %3769 = vmatprep.subr.bf16.mxu0 0
        %3770 = vmatpush2.bf16.msra.mxu0 0
        %3771 = vmatprep.subr.bf16.mxu0 0
        %3772 = vmatpush2.bf16.msra.mxu0 0
        %3773 = vmatprep.subr.bf16.mxu0 0
        %3774 = vmatpush2.bf16.msra.mxu0 0
        %3775 = vmatprep.subr.bf16.mxu0 0
        %3776 = vmatpush2.bf16.msra.mxu0 0
        %3777 = vmatprep.subr.bf16.mxu0 0
        %3778 = vmatpush2.bf16.msra.mxu0 0
        %3779 = vmatprep.subr.bf16.mxu0 0
        %3780 = vmatpush2.bf16.msra.mxu0 0
        %3781 = vmatprep.subr.bf16.mxu0 0
        %3782 = vmatpush2.bf16.msra.mxu0 0
        %3783 = vmatprep.subr.bf16.mxu0 0
        %3784 = vmatpush2.bf16.msra.mxu0 0
        %3785 = vmatprep.mubr.bf16.mxu0 0
        %3786 = vmatmul.mubr.bf16.gmra.mxu0 %v3751
        %v3787 = vpop.f32.mrf.mxu0
        %v3788 = vadd.f32 0.0, %v3787
        %v3789 = vpop.f32.mrf.mxu0
        %v3790 = vpop.f32.mrf.mxu0
        %v3791 = vpop.f32.mrf.mxu0
        %3792 = vdwg.mxu0
        %v3793 = vpack.c.bf16 %v3788, %v3788
        %vm3794 = vcmask 254976
        %3795 = vst.msk [vmem:[#allocation4] sm:$0x3] %vm3794, %v3793
        %s3796 = scalar_lea.vmem [#allocation14], 2
        %v3797 = vld [vmem:[%s3796] sm:$0x3]
        %v3799 = vsel %vm3494, %v3797, 0
        %3801 = vmatprep.subr.bf16.mxu0 0
        %3802 = vmatpush1.bf16.msra.mxu0 0
        %3803 = vmatprep.subr.bf16.mxu0 0
        %3804 = vmatpush1.bf16.msra.mxu0 0
        %3805 = vmatprep.subr.bf16.mxu0 0
        %3806 = vmatpush1.bf16.msra.mxu0 0
        %3807 = vmatprep.subr.bf16.mxu0 0
        %3808 = vmatpush1.bf16.msra.mxu0 0
        %3809 = vmatprep.subr.bf16.mxu0 0
        %3810 = vmatpush1.bf16.msra.mxu0 0
        %3811 = vmatprep.subr.bf16.mxu0 0
        %3812 = vmatpush1.bf16.msra.mxu0 0
        %3813 = vmatprep.subr.bf16.mxu0 0
        %3814 = vmatpush1.bf16.msra.mxu0 0
        %3815 = vmatprep.subr.bf16.mxu0 0
        %3816 = vmatpush1.bf16.msra.mxu0 %v3748
        %3817 = vmatprep.subr.bf16.mxu0 0
        %3818 = vmatpush2.bf16.msra.mxu0 0
        %3819 = vmatprep.subr.bf16.mxu0 0
        %3820 = vmatpush2.bf16.msra.mxu0 0
        %3821 = vmatprep.subr.bf16.mxu0 0
        %3822 = vmatpush2.bf16.msra.mxu0 0
        %3823 = vmatprep.subr.bf16.mxu0 0
        %3824 = vmatpush2.bf16.msra.mxu0 0
        %3825 = vmatprep.subr.bf16.mxu0 0
        %3826 = vmatpush2.bf16.msra.mxu0 0
        %3827 = vmatprep.subr.bf16.mxu0 0
        %3828 = vmatpush2.bf16.msra.mxu0 0
        %3829 = vmatprep.subr.bf16.mxu0 0
        %3830 = vmatpush2.bf16.msra.mxu0 0
        %3831 = vmatprep.subr.bf16.mxu0 0
        %3832 = vmatpush2.bf16.msra.mxu0 0
        %3833 = vmatprep.mubr.bf16.mxu0 0
        %3834 = vmatmul.mubr.bf16.gmra.mxu0 %v3799
        %v3835 = vpop.f32.mrf.mxu0
        %v3836 = vadd.f32 0.0, %v3835
        %v3837 = vpop.f32.mrf.mxu0
        %v3838 = vpop.f32.mrf.mxu0
        %v3839 = vpop.f32.mrf.mxu0
        %3840 = vdwg.mxu0
        %v3841 = vpack.c.bf16 %v3836, %v3836
        %v3844 = vunpack.c.l.s4 1983009808
        %v3845 = vunpack.c.0.s8 %v3844
        %v3846 = vlaneseq
        %v3847 = vshrl.u32 %v3846, 7
        %v3848 = vsub.s32 %v3845, %v3847
        %v3849 = vrot.slane %v3841, %v3848
        %3850 = vrot.lane.b32.xlu0 %v3849, 32
        %v3851 = vpop.permute.xlu0 %3850
        %vm3853 = vcmask 517376
        %3854 = vst.msk [vmem:[#allocation4] sm:$0x3] %vm3853, %v3851
        %s3855 = scalar_lea.vmem [#allocation14], 4
        %v3856 = vld [vmem:[%s3855] sm:$0x3]
        %v3858 = vsel %vm3494, %v3856, 0
        %3860 = vmatprep.subr.bf16.mxu0 0
        %3861 = vmatpush1.bf16.msra.mxu0 0
        %3862 = vmatprep.subr.bf16.mxu0 0
        %3863 = vmatpush1.bf16.msra.mxu0 0
        %3864 = vmatprep.subr.bf16.mxu0 0
        %3865 = vmatpush1.bf16.msra.mxu0 0
        %3866 = vmatprep.subr.bf16.mxu0 0
        %3867 = vmatpush1.bf16.msra.mxu0 0
        %3868 = vmatprep.subr.bf16.mxu0 0
        %3869 = vmatpush1.bf16.msra.mxu0 0
        %3870 = vmatprep.subr.bf16.mxu0 0
        %3871 = vmatpush1.bf16.msra.mxu0 0
        %3872 = vmatprep.subr.bf16.mxu0 0
        %3873 = vmatpush1.bf16.msra.mxu0 0
        %3874 = vmatprep.subr.bf16.mxu0 0
        %3875 = vmatpush1.bf16.msra.mxu0 %v3748
        %3876 = vmatprep.subr.bf16.mxu0 0
        %3877 = vmatpush2.bf16.msra.mxu0 0
        %3878 = vmatprep.subr.bf16.mxu0 0
        %3879 = vmatpush2.bf16.msra.mxu0 0
        %3880 = vmatprep.subr.bf16.mxu0 0
        %3881 = vmatpush2.bf16.msra.mxu0 0
        %3882 = vmatprep.subr.bf16.mxu0 0
        %3883 = vmatpush2.bf16.msra.mxu0 0
        %3884 = vmatprep.subr.bf16.mxu0 0
        %3885 = vmatpush2.bf16.msra.mxu0 0
        %3886 = vmatprep.subr.bf16.mxu0 0
        %3887 = vmatpush2.bf16.msra.mxu0 0
        %3888 = vmatprep.subr.bf16.mxu0 0
        %3889 = vmatpush2.bf16.msra.mxu0 0
        %3890 = vmatprep.subr.bf16.mxu0 0
        %3891 = vmatpush2.bf16.msra.mxu0 0
        %3892 = vmatprep.mubr.bf16.mxu0 0
        %3893 = vmatmul.mubr.bf16.gmra.mxu0 %v3858
        %v3894 = vpop.f32.mrf.mxu0
        %v3895 = vadd.f32 0.0, %v3894
        %v3896 = vpop.f32.mrf.mxu0
        %v3897 = vpop.f32.mrf.mxu0
        %v3898 = vpop.f32.mrf.mxu0
        %3899 = vdwg.mxu0
        %v3900 = vpack.c.bf16 %v3895, %v3895
        %v3903 = vunpack.c.l.s4 1983009808
        %v3904 = vunpack.c.0.s8 %v3903
        %v3905 = vlaneseq
        %v3906 = vshrl.u32 %v3905, 7
        %v3907 = vsub.s32 %v3904, %v3906
        %v3908 = vrot.slane %v3900, %v3907
        %3909 = vrot.lane.b32.xlu0 %v3908, 64
        %v3910 = vpop.permute.xlu0 %3909
        %vm3912 = vcmask 779776
        %3913 = vst.msk [vmem:[#allocation4] sm:$0x3] %vm3912, %v3910
        %s3914 = scalar_lea.vmem [#allocation14], 6
        %v3915 = vld [vmem:[%s3914] sm:$0x3]
        %v3917 = vsel %vm3494, %v3915, 0
        %3919 = vmatprep.subr.bf16.mxu0 0
        %3920 = vmatpush1.bf16.msra.mxu0 0
        %3921 = vmatprep.subr.bf16.mxu0 0
        %3922 = vmatpush1.bf16.msra.mxu0 0
        %3923 = vmatprep.subr.bf16.mxu0 0
        %3924 = vmatpush1.bf16.msra.mxu0 0
        %3925 = vmatprep.subr.bf16.mxu0 0
        %3926 = vmatpush1.bf16.msra.mxu0 0
        %3927 = vmatprep.subr.bf16.mxu0 0
        %3928 = vmatpush1.bf16.msra.mxu0 0
        %3929 = vmatprep.subr.bf16.mxu0 0
        %3930 = vmatpush1.bf16.msra.mxu0 0
        %3931 = vmatprep.subr.bf16.mxu0 0
        %3932 = vmatpush1.bf16.msra.mxu0 0
        %3933 = vmatprep.subr.bf16.mxu0 0
        %3934 = vmatpush1.bf16.msra.mxu0 %v3748
        %3935 = vmatprep.subr.bf16.mxu0 0
        %3936 = vmatpush2.bf16.msra.mxu0 0
        %3937 = vmatprep.subr.bf16.mxu0 0
        %3938 = vmatpush2.bf16.msra.mxu0 0
        %3939 = vmatprep.subr.bf16.mxu0 0
        %3940 = vmatpush2.bf16.msra.mxu0 0
        %3941 = vmatprep.subr.bf16.mxu0 0
        %3942 = vmatpush2.bf16.msra.mxu0 0
        %3943 = vmatprep.subr.bf16.mxu0 0
        %3944 = vmatpush2.bf16.msra.mxu0 0
        %3945 = vmatprep.subr.bf16.mxu0 0
        %3946 = vmatpush2.bf16.msra.mxu0 0
        %3947 = vmatprep.subr.bf16.mxu0 0
        %3948 = vmatpush2.bf16.msra.mxu0 0
        %3949 = vmatprep.subr.bf16.mxu0 0
        %3950 = vmatpush2.bf16.msra.mxu0 0
        %3951 = vmatprep.mubr.bf16.mxu0 0
        %3952 = vmatmul.mubr.bf16.gmra.mxu0 %v3917
        %v3953 = vpop.f32.mrf.mxu0
        %v3954 = vadd.f32 0.0, %v3953
        %v3955 = vpop.f32.mrf.mxu0
        %v3956 = vpop.f32.mrf.mxu0
        %v3957 = vpop.f32.mrf.mxu0
        %3958 = vdwg.mxu0
        %v3959 = vpack.c.bf16 %v3954, %v3954
        %v3962 = vunpack.c.l.s4 1983009808
        %v3963 = vunpack.c.0.s8 %v3962
        %v3964 = vlaneseq
        %v3965 = vshrl.u32 %v3964, 7
        %v3966 = vsub.s32 %v3963, %v3965
        %v3967 = vrot.slane %v3959, %v3966
        %3968 = vrot.lane.b32.xlu0 %v3967, 96
        %v3969 = vpop.permute.xlu0 %3968
        %vm3971 = vcmask 1042176
        %3972 = vst.msk [vmem:[#allocation4] sm:$0x3] %vm3971, %v3969
        %s3973 = scalar_lea.vmem [#allocation14], 8
        %v3974 = vld [vmem:[%s3973] sm:$0x3]
        %v3976 = vsel %vm3494, %v3974, 0
        %3978 = vmatprep.subr.bf16.mxu0 0
        %3979 = vmatpush1.bf16.msra.mxu0 0
        %3980 = vmatprep.subr.bf16.mxu0 0
        %3981 = vmatpush1.bf16.msra.mxu0 0
        %3982 = vmatprep.subr.bf16.mxu0 0
        %3983 = vmatpush1.bf16.msra.mxu0 0
        %3984 = vmatprep.subr.bf16.mxu0 0
        %3985 = vmatpush1.bf16.msra.mxu0 0
        %3986 = vmatprep.subr.bf16.mxu0 0
        %3987 = vmatpush1.bf16.msra.mxu0 0
        %3988 = vmatprep.subr.bf16.mxu0 0
        %3989 = vmatpush1.bf16.msra.mxu0 0
        %3990 = vmatprep.subr.bf16.mxu0 0
        %3991 = vmatpush1.bf16.msra.mxu0 0
        %3992 = vmatprep.subr.bf16.mxu0 0
        %3993 = vmatpush1.bf16.msra.mxu0 %v3748
        %3994 = vmatprep.subr.bf16.mxu0 0
        %3995 = vmatpush2.bf16.msra.mxu0 0
        %3996 = vmatprep.subr.bf16.mxu0 0
        %3997 = vmatpush2.bf16.msra.mxu0 0
        %3998 = vmatprep.subr.bf16.mxu0 0
        %3999 = vmatpush2.bf16.msra.mxu0 0
        %4000 = vmatprep.subr.bf16.mxu0 0
        %4001 = vmatpush2.bf16.msra.mxu0 0
        %4002 = vmatprep.subr.bf16.mxu0 0
        %4003 = vmatpush2.bf16.msra.mxu0 0
        %4004 = vmatprep.subr.bf16.mxu0 0
        %4005 = vmatpush2.bf16.msra.mxu0 0
        %4006 = vmatprep.subr.bf16.mxu0 0
        %4007 = vmatpush2.bf16.msra.mxu0 0
        %4008 = vmatprep.subr.bf16.mxu0 0
        %4009 = vmatpush2.bf16.msra.mxu0 0
        %4010 = vmatprep.mubr.bf16.mxu0 0
        %4011 = vmatmul.mubr.bf16.gmra.mxu0 %v3976
        %v4012 = vpop.f32.mrf.mxu0
        %v4013 = vadd.f32 0.0, %v4012
        %v4014 = vpop.f32.mrf.mxu0
        %v4015 = vpop.f32.mrf.mxu0
        %v4016 = vpop.f32.mrf.mxu0
        %4017 = vdwg.mxu0
        %v4018 = vpack.c.bf16 %v4013, %v4013
        %4019 = vst.msk [vmem:[#allocation4 + $0x2] sm:$0x3] %vm3794, %v4018
        %s4020 = scalar_lea.vmem [#allocation14], 10
        %v4021 = vld [vmem:[%s4020] sm:$0x3]
        %v4023 = vsel %vm3494, %v4021, 0
        %4025 = vmatprep.subr.bf16.mxu0 0
        %4026 = vmatpush1.bf16.msra.mxu0 0
        %4027 = vmatprep.subr.bf16.mxu0 0
        %4028 = vmatpush1.bf16.msra.mxu0 0
        %4029 = vmatprep.subr.bf16.mxu0 0
        %4030 = vmatpush1.bf16.msra.mxu0 0
        %4031 = vmatprep.subr.bf16.mxu0 0
        %4032 = vmatpush1.bf16.msra.mxu0 0
        %4033 = vmatprep.subr.bf16.mxu0 0
        %4034 = vmatpush1.bf16.msra.mxu0 0
        %4035 = vmatprep.subr.bf16.mxu0 0
        %4036 = vmatpush1.bf16.msra.mxu0 0
        %4037 = vmatprep.subr.bf16.mxu0 0
        %4038 = vmatpush1.bf16.msra.mxu0 0
        %4039 = vmatprep.subr.bf16.mxu0 0
        %4040 = vmatpush1.bf16.msra.mxu0 %v3748
        %4041 = vmatprep.subr.bf16.mxu0 0
        %4042 = vmatpush2.bf16.msra.mxu0 0
        %4043 = vmatprep.subr.bf16.mxu0 0
        %4044 = vmatpush2.bf16.msra.mxu0 0
        %4045 = vmatprep.subr.bf16.mxu0 0
        %4046 = vmatpush2.bf16.msra.mxu0 0
        %4047 = vmatprep.subr.bf16.mxu0 0
        %4048 = vmatpush2.bf16.msra.mxu0 0
        %4049 = vmatprep.subr.bf16.mxu0 0
        %4050 = vmatpush2.bf16.msra.mxu0 0
        %4051 = vmatprep.subr.bf16.mxu0 0
        %4052 = vmatpush2.bf16.msra.mxu0 0
        %4053 = vmatprep.subr.bf16.mxu0 0
        %4054 = vmatpush2.bf16.msra.mxu0 0
        %4055 = vmatprep.subr.bf16.mxu0 0
        %4056 = vmatpush2.bf16.msra.mxu0 0
        %4057 = vmatprep.mubr.bf16.mxu0 0
        %4058 = vmatmul.mubr.bf16.gmra.mxu0 %v4023
        %v4059 = vpop.f32.mrf.mxu0
        %v4060 = vadd.f32 0.0, %v4059
        %v4061 = vpop.f32.mrf.mxu0
        %v4062 = vpop.f32.mrf.mxu0
        %v4063 = vpop.f32.mrf.mxu0
        %4064 = vdwg.mxu0
        %v4065 = vpack.c.bf16 %v4060, %v4060
        %v4068 = vunpack.c.l.s4 1983009808
        %v4069 = vunpack.c.0.s8 %v4068
        %v4070 = vlaneseq
        %v4071 = vshrl.u32 %v4070, 7
        %v4072 = vsub.s32 %v4069, %v4071
        %v4073 = vrot.slane %v4065, %v4072
        %4074 = vrot.lane.b32.xlu0 %v4073, 32
        %v4075 = vpop.permute.xlu0 %4074
        %4077 = vst.msk [vmem:[#allocation4 + $0x2] sm:$0x3] %vm3853, %v4075
        %s4078 = scalar_lea.vmem [#allocation14], 12
        %v4079 = vld [vmem:[%s4078] sm:$0x3]
        %v4081 = vsel %vm3494, %v4079, 0
        %4083 = vmatprep.subr.bf16.mxu0 0
        %4084 = vmatpush1.bf16.msra.mxu0 0
        %4085 = vmatprep.subr.bf16.mxu0 0
        %4086 = vmatpush1.bf16.msra.mxu0 0
        %4087 = vmatprep.subr.bf16.mxu0 0
        %4088 = vmatpush1.bf16.msra.mxu0 0
        %4089 = vmatprep.subr.bf16.mxu0 0
        %4090 = vmatpush1.bf16.msra.mxu0 0
        %4091 = vmatprep.subr.bf16.mxu0 0
        %4092 = vmatpush1.bf16.msra.mxu0 0
        %4093 = vmatprep.subr.bf16.mxu0 0
        %4094 = vmatpush1.bf16.msra.mxu0 0
        %4095 = vmatprep.subr.bf16.mxu0 0
        %4096 = vmatpush1.bf16.msra.mxu0 0
        %4097 = vmatprep.subr.bf16.mxu0 0
        %4098 = vmatpush1.bf16.msra.mxu0 %v3748
        %4099 = vmatprep.subr.bf16.mxu0 0
        %4100 = vmatpush2.bf16.msra.mxu0 0
        %4101 = vmatprep.subr.bf16.mxu0 0
        %4102 = vmatpush2.bf16.msra.mxu0 0
        %4103 = vmatprep.subr.bf16.mxu0 0
        %4104 = vmatpush2.bf16.msra.mxu0 0
        %4105 = vmatprep.subr.bf16.mxu0 0
        %4106 = vmatpush2.bf16.msra.mxu0 0
        %4107 = vmatprep.subr.bf16.mxu0 0
        %4108 = vmatpush2.bf16.msra.mxu0 0
        %4109 = vmatprep.subr.bf16.mxu0 0
        %4110 = vmatpush2.bf16.msra.mxu0 0
        %4111 = vmatprep.subr.bf16.mxu0 0
        %4112 = vmatpush2.bf16.msra.mxu0 0
        %4113 = vmatprep.subr.bf16.mxu0 0
        %4114 = vmatpush2.bf16.msra.mxu0 0
        %4115 = vmatprep.mubr.bf16.mxu0 0
        %4116 = vmatmul.mubr.bf16.gmra.mxu0 %v4081
        %v4117 = vpop.f32.mrf.mxu0
        %v4118 = vadd.f32 0.0, %v4117
        %v4119 = vpop.f32.mrf.mxu0
        %v4120 = vpop.f32.mrf.mxu0
        %v4121 = vpop.f32.mrf.mxu0
        %4122 = vdwg.mxu0
        %v4123 = vpack.c.bf16 %v4118, %v4118
        %v4126 = vunpack.c.l.s4 1983009808
        %v4127 = vunpack.c.0.s8 %v4126
        %v4128 = vlaneseq
        %v4129 = vshrl.u32 %v4128, 7
        %v4130 = vsub.s32 %v4127, %v4129
        %v4131 = vrot.slane %v4123, %v4130
        %4132 = vrot.lane.b32.xlu0 %v4131, 64
        %v4133 = vpop.permute.xlu0 %4132
        %4135 = vst.msk [vmem:[#allocation4 + $0x2] sm:$0x3] %vm3912, %v4133
        %s4136 = scalar_lea.vmem [#allocation14], 14
        %v4137 = vld [vmem:[%s4136] sm:$0x3]
        %v4139 = vsel %vm3494, %v4137, 0
        %4141 = vmatprep.subr.bf16.mxu0 0
        %4142 = vmatpush1.bf16.msra.mxu0 0
        %4143 = vmatprep.subr.bf16.mxu0 0
        %4144 = vmatpush1.bf16.msra.mxu0 0
        %4145 = vmatprep.subr.bf16.mxu0 0
        %4146 = vmatpush1.bf16.msra.mxu0 0
        %4147 = vmatprep.subr.bf16.mxu0 0
        %4148 = vmatpush1.bf16.msra.mxu0 0
        %4149 = vmatprep.subr.bf16.mxu0 0
        %4150 = vmatpush1.bf16.msra.mxu0 0
        %4151 = vmatprep.subr.bf16.mxu0 0
        %4152 = vmatpush1.bf16.msra.mxu0 0
        %4153 = vmatprep.subr.bf16.mxu0 0
        %4154 = vmatpush1.bf16.msra.mxu0 0
        %4155 = vmatprep.subr.bf16.mxu0 0
        %4156 = vmatpush1.bf16.msra.mxu0 %v3748
        %4157 = vmatprep.subr.bf16.mxu0 0
        %4158 = vmatpush2.bf16.msra.mxu0 0
        %4159 = vmatprep.subr.bf16.mxu0 0
        %4160 = vmatpush2.bf16.msra.mxu0 0
        %4161 = vmatprep.subr.bf16.mxu0 0
        %4162 = vmatpush2.bf16.msra.mxu0 0
        %4163 = vmatprep.subr.bf16.mxu0 0
        %4164 = vmatpush2.bf16.msra.mxu0 0
        %4165 = vmatprep.subr.bf16.mxu0 0
        %4166 = vmatpush2.bf16.msra.mxu0 0
        %4167 = vmatprep.subr.bf16.mxu0 0
        %4168 = vmatpush2.bf16.msra.mxu0 0
        %4169 = vmatprep.subr.bf16.mxu0 0
        %4170 = vmatpush2.bf16.msra.mxu0 0
        %4171 = vmatprep.subr.bf16.mxu0 0
        %4172 = vmatpush2.bf16.msra.mxu0 0
        %4173 = vmatprep.mubr.bf16.mxu0 0
        %4174 = vmatmul.mubr.bf16.gmra.mxu0 %v4139
        %v4175 = vpop.f32.mrf.mxu0
        %v4176 = vadd.f32 0.0, %v4175
        %v4177 = vpop.f32.mrf.mxu0
        %v4178 = vpop.f32.mrf.mxu0
        %v4179 = vpop.f32.mrf.mxu0
        %4180 = vdwg.mxu0
        %v4181 = vpack.c.bf16 %v4176, %v4176
        %v4184 = vunpack.c.l.s4 1983009808
        %v4185 = vunpack.c.0.s8 %v4184
        %v4186 = vlaneseq
        %v4187 = vshrl.u32 %v4186, 7
        %v4188 = vsub.s32 %v4185, %v4187
        %v4189 = vrot.slane %v4181, %v4188
        %4190 = vrot.lane.b32.xlu0 %v4189, 96
        %v4191 = vpop.permute.xlu0 %4190
        %4193 = vst.msk [vmem:[#allocation4 + $0x2] sm:$0x3] %vm3971, %v4191
        %s4194 = scalar_lea.vmem [#allocation14], 16
        %v4195 = vld [vmem:[%s4194] sm:$0x3]
        %v4197 = vsel %vm3494, %v4195, 0
        %4199 = vmatprep.subr.bf16.mxu0 0
        %4200 = vmatpush1.bf16.msra.mxu0 0
        %4201 = vmatprep.subr.bf16.mxu0 0
        %4202 = vmatpush1.bf16.msra.mxu0 0
        %4203 = vmatprep.subr.bf16.mxu0 0
        %4204 = vmatpush1.bf16.msra.mxu0 0
        %4205 = vmatprep.subr.bf16.mxu0 0
        %4206 = vmatpush1.bf16.msra.mxu0 0
        %4207 = vmatprep.subr.bf16.mxu0 0
        %4208 = vmatpush1.bf16.msra.mxu0 0
        %4209 = vmatprep.subr.bf16.mxu0 0
        %4210 = vmatpush1.bf16.msra.mxu0 0
        %4211 = vmatprep.subr.bf16.mxu0 0
        %4212 = vmatpush1.bf16.msra.mxu0 0
        %4213 = vmatprep.subr.bf16.mxu0 0
        %4214 = vmatpush1.bf16.msra.mxu0 %v3748
        %4215 = vmatprep.subr.bf16.mxu0 0
        %4216 = vmatpush2.bf16.msra.mxu0 0
        %4217 = vmatprep.subr.bf16.mxu0 0
        %4218 = vmatpush2.bf16.msra.mxu0 0
        %4219 = vmatprep.subr.bf16.mxu0 0
        %4220 = vmatpush2.bf16.msra.mxu0 0
        %4221 = vmatprep.subr.bf16.mxu0 0
        %4222 = vmatpush2.bf16.msra.mxu0 0
        %4223 = vmatprep.subr.bf16.mxu0 0
        %4224 = vmatpush2.bf16.msra.mxu0 0
        %4225 = vmatprep.subr.bf16.mxu0 0
        %4226 = vmatpush2.bf16.msra.mxu0 0
        %4227 = vmatprep.subr.bf16.mxu0 0
        %4228 = vmatpush2.bf16.msra.mxu0 0
        %4229 = vmatprep.subr.bf16.mxu0 0
        %4230 = vmatpush2.bf16.msra.mxu0 0
        %4231 = vmatprep.mubr.bf16.mxu0 0
        %4232 = vmatmul.mubr.bf16.gmra.mxu0 %v4197
        %v4233 = vpop.f32.mrf.mxu0
        %v4234 = vadd.f32 0.0, %v4233
        %v4235 = vpop.f32.mrf.mxu0
        %v4236 = vpop.f32.mrf.mxu0
        %v4237 = vpop.f32.mrf.mxu0
        %4238 = vdwg.mxu0
        %v4239 = vpack.c.bf16 %v4234, %v4234
        %4240 = vst.msk [vmem:[#allocation4 + $0x4] sm:$0x3] %vm3794, %v4239
        %v4241 = vld [vmem:[#allocation4] sm:$0x3f]
        %v4242 = vld [vmem:[%s12] sm:$0xf]
        %v4243 = vld [vmem:[%s12 + $0x4] sm:$0xf]
        %v4244 = vld [vmem:[%s12 + $0x8] sm:$0xf]
        %v4245 = vld [vmem:[%s12 + $0xc] sm:$0xf]
        %v4246 = vld [vmem:[%s12 + $0x10] sm:$0xf]
        %v4247 = vld [vmem:[%s12 + $0x14] sm:$0xf]
        %v4248 = vld [vmem:[%s12 + $0x18] sm:$0xf]
        %v4249 = vld [vmem:[%s12 + $0x1c] sm:$0xf]
        %v4250 = vld [vmem:[%s12 + $0x20] sm:$0xf]
        %v4251 = vld [vmem:[%s12 + $0x24] sm:$0xf]
        %v4252 = vld [vmem:[%s12 + $0x28] sm:$0xf]
        %v4253 = vld [vmem:[%s12 + $0x2c] sm:$0xf]
        %v4254 = vld [vmem:[%s12 + $0x30] sm:$0xf]
        %v4255 = vld [vmem:[%s12 + $0x34] sm:$0xf]
        %v4256 = vld [vmem:[%s12 + $0x38] sm:$0xf]
        %v4257 = vld [vmem:[%s12 + $0x3c] sm:$0xf]
        %v4258 = vld [vmem:[%s12 + $0x40] sm:$0xf]
        %v4259 = vld [vmem:[%s12 + $0x44] sm:$0xf]
        %v4260 = vld [vmem:[%s12 + $0x48] sm:$0xf]
        %v4261 = vld [vmem:[%s12 + $0x4c] sm:$0xf]
        %v4262 = vld [vmem:[%s12 + $0x50] sm:$0xf]
        %v4263 = vld [vmem:[%s12 + $0x54] sm:$0xf]
        %v4264 = vld [vmem:[%s12 + $0x58] sm:$0xf]
        %v4265 = vld [vmem:[%s12 + $0x5c] sm:$0xf]
        %v4266 = vld [vmem:[%s12 + $0x60] sm:$0xf]
        %v4267 = vld [vmem:[%s12 + $0x64] sm:$0xf]
        %v4268 = vld [vmem:[%s12 + $0x68] sm:$0xf]
        %v4269 = vld [vmem:[%s12 + $0x6c] sm:$0xf]
        %v4270 = vld [vmem:[%s12 + $0x70] sm:$0xf]
        %v4271 = vld [vmem:[%s12 + $0x74] sm:$0xf]
        %v4272 = vld [vmem:[%s12 + $0x78] sm:$0xf]
        %v4273 = vld [vmem:[%s12 + $0x7c] sm:$0xf]
        %v4274 = vld [vmem:[%s12 + $0x80] sm:$0xf]
        %v4275 = vld [vmem:[%s12 + $0x84] sm:$0xf]
        %v4276 = vld [vmem:[%s12 + $0x88] sm:$0xf]
        %v4277 = vld [vmem:[%s12 + $0x8c] sm:$0xf]
        %v4278 = vld [vmem:[%s13] sm:$0x1]
        %v4280 = vlaneseq
        %v4281 = vshrl.u32 %v4280, 7
        %v4282 = vsub.s32 0, %v4281
        %v4283 = vrot.slane %v4278, %v4282
        %v4286 = vcombine.high %v4241, %v4241
        %v4288 = vunpack.c.l.s4 1983009808
        %v4289 = vunpack.c.0.s8 %v4288
        %v4290 = vlaneseq
        %v4291 = vshrl.u32 %v4290, 7
        %v4292 = vsub.s32 %v4289, %v4291
        %v4293 = vrot.slane %v4241, %v4292
        %v4295 = vunpack.c.l.s4 1983009808
        %v4296 = vunpack.c.0.s8 %v4295
        %v4297 = vlaneseq
        %v4298 = vshrl.u32 %v4297, 7
        %v4299 = vsub.s32 %v4296, %v4298
        %v4300 = vrot.slane %v4286, %v4299
        %v4301 = vcombine.high %v4293, %v4293
        %v4340 = vunpack.c.l.b16 %v4242
        %v4341 = vunpack.c.l.b16 %v4243
        %v4342 = vunpack.c.l.b16 %v4244
        %v4343 = vunpack.c.l.b16 %v4245
        %v4344 = vunpack.c.l.b16 %v4246
        %v4345 = vunpack.c.l.b16 %v4247
        %v4346 = vunpack.c.l.b16 %v4248
        %v4347 = vunpack.c.l.b16 %v4249
        %v4348 = vunpack.c.l.b16 %v4250
        %v4349 = vunpack.c.l.b16 %v4251
        %v4350 = vunpack.c.l.b16 %v4252
        %v4351 = vunpack.c.l.b16 %v4253
        %v4352 = vunpack.c.l.b16 %v4254
        %v4353 = vunpack.c.l.b16 %v4255
        %v4354 = vunpack.c.l.b16 %v4256
        %v4355 = vunpack.c.l.b16 %v4257
        %v4356 = vunpack.c.l.b16 %v4258
        %v4357 = vunpack.c.l.b16 %v4259
        %v4358 = vunpack.c.l.b16 %v4260
        %v4359 = vunpack.c.l.b16 %v4261
        %v4360 = vunpack.c.l.b16 %v4262
        %v4361 = vunpack.c.l.b16 %v4263
        %v4362 = vunpack.c.l.b16 %v4264
        %v4363 = vunpack.c.l.b16 %v4265
        %v4364 = vunpack.c.l.b16 %v4266
        %v4365 = vunpack.c.l.b16 %v4267
        %v4366 = vunpack.c.l.b16 %v4268
        %v4367 = vunpack.c.l.b16 %v4269
        %v4368 = vunpack.c.l.b16 %v4270
        %v4369 = vunpack.c.l.b16 %v4271
        %v4370 = vunpack.c.l.b16 %v4272
        %v4371 = vunpack.c.l.b16 %v4273
        %v4372 = vunpack.c.l.b16 %v4274
        %v4373 = vunpack.c.l.b16 %v4275
        %v4374 = vunpack.c.l.b16 %v4276
        %v4375 = vunpack.c.l.b16 %v4277
        %v4376 = vpack.c.b16 %v4341, %v4340
        %v4377 = vpack.c.b16 %v4343, %v4342
        %v4378 = vpack.c.b16 %v4345, %v4344
        %v4379 = vpack.c.b16 %v4347, %v4346
        %v4380 = vpack.c.b16 %v4349, %v4348
        %v4381 = vpack.c.b16 %v4351, %v4350
        %v4382 = vpack.c.b16 %v4353, %v4352
        %v4383 = vpack.c.b16 %v4355, %v4354
        %v4384 = vpack.c.b16 %v4357, %v4356
        %v4385 = vpack.c.b16 %v4359, %v4358
        %v4386 = vpack.c.b16 %v4361, %v4360
        %v4387 = vpack.c.b16 %v4363, %v4362
        %v4388 = vpack.c.b16 %v4365, %v4364
        %v4389 = vpack.c.b16 %v4367, %v4366
        %v4390 = vpack.c.b16 %v4369, %v4368
        %v4391 = vpack.c.b16 %v4371, %v4370
        %v4392 = vpack.c.b16 %v4373, %v4372
        %v4393 = vpack.c.b16 %v4375, %v4374
        %v4413 = vsel %vm3543, %v4300, 0
        %4415 = vmatprep.subr.bf16.mxu0 0
        %4416 = vmatpush1.bf16.msra.mxu0 %v4383
        %4417 = vmatprep.subr.bf16.mxu0 0
        %4418 = vmatpush1.bf16.msra.mxu0 %v4382
        %4419 = vmatprep.subr.bf16.mxu0 0
        %4420 = vmatpush1.bf16.msra.mxu0 %v4381
        %4421 = vmatprep.subr.bf16.mxu0 0
        %4422 = vmatpush1.bf16.msra.mxu0 %v4380
        %4423 = vmatprep.subr.bf16.mxu0 0
        %4424 = vmatpush1.bf16.msra.mxu0 %v4379
        %4425 = vmatprep.subr.bf16.mxu0 0
        %4426 = vmatpush1.bf16.msra.mxu0 %v4378
        %4427 = vmatprep.subr.bf16.mxu0 0
        %4428 = vmatpush1.bf16.msra.mxu0 %v4377
        %4429 = vmatprep.subr.bf16.mxu0 0
        %4430 = vmatpush1.bf16.msra.mxu0 %v4376
        %4431 = vmatprep.subr.bf16.mxu0 0
        %4432 = vmatpush2.bf16.msra.mxu0 %v4391
        %4433 = vmatprep.subr.bf16.mxu0 0
        %4434 = vmatpush2.bf16.msra.mxu0 %v4390
        %4435 = vmatprep.subr.bf16.mxu0 0
        %4436 = vmatpush2.bf16.msra.mxu0 %v4389
        %4437 = vmatprep.subr.bf16.mxu0 0
        %4438 = vmatpush2.bf16.msra.mxu0 %v4388
        %4439 = vmatprep.subr.bf16.mxu0 0
        %4440 = vmatpush2.bf16.msra.mxu0 %v4387
        %4441 = vmatprep.subr.bf16.mxu0 0
        %4442 = vmatpush2.bf16.msra.mxu0 %v4386
        %4443 = vmatprep.subr.bf16.mxu0 0
        %4444 = vmatpush2.bf16.msra.mxu0 %v4385
        %4445 = vmatprep.subr.bf16.mxu0 0
        %4446 = vmatpush2.bf16.msra.mxu0 %v4384
        %4447 = vmatprep.mubr.bf16.mxu0 %v4301
        %4448 = vmatmul.mubr.bf16.gmra.mxu0 %v4293
        %v4449 = vpop.f32.mrf.mxu0
        %v4450 = vadd.f32 %v4283, %v4449
        %v4451 = vpop.f32.mrf.mxu0
        %v4452 = vpop.f32.mrf.mxu0
        %v4453 = vpop.f32.mrf.mxu0
        %4454 = vdwg.mxu0
        %4455 = vmatprep.subr.bf16.mxu0 0
        %4456 = vmatpush1.bf16.msra.mxu0 0
        %4457 = vmatprep.subr.bf16.mxu0 0
        %4458 = vmatpush1.bf16.msra.mxu0 0
        %4459 = vmatprep.subr.bf16.mxu0 0
        %4460 = vmatpush1.bf16.msra.mxu0 0
        %4461 = vmatprep.subr.bf16.mxu0 0
        %4462 = vmatpush1.bf16.msra.mxu0 0
        %4463 = vmatprep.subr.bf16.mxu0 0
        %4464 = vmatpush1.bf16.msra.mxu0 0
        %4465 = vmatprep.subr.bf16.mxu0 0
        %4466 = vmatpush1.bf16.msra.mxu0 0
        %4467 = vmatprep.subr.bf16.mxu0 0
        %4468 = vmatpush1.bf16.msra.mxu0 %v4393
        %4469 = vmatprep.subr.bf16.mxu0 0
        %4470 = vmatpush1.bf16.msra.mxu0 %v4392
        %4471 = vmatprep.subr.bf16.mxu0 0
        %4472 = vmatpush2.bf16.msra.mxu0 0
        %4473 = vmatprep.subr.bf16.mxu0 0
        %4474 = vmatpush2.bf16.msra.mxu0 0
        %4475 = vmatprep.subr.bf16.mxu0 0
        %4476 = vmatpush2.bf16.msra.mxu0 0
        %4477 = vmatprep.subr.bf16.mxu0 0
        %4478 = vmatpush2.bf16.msra.mxu0 0
        %4479 = vmatprep.subr.bf16.mxu0 0
        %4480 = vmatpush2.bf16.msra.mxu0 0
        %4481 = vmatprep.subr.bf16.mxu0 0
        %4482 = vmatpush2.bf16.msra.mxu0 0
        %4483 = vmatprep.subr.bf16.mxu0 0
        %4484 = vmatpush2.bf16.msra.mxu0 0
        %4485 = vmatprep.subr.bf16.mxu0 0
        %4486 = vmatpush2.bf16.msra.mxu0 0
        %4487 = vmatprep.mubr.bf16.mxu0 0
        %4488 = vmatmul.mubr.bf16.gmra.mxu0 %v4413
        %v4489 = vpop.f32.mrf.mxu0
        %v4490 = vadd.f32 %v4450, %v4489
        %v4491 = vpop.f32.mrf.mxu0
        %v4492 = vpop.f32.mrf.mxu0
        %v4493 = vpop.f32.mrf.mxu0
        %4494 = vdwg.mxu0
        %v4495 = vmul.f32 %v4490, 0.2
        %v4496 = vmax.f32 %v4490, %v4495
        %vm4497 = vcmask 519168
        %v4498 = vsel %vm4497, %v4496, 0.0
        %v4499 = vrot.slane %v4498, 4
        %v4500 = vadd.f32 %v4498, %v4499
        %v4501 = vrot.slane %v4500, 2
        %v4502 = vadd.f32 %v4500, %v4501
        %v4503 = vrot.slane %v4502, 1
        %v4504 = vadd.f32 %v4502, %v4503
        %v4505 = vrcp.pop 4.0
        %v4506 = vmul.f32 %v4504, %v4505
        %v4507 = vld [vmem:[#allocation15] sm:$0xff]
        %v4508 = vld [vmem:[#allocation15 + $0x8] sm:$0xff]
        %v4509 = vld [vmem:[#allocation15 + $0x10] sm:$0xff]
        %v4510 = vld [vmem:[#allocation15 + $0x18] sm:$0xff]
        %v4511 = vld [vmem:[#allocation15 + $0x20] sm:$0xff]
        %v4512 = vld [vmem:[#allocation15 + $0x28] sm:$0xff]
        %v4513 = vld [vmem:[#allocation15 + $0x30] sm:$0xff]
        %v4514 = vld [vmem:[#allocation15 + $0x38] sm:$0xff]
        %v4515 = vld [vmem:[%s15] sm:$0x1]
        %v4517 = vlaneseq
        %v4518 = vshrl.u32 %v4517, 7
        %v4519 = vsub.s32 0, %v4518
        %v4520 = vrot.slane %v4515, %v4519
        %v4523 = vsel %vm2817, %v4506, 0
        %4525 = vmatprep.subr.mxu0 0.0
        %4526 = vmatpush1.msra.mxu0 0.0
        %4527 = vmatprep.subr.mxu0 0.0
        %4528 = vmatpush1.msra.mxu0 0.0
        %4529 = vmatprep.subr.mxu0 0.0
        %4530 = vmatpush1.msra.mxu0 0.0
        %4531 = vmatprep.subr.mxu0 0.0
        %4532 = vmatpush1.msra.mxu0 0.0
        %4533 = vmatprep.subr.mxu0 0.0
        %4534 = vmatpush1.msra.mxu0 0.0
        %4535 = vmatprep.subr.mxu0 0.0
        %4536 = vmatpush1.msra.mxu0 0.0
        %4537 = vmatprep.subr.mxu0 0.0
        %4538 = vmatpush1.msra.mxu0 0.0
        %4539 = vmatprep.subr.mxu0 0.0
        %4540 = vmatpush1.msra.mxu0 0.0
        %4541 = vmatprep.subr.mxu0 0.0
        %4542 = vmatpush1.msra.mxu0 %v4514
        %4543 = vmatprep.subr.mxu0 0.0
        %4544 = vmatpush1.msra.mxu0 %v4513
        %4545 = vmatprep.subr.mxu0 0.0
        %4546 = vmatpush1.msra.mxu0 %v4512
        %4547 = vmatprep.subr.mxu0 0.0
        %4548 = vmatpush1.msra.mxu0 %v4511
        %4549 = vmatprep.subr.mxu0 0.0
        %4550 = vmatpush1.msra.mxu0 %v4510
        %4551 = vmatprep.subr.mxu0 0.0
        %4552 = vmatpush1.msra.mxu0 %v4509
        %4553 = vmatprep.subr.mxu0 0.0
        %4554 = vmatpush1.msra.mxu0 %v4508
        %4555 = vmatprep.subr.mxu0 0.0
        %4556 = vmatpush1.msra.mxu0 %v4507
        %4557 = vmatprep.subr.mxu0 0.0
        %4558 = vmatpush2.msra.mxu0 0.0
        %4559 = vmatprep.subr.mxu0 0.0
        %4560 = vmatpush2.msra.mxu0 0.0
        %4561 = vmatprep.subr.mxu0 0.0
        %4562 = vmatpush2.msra.mxu0 0.0
        %4563 = vmatprep.subr.mxu0 0.0
        %4564 = vmatpush2.msra.mxu0 0.0
        %4565 = vmatprep.subr.mxu0 0.0
        %4566 = vmatpush2.msra.mxu0 0.0
        %4567 = vmatprep.subr.mxu0 0.0
        %4568 = vmatpush2.msra.mxu0 0.0
        %4569 = vmatprep.subr.mxu0 0.0
        %4570 = vmatpush2.msra.mxu0 0.0
        %4571 = vmatprep.subr.mxu0 0.0
        %4572 = vmatpush2.msra.mxu0 0.0
        %4573 = vmatprep.subr.mxu0 0.0
        %4574 = vmatpush2.msra.mxu0 0.0
        %4575 = vmatprep.subr.mxu0 0.0
        %4576 = vmatpush2.msra.mxu0 0.0
        %4577 = vmatprep.subr.mxu0 0.0
        %4578 = vmatpush2.msra.mxu0 0.0
        %4579 = vmatprep.subr.mxu0 0.0
        %4580 = vmatpush2.msra.mxu0 0.0
        %4581 = vmatprep.subr.mxu0 0.0
        %4582 = vmatpush2.msra.mxu0 0.0
        %4583 = vmatprep.subr.mxu0 0.0
        %4584 = vmatpush2.msra.mxu0 0.0
        %4585 = vmatprep.subr.mxu0 0.0
        %4586 = vmatpush2.msra.mxu0 0.0
        %4587 = vmatprep.subr.mxu0 0.0
        %4588 = vmatpush2.msra.mxu0 0.0
        %4589 = vmatprep.mubr.f32.mxu0 0.0
        %4590 = vmatmul.mubr.f32.gmra.mxu0 %v4523
        %v4591 = vpop.f32.mrf.mxu0
        %v4592 = vadd.f32 %v4520, %v4591
        %v4593 = vpop.f32.mrf.mxu0
        %4594 = vdwg.mxu0
        %v4595 = vmax.f32 %v4592, 0.0
        %v4596 = vld [vmem:[#allocation17] sm:$0xff]
        %v4597 = vld [vmem:[#allocation17 + $0x8] sm:$0xff]
        %v4598 = vld [vmem:[#allocation17 + $0x10] sm:$0xff]
        %v4599 = vld [vmem:[#allocation17 + $0x18] sm:$0xff]
        %v4600 = vld [vmem:[#allocation17 + $0x20] sm:$0xff]
        %v4601 = vld [vmem:[#allocation17 + $0x28] sm:$0xff]
        %v4602 = vld [vmem:[#allocation17 + $0x30] sm:$0xff]
        %v4603 = vld [vmem:[#allocation17 + $0x38] sm:$0xff]
        %v4604 = vld [vmem:[#allocation17 + $0x40] sm:$0xff]
        %v4605 = vld [vmem:[#allocation17 + $0x48] sm:$0xff]
        %v4606 = vld [vmem:[#allocation17 + $0x50] sm:$0xff]
        %v4607 = vld [vmem:[#allocation17 + $0x58] sm:$0xff]
        %v4608 = vld [vmem:[#allocation17 + $0x60] sm:$0xff]
        %v4609 = vld [vmem:[#allocation17 + $0x68] sm:$0xff]
        %v4610 = vld [vmem:[#allocation17 + $0x70] sm:$0xff]
        %v4611 = vld [vmem:[#allocation17 + $0x78] sm:$0xff]
        %v4612 = vld [vmem:[%s17] sm:$0x1]
        %v4614 = vlaneseq
        %v4615 = vshrl.u32 %v4614, 7
        %v4616 = vsub.s32 0, %v4615
        %v4617 = vrot.slane %v4612, %v4616
        %4619 = vmatprep.subr.mxu0 0.0
        %4620 = vmatpush1.msra.mxu0 %v4611
        %4621 = vmatprep.subr.mxu0 0.0
        %4622 = vmatpush1.msra.mxu0 %v4610
        %4623 = vmatprep.subr.mxu0 0.0
        %4624 = vmatpush1.msra.mxu0 %v4609
        %4625 = vmatprep.subr.mxu0 0.0
        %4626 = vmatpush1.msra.mxu0 %v4608
        %4627 = vmatprep.subr.mxu0 0.0
        %4628 = vmatpush1.msra.mxu0 %v4607
        %4629 = vmatprep.subr.mxu0 0.0
        %4630 = vmatpush1.msra.mxu0 %v4606
        %4631 = vmatprep.subr.mxu0 0.0
        %4632 = vmatpush1.msra.mxu0 %v4605
        %4633 = vmatprep.subr.mxu0 0.0
        %4634 = vmatpush1.msra.mxu0 %v4604
        %4635 = vmatprep.subr.mxu0 0.0
        %4636 = vmatpush1.msra.mxu0 %v4603
        %4637 = vmatprep.subr.mxu0 0.0
        %4638 = vmatpush1.msra.mxu0 %v4602
        %4639 = vmatprep.subr.mxu0 0.0
        %4640 = vmatpush1.msra.mxu0 %v4601
        %4641 = vmatprep.subr.mxu0 0.0
        %4642 = vmatpush1.msra.mxu0 %v4600
        %4643 = vmatprep.subr.mxu0 0.0
        %4644 = vmatpush1.msra.mxu0 %v4599
        %4645 = vmatprep.subr.mxu0 0.0
        %4646 = vmatpush1.msra.mxu0 %v4598
        %4647 = vmatprep.subr.mxu0 0.0
        %4648 = vmatpush1.msra.mxu0 %v4597
        %4649 = vmatprep.subr.mxu0 0.0
        %4650 = vmatpush1.msra.mxu0 %v4596
        %4651 = vmatprep.subr.mxu0 0.0
        %4652 = vmatpush2.msra.mxu0 0.0
        %4653 = vmatprep.subr.mxu0 0.0
        %4654 = vmatpush2.msra.mxu0 0.0
        %4655 = vmatprep.subr.mxu0 0.0
        %4656 = vmatpush2.msra.mxu0 0.0
        %4657 = vmatprep.subr.mxu0 0.0
        %4658 = vmatpush2.msra.mxu0 0.0
        %4659 = vmatprep.subr.mxu0 0.0
        %4660 = vmatpush2.msra.mxu0 0.0
        %4661 = vmatprep.subr.mxu0 0.0
        %4662 = vmatpush2.msra.mxu0 0.0
        %4663 = vmatprep.subr.mxu0 0.0
        %4664 = vmatpush2.msra.mxu0 0.0
        %4665 = vmatprep.subr.mxu0 0.0
        %4666 = vmatpush2.msra.mxu0 0.0
        %4667 = vmatprep.subr.mxu0 0.0
        %4668 = vmatpush2.msra.mxu0 0.0
        %4669 = vmatprep.subr.mxu0 0.0
        %4670 = vmatpush2.msra.mxu0 0.0
        %4671 = vmatprep.subr.mxu0 0.0
        %4672 = vmatpush2.msra.mxu0 0.0
        %4673 = vmatprep.subr.mxu0 0.0
        %4674 = vmatpush2.msra.mxu0 0.0
        %4675 = vmatprep.subr.mxu0 0.0
        %4676 = vmatpush2.msra.mxu0 0.0
        %4677 = vmatprep.subr.mxu0 0.0
        %4678 = vmatpush2.msra.mxu0 0.0
        %4679 = vmatprep.subr.mxu0 0.0
        %4680 = vmatpush2.msra.mxu0 0.0
        %4681 = vmatprep.subr.mxu0 0.0
        %4682 = vmatpush2.msra.mxu0 0.0
        %4683 = vmatprep.mubr.f32.mxu0 0.0
        %4684 = vmatmul.mubr.f32.gmra.mxu0 %v4595
        %v4685 = vpop.f32.mrf.mxu0
        %v4686 = vadd.f32 %v4617, %v4685
        %v4687 = vpop.f32.mrf.mxu0
        %4688 = vdwg.mxu0
        %v4689 = vsub.f32 0.0, %v4686
        %v4690 = vmul.f32 %v4689, 1.442695
        %v4691 = vpow.pop %v4690
        %v4692 = vadd.f32 %v4691, 1.0
        %v4693 = vrcp.pop %v4692
        %v4694 = vmul.f32 1.0, %v4693
        %v4695 = vpack.c.bf16 %v4496, %v4496
        %v4696 = vunpack.c.l.bf16 %v4695
        %v4697 = vlaneseq
        %v4698 = vshrl.u32 %v4697, 7
        %v4699 = vsub.s32 0, %v4698
        %v4700 = vrot.slane %v4694, %v4699
        %v4701 = vmul.f32 %v4696, %v4700
        %v4702 = vpack.c.bf16 %v4701, %v4701
        %v4703 = vld [vmem:[%s18] sm:$0x3]
        %vm4704 = vcmask 31744
        %v4706 = vsel %vm4704, %v4703, 0
        %v4709 = vsel %vm2721, %v4702, 0
        %4711 = vmatprep.subr.bf16.mxu0 0
        %4712 = vmatpush1.bf16.msra.mxu0 0
        %4713 = vmatprep.subr.bf16.mxu0 0
        %4714 = vmatpush1.bf16.msra.mxu0 0
        %4715 = vmatprep.subr.bf16.mxu0 0
        %4716 = vmatpush1.bf16.msra.mxu0 0
        %4717 = vmatprep.subr.bf16.mxu0 0
        %4718 = vmatpush1.bf16.msra.mxu0 0
        %4719 = vmatprep.subr.bf16.mxu0 0
        %4720 = vmatpush1.bf16.msra.mxu0 0
        %4721 = vmatprep.subr.bf16.mxu0 0
        %4722 = vmatpush1.bf16.msra.mxu0 0
        %4723 = vmatprep.subr.bf16.mxu0 0
        %4724 = vmatpush1.bf16.msra.mxu0 0
        %4725 = vmatprep.subr.bf16.mxu0 0
        %4726 = vmatpush1.bf16.msra.mxu0 %v4709
        %4727 = vmatprep.subr.bf16.mxu0 0
        %4728 = vmatpush2.bf16.msra.mxu0 0
        %4729 = vmatprep.subr.bf16.mxu0 0
        %4730 = vmatpush2.bf16.msra.mxu0 0
        %4731 = vmatprep.subr.bf16.mxu0 0
        %4732 = vmatpush2.bf16.msra.mxu0 0
        %4733 = vmatprep.subr.bf16.mxu0 0
        %4734 = vmatpush2.bf16.msra.mxu0 0
        %4735 = vmatprep.subr.bf16.mxu0 0
        %4736 = vmatpush2.bf16.msra.mxu0 0
        %4737 = vmatprep.subr.bf16.mxu0 0
        %4738 = vmatpush2.bf16.msra.mxu0 0
        %4739 = vmatprep.subr.bf16.mxu0 0
        %4740 = vmatpush2.bf16.msra.mxu0 0
        %4741 = vmatprep.subr.bf16.mxu0 0
        %4742 = vmatpush2.bf16.msra.mxu0 0
        %4743 = vmatprep.mubr.bf16.mxu0 0
        %4744 = vmatmul.mubr.bf16.gmra.mxu0 %v4706
        %v4745 = vpop.f32.mrf.mxu0
        %v4746 = vadd.f32 0.0, %v4745
        %v4747 = vpop.f32.mrf.mxu0
        %v4748 = vpop.f32.mrf.mxu0
        %v4749 = vpop.f32.mrf.mxu0
        %4750 = vdwg.mxu0
        %v4751 = vpack.c.bf16 %v4746, %v4746
        %vm4752 = vcmask 517120
        %4753 = vst.msk [vmem:[#allocation5] sm:$0x3] %vm4752, %v4751
        %s4754 = scalar_lea.vmem %s18, 2
        %v4755 = vld [vmem:[%s4754] sm:$0x3]
        %v4757 = vsel %vm4704, %v4755, 0
        %4759 = vmatprep.subr.bf16.mxu0 0
        %4760 = vmatpush1.bf16.msra.mxu0 0
        %4761 = vmatprep.subr.bf16.mxu0 0
        %4762 = vmatpush1.bf16.msra.mxu0 0
        %4763 = vmatprep.subr.bf16.mxu0 0
        %4764 = vmatpush1.bf16.msra.mxu0 0
        %4765 = vmatprep.subr.bf16.mxu0 0
        %4766 = vmatpush1.bf16.msra.mxu0 0
        %4767 = vmatprep.subr.bf16.mxu0 0
        %4768 = vmatpush1.bf16.msra.mxu0 0
        %4769 = vmatprep.subr.bf16.mxu0 0
        %4770 = vmatpush1.bf16.msra.mxu0 0
        %4771 = vmatprep.subr.bf16.mxu0 0
        %4772 = vmatpush1.bf16.msra.mxu0 0
        %4773 = vmatprep.subr.bf16.mxu0 0
        %4774 = vmatpush1.bf16.msra.mxu0 %v4709
        %4775 = vmatprep.subr.bf16.mxu0 0
        %4776 = vmatpush2.bf16.msra.mxu0 0
        %4777 = vmatprep.subr.bf16.mxu0 0
        %4778 = vmatpush2.bf16.msra.mxu0 0
        %4779 = vmatprep.subr.bf16.mxu0 0
        %4780 = vmatpush2.bf16.msra.mxu0 0
        %4781 = vmatprep.subr.bf16.mxu0 0
        %4782 = vmatpush2.bf16.msra.mxu0 0
        %4783 = vmatprep.subr.bf16.mxu0 0
        %4784 = vmatpush2.bf16.msra.mxu0 0
        %4785 = vmatprep.subr.bf16.mxu0 0
        %4786 = vmatpush2.bf16.msra.mxu0 0
        %4787 = vmatprep.subr.bf16.mxu0 0
        %4788 = vmatpush2.bf16.msra.mxu0 0
        %4789 = vmatprep.subr.bf16.mxu0 0
        %4790 = vmatpush2.bf16.msra.mxu0 0
        %4791 = vmatprep.mubr.bf16.mxu0 0
        %4792 = vmatmul.mubr.bf16.gmra.mxu0 %v4757
        %v4793 = vpop.f32.mrf.mxu0
        %v4794 = vadd.f32 0.0, %v4793
        %v4795 = vpop.f32.mrf.mxu0
        %v4796 = vpop.f32.mrf.mxu0
        %v4797 = vpop.f32.mrf.mxu0
        %4798 = vdwg.mxu0
        %v4799 = vpack.c.bf16 %v4794, %v4794
        %v4802 = vunpack.c.l.s4 1983009808
        %v4803 = vunpack.c.0.s8 %v4802
        %v4804 = vlaneseq
        %v4805 = vshrl.u32 %v4804, 7
        %v4806 = vsub.s32 %v4803, %v4805
        %v4807 = vrot.slane %v4799, %v4806
        %4808 = vrot.lane.b32.xlu0 %v4807, 64
        %v4809 = vpop.permute.xlu0 %4808
        %vm4811 = vcmask 1041920
        %4812 = vst.msk [vmem:[#allocation5] sm:$0x3] %vm4811, %v4809
        %s4813 = scalar_lea.vmem %s18, 4
        %v4814 = vld [vmem:[%s4813] sm:$0x3]
        %v4816 = vsel %vm4704, %v4814, 0
        %4818 = vmatprep.subr.bf16.mxu0 0
        %4819 = vmatpush1.bf16.msra.mxu0 0
        %4820 = vmatprep.subr.bf16.mxu0 0
        %4821 = vmatpush1.bf16.msra.mxu0 0
        %4822 = vmatprep.subr.bf16.mxu0 0
        %4823 = vmatpush1.bf16.msra.mxu0 0
        %4824 = vmatprep.subr.bf16.mxu0 0
        %4825 = vmatpush1.bf16.msra.mxu0 0
        %4826 = vmatprep.subr.bf16.mxu0 0
        %4827 = vmatpush1.bf16.msra.mxu0 0
        %4828 = vmatprep.subr.bf16.mxu0 0
        %4829 = vmatpush1.bf16.msra.mxu0 0
        %4830 = vmatprep.subr.bf16.mxu0 0
        %4831 = vmatpush1.bf16.msra.mxu0 0
        %4832 = vmatprep.subr.bf16.mxu0 0
        %4833 = vmatpush1.bf16.msra.mxu0 %v4709
        %4834 = vmatprep.subr.bf16.mxu0 0
        %4835 = vmatpush2.bf16.msra.mxu0 0
        %4836 = vmatprep.subr.bf16.mxu0 0
        %4837 = vmatpush2.bf16.msra.mxu0 0
        %4838 = vmatprep.subr.bf16.mxu0 0
        %4839 = vmatpush2.bf16.msra.mxu0 0
        %4840 = vmatprep.subr.bf16.mxu0 0
        %4841 = vmatpush2.bf16.msra.mxu0 0
        %4842 = vmatprep.subr.bf16.mxu0 0
        %4843 = vmatpush2.bf16.msra.mxu0 0
        %4844 = vmatprep.subr.bf16.mxu0 0
        %4845 = vmatpush2.bf16.msra.mxu0 0
        %4846 = vmatprep.subr.bf16.mxu0 0
        %4847 = vmatpush2.bf16.msra.mxu0 0
        %4848 = vmatprep.subr.bf16.mxu0 0
        %4849 = vmatpush2.bf16.msra.mxu0 0
        %4850 = vmatprep.mubr.bf16.mxu0 0
        %4851 = vmatmul.mubr.bf16.gmra.mxu0 %v4816
        %v4852 = vpop.f32.mrf.mxu0
        %v4853 = vadd.f32 0.0, %v4852
        %v4854 = vpop.f32.mrf.mxu0
        %v4855 = vpop.f32.mrf.mxu0
        %v4856 = vpop.f32.mrf.mxu0
        %4857 = vdwg.mxu0
        %v4858 = vpack.c.bf16 %v4853, %v4853
        %4859 = vst.msk [vmem:[#allocation5 + $0x2] sm:$0x3] %vm4752, %v4858
        %s4860 = scalar_lea.vmem %s18, 6
        %v4861 = vld [vmem:[%s4860] sm:$0x3]
        %v4863 = vsel %vm4704, %v4861, 0
        %4865 = vmatprep.subr.bf16.mxu0 0
        %4866 = vmatpush1.bf16.msra.mxu0 0
        %4867 = vmatprep.subr.bf16.mxu0 0
        %4868 = vmatpush1.bf16.msra.mxu0 0
        %4869 = vmatprep.subr.bf16.mxu0 0
        %4870 = vmatpush1.bf16.msra.mxu0 0
        %4871 = vmatprep.subr.bf16.mxu0 0
        %4872 = vmatpush1.bf16.msra.mxu0 0
        %4873 = vmatprep.subr.bf16.mxu0 0
        %4874 = vmatpush1.bf16.msra.mxu0 0
        %4875 = vmatprep.subr.bf16.mxu0 0
        %4876 = vmatpush1.bf16.msra.mxu0 0
        %4877 = vmatprep.subr.bf16.mxu0 0
        %4878 = vmatpush1.bf16.msra.mxu0 0
        %4879 = vmatprep.subr.bf16.mxu0 0
        %4880 = vmatpush1.bf16.msra.mxu0 %v4709
        %4881 = vmatprep.subr.bf16.mxu0 0
        %4882 = vmatpush2.bf16.msra.mxu0 0
        %4883 = vmatprep.subr.bf16.mxu0 0
        %4884 = vmatpush2.bf16.msra.mxu0 0
        %4885 = vmatprep.subr.bf16.mxu0 0
        %4886 = vmatpush2.bf16.msra.mxu0 0
        %4887 = vmatprep.subr.bf16.mxu0 0
        %4888 = vmatpush2.bf16.msra.mxu0 0
        %4889 = vmatprep.subr.bf16.mxu0 0
        %4890 = vmatpush2.bf16.msra.mxu0 0
        %4891 = vmatprep.subr.bf16.mxu0 0
        %4892 = vmatpush2.bf16.msra.mxu0 0
        %4893 = vmatprep.subr.bf16.mxu0 0
        %4894 = vmatpush2.bf16.msra.mxu0 0
        %4895 = vmatprep.subr.bf16.mxu0 0
        %4896 = vmatpush2.bf16.msra.mxu0 0
        %4897 = vmatprep.mubr.bf16.mxu0 0
        %4898 = vmatmul.mubr.bf16.gmra.mxu0 %v4863
        %v4899 = vpop.f32.mrf.mxu0
        %v4900 = vadd.f32 0.0, %v4899
        %v4901 = vpop.f32.mrf.mxu0
        %v4902 = vpop.f32.mrf.mxu0
        %v4903 = vpop.f32.mrf.mxu0
        %4904 = vdwg.mxu0
        %v4905 = vpack.c.bf16 %v4900, %v4900
        %v4908 = vunpack.c.l.s4 1983009808
        %v4909 = vunpack.c.0.s8 %v4908
        %v4910 = vlaneseq
        %v4911 = vshrl.u32 %v4910, 7
        %v4912 = vsub.s32 %v4909, %v4911
        %v4913 = vrot.slane %v4905, %v4912
        %4914 = vrot.lane.b32.xlu0 %v4913, 64
        %v4915 = vpop.permute.xlu0 %4914
        %4917 = vst.msk [vmem:[#allocation5 + $0x2] sm:$0x3] %vm4811, %v4915
        %s4918 = scalar_lea.vmem %s18, 8
        %v4919 = vld [vmem:[%s4918] sm:$0x3]
        %v4921 = vsel %vm4704, %v4919, 0
        %4923 = vmatprep.subr.bf16.mxu0 0
        %4924 = vmatpush1.bf16.msra.mxu0 0
        %4925 = vmatprep.subr.bf16.mxu0 0
        %4926 = vmatpush1.bf16.msra.mxu0 0
        %4927 = vmatprep.subr.bf16.mxu0 0
        %4928 = vmatpush1.bf16.msra.mxu0 0
        %4929 = vmatprep.subr.bf16.mxu0 0
        %4930 = vmatpush1.bf16.msra.mxu0 0
        %4931 = vmatprep.subr.bf16.mxu0 0
        %4932 = vmatpush1.bf16.msra.mxu0 0
        %4933 = vmatprep.subr.bf16.mxu0 0
        %4934 = vmatpush1.bf16.msra.mxu0 0
        %4935 = vmatprep.subr.bf16.mxu0 0
        %4936 = vmatpush1.bf16.msra.mxu0 0
        %4937 = vmatprep.subr.bf16.mxu0 0
        %4938 = vmatpush1.bf16.msra.mxu0 %v4709
        %4939 = vmatprep.subr.bf16.mxu0 0
        %4940 = vmatpush2.bf16.msra.mxu0 0
        %4941 = vmatprep.subr.bf16.mxu0 0
        %4942 = vmatpush2.bf16.msra.mxu0 0
        %4943 = vmatprep.subr.bf16.mxu0 0
        %4944 = vmatpush2.bf16.msra.mxu0 0
        %4945 = vmatprep.subr.bf16.mxu0 0
        %4946 = vmatpush2.bf16.msra.mxu0 0
        %4947 = vmatprep.subr.bf16.mxu0 0
        %4948 = vmatpush2.bf16.msra.mxu0 0
        %4949 = vmatprep.subr.bf16.mxu0 0
        %4950 = vmatpush2.bf16.msra.mxu0 0
        %4951 = vmatprep.subr.bf16.mxu0 0
        %4952 = vmatpush2.bf16.msra.mxu0 0
        %4953 = vmatprep.subr.bf16.mxu0 0
        %4954 = vmatpush2.bf16.msra.mxu0 0
        %4955 = vmatprep.mubr.bf16.mxu0 0
        %4956 = vmatmul.mubr.bf16.gmra.mxu0 %v4921
        %v4957 = vpop.f32.mrf.mxu0
        %v4958 = vadd.f32 0.0, %v4957
        %v4959 = vpop.f32.mrf.mxu0
        %v4960 = vpop.f32.mrf.mxu0
        %v4961 = vpop.f32.mrf.mxu0
        %4962 = vdwg.mxu0
        %v4963 = vpack.c.bf16 %v4958, %v4958
        %4964 = vst.msk [vmem:[#allocation5 + $0x4] sm:$0x3] %vm4752, %v4963
        %s4965 = scalar_lea.vmem %s18, 10
        %v4966 = vld [vmem:[%s4965] sm:$0x3]
        %v4968 = vsel %vm4704, %v4966, 0
        %4970 = vmatprep.subr.bf16.mxu0 0
        %4971 = vmatpush1.bf16.msra.mxu0 0
        %4972 = vmatprep.subr.bf16.mxu0 0
        %4973 = vmatpush1.bf16.msra.mxu0 0
        %4974 = vmatprep.subr.bf16.mxu0 0
        %4975 = vmatpush1.bf16.msra.mxu0 0
        %4976 = vmatprep.subr.bf16.mxu0 0
        %4977 = vmatpush1.bf16.msra.mxu0 0
        %4978 = vmatprep.subr.bf16.mxu0 0
        %4979 = vmatpush1.bf16.msra.mxu0 0
        %4980 = vmatprep.subr.bf16.mxu0 0
        %4981 = vmatpush1.bf16.msra.mxu0 0
        %4982 = vmatprep.subr.bf16.mxu0 0
        %4983 = vmatpush1.bf16.msra.mxu0 0
        %4984 = vmatprep.subr.bf16.mxu0 0
        %4985 = vmatpush1.bf16.msra.mxu0 %v4709
        %4986 = vmatprep.subr.bf16.mxu0 0
        %4987 = vmatpush2.bf16.msra.mxu0 0
        %4988 = vmatprep.subr.bf16.mxu0 0
        %4989 = vmatpush2.bf16.msra.mxu0 0
        %4990 = vmatprep.subr.bf16.mxu0 0
        %4991 = vmatpush2.bf16.msra.mxu0 0
        %4992 = vmatprep.subr.bf16.mxu0 0
        %4993 = vmatpush2.bf16.msra.mxu0 0
        %4994 = vmatprep.subr.bf16.mxu0 0
        %4995 = vmatpush2.bf16.msra.mxu0 0
        %4996 = vmatprep.subr.bf16.mxu0 0
        %4997 = vmatpush2.bf16.msra.mxu0 0
        %4998 = vmatprep.subr.bf16.mxu0 0
        %4999 = vmatpush2.bf16.msra.mxu0 0
        %5000 = vmatprep.subr.bf16.mxu0 0
        %5001 = vmatpush2.bf16.msra.mxu0 0
        %5002 = vmatprep.mubr.bf16.mxu0 0
        %5003 = vmatmul.mubr.bf16.gmra.mxu0 %v4968
        %v5004 = vpop.f32.mrf.mxu0
        %v5005 = vadd.f32 0.0, %v5004
        %v5006 = vpop.f32.mrf.mxu0
        %v5007 = vpop.f32.mrf.mxu0
        %v5008 = vpop.f32.mrf.mxu0
        %5009 = vdwg.mxu0
        %v5010 = vpack.c.bf16 %v5005, %v5005
        %v5013 = vunpack.c.l.s4 1983009808
        %v5014 = vunpack.c.0.s8 %v5013
        %v5015 = vlaneseq
        %v5016 = vshrl.u32 %v5015, 7
        %v5017 = vsub.s32 %v5014, %v5016
        %v5018 = vrot.slane %v5010, %v5017
        %5019 = vrot.lane.b32.xlu0 %v5018, 64
        %v5020 = vpop.permute.xlu0 %5019
        %5022 = vst.msk [vmem:[#allocation5 + $0x4] sm:$0x3] %vm4811, %v5020
        %s5023 = scalar_lea.vmem %s18, 12
        %v5024 = vld [vmem:[%s5023] sm:$0x3]
        %v5026 = vsel %vm4704, %v5024, 0
        %5028 = vmatprep.subr.bf16.mxu0 0
        %5029 = vmatpush1.bf16.msra.mxu0 0
        %5030 = vmatprep.subr.bf16.mxu0 0
        %5031 = vmatpush1.bf16.msra.mxu0 0
        %5032 = vmatprep.subr.bf16.mxu0 0
        %5033 = vmatpush1.bf16.msra.mxu0 0
        %5034 = vmatprep.subr.bf16.mxu0 0
        %5035 = vmatpush1.bf16.msra.mxu0 0
        %5036 = vmatprep.subr.bf16.mxu0 0
        %5037 = vmatpush1.bf16.msra.mxu0 0
        %5038 = vmatprep.subr.bf16.mxu0 0
        %5039 = vmatpush1.bf16.msra.mxu0 0
        %5040 = vmatprep.subr.bf16.mxu0 0
        %5041 = vmatpush1.bf16.msra.mxu0 0
        %5042 = vmatprep.subr.bf16.mxu0 0
        %5043 = vmatpush1.bf16.msra.mxu0 %v4709
        %5044 = vmatprep.subr.bf16.mxu0 0
        %5045 = vmatpush2.bf16.msra.mxu0 0
        %5046 = vmatprep.subr.bf16.mxu0 0
        %5047 = vmatpush2.bf16.msra.mxu0 0
        %5048 = vmatprep.subr.bf16.mxu0 0
        %5049 = vmatpush2.bf16.msra.mxu0 0
        %5050 = vmatprep.subr.bf16.mxu0 0
        %5051 = vmatpush2.bf16.msra.mxu0 0
        %5052 = vmatprep.subr.bf16.mxu0 0
        %5053 = vmatpush2.bf16.msra.mxu0 0
        %5054 = vmatprep.subr.bf16.mxu0 0
        %5055 = vmatpush2.bf16.msra.mxu0 0
        %5056 = vmatprep.subr.bf16.mxu0 0
        %5057 = vmatpush2.bf16.msra.mxu0 0
        %5058 = vmatprep.subr.bf16.mxu0 0
        %5059 = vmatpush2.bf16.msra.mxu0 0
        %5060 = vmatprep.mubr.bf16.mxu0 0
        %5061 = vmatmul.mubr.bf16.gmra.mxu0 %v5026
        %v5062 = vpop.f32.mrf.mxu0
        %v5063 = vadd.f32 0.0, %v5062
        %v5064 = vpop.f32.mrf.mxu0
        %v5065 = vpop.f32.mrf.mxu0
        %v5066 = vpop.f32.mrf.mxu0
        %5067 = vdwg.mxu0
        %v5068 = vpack.c.bf16 %v5063, %v5063
        %5069 = vst.msk [vmem:[#allocation5 + $0x6] sm:$0x3] %vm4752, %v5068
        %s5070 = scalar_lea.vmem %s18, 14
        %v5071 = vld [vmem:[%s5070] sm:$0x3]
        %v5073 = vsel %vm4704, %v5071, 0
        %5075 = vmatprep.subr.bf16.mxu0 0
        %5076 = vmatpush1.bf16.msra.mxu0 0
        %5077 = vmatprep.subr.bf16.mxu0 0
        %5078 = vmatpush1.bf16.msra.mxu0 0
        %5079 = vmatprep.subr.bf16.mxu0 0
        %5080 = vmatpush1.bf16.msra.mxu0 0
        %5081 = vmatprep.subr.bf16.mxu0 0
        %5082 = vmatpush1.bf16.msra.mxu0 0
        %5083 = vmatprep.subr.bf16.mxu0 0
        %5084 = vmatpush1.bf16.msra.mxu0 0
        %5085 = vmatprep.subr.bf16.mxu0 0
        %5086 = vmatpush1.bf16.msra.mxu0 0
        %5087 = vmatprep.subr.bf16.mxu0 0
        %5088 = vmatpush1.bf16.msra.mxu0 0
        %5089 = vmatprep.subr.bf16.mxu0 0
        %5090 = vmatpush1.bf16.msra.mxu0 %v4709
        %5091 = vmatprep.subr.bf16.mxu0 0
        %5092 = vmatpush2.bf16.msra.mxu0 0
        %5093 = vmatprep.subr.bf16.mxu0 0
        %5094 = vmatpush2.bf16.msra.mxu0 0
        %5095 = vmatprep.subr.bf16.mxu0 0
        %5096 = vmatpush2.bf16.msra.mxu0 0
        %5097 = vmatprep.subr.bf16.mxu0 0
        %5098 = vmatpush2.bf16.msra.mxu0 0
        %5099 = vmatprep.subr.bf16.mxu0 0
        %5100 = vmatpush2.bf16.msra.mxu0 0
        %5101 = vmatprep.subr.bf16.mxu0 0
        %5102 = vmatpush2.bf16.msra.mxu0 0
        %5103 = vmatprep.subr.bf16.mxu0 0
        %5104 = vmatpush2.bf16.msra.mxu0 0
        %5105 = vmatprep.subr.bf16.mxu0 0
        %5106 = vmatpush2.bf16.msra.mxu0 0
        %5107 = vmatprep.mubr.bf16.mxu0 0
        %5108 = vmatmul.mubr.bf16.gmra.mxu0 %v5073
        %v5109 = vpop.f32.mrf.mxu0
        %v5110 = vadd.f32 0.0, %v5109
        %v5111 = vpop.f32.mrf.mxu0
        %v5112 = vpop.f32.mrf.mxu0
        %v5113 = vpop.f32.mrf.mxu0
        %5114 = vdwg.mxu0
        %v5115 = vpack.c.bf16 %v5110, %v5110
        %v5118 = vunpack.c.l.s4 1983009808
        %v5119 = vunpack.c.0.s8 %v5118
        %v5120 = vlaneseq
        %v5121 = vshrl.u32 %v5120, 7
        %v5122 = vsub.s32 %v5119, %v5121
        %v5123 = vrot.slane %v5115, %v5122
        %5124 = vrot.lane.b32.xlu0 %v5123, 64
        %v5125 = vpop.permute.xlu0 %5124
        %5127 = vst.msk [vmem:[#allocation5 + $0x6] sm:$0x3] %vm4811, %v5125
        %s5128 = scalar_lea.vmem %s18, 16
        %v5129 = vld [vmem:[%s5128] sm:$0x3]
        %v5131 = vsel %vm4704, %v5129, 0
        %5133 = vmatprep.subr.bf16.mxu0 0
        %5134 = vmatpush1.bf16.msra.mxu0 0
        %5135 = vmatprep.subr.bf16.mxu0 0
        %5136 = vmatpush1.bf16.msra.mxu0 0
        %5137 = vmatprep.subr.bf16.mxu0 0
        %5138 = vmatpush1.bf16.msra.mxu0 0
        %5139 = vmatprep.subr.bf16.mxu0 0
        %5140 = vmatpush1.bf16.msra.mxu0 0
        %5141 = vmatprep.subr.bf16.mxu0 0
        %5142 = vmatpush1.bf16.msra.mxu0 0
        %5143 = vmatprep.subr.bf16.mxu0 0
        %5144 = vmatpush1.bf16.msra.mxu0 0
        %5145 = vmatprep.subr.bf16.mxu0 0
        %5146 = vmatpush1.bf16.msra.mxu0 0
        %5147 = vmatprep.subr.bf16.mxu0 0
        %5148 = vmatpush1.bf16.msra.mxu0 %v4709
        %5149 = vmatprep.subr.bf16.mxu0 0
        %5150 = vmatpush2.bf16.msra.mxu0 0
        %5151 = vmatprep.subr.bf16.mxu0 0
        %5152 = vmatpush2.bf16.msra.mxu0 0
        %5153 = vmatprep.subr.bf16.mxu0 0
        %5154 = vmatpush2.bf16.msra.mxu0 0
        %5155 = vmatprep.subr.bf16.mxu0 0
        %5156 = vmatpush2.bf16.msra.mxu0 0
        %5157 = vmatprep.subr.bf16.mxu0 0
        %5158 = vmatpush2.bf16.msra.mxu0 0
        %5159 = vmatprep.subr.bf16.mxu0 0
        %5160 = vmatpush2.bf16.msra.mxu0 0
        %5161 = vmatprep.subr.bf16.mxu0 0
        %5162 = vmatpush2.bf16.msra.mxu0 0
        %5163 = vmatprep.subr.bf16.mxu0 0
        %5164 = vmatpush2.bf16.msra.mxu0 0
        %5165 = vmatprep.mubr.bf16.mxu0 0
        %5166 = vmatmul.mubr.bf16.gmra.mxu0 %v5131
        %v5167 = vpop.f32.mrf.mxu0
        %v5168 = vadd.f32 0.0, %v5167
        %v5169 = vpop.f32.mrf.mxu0
        %v5170 = vpop.f32.mrf.mxu0
        %v5171 = vpop.f32.mrf.mxu0
        %5172 = vdwg.mxu0
        %v5173 = vpack.c.bf16 %v5168, %v5168
        %5174 = vst.msk [vmem:[#allocation5 + $0x8] sm:$0x3] %vm4752, %v5173
        %v5175 = vld [vmem:[#allocation5] sm:$0xff]
        %v5176 = vld [vmem:[#allocation5 + $0x8] sm:$0x3]
        %v5177 = vld [vmem:[%s19] sm:$0xf]
        %v5178 = vld [vmem:[%s19 + $0x4] sm:$0xf]
        %v5179 = vld [vmem:[%s19 + $0x8] sm:$0xf]
        %v5180 = vld [vmem:[%s19 + $0xc] sm:$0xf]
        %v5181 = vld [vmem:[%s19 + $0x10] sm:$0xf]
        %v5182 = vld [vmem:[%s19 + $0x14] sm:$0xf]
        %v5183 = vld [vmem:[%s19 + $0x18] sm:$0xf]
        %v5184 = vld [vmem:[%s19 + $0x1c] sm:$0xf]
        %v5185 = vld [vmem:[%s19 + $0x20] sm:$0xf]
        %v5186 = vld [vmem:[%s19 + $0x24] sm:$0xf]
        %v5187 = vld [vmem:[%s19 + $0x28] sm:$0xf]
        %v5188 = vld [vmem:[%s19 + $0x2c] sm:$0xf]
        %v5189 = vld [vmem:[%s19 + $0x30] sm:$0xf]
        %v5190 = vld [vmem:[%s19 + $0x34] sm:$0xf]
        %v5191 = vld [vmem:[%s19 + $0x38] sm:$0xf]
        %v5192 = vld [vmem:[%s19 + $0x3c] sm:$0xf]
        %v5193 = vld [vmem:[%s19 + $0x40] sm:$0xf]
        %v5194 = vld [vmem:[%s19 + $0x44] sm:$0xf]
        %v5195 = vld [vmem:[%s19 + $0x48] sm:$0xf]
        %v5196 = vld [vmem:[%s19 + $0x4c] sm:$0xf]
        %v5197 = vld [vmem:[%s19 + $0x50] sm:$0xf]
        %v5198 = vld [vmem:[%s19 + $0x54] sm:$0xf]
        %v5199 = vld [vmem:[%s19 + $0x58] sm:$0xf]
        %v5200 = vld [vmem:[%s19 + $0x5c] sm:$0xf]
        %v5201 = vld [vmem:[%s19 + $0x60] sm:$0xf]
        %v5202 = vld [vmem:[%s19 + $0x64] sm:$0xf]
        %v5203 = vld [vmem:[%s19 + $0x68] sm:$0xf]
        %v5204 = vld [vmem:[%s19 + $0x6c] sm:$0xf]
        %v5205 = vld [vmem:[%s19 + $0x70] sm:$0xf]
        %v5206 = vld [vmem:[%s19 + $0x74] sm:$0xf]
        %v5207 = vld [vmem:[%s19 + $0x78] sm:$0xf]
        %v5208 = vld [vmem:[%s19 + $0x7c] sm:$0xf]
        %v5209 = vld [vmem:[%s19 + $0x80] sm:$0xf]
        %v5210 = vld [vmem:[%s19 + $0x84] sm:$0xf]
        %v5211 = vld [vmem:[%s19 + $0x88] sm:$0xf]
        %v5212 = vld [vmem:[%s19 + $0x8c] sm:$0xf]
        %v5213 = vld [vmem:[%s19 + $0x90] sm:$0xf]
        %v5214 = vld [vmem:[%s19 + $0x94] sm:$0xf]
        %v5215 = vld [vmem:[%s19 + $0x98] sm:$0xf]
        %v5216 = vld [vmem:[%s19 + $0x9c] sm:$0xf]
        %v5217 = vld [vmem:[%s19 + $0xa0] sm:$0xf]
        %v5218 = vld [vmem:[%s19 + $0xa4] sm:$0xf]
        %v5219 = vld [vmem:[%s19 + $0xa8] sm:$0xf]
        %v5220 = vld [vmem:[%s19 + $0xac] sm:$0xf]
        %v5221 = vld [vmem:[%s19 + $0xb0] sm:$0xf]
        %v5222 = vld [vmem:[%s19 + $0xb4] sm:$0xf]
        %v5223 = vld [vmem:[%s19 + $0xb8] sm:$0xf]
        %v5224 = vld [vmem:[%s19 + $0xbc] sm:$0xf]
        %v5225 = vld [vmem:[%s19 + $0xc0] sm:$0xf]
        %v5226 = vld [vmem:[%s19 + $0xc4] sm:$0xf]
        %v5227 = vld [vmem:[%s19 + $0xc8] sm:$0xf]
        %v5228 = vld [vmem:[%s19 + $0xcc] sm:$0xf]
        %v5229 = vld [vmem:[%s19 + $0xd0] sm:$0xf]
        %v5230 = vld [vmem:[%s19 + $0xd4] sm:$0xf]
        %v5231 = vld [vmem:[%s19 + $0xd8] sm:$0xf]
        %v5232 = vld [vmem:[%s19 + $0xdc] sm:$0xf]
        %v5233 = vld [vmem:[%s19 + $0xe0] sm:$0xf]
        %v5234 = vld [vmem:[%s19 + $0xe4] sm:$0xf]
        %v5235 = vld [vmem:[%s19 + $0xe8] sm:$0xf]
        %v5236 = vld [vmem:[%s19 + $0xec] sm:$0xf]
        %v5237 = vld [vmem:[%s19 + $0xf0] sm:$0xf]
        %v5238 = vld [vmem:[%s19 + $0xf4] sm:$0xf]
        %v5239 = vld [vmem:[%s19 + $0xf8] sm:$0xf]
        %v5240 = vld [vmem:[%s19 + $0xfc] sm:$0xf]
        %v5241 = vld [vmem:[%s19 + $0x100] sm:$0xf]
        %v5242 = vld [vmem:[%s19 + $0x104] sm:$0xf]
        %v5243 = vld [vmem:[%s19 + $0x108] sm:$0xf]
        %v5244 = vld [vmem:[%s19 + $0x10c] sm:$0xf]
        %v5245 = vld [vmem:[%s19 + $0x110] sm:$0xf]
        %v5246 = vld [vmem:[%s19 + $0x114] sm:$0xf]
        %v5247 = vld [vmem:[%s19 + $0x118] sm:$0xf]
        %v5248 = vld [vmem:[%s19 + $0x11c] sm:$0xf]
        %v5249 = vld [vmem:[#allocation18] sm:$0x1]
        %v5251 = vlaneseq
        %v5252 = vshrl.u32 %v5251, 7
        %v5253 = vsub.s32 0, %v5252
        %v5254 = vrot.slane %v5249, %v5253
        %v5258 = vcombine.high %v5175, %v5175
        %v5260 = vunpack.c.l.s4 1983009808
        %v5261 = vunpack.c.0.s8 %v5260
        %v5262 = vlaneseq
        %v5263 = vshrl.u32 %v5262, 7
        %v5264 = vsub.s32 %v5261, %v5263
        %v5265 = vrot.slane %v5175, %v5264
        %v5267 = vunpack.c.l.s4 1983009808
        %v5268 = vunpack.c.0.s8 %v5267
        %v5269 = vlaneseq
        %v5270 = vshrl.u32 %v5269, 7
        %v5271 = vsub.s32 %v5268, %v5270
        %v5272 = vrot.slane %v5258, %v5271
        %v5273 = vcombine.high %v5265, %v5265
        %v5274 = vcombine.high %v5272, %v5272
        %v5276 = vunpack.c.l.s4 1983009808
        %v5277 = vunpack.c.0.s8 %v5276
        %v5278 = vlaneseq
        %v5279 = vshrl.u32 %v5278, 7
        %v5280 = vsub.s32 %v5277, %v5279
        %v5281 = vrot.slane %v5176, %v5280
        %v5358 = vunpack.c.l.b16 %v5177
        %v5359 = vunpack.c.l.b16 %v5178
        %v5360 = vunpack.c.l.b16 %v5179
        %v5361 = vunpack.c.l.b16 %v5180
        %v5362 = vunpack.c.l.b16 %v5181
        %v5363 = vunpack.c.l.b16 %v5182
        %v5364 = vunpack.c.l.b16 %v5183
        %v5365 = vunpack.c.l.b16 %v5184
        %v5366 = vunpack.c.l.b16 %v5185
        %v5367 = vunpack.c.l.b16 %v5186
        %v5368 = vunpack.c.l.b16 %v5187
        %v5369 = vunpack.c.l.b16 %v5188
        %v5370 = vunpack.c.l.b16 %v5189
        %v5371 = vunpack.c.l.b16 %v5190
        %v5372 = vunpack.c.l.b16 %v5191
        %v5373 = vunpack.c.l.b16 %v5192
        %v5374 = vunpack.c.l.b16 %v5193
        %v5375 = vunpack.c.l.b16 %v5194
        %v5376 = vunpack.c.l.b16 %v5195
        %v5377 = vunpack.c.l.b16 %v5196
        %v5378 = vunpack.c.l.b16 %v5197
        %v5379 = vunpack.c.l.b16 %v5198
        %v5380 = vunpack.c.l.b16 %v5199
        %v5381 = vunpack.c.l.b16 %v5200
        %v5382 = vunpack.c.l.b16 %v5201
        %v5383 = vunpack.c.l.b16 %v5202
        %v5384 = vunpack.c.l.b16 %v5203
        %v5385 = vunpack.c.l.b16 %v5204
        %v5386 = vunpack.c.l.b16 %v5205
        %v5387 = vunpack.c.l.b16 %v5206
        %v5388 = vunpack.c.l.b16 %v5207
        %v5389 = vunpack.c.l.b16 %v5208
        %v5390 = vunpack.c.l.b16 %v5209
        %v5391 = vunpack.c.l.b16 %v5210
        %v5392 = vunpack.c.l.b16 %v5211
        %v5393 = vunpack.c.l.b16 %v5212
        %v5394 = vunpack.c.l.b16 %v5213
        %v5395 = vunpack.c.l.b16 %v5214
        %v5396 = vunpack.c.l.b16 %v5215
        %v5397 = vunpack.c.l.b16 %v5216
        %v5398 = vunpack.c.l.b16 %v5217
        %v5399 = vunpack.c.l.b16 %v5218
        %v5400 = vunpack.c.l.b16 %v5219
        %v5401 = vunpack.c.l.b16 %v5220
        %v5402 = vunpack.c.l.b16 %v5221
        %v5403 = vunpack.c.l.b16 %v5222
        %v5404 = vunpack.c.l.b16 %v5223
        %v5405 = vunpack.c.l.b16 %v5224
        %v5406 = vunpack.c.l.b16 %v5225
        %v5407 = vunpack.c.l.b16 %v5226
        %v5408 = vunpack.c.l.b16 %v5227
        %v5409 = vunpack.c.l.b16 %v5228
        %v5410 = vunpack.c.l.b16 %v5229
        %v5411 = vunpack.c.l.b16 %v5230
        %v5412 = vunpack.c.l.b16 %v5231
        %v5413 = vunpack.c.l.b16 %v5232
        %v5414 = vunpack.c.l.b16 %v5233
        %v5415 = vunpack.c.l.b16 %v5234
        %v5416 = vunpack.c.l.b16 %v5235
        %v5417 = vunpack.c.l.b16 %v5236
        %v5418 = vunpack.c.l.b16 %v5237
        %v5419 = vunpack.c.l.b16 %v5238
        %v5420 = vunpack.c.l.b16 %v5239
        %v5421 = vunpack.c.l.b16 %v5240
        %v5422 = vunpack.c.l.b16 %v5241
        %v5423 = vunpack.c.l.b16 %v5242
        %v5424 = vunpack.c.l.b16 %v5243
        %v5425 = vunpack.c.l.b16 %v5244
        %v5426 = vunpack.c.l.b16 %v5245
        %v5427 = vunpack.c.l.b16 %v5246
        %v5428 = vunpack.c.l.b16 %v5247
        %v5429 = vunpack.c.l.b16 %v5248
        %v5430 = vpack.c.b16 %v5359, %v5358
        %v5431 = vpack.c.b16 %v5361, %v5360
        %v5432 = vpack.c.b16 %v5363, %v5362
        %v5433 = vpack.c.b16 %v5365, %v5364
        %v5434 = vpack.c.b16 %v5367, %v5366
        %v5435 = vpack.c.b16 %v5369, %v5368
        %v5436 = vpack.c.b16 %v5371, %v5370
        %v5437 = vpack.c.b16 %v5373, %v5372
        %v5438 = vpack.c.b16 %v5375, %v5374
        %v5439 = vpack.c.b16 %v5377, %v5376
        %v5440 = vpack.c.b16 %v5379, %v5378
        %v5441 = vpack.c.b16 %v5381, %v5380
        %v5442 = vpack.c.b16 %v5383, %v5382
        %v5443 = vpack.c.b16 %v5385, %v5384
        %v5444 = vpack.c.b16 %v5387, %v5386
        %v5445 = vpack.c.b16 %v5389, %v5388
        %v5446 = vpack.c.b16 %v5391, %v5390
        %v5447 = vpack.c.b16 %v5393, %v5392
        %v5448 = vpack.c.b16 %v5395, %v5394
        %v5449 = vpack.c.b16 %v5397, %v5396
        %v5450 = vpack.c.b16 %v5399, %v5398
        %v5451 = vpack.c.b16 %v5401, %v5400
        %v5452 = vpack.c.b16 %v5403, %v5402
        %v5453 = vpack.c.b16 %v5405, %v5404
        %v5454 = vpack.c.b16 %v5407, %v5406
        %v5455 = vpack.c.b16 %v5409, %v5408
        %v5456 = vpack.c.b16 %v5411, %v5410
        %v5457 = vpack.c.b16 %v5413, %v5412
        %v5458 = vpack.c.b16 %v5415, %v5414
        %v5459 = vpack.c.b16 %v5417, %v5416
        %v5460 = vpack.c.b16 %v5419, %v5418
        %v5461 = vpack.c.b16 %v5421, %v5420
        %v5462 = vpack.c.b16 %v5423, %v5422
        %v5463 = vpack.c.b16 %v5425, %v5424
        %v5464 = vpack.c.b16 %v5427, %v5426
        %v5465 = vpack.c.b16 %v5429, %v5428
        %v5503 = vsel %vm2817, %v5281, 0
        %5505 = vmatprep.subr.bf16.mxu0 0
        %5506 = vmatpush1.bf16.msra.mxu0 %v5437
        %5507 = vmatprep.subr.bf16.mxu0 0
        %5508 = vmatpush1.bf16.msra.mxu0 %v5436
        %5509 = vmatprep.subr.bf16.mxu0 0
        %5510 = vmatpush1.bf16.msra.mxu0 %v5435
        %5511 = vmatprep.subr.bf16.mxu0 0
        %5512 = vmatpush1.bf16.msra.mxu0 %v5434
        %5513 = vmatprep.subr.bf16.mxu0 0
        %5514 = vmatpush1.bf16.msra.mxu0 %v5433
        %5515 = vmatprep.subr.bf16.mxu0 0
        %5516 = vmatpush1.bf16.msra.mxu0 %v5432
        %5517 = vmatprep.subr.bf16.mxu0 0
        %5518 = vmatpush1.bf16.msra.mxu0 %v5431
        %5519 = vmatprep.subr.bf16.mxu0 0
        %5520 = vmatpush1.bf16.msra.mxu0 %v5430
        %5521 = vmatprep.subr.bf16.mxu0 0
        %5522 = vmatpush2.bf16.msra.mxu0 %v5445
        %5523 = vmatprep.subr.bf16.mxu0 0
        %5524 = vmatpush2.bf16.msra.mxu0 %v5444
        %5525 = vmatprep.subr.bf16.mxu0 0
        %5526 = vmatpush2.bf16.msra.mxu0 %v5443
        %5527 = vmatprep.subr.bf16.mxu0 0
        %5528 = vmatpush2.bf16.msra.mxu0 %v5442
        %5529 = vmatprep.subr.bf16.mxu0 0
        %5530 = vmatpush2.bf16.msra.mxu0 %v5441
        %5531 = vmatprep.subr.bf16.mxu0 0
        %5532 = vmatpush2.bf16.msra.mxu0 %v5440
        %5533 = vmatprep.subr.bf16.mxu0 0
        %5534 = vmatpush2.bf16.msra.mxu0 %v5439
        %5535 = vmatprep.subr.bf16.mxu0 0
        %5536 = vmatpush2.bf16.msra.mxu0 %v5438
        %5537 = vmatprep.mubr.bf16.mxu0 %v5273
        %5538 = vmatmul.mubr.bf16.gmra.mxu0 %v5265
        %v5539 = vpop.f32.mrf.mxu0
        %v5540 = vadd.f32 %v5254, %v5539
        %v5541 = vpop.f32.mrf.mxu0
        %v5542 = vpop.f32.mrf.mxu0
        %v5543 = vpop.f32.mrf.mxu0
        %5544 = vdwg.mxu0
        %5545 = vmatprep.subr.bf16.mxu0 0
        %5546 = vmatpush1.bf16.msra.mxu0 %v5453
        %5547 = vmatprep.subr.bf16.mxu0 0
        %5548 = vmatpush1.bf16.msra.mxu0 %v5452
        %5549 = vmatprep.subr.bf16.mxu0 0
        %5550 = vmatpush1.bf16.msra.mxu0 %v5451
        %5551 = vmatprep.subr.bf16.mxu0 0
        %5552 = vmatpush1.bf16.msra.mxu0 %v5450
        %5553 = vmatprep.subr.bf16.mxu0 0
        %5554 = vmatpush1.bf16.msra.mxu0 %v5449
        %5555 = vmatprep.subr.bf16.mxu0 0
        %5556 = vmatpush1.bf16.msra.mxu0 %v5448
        %5557 = vmatprep.subr.bf16.mxu0 0
        %5558 = vmatpush1.bf16.msra.mxu0 %v5447
        %5559 = vmatprep.subr.bf16.mxu0 0
        %5560 = vmatpush1.bf16.msra.mxu0 %v5446
        %5561 = vmatprep.subr.bf16.mxu0 0
        %5562 = vmatpush2.bf16.msra.mxu0 %v5461
        %5563 = vmatprep.subr.bf16.mxu0 0
        %5564 = vmatpush2.bf16.msra.mxu0 %v5460
        %5565 = vmatprep.subr.bf16.mxu0 0
        %5566 = vmatpush2.bf16.msra.mxu0 %v5459
        %5567 = vmatprep.subr.bf16.mxu0 0
        %5568 = vmatpush2.bf16.msra.mxu0 %v5458
        %5569 = vmatprep.subr.bf16.mxu0 0
        %5570 = vmatpush2.bf16.msra.mxu0 %v5457
        %5571 = vmatprep.subr.bf16.mxu0 0
        %5572 = vmatpush2.bf16.msra.mxu0 %v5456
        %5573 = vmatprep.subr.bf16.mxu0 0
        %5574 = vmatpush2.bf16.msra.mxu0 %v5455
        %5575 = vmatprep.subr.bf16.mxu0 0
        %5576 = vmatpush2.bf16.msra.mxu0 %v5454
        %5577 = vmatprep.mubr.bf16.mxu0 %v5274
        %5578 = vmatmul.mubr.bf16.gmra.mxu0 %v5272
        %v5579 = vpop.f32.mrf.mxu0
        %v5580 = vadd.f32 %v5540, %v5579
        %v5581 = vpop.f32.mrf.mxu0
        %v5582 = vpop.f32.mrf.mxu0
        %v5583 = vpop.f32.mrf.mxu0
        %5584 = vdwg.mxu0
        %5585 = vmatprep.subr.bf16.mxu0 0
        %5586 = vmatpush1.bf16.msra.mxu0 0
        %5587 = vmatprep.subr.bf16.mxu0 0
        %5588 = vmatpush1.bf16.msra.mxu0 0
        %5589 = vmatprep.subr.bf16.mxu0 0
        %5590 = vmatpush1.bf16.msra.mxu0 0
        %5591 = vmatprep.subr.bf16.mxu0 0
        %5592 = vmatpush1.bf16.msra.mxu0 0
        %5593 = vmatprep.subr.bf16.mxu0 0
        %5594 = vmatpush1.bf16.msra.mxu0 %v5465
        %5595 = vmatprep.subr.bf16.mxu0 0
        %5596 = vmatpush1.bf16.msra.mxu0 %v5464
        %5597 = vmatprep.subr.bf16.mxu0 0
        %5598 = vmatpush1.bf16.msra.mxu0 %v5463
        %5599 = vmatprep.subr.bf16.mxu0 0
        %5600 = vmatpush1.bf16.msra.mxu0 %v5462
        %5601 = vmatprep.subr.bf16.mxu0 0
        %5602 = vmatpush2.bf16.msra.mxu0 0
        %5603 = vmatprep.subr.bf16.mxu0 0
        %5604 = vmatpush2.bf16.msra.mxu0 0
        %5605 = vmatprep.subr.bf16.mxu0 0
        %5606 = vmatpush2.bf16.msra.mxu0 0
        %5607 = vmatprep.subr.bf16.mxu0 0
        %5608 = vmatpush2.bf16.msra.mxu0 0
        %5609 = vmatprep.subr.bf16.mxu0 0
        %5610 = vmatpush2.bf16.msra.mxu0 0
        %5611 = vmatprep.subr.bf16.mxu0 0
        %5612 = vmatpush2.bf16.msra.mxu0 0
        %5613 = vmatprep.subr.bf16.mxu0 0
        %5614 = vmatpush2.bf16.msra.mxu0 0
        %5615 = vmatprep.subr.bf16.mxu0 0
        %5616 = vmatpush2.bf16.msra.mxu0 0
        %5617 = vmatprep.mubr.bf16.mxu0 0
        %5618 = vmatmul.mubr.bf16.gmra.mxu0 %v5503
        %v5619 = vpop.f32.mrf.mxu0
        %v5620 = vadd.f32 %v5580, %v5619
        %v5621 = vpop.f32.mrf.mxu0
        %v5622 = vpop.f32.mrf.mxu0
        %v5623 = vpop.f32.mrf.mxu0
        %5624 = vdwg.mxu0
        %v5625 = vmul.f32 %v5620, 0.2
        %v5626 = vmax.f32 %v5620, %v5625
        %vm5627 = vcmask 1043456
        %v5628 = vsel %vm5627, %v5626, 0.0
        %v5629 = vrot.slane %v5628, 4
        %v5630 = vadd.f32 %v5628, %v5629
        %v5631 = vrot.slane %v5630, 2
        %v5632 = vadd.f32 %v5630, %v5631
        %v5633 = vrot.slane %v5632, 1
        %v5634 = vadd.f32 %v5632, %v5633
        %v5635 = vmul.f32 %v5634, %v4505
        %v5636 = vld [vmem:[#allocation20] sm:$0xff]
        %v5637 = vld [vmem:[#allocation20 + $0x8] sm:$0xff]
        %v5638 = vld [vmem:[#allocation20 + $0x10] sm:$0xff]
        %v5639 = vld [vmem:[#allocation20 + $0x18] sm:$0xff]
        %v5640 = vld [vmem:[#allocation20 + $0x20] sm:$0xff]
        %v5641 = vld [vmem:[#allocation20 + $0x28] sm:$0xff]
        %v5642 = vld [vmem:[#allocation20 + $0x30] sm:$0xff]
        %v5643 = vld [vmem:[#allocation20 + $0x38] sm:$0xff]
        %v5644 = vld [vmem:[#allocation20 + $0x40] sm:$0xff]
        %v5645 = vld [vmem:[#allocation20 + $0x48] sm:$0xff]
        %v5646 = vld [vmem:[#allocation20 + $0x50] sm:$0xff]
        %v5647 = vld [vmem:[#allocation20 + $0x58] sm:$0xff]
        %v5648 = vld [vmem:[#allocation20 + $0x60] sm:$0xff]
        %v5649 = vld [vmem:[#allocation20 + $0x68] sm:$0xff]
        %v5650 = vld [vmem:[#allocation20 + $0x70] sm:$0xff]
        %v5651 = vld [vmem:[#allocation20 + $0x78] sm:$0xff]
        %v5652 = vld [vmem:[%s22] sm:$0x1]
        %v5654 = vlaneseq
        %v5655 = vshrl.u32 %v5654, 7
        %v5656 = vsub.s32 0, %v5655
        %v5657 = vrot.slane %v5652, %v5656
        %5659 = vmatprep.subr.mxu0 0.0
        %5660 = vmatpush1.msra.mxu0 %v5651
        %5661 = vmatprep.subr.mxu0 0.0
        %5662 = vmatpush1.msra.mxu0 %v5650
        %5663 = vmatprep.subr.mxu0 0.0
        %5664 = vmatpush1.msra.mxu0 %v5649
        %5665 = vmatprep.subr.mxu0 0.0
        %5666 = vmatpush1.msra.mxu0 %v5648
        %5667 = vmatprep.subr.mxu0 0.0
        %5668 = vmatpush1.msra.mxu0 %v5647
        %5669 = vmatprep.subr.mxu0 0.0
        %5670 = vmatpush1.msra.mxu0 %v5646
        %5671 = vmatprep.subr.mxu0 0.0
        %5672 = vmatpush1.msra.mxu0 %v5645
        %5673 = vmatprep.subr.mxu0 0.0
        %5674 = vmatpush1.msra.mxu0 %v5644
        %5675 = vmatprep.subr.mxu0 0.0
        %5676 = vmatpush1.msra.mxu0 %v5643
        %5677 = vmatprep.subr.mxu0 0.0
        %5678 = vmatpush1.msra.mxu0 %v5642
        %5679 = vmatprep.subr.mxu0 0.0
        %5680 = vmatpush1.msra.mxu0 %v5641
        %5681 = vmatprep.subr.mxu0 0.0
        %5682 = vmatpush1.msra.mxu0 %v5640
        %5683 = vmatprep.subr.mxu0 0.0
        %5684 = vmatpush1.msra.mxu0 %v5639
        %5685 = vmatprep.subr.mxu0 0.0
        %5686 = vmatpush1.msra.mxu0 %v5638
        %5687 = vmatprep.subr.mxu0 0.0
        %5688 = vmatpush1.msra.mxu0 %v5637
        %5689 = vmatprep.subr.mxu0 0.0
        %5690 = vmatpush1.msra.mxu0 %v5636
        %5691 = vmatprep.subr.mxu0 0.0
        %5692 = vmatpush2.msra.mxu0 0.0
        %5693 = vmatprep.subr.mxu0 0.0
        %5694 = vmatpush2.msra.mxu0 0.0
        %5695 = vmatprep.subr.mxu0 0.0
        %5696 = vmatpush2.msra.mxu0 0.0
        %5697 = vmatprep.subr.mxu0 0.0
        %5698 = vmatpush2.msra.mxu0 0.0
        %5699 = vmatprep.subr.mxu0 0.0
        %5700 = vmatpush2.msra.mxu0 0.0
        %5701 = vmatprep.subr.mxu0 0.0
        %5702 = vmatpush2.msra.mxu0 0.0
        %5703 = vmatprep.subr.mxu0 0.0
        %5704 = vmatpush2.msra.mxu0 0.0
        %5705 = vmatprep.subr.mxu0 0.0
        %5706 = vmatpush2.msra.mxu0 0.0
        %5707 = vmatprep.subr.mxu0 0.0
        %5708 = vmatpush2.msra.mxu0 0.0
        %5709 = vmatprep.subr.mxu0 0.0
        %5710 = vmatpush2.msra.mxu0 0.0
        %5711 = vmatprep.subr.mxu0 0.0
        %5712 = vmatpush2.msra.mxu0 0.0
        %5713 = vmatprep.subr.mxu0 0.0
        %5714 = vmatpush2.msra.mxu0 0.0
        %5715 = vmatprep.subr.mxu0 0.0
        %5716 = vmatpush2.msra.mxu0 0.0
        %5717 = vmatprep.subr.mxu0 0.0
        %5718 = vmatpush2.msra.mxu0 0.0
        %5719 = vmatprep.subr.mxu0 0.0
        %5720 = vmatpush2.msra.mxu0 0.0
        %5721 = vmatprep.subr.mxu0 0.0
        %5722 = vmatpush2.msra.mxu0 0.0
        %5723 = vmatprep.mubr.f32.mxu0 0.0
        %5724 = vmatmul.mubr.f32.gmra.mxu0 %v5635
        %v5725 = vpop.f32.mrf.mxu0
        %v5726 = vadd.f32 %v5657, %v5725
        %v5727 = vpop.f32.mrf.mxu0
        %5728 = vdwg.mxu0
        %v5729 = vmax.f32 %v5726, 0.0
        %v5730 = vld [vmem:[#allocation21] sm:$0xff]
        %v5731 = vld [vmem:[#allocation21 + $0x8] sm:$0xff]
        %v5732 = vld [vmem:[#allocation21 + $0x10] sm:$0xff]
        %v5733 = vld [vmem:[#allocation21 + $0x18] sm:$0xff]
        %v5734 = vld [vmem:[#allocation21 + $0x20] sm:$0xff]
        %v5735 = vld [vmem:[#allocation21 + $0x28] sm:$0xff]
        %v5736 = vld [vmem:[#allocation21 + $0x30] sm:$0xff]
        %v5737 = vld [vmem:[#allocation21 + $0x38] sm:$0xff]
        %v5738 = vld [vmem:[#allocation21 + $0x40] sm:$0xff]
        %v5739 = vld [vmem:[#allocation21 + $0x48] sm:$0xff]
        %v5740 = vld [vmem:[#allocation21 + $0x50] sm:$0xff]
        %v5741 = vld [vmem:[#allocation21 + $0x58] sm:$0xff]
        %v5742 = vld [vmem:[#allocation21 + $0x60] sm:$0xff]
        %v5743 = vld [vmem:[#allocation21 + $0x68] sm:$0xff]
        %v5744 = vld [vmem:[#allocation21 + $0x70] sm:$0xff]
        %v5745 = vld [vmem:[#allocation21 + $0x78] sm:$0xff]
        %v5746 = vld [vmem:[%s24] sm:$0x1]
        %v5748 = vlaneseq
        %v5749 = vshrl.u32 %v5748, 7
        %v5750 = vsub.s32 0, %v5749
        %v5751 = vrot.slane %v5746, %v5750
        %5753 = vmatprep.subr.mxu0 0.0
        %5754 = vmatpush1.msra.mxu0 %v5745
        %5755 = vmatprep.subr.mxu0 0.0
        %5756 = vmatpush1.msra.mxu0 %v5744
        %5757 = vmatprep.subr.mxu0 0.0
        %5758 = vmatpush1.msra.mxu0 %v5743
        %5759 = vmatprep.subr.mxu0 0.0
        %5760 = vmatpush1.msra.mxu0 %v5742
        %5761 = vmatprep.subr.mxu0 0.0
        %5762 = vmatpush1.msra.mxu0 %v5741
        %5763 = vmatprep.subr.mxu0 0.0
        %5764 = vmatpush1.msra.mxu0 %v5740
        %5765 = vmatprep.subr.mxu0 0.0
        %5766 = vmatpush1.msra.mxu0 %v5739
        %5767 = vmatprep.subr.mxu0 0.0
        %5768 = vmatpush1.msra.mxu0 %v5738
        %5769 = vmatprep.subr.mxu0 0.0
        %5770 = vmatpush1.msra.mxu0 %v5737
        %5771 = vmatprep.subr.mxu0 0.0
        %5772 = vmatpush1.msra.mxu0 %v5736
        %5773 = vmatprep.subr.mxu0 0.0
        %5774 = vmatpush1.msra.mxu0 %v5735
        %5775 = vmatprep.subr.mxu0 0.0
        %5776 = vmatpush1.msra.mxu0 %v5734
        %5777 = vmatprep.subr.mxu0 0.0
        %5778 = vmatpush1.msra.mxu0 %v5733
        %5779 = vmatprep.subr.mxu0 0.0
        %5780 = vmatpush1.msra.mxu0 %v5732
        %5781 = vmatprep.subr.mxu0 0.0
        %5782 = vmatpush1.msra.mxu0 %v5731
        %5783 = vmatprep.subr.mxu0 0.0
        %5784 = vmatpush1.msra.mxu0 %v5730
        %5785 = vmatprep.subr.mxu0 0.0
        %5786 = vmatpush2.msra.mxu0 0.0
        %5787 = vmatprep.subr.mxu0 0.0
        %5788 = vmatpush2.msra.mxu0 0.0
        %5789 = vmatprep.subr.mxu0 0.0
        %5790 = vmatpush2.msra.mxu0 0.0
        %5791 = vmatprep.subr.mxu0 0.0
        %5792 = vmatpush2.msra.mxu0 0.0
        %5793 = vmatprep.subr.mxu0 0.0
        %5794 = vmatpush2.msra.mxu0 0.0
        %5795 = vmatprep.subr.mxu0 0.0
        %5796 = vmatpush2.msra.mxu0 0.0
        %5797 = vmatprep.subr.mxu0 0.0
        %5798 = vmatpush2.msra.mxu0 0.0
        %5799 = vmatprep.subr.mxu0 0.0
        %5800 = vmatpush2.msra.mxu0 0.0
        %5801 = vmatprep.subr.mxu0 0.0
        %5802 = vmatpush2.msra.mxu0 0.0
        %5803 = vmatprep.subr.mxu0 0.0
        %5804 = vmatpush2.msra.mxu0 0.0
        %5805 = vmatprep.subr.mxu0 0.0
        %5806 = vmatpush2.msra.mxu0 0.0
        %5807 = vmatprep.subr.mxu0 0.0
        %5808 = vmatpush2.msra.mxu0 0.0
        %5809 = vmatprep.subr.mxu0 0.0
        %5810 = vmatpush2.msra.mxu0 0.0
        %5811 = vmatprep.subr.mxu0 0.0
        %5812 = vmatpush2.msra.mxu0 0.0
        %5813 = vmatprep.subr.mxu0 0.0
        %5814 = vmatpush2.msra.mxu0 0.0
        %5815 = vmatprep.subr.mxu0 0.0
        %5816 = vmatpush2.msra.mxu0 0.0
        %5817 = vmatprep.mubr.f32.mxu0 0.0
        %5818 = vmatmul.mubr.f32.gmra.mxu0 %v5729
        %v5819 = vpop.f32.mrf.mxu0
        %v5820 = vadd.f32 %v5751, %v5819
        %v5821 = vpop.f32.mrf.mxu0
        %5822 = vdwg.mxu0
        %v5823 = vsub.f32 0.0, %v5820
        %v5824 = vmul.f32 %v5823, 1.442695
        %v5825 = vpow.pop %v5824
        %v5826 = vadd.f32 %v5825, 1.0
        %v5827 = vrcp.pop %v5826
        %v5828 = vmul.f32 1.0, %v5827
        %v5829 = vpack.c.bf16 %v5626, %v5626
        %v5830 = vunpack.c.l.bf16 %v5829
        %v5831 = vlaneseq
        %v5832 = vshrl.u32 %v5831, 7
        %v5833 = vsub.s32 0, %v5832
        %v5834 = vrot.slane %v5828, %v5833
        %v5835 = vmul.f32 %v5830, %v5834
        %v5836 = vpack.c.bf16 %v5835, %v5835
        %v5837 = vld [vmem:[%s25] sm:$0x3]
        %v5839 = vsel %vm4704, %v5837, 0
        %v5842 = vsel %vm2721, %v5836, 0
        %5844 = vmatprep.subr.bf16.mxu0 0
        %5845 = vmatpush1.bf16.msra.mxu0 0
        %5846 = vmatprep.subr.bf16.mxu0 0
        %5847 = vmatpush1.bf16.msra.mxu0 0
        %5848 = vmatprep.subr.bf16.mxu0 0
        %5849 = vmatpush1.bf16.msra.mxu0 0
        %5850 = vmatprep.subr.bf16.mxu0 0
        %5851 = vmatpush1.bf16.msra.mxu0 0
        %5852 = vmatprep.subr.bf16.mxu0 0
        %5853 = vmatpush1.bf16.msra.mxu0 0
        %5854 = vmatprep.subr.bf16.mxu0 0
        %5855 = vmatpush1.bf16.msra.mxu0 0
        %5856 = vmatprep.subr.bf16.mxu0 0
        %5857 = vmatpush1.bf16.msra.mxu0 0
        %5858 = vmatprep.subr.bf16.mxu0 0
        %5859 = vmatpush1.bf16.msra.mxu0 %v5842
        %5860 = vmatprep.subr.bf16.mxu0 0
        %5861 = vmatpush2.bf16.msra.mxu0 0
        %5862 = vmatprep.subr.bf16.mxu0 0
        %5863 = vmatpush2.bf16.msra.mxu0 0
        %5864 = vmatprep.subr.bf16.mxu0 0
        %5865 = vmatpush2.bf16.msra.mxu0 0
        %5866 = vmatprep.subr.bf16.mxu0 0
        %5867 = vmatpush2.bf16.msra.mxu0 0
        %5868 = vmatprep.subr.bf16.mxu0 0
        %5869 = vmatpush2.bf16.msra.mxu0 0
        %5870 = vmatprep.subr.bf16.mxu0 0
        %5871 = vmatpush2.bf16.msra.mxu0 0
        %5872 = vmatprep.subr.bf16.mxu0 0
        %5873 = vmatpush2.bf16.msra.mxu0 0
        %5874 = vmatprep.subr.bf16.mxu0 0
        %5875 = vmatpush2.bf16.msra.mxu0 0
        %5876 = vmatprep.mubr.bf16.mxu0 0
        %5877 = vmatmul.mubr.bf16.gmra.mxu0 %v5839
        %v5878 = vpop.f32.mrf.mxu0
        %v5879 = vadd.f32 0.0, %v5878
        %v5880 = vpop.f32.mrf.mxu0
        %v5881 = vpop.f32.mrf.mxu0
        %v5882 = vpop.f32.mrf.mxu0
        %5883 = vdwg.mxu0
        %v5884 = vpack.c.bf16 %v5879, %v5879
        %5885 = vst [vmem:[#allocation6] sm:$0x3] %v5884
        %s5886 = scalar_lea.vmem %s25, 2
        %v5887 = vld [vmem:[%s5886] sm:$0x3]
        %v5889 = vsel %vm4704, %v5887, 0
        %5891 = vmatprep.subr.bf16.mxu0 0
        %5892 = vmatpush1.bf16.msra.mxu0 0
        %5893 = vmatprep.subr.bf16.mxu0 0
        %5894 = vmatpush1.bf16.msra.mxu0 0
        %5895 = vmatprep.subr.bf16.mxu0 0
        %5896 = vmatpush1.bf16.msra.mxu0 0
        %5897 = vmatprep.subr.bf16.mxu0 0
        %5898 = vmatpush1.bf16.msra.mxu0 0
        %5899 = vmatprep.subr.bf16.mxu0 0
        %5900 = vmatpush1.bf16.msra.mxu0 0
        %5901 = vmatprep.subr.bf16.mxu0 0
        %5902 = vmatpush1.bf16.msra.mxu0 0
        %5903 = vmatprep.subr.bf16.mxu0 0
        %5904 = vmatpush1.bf16.msra.mxu0 0
        %5905 = vmatprep.subr.bf16.mxu0 0
        %5906 = vmatpush1.bf16.msra.mxu0 %v5842
        %5907 = vmatprep.subr.bf16.mxu0 0
        %5908 = vmatpush2.bf16.msra.mxu0 0
        %5909 = vmatprep.subr.bf16.mxu0 0
        %5910 = vmatpush2.bf16.msra.mxu0 0
        %5911 = vmatprep.subr.bf16.mxu0 0
        %5912 = vmatpush2.bf16.msra.mxu0 0
        %5913 = vmatprep.subr.bf16.mxu0 0
        %5914 = vmatpush2.bf16.msra.mxu0 0
        %5915 = vmatprep.subr.bf16.mxu0 0
        %5916 = vmatpush2.bf16.msra.mxu0 0
        %5917 = vmatprep.subr.bf16.mxu0 0
        %5918 = vmatpush2.bf16.msra.mxu0 0
        %5919 = vmatprep.subr.bf16.mxu0 0
        %5920 = vmatpush2.bf16.msra.mxu0 0
        %5921 = vmatprep.subr.bf16.mxu0 0
        %5922 = vmatpush2.bf16.msra.mxu0 0
        %5923 = vmatprep.mubr.bf16.mxu0 0
        %5924 = vmatmul.mubr.bf16.gmra.mxu0 %v5889
        %v5925 = vpop.f32.mrf.mxu0
        %v5926 = vadd.f32 0.0, %v5925
        %v5927 = vpop.f32.mrf.mxu0
        %v5928 = vpop.f32.mrf.mxu0
        %v5929 = vpop.f32.mrf.mxu0
        %5930 = vdwg.mxu0
        %v5931 = vpack.c.bf16 %v5926, %v5926
        %5932 = vst [vmem:[#allocation6 + $0x2] sm:$0x3] %v5931
        %s5933 = scalar_lea.vmem %s25, 4
        %v5934 = vld [vmem:[%s5933] sm:$0x3]
        %v5936 = vsel %vm4704, %v5934, 0
        %5938 = vmatprep.subr.bf16.mxu0 0
        %5939 = vmatpush1.bf16.msra.mxu0 0
        %5940 = vmatprep.subr.bf16.mxu0 0
        %5941 = vmatpush1.bf16.msra.mxu0 0
        %5942 = vmatprep.subr.bf16.mxu0 0
        %5943 = vmatpush1.bf16.msra.mxu0 0
        %5944 = vmatprep.subr.bf16.mxu0 0
        %5945 = vmatpush1.bf16.msra.mxu0 0
        %5946 = vmatprep.subr.bf16.mxu0 0
        %5947 = vmatpush1.bf16.msra.mxu0 0
        %5948 = vmatprep.subr.bf16.mxu0 0
        %5949 = vmatpush1.bf16.msra.mxu0 0
        %5950 = vmatprep.subr.bf16.mxu0 0
        %5951 = vmatpush1.bf16.msra.mxu0 0
        %5952 = vmatprep.subr.bf16.mxu0 0
        %5953 = vmatpush1.bf16.msra.mxu0 %v5842
        %5954 = vmatprep.subr.bf16.mxu0 0
        %5955 = vmatpush2.bf16.msra.mxu0 0
        %5956 = vmatprep.subr.bf16.mxu0 0
        %5957 = vmatpush2.bf16.msra.mxu0 0
        %5958 = vmatprep.subr.bf16.mxu0 0
        %5959 = vmatpush2.bf16.msra.mxu0 0
        %5960 = vmatprep.subr.bf16.mxu0 0
        %5961 = vmatpush2.bf16.msra.mxu0 0
        %5962 = vmatprep.subr.bf16.mxu0 0
        %5963 = vmatpush2.bf16.msra.mxu0 0
        %5964 = vmatprep.subr.bf16.mxu0 0
        %5965 = vmatpush2.bf16.msra.mxu0 0
        %5966 = vmatprep.subr.bf16.mxu0 0
        %5967 = vmatpush2.bf16.msra.mxu0 0
        %5968 = vmatprep.subr.bf16.mxu0 0
        %5969 = vmatpush2.bf16.msra.mxu0 0
        %5970 = vmatprep.mubr.bf16.mxu0 0
        %5971 = vmatmul.mubr.bf16.gmra.mxu0 %v5936
        %v5972 = vpop.f32.mrf.mxu0
        %v5973 = vadd.f32 0.0, %v5972
        %v5974 = vpop.f32.mrf.mxu0
        %v5975 = vpop.f32.mrf.mxu0
        %v5976 = vpop.f32.mrf.mxu0
        %5977 = vdwg.mxu0
        %v5978 = vpack.c.bf16 %v5973, %v5973
        %5979 = vst [vmem:[#allocation6 + $0x4] sm:$0x3] %v5978
        %s5980 = scalar_lea.vmem %s25, 6
        %v5981 = vld [vmem:[%s5980] sm:$0x3]
        %v5983 = vsel %vm4704, %v5981, 0
        %5985 = vmatprep.subr.bf16.mxu0 0
        %5986 = vmatpush1.bf16.msra.mxu0 0
        %5987 = vmatprep.subr.bf16.mxu0 0
        %5988 = vmatpush1.bf16.msra.mxu0 0
        %5989 = vmatprep.subr.bf16.mxu0 0
        %5990 = vmatpush1.bf16.msra.mxu0 0
        %5991 = vmatprep.subr.bf16.mxu0 0
        %5992 = vmatpush1.bf16.msra.mxu0 0
        %5993 = vmatprep.subr.bf16.mxu0 0
        %5994 = vmatpush1.bf16.msra.mxu0 0
        %5995 = vmatprep.subr.bf16.mxu0 0
        %5996 = vmatpush1.bf16.msra.mxu0 0
        %5997 = vmatprep.subr.bf16.mxu0 0
        %5998 = vmatpush1.bf16.msra.mxu0 0
        %5999 = vmatprep.subr.bf16.mxu0 0
        %6000 = vmatpush1.bf16.msra.mxu0 %v5842
        %6001 = vmatprep.subr.bf16.mxu0 0
        %6002 = vmatpush2.bf16.msra.mxu0 0
        %6003 = vmatprep.subr.bf16.mxu0 0
        %6004 = vmatpush2.bf16.msra.mxu0 0
        %6005 = vmatprep.subr.bf16.mxu0 0
        %6006 = vmatpush2.bf16.msra.mxu0 0
        %6007 = vmatprep.subr.bf16.mxu0 0
        %6008 = vmatpush2.bf16.msra.mxu0 0
        %6009 = vmatprep.subr.bf16.mxu0 0
        %6010 = vmatpush2.bf16.msra.mxu0 0
        %6011 = vmatprep.subr.bf16.mxu0 0
        %6012 = vmatpush2.bf16.msra.mxu0 0
        %6013 = vmatprep.subr.bf16.mxu0 0
        %6014 = vmatpush2.bf16.msra.mxu0 0
        %6015 = vmatprep.subr.bf16.mxu0 0
        %6016 = vmatpush2.bf16.msra.mxu0 0
        %6017 = vmatprep.mubr.bf16.mxu0 0
        %6018 = vmatmul.mubr.bf16.gmra.mxu0 %v5983
        %v6019 = vpop.f32.mrf.mxu0
        %v6020 = vadd.f32 0.0, %v6019
        %v6021 = vpop.f32.mrf.mxu0
        %v6022 = vpop.f32.mrf.mxu0
        %v6023 = vpop.f32.mrf.mxu0
        %6024 = vdwg.mxu0
        %v6025 = vpack.c.bf16 %v6020, %v6020
        %6026 = vst [vmem:[#allocation6 + $0x6] sm:$0x3] %v6025
        %s6027 = scalar_lea.vmem %s25, 8
        %v6028 = vld [vmem:[%s6027] sm:$0x3]
        %v6030 = vsel %vm4704, %v6028, 0
        %6032 = vmatprep.subr.bf16.mxu0 0
        %6033 = vmatpush1.bf16.msra.mxu0 0
        %6034 = vmatprep.subr.bf16.mxu0 0
        %6035 = vmatpush1.bf16.msra.mxu0 0
        %6036 = vmatprep.subr.bf16.mxu0 0
        %6037 = vmatpush1.bf16.msra.mxu0 0
        %6038 = vmatprep.subr.bf16.mxu0 0
        %6039 = vmatpush1.bf16.msra.mxu0 0
        %6040 = vmatprep.subr.bf16.mxu0 0
        %6041 = vmatpush1.bf16.msra.mxu0 0
        %6042 = vmatprep.subr.bf16.mxu0 0
        %6043 = vmatpush1.bf16.msra.mxu0 0
        %6044 = vmatprep.subr.bf16.mxu0 0
        %6045 = vmatpush1.bf16.msra.mxu0 0
        %6046 = vmatprep.subr.bf16.mxu0 0
        %6047 = vmatpush1.bf16.msra.mxu0 %v5842
        %6048 = vmatprep.subr.bf16.mxu0 0
        %6049 = vmatpush2.bf16.msra.mxu0 0
        %6050 = vmatprep.subr.bf16.mxu0 0
        %6051 = vmatpush2.bf16.msra.mxu0 0
        %6052 = vmatprep.subr.bf16.mxu0 0
        %6053 = vmatpush2.bf16.msra.mxu0 0
        %6054 = vmatprep.subr.bf16.mxu0 0
        %6055 = vmatpush2.bf16.msra.mxu0 0
        %6056 = vmatprep.subr.bf16.mxu0 0
        %6057 = vmatpush2.bf16.msra.mxu0 0
        %6058 = vmatprep.subr.bf16.mxu0 0
        %6059 = vmatpush2.bf16.msra.mxu0 0
        %6060 = vmatprep.subr.bf16.mxu0 0
        %6061 = vmatpush2.bf16.msra.mxu0 0
        %6062 = vmatprep.subr.bf16.mxu0 0
        %6063 = vmatpush2.bf16.msra.mxu0 0
        %6064 = vmatprep.mubr.bf16.mxu0 0
        %6065 = vmatmul.mubr.bf16.gmra.mxu0 %v6030
        %v6066 = vpop.f32.mrf.mxu0
        %v6067 = vadd.f32 0.0, %v6066
        %v6068 = vpop.f32.mrf.mxu0
        %v6069 = vpop.f32.mrf.mxu0
        %v6070 = vpop.f32.mrf.mxu0
        %6071 = vdwg.mxu0
        %v6072 = vpack.c.bf16 %v6067, %v6067
        %6073 = vst [vmem:[#allocation6 + $0x8] sm:$0x3] %v6072
        %s6074 = scalar_lea.vmem %s25, 10
        %v6075 = vld [vmem:[%s6074] sm:$0x3]
        %v6077 = vsel %vm4704, %v6075, 0
        %6079 = vmatprep.subr.bf16.mxu0 0
        %6080 = vmatpush1.bf16.msra.mxu0 0
        %6081 = vmatprep.subr.bf16.mxu0 0
        %6082 = vmatpush1.bf16.msra.mxu0 0
        %6083 = vmatprep.subr.bf16.mxu0 0
        %6084 = vmatpush1.bf16.msra.mxu0 0
        %6085 = vmatprep.subr.bf16.mxu0 0
        %6086 = vmatpush1.bf16.msra.mxu0 0
        %6087 = vmatprep.subr.bf16.mxu0 0
        %6088 = vmatpush1.bf16.msra.mxu0 0
        %6089 = vmatprep.subr.bf16.mxu0 0
        %6090 = vmatpush1.bf16.msra.mxu0 0
        %6091 = vmatprep.subr.bf16.mxu0 0
        %6092 = vmatpush1.bf16.msra.mxu0 0
        %6093 = vmatprep.subr.bf16.mxu0 0
        %6094 = vmatpush1.bf16.msra.mxu0 %v5842
        %6095 = vmatprep.subr.bf16.mxu0 0
        %6096 = vmatpush2.bf16.msra.mxu0 0
        %6097 = vmatprep.subr.bf16.mxu0 0
        %6098 = vmatpush2.bf16.msra.mxu0 0
        %6099 = vmatprep.subr.bf16.mxu0 0
        %6100 = vmatpush2.bf16.msra.mxu0 0
        %6101 = vmatprep.subr.bf16.mxu0 0
        %6102 = vmatpush2.bf16.msra.mxu0 0
        %6103 = vmatprep.subr.bf16.mxu0 0
        %6104 = vmatpush2.bf16.msra.mxu0 0
        %6105 = vmatprep.subr.bf16.mxu0 0
        %6106 = vmatpush2.bf16.msra.mxu0 0
        %6107 = vmatprep.subr.bf16.mxu0 0
        %6108 = vmatpush2.bf16.msra.mxu0 0
        %6109 = vmatprep.subr.bf16.mxu0 0
        %6110 = vmatpush2.bf16.msra.mxu0 0
        %6111 = vmatprep.mubr.bf16.mxu0 0
        %6112 = vmatmul.mubr.bf16.gmra.mxu0 %v6077
        %v6113 = vpop.f32.mrf.mxu0
        %v6114 = vadd.f32 0.0, %v6113
        %v6115 = vpop.f32.mrf.mxu0
        %v6116 = vpop.f32.mrf.mxu0
        %v6117 = vpop.f32.mrf.mxu0
        %6118 = vdwg.mxu0
        %v6119 = vpack.c.bf16 %v6114, %v6114
        %6120 = vst [vmem:[#allocation6 + $0xa] sm:$0x3] %v6119
        %s6121 = scalar_lea.vmem %s25, 12
        %v6122 = vld [vmem:[%s6121] sm:$0x3]
        %v6124 = vsel %vm4704, %v6122, 0
        %6126 = vmatprep.subr.bf16.mxu0 0
        %6127 = vmatpush1.bf16.msra.mxu0 0
        %6128 = vmatprep.subr.bf16.mxu0 0
        %6129 = vmatpush1.bf16.msra.mxu0 0
        %6130 = vmatprep.subr.bf16.mxu0 0
        %6131 = vmatpush1.bf16.msra.mxu0 0
        %6132 = vmatprep.subr.bf16.mxu0 0
        %6133 = vmatpush1.bf16.msra.mxu0 0
        %6134 = vmatprep.subr.bf16.mxu0 0
        %6135 = vmatpush1.bf16.msra.mxu0 0
        %6136 = vmatprep.subr.bf16.mxu0 0
        %6137 = vmatpush1.bf16.msra.mxu0 0
        %6138 = vmatprep.subr.bf16.mxu0 0
        %6139 = vmatpush1.bf16.msra.mxu0 0
        %6140 = vmatprep.subr.bf16.mxu0 0
        %6141 = vmatpush1.bf16.msra.mxu0 %v5842
        %6142 = vmatprep.subr.bf16.mxu0 0
        %6143 = vmatpush2.bf16.msra.mxu0 0
        %6144 = vmatprep.subr.bf16.mxu0 0
        %6145 = vmatpush2.bf16.msra.mxu0 0
        %6146 = vmatprep.subr.bf16.mxu0 0
        %6147 = vmatpush2.bf16.msra.mxu0 0
        %6148 = vmatprep.subr.bf16.mxu0 0
        %6149 = vmatpush2.bf16.msra.mxu0 0
        %6150 = vmatprep.subr.bf16.mxu0 0
        %6151 = vmatpush2.bf16.msra.mxu0 0
        %6152 = vmatprep.subr.bf16.mxu0 0
        %6153 = vmatpush2.bf16.msra.mxu0 0
        %6154 = vmatprep.subr.bf16.mxu0 0
        %6155 = vmatpush2.bf16.msra.mxu0 0
        %6156 = vmatprep.subr.bf16.mxu0 0
        %6157 = vmatpush2.bf16.msra.mxu0 0
        %6158 = vmatprep.mubr.bf16.mxu0 0
        %6159 = vmatmul.mubr.bf16.gmra.mxu0 %v6124
        %v6160 = vpop.f32.mrf.mxu0
        %v6161 = vadd.f32 0.0, %v6160
        %v6162 = vpop.f32.mrf.mxu0
        %v6163 = vpop.f32.mrf.mxu0
        %v6164 = vpop.f32.mrf.mxu0
        %6165 = vdwg.mxu0
        %v6166 = vpack.c.bf16 %v6161, %v6161
        %6167 = vst [vmem:[#allocation6 + $0xc] sm:$0x3] %v6166
        %s6168 = scalar_lea.vmem %s25, 14
        %v6169 = vld [vmem:[%s6168] sm:$0x3]
        %v6171 = vsel %vm4704, %v6169, 0
        %6173 = vmatprep.subr.bf16.mxu0 0
        %6174 = vmatpush1.bf16.msra.mxu0 0
        %6175 = vmatprep.subr.bf16.mxu0 0
        %6176 = vmatpush1.bf16.msra.mxu0 0
        %6177 = vmatprep.subr.bf16.mxu0 0
        %6178 = vmatpush1.bf16.msra.mxu0 0
        %6179 = vmatprep.subr.bf16.mxu0 0
        %6180 = vmatpush1.bf16.msra.mxu0 0
        %6181 = vmatprep.subr.bf16.mxu0 0
        %6182 = vmatpush1.bf16.msra.mxu0 0
        %6183 = vmatprep.subr.bf16.mxu0 0
        %6184 = vmatpush1.bf16.msra.mxu0 0
        %6185 = vmatprep.subr.bf16.mxu0 0
        %6186 = vmatpush1.bf16.msra.mxu0 0
        %6187 = vmatprep.subr.bf16.mxu0 0
        %6188 = vmatpush1.bf16.msra.mxu0 %v5842
        %6189 = vmatprep.subr.bf16.mxu0 0
        %6190 = vmatpush2.bf16.msra.mxu0 0
        %6191 = vmatprep.subr.bf16.mxu0 0
        %6192 = vmatpush2.bf16.msra.mxu0 0
        %6193 = vmatprep.subr.bf16.mxu0 0
        %6194 = vmatpush2.bf16.msra.mxu0 0
        %6195 = vmatprep.subr.bf16.mxu0 0
        %6196 = vmatpush2.bf16.msra.mxu0 0
        %6197 = vmatprep.subr.bf16.mxu0 0
        %6198 = vmatpush2.bf16.msra.mxu0 0
        %6199 = vmatprep.subr.bf16.mxu0 0
        %6200 = vmatpush2.bf16.msra.mxu0 0
        %6201 = vmatprep.subr.bf16.mxu0 0
        %6202 = vmatpush2.bf16.msra.mxu0 0
        %6203 = vmatprep.subr.bf16.mxu0 0
        %6204 = vmatpush2.bf16.msra.mxu0 0
        %6205 = vmatprep.mubr.bf16.mxu0 0
        %6206 = vmatmul.mubr.bf16.gmra.mxu0 %v6171
        %v6207 = vpop.f32.mrf.mxu0
        %v6208 = vadd.f32 0.0, %v6207
        %v6209 = vpop.f32.mrf.mxu0
        %v6210 = vpop.f32.mrf.mxu0
        %v6211 = vpop.f32.mrf.mxu0
        %6212 = vdwg.mxu0
        %v6213 = vpack.c.bf16 %v6208, %v6208
        %6214 = vst [vmem:[#allocation6 + $0xe] sm:$0x3] %v6213
        %s6215 = scalar_lea.vmem %s25, 16
        %v6216 = vld [vmem:[%s6215] sm:$0x3]
        %v6218 = vsel %vm4704, %v6216, 0
        %6220 = vmatprep.subr.bf16.mxu0 0
        %6221 = vmatpush1.bf16.msra.mxu0 0
        %6222 = vmatprep.subr.bf16.mxu0 0
        %6223 = vmatpush1.bf16.msra.mxu0 0
        %6224 = vmatprep.subr.bf16.mxu0 0
        %6225 = vmatpush1.bf16.msra.mxu0 0
        %6226 = vmatprep.subr.bf16.mxu0 0
        %6227 = vmatpush1.bf16.msra.mxu0 0
        %6228 = vmatprep.subr.bf16.mxu0 0
        %6229 = vmatpush1.bf16.msra.mxu0 0
        %6230 = vmatprep.subr.bf16.mxu0 0
        %6231 = vmatpush1.bf16.msra.mxu0 0
        %6232 = vmatprep.subr.bf16.mxu0 0
        %6233 = vmatpush1.bf16.msra.mxu0 0
        %6234 = vmatprep.subr.bf16.mxu0 0
        %6235 = vmatpush1.bf16.msra.mxu0 %v5842
        %6236 = vmatprep.subr.bf16.mxu0 0
        %6237 = vmatpush2.bf16.msra.mxu0 0
        %6238 = vmatprep.subr.bf16.mxu0 0
        %6239 = vmatpush2.bf16.msra.mxu0 0
        %6240 = vmatprep.subr.bf16.mxu0 0
        %6241 = vmatpush2.bf16.msra.mxu0 0
        %6242 = vmatprep.subr.bf16.mxu0 0
        %6243 = vmatpush2.bf16.msra.mxu0 0
        %6244 = vmatprep.subr.bf16.mxu0 0
        %6245 = vmatpush2.bf16.msra.mxu0 0
        %6246 = vmatprep.subr.bf16.mxu0 0
        %6247 = vmatpush2.bf16.msra.mxu0 0
        %6248 = vmatprep.subr.bf16.mxu0 0
        %6249 = vmatpush2.bf16.msra.mxu0 0
        %6250 = vmatprep.subr.bf16.mxu0 0
        %6251 = vmatpush2.bf16.msra.mxu0 0
        %6252 = vmatprep.mubr.bf16.mxu0 0
        %6253 = vmatmul.mubr.bf16.gmra.mxu0 %v6218
        %v6254 = vpop.f32.mrf.mxu0
        %v6255 = vadd.f32 0.0, %v6254
        %v6256 = vpop.f32.mrf.mxu0
        %v6257 = vpop.f32.mrf.mxu0
        %v6258 = vpop.f32.mrf.mxu0
        %6259 = vdwg.mxu0
        %v6260 = vpack.c.bf16 %v6255, %v6255
        %6261 = vst [vmem:[#allocation6 + $0x10] sm:$0x3] %v6260
        %v6262 = vld [vmem:[#allocation6] sm:$0xff]
        %v6263 = vld [vmem:[#allocation6 + $0x8] sm:$0xff]
        %v6264 = vld [vmem:[#allocation6 + $0x10] sm:$0x3]
        %v6265 = vld [vmem:[#allocation23] sm:$0xf]
        %v6266 = vld [vmem:[#allocation23 + $0x4] sm:$0xf]
        %v6267 = vld [vmem:[#allocation23 + $0x8] sm:$0xf]
        %v6268 = vld [vmem:[#allocation23 + $0xc] sm:$0xf]
        %v6269 = vld [vmem:[#allocation23 + $0x10] sm:$0xf]
        %v6270 = vld [vmem:[#allocation23 + $0x14] sm:$0xf]
        %v6271 = vld [vmem:[#allocation23 + $0x18] sm:$0xf]
        %v6272 = vld [vmem:[#allocation23 + $0x1c] sm:$0xf]
        %v6273 = vld [vmem:[#allocation23 + $0x20] sm:$0xf]
        %v6274 = vld [vmem:[#allocation23 + $0x24] sm:$0xf]
        %v6275 = vld [vmem:[#allocation23 + $0x28] sm:$0xf]
        %v6276 = vld [vmem:[#allocation23 + $0x2c] sm:$0xf]
        %v6277 = vld [vmem:[#allocation23 + $0x30] sm:$0xf]
        %v6278 = vld [vmem:[#allocation23 + $0x34] sm:$0xf]
        %v6279 = vld [vmem:[#allocation23 + $0x38] sm:$0xf]
        %v6280 = vld [vmem:[#allocation23 + $0x3c] sm:$0xf]
        %v6281 = vld [vmem:[#allocation23 + $0x40] sm:$0xf]
        %v6282 = vld [vmem:[#allocation23 + $0x44] sm:$0xf]
        %v6283 = vld [vmem:[#allocation23 + $0x48] sm:$0xf]
        %v6284 = vld [vmem:[#allocation23 + $0x4c] sm:$0xf]
        %v6285 = vld [vmem:[#allocation23 + $0x50] sm:$0xf]
        %v6286 = vld [vmem:[#allocation23 + $0x54] sm:$0xf]
        %v6287 = vld [vmem:[#allocation23 + $0x58] sm:$0xf]
        %v6288 = vld [vmem:[#allocation23 + $0x5c] sm:$0xf]
        %v6289 = vld [vmem:[#allocation23 + $0x60] sm:$0xf]
        %v6290 = vld [vmem:[#allocation23 + $0x64] sm:$0xf]
        %v6291 = vld [vmem:[#allocation23 + $0x68] sm:$0xf]
        %v6292 = vld [vmem:[#allocation23 + $0x6c] sm:$0xf]
        %v6293 = vld [vmem:[#allocation23 + $0x70] sm:$0xf]
        %v6294 = vld [vmem:[#allocation23 + $0x74] sm:$0xf]
        %v6295 = vld [vmem:[#allocation23 + $0x78] sm:$0xf]
        %v6296 = vld [vmem:[#allocation23 + $0x7c] sm:$0xf]
        %v6297 = vld [vmem:[#allocation23 + $0x80] sm:$0xf]
        %v6298 = vld [vmem:[#allocation23 + $0x84] sm:$0xf]
        %v6299 = vld [vmem:[#allocation23 + $0x88] sm:$0xf]
        %v6300 = vld [vmem:[#allocation23 + $0x8c] sm:$0xf]
        %v6301 = vld [vmem:[#allocation23 + $0x90] sm:$0xf]
        %v6302 = vld [vmem:[#allocation23 + $0x94] sm:$0xf]
        %v6303 = vld [vmem:[#allocation23 + $0x98] sm:$0xf]
        %v6304 = vld [vmem:[#allocation23 + $0x9c] sm:$0xf]
        %v6305 = vld [vmem:[#allocation23 + $0xa0] sm:$0xf]
        %v6306 = vld [vmem:[#allocation23 + $0xa4] sm:$0xf]
        %v6307 = vld [vmem:[#allocation23 + $0xa8] sm:$0xf]
        %v6308 = vld [vmem:[#allocation23 + $0xac] sm:$0xf]
        %v6309 = vld [vmem:[#allocation23 + $0xb0] sm:$0xf]
        %v6310 = vld [vmem:[#allocation23 + $0xb4] sm:$0xf]
        %v6311 = vld [vmem:[#allocation23 + $0xb8] sm:$0xf]
        %v6312 = vld [vmem:[#allocation23 + $0xbc] sm:$0xf]
        %v6313 = vld [vmem:[#allocation23 + $0xc0] sm:$0xf]
        %v6314 = vld [vmem:[#allocation23 + $0xc4] sm:$0xf]
        %v6315 = vld [vmem:[#allocation23 + $0xc8] sm:$0xf]
        %v6316 = vld [vmem:[#allocation23 + $0xcc] sm:$0xf]
        %v6317 = vld [vmem:[#allocation23 + $0xd0] sm:$0xf]
        %v6318 = vld [vmem:[#allocation23 + $0xd4] sm:$0xf]
        %v6319 = vld [vmem:[#allocation23 + $0xd8] sm:$0xf]
        %v6320 = vld [vmem:[#allocation23 + $0xdc] sm:$0xf]
        %v6321 = vld [vmem:[#allocation23 + $0xe0] sm:$0xf]
        %v6322 = vld [vmem:[#allocation23 + $0xe4] sm:$0xf]
        %v6323 = vld [vmem:[#allocation23 + $0xe8] sm:$0xf]
        %v6324 = vld [vmem:[#allocation23 + $0xec] sm:$0xf]
        %v6325 = vld [vmem:[#allocation23 + $0xf0] sm:$0xf]
        %v6326 = vld [vmem:[#allocation23 + $0xf4] sm:$0xf]
        %v6327 = vld [vmem:[#allocation23 + $0xf8] sm:$0xf]
        %v6328 = vld [vmem:[#allocation23 + $0xfc] sm:$0xf]
        %v6329 = vld [vmem:[#allocation23 + $0x100] sm:$0xf]
        %v6330 = vld [vmem:[#allocation23 + $0x104] sm:$0xf]
        %v6331 = vld [vmem:[#allocation23 + $0x108] sm:$0xf]
        %v6332 = vld [vmem:[#allocation23 + $0x10c] sm:$0xf]
        %v6333 = vld [vmem:[#allocation23 + $0x110] sm:$0xf]
        %v6334 = vld [vmem:[#allocation23 + $0x114] sm:$0xf]
        %v6335 = vld [vmem:[#allocation23 + $0x118] sm:$0xf]
        %v6336 = vld [vmem:[#allocation23 + $0x11c] sm:$0xf]
        %v6337 = vld [vmem:[#allocation23 + $0x120] sm:$0xf]
        %v6338 = vld [vmem:[#allocation23 + $0x124] sm:$0xf]
        %v6339 = vld [vmem:[#allocation23 + $0x128] sm:$0xf]
        %v6340 = vld [vmem:[#allocation23 + $0x12c] sm:$0xf]
        %v6341 = vld [vmem:[#allocation23 + $0x130] sm:$0xf]
        %v6342 = vld [vmem:[#allocation23 + $0x134] sm:$0xf]
        %v6343 = vld [vmem:[#allocation23 + $0x138] sm:$0xf]
        %v6344 = vld [vmem:[#allocation23 + $0x13c] sm:$0xf]
        %v6345 = vld [vmem:[#allocation23 + $0x140] sm:$0xf]
        %v6346 = vld [vmem:[#allocation23 + $0x144] sm:$0xf]
        %v6347 = vld [vmem:[#allocation23 + $0x148] sm:$0xf]
        %v6348 = vld [vmem:[#allocation23 + $0x14c] sm:$0xf]
        %v6349 = vld [vmem:[#allocation23 + $0x150] sm:$0xf]
        %v6350 = vld [vmem:[#allocation23 + $0x154] sm:$0xf]
        %v6351 = vld [vmem:[#allocation23 + $0x158] sm:$0xf]
        %v6352 = vld [vmem:[#allocation23 + $0x15c] sm:$0xf]
        %v6353 = vld [vmem:[#allocation23 + $0x160] sm:$0xf]
        %v6354 = vld [vmem:[#allocation23 + $0x164] sm:$0xf]
        %v6355 = vld [vmem:[#allocation23 + $0x168] sm:$0xf]
        %v6356 = vld [vmem:[#allocation23 + $0x16c] sm:$0xf]
        %v6357 = vld [vmem:[#allocation23 + $0x170] sm:$0xf]
        %v6358 = vld [vmem:[#allocation23 + $0x174] sm:$0xf]
        %v6359 = vld [vmem:[#allocation23 + $0x178] sm:$0xf]
        %v6360 = vld [vmem:[#allocation23 + $0x17c] sm:$0xf]
        %v6361 = vld [vmem:[#allocation23 + $0x180] sm:$0xf]
        %v6362 = vld [vmem:[#allocation23 + $0x184] sm:$0xf]
        %v6363 = vld [vmem:[#allocation23 + $0x188] sm:$0xf]
        %v6364 = vld [vmem:[#allocation23 + $0x18c] sm:$0xf]
        %v6365 = vld [vmem:[#allocation23 + $0x190] sm:$0xf]
        %v6366 = vld [vmem:[#allocation23 + $0x194] sm:$0xf]
        %v6367 = vld [vmem:[#allocation23 + $0x198] sm:$0xf]
        %v6368 = vld [vmem:[#allocation23 + $0x19c] sm:$0xf]
        %v6369 = vld [vmem:[#allocation23 + $0x1a0] sm:$0xf]
        %v6370 = vld [vmem:[#allocation23 + $0x1a4] sm:$0xf]
        %v6371 = vld [vmem:[#allocation23 + $0x1a8] sm:$0xf]
        %v6372 = vld [vmem:[#allocation23 + $0x1ac] sm:$0xf]
        %v6373 = vld [vmem:[#allocation23 + $0x1b0] sm:$0xf]
        %v6374 = vld [vmem:[#allocation23 + $0x1b4] sm:$0xf]
        %v6375 = vld [vmem:[#allocation23 + $0x1b8] sm:$0xf]
        %v6376 = vld [vmem:[#allocation23 + $0x1bc] sm:$0xf]
        %v6377 = vld [vmem:[#allocation23 + $0x1c0] sm:$0xf]
        %v6378 = vld [vmem:[#allocation23 + $0x1c4] sm:$0xf]
        %v6379 = vld [vmem:[#allocation23 + $0x1c8] sm:$0xf]
        %v6380 = vld [vmem:[#allocation23 + $0x1cc] sm:$0xf]
        %v6381 = vld [vmem:[#allocation23 + $0x1d0] sm:$0xf]
        %v6382 = vld [vmem:[#allocation23 + $0x1d4] sm:$0xf]
        %v6383 = vld [vmem:[#allocation23 + $0x1d8] sm:$0xf]
        %v6384 = vld [vmem:[#allocation23 + $0x1dc] sm:$0xf]
        %v6385 = vld [vmem:[#allocation23 + $0x1e0] sm:$0xf]
        %v6386 = vld [vmem:[#allocation23 + $0x1e4] sm:$0xf]
        %v6387 = vld [vmem:[#allocation23 + $0x1e8] sm:$0xf]
        %v6388 = vld [vmem:[#allocation23 + $0x1ec] sm:$0xf]
        %v6389 = vld [vmem:[#allocation23 + $0x1f0] sm:$0xf]
        %v6390 = vld [vmem:[#allocation23 + $0x1f4] sm:$0xf]
        %v6391 = vld [vmem:[#allocation23 + $0x1f8] sm:$0xf]
        %v6392 = vld [vmem:[#allocation23 + $0x1fc] sm:$0xf]
        %v6393 = vld [vmem:[#allocation23 + $0x200] sm:$0xf]
        %v6394 = vld [vmem:[#allocation23 + $0x204] sm:$0xf]
        %v6395 = vld [vmem:[#allocation23 + $0x208] sm:$0xf]
        %v6396 = vld [vmem:[#allocation23 + $0x20c] sm:$0xf]
        %v6397 = vld [vmem:[#allocation23 + $0x210] sm:$0xf]
        %v6398 = vld [vmem:[#allocation23 + $0x214] sm:$0xf]
        %v6399 = vld [vmem:[#allocation23 + $0x218] sm:$0xf]
        %v6400 = vld [vmem:[#allocation23 + $0x21c] sm:$0xf]
        %v6401 = vld [vmem:[#allocation23 + $0x220] sm:$0xf]
        %v6402 = vld [vmem:[#allocation23 + $0x224] sm:$0xf]
        %v6403 = vld [vmem:[#allocation23 + $0x228] sm:$0xf]
        %v6404 = vld [vmem:[#allocation23 + $0x22c] sm:$0xf]
        %v6405 = vld [vmem:[#allocation23 + $0x230] sm:$0xf]
        %v6406 = vld [vmem:[#allocation23 + $0x234] sm:$0xf]
        %v6407 = vld [vmem:[#allocation23 + $0x238] sm:$0xf]
        %v6408 = vld [vmem:[#allocation23 + $0x23c] sm:$0xf]
        %v6409 = vld [vmem:[%s27] sm:$0x1]
        %v6411 = vlaneseq
        %v6412 = vshrl.u32 %v6411, 7
        %v6413 = vsub.s32 0, %v6412
        %v6414 = vrot.slane %v6409, %v6413
        %v6419 = vcombine.high %v6262, %v6262
        %v6421 = vunpack.c.l.s4 1983009808
        %v6422 = vunpack.c.0.s8 %v6421
        %v6423 = vlaneseq
        %v6424 = vshrl.u32 %v6423, 7
        %v6425 = vsub.s32 %v6422, %v6424
        %v6426 = vrot.slane %v6262, %v6425
        %v6428 = vunpack.c.l.s4 1983009808
        %v6429 = vunpack.c.0.s8 %v6428
        %v6430 = vlaneseq
        %v6431 = vshrl.u32 %v6430, 7
        %v6432 = vsub.s32 %v6429, %v6431
        %v6433 = vrot.slane %v6419, %v6432
        %v6434 = vcombine.high %v6426, %v6426
        %v6435 = vcombine.high %v6433, %v6433
        %v6436 = vcombine.high %v6263, %v6263
        %v6438 = vunpack.c.l.s4 1983009808
        %v6439 = vunpack.c.0.s8 %v6438
        %v6440 = vlaneseq
        %v6441 = vshrl.u32 %v6440, 7
        %v6442 = vsub.s32 %v6439, %v6441
        %v6443 = vrot.slane %v6263, %v6442
        %v6445 = vunpack.c.l.s4 1983009808
        %v6446 = vunpack.c.0.s8 %v6445
        %v6447 = vlaneseq
        %v6448 = vshrl.u32 %v6447, 7
        %v6449 = vsub.s32 %v6446, %v6448
        %v6450 = vrot.slane %v6436, %v6449
        %v6451 = vcombine.high %v6443, %v6443
        %v6452 = vcombine.high %v6450, %v6450
        %v6454 = vunpack.c.l.s4 1983009808
        %v6455 = vunpack.c.0.s8 %v6454
        %v6456 = vlaneseq
        %v6457 = vshrl.u32 %v6456, 7
        %v6458 = vsub.s32 %v6455, %v6457
        %v6459 = vrot.slane %v6264, %v6458
        %v6613 = vunpack.c.l.b16 %v6265
        %v6614 = vunpack.c.l.b16 %v6266
        %v6615 = vunpack.c.l.b16 %v6267
        %v6616 = vunpack.c.l.b16 %v6268
        %v6617 = vunpack.c.l.b16 %v6269
        %v6618 = vunpack.c.l.b16 %v6270
        %v6619 = vunpack.c.l.b16 %v6271
        %v6620 = vunpack.c.l.b16 %v6272
        %v6621 = vunpack.c.l.b16 %v6273
        %v6622 = vunpack.c.l.b16 %v6274
        %v6623 = vunpack.c.l.b16 %v6275
        %v6624 = vunpack.c.l.b16 %v6276
        %v6625 = vunpack.c.l.b16 %v6277
        %v6626 = vunpack.c.l.b16 %v6278
        %v6627 = vunpack.c.l.b16 %v6279
        %v6628 = vunpack.c.l.b16 %v6280
        %v6629 = vunpack.c.l.b16 %v6281
        %v6630 = vunpack.c.l.b16 %v6282
        %v6631 = vunpack.c.l.b16 %v6283
        %v6632 = vunpack.c.l.b16 %v6284
        %v6633 = vunpack.c.l.b16 %v6285
        %v6634 = vunpack.c.l.b16 %v6286
        %v6635 = vunpack.c.l.b16 %v6287
        %v6636 = vunpack.c.l.b16 %v6288
        %v6637 = vunpack.c.l.b16 %v6289
        %v6638 = vunpack.c.l.b16 %v6290
        %v6639 = vunpack.c.l.b16 %v6291
        %v6640 = vunpack.c.l.b16 %v6292
        %v6641 = vunpack.c.l.b16 %v6293
        %v6642 = vunpack.c.l.b16 %v6294
        %v6643 = vunpack.c.l.b16 %v6295
        %v6644 = vunpack.c.l.b16 %v6296
        %v6645 = vunpack.c.l.b16 %v6297
        %v6646 = vunpack.c.l.b16 %v6298
        %v6647 = vunpack.c.l.b16 %v6299
        %v6648 = vunpack.c.l.b16 %v6300
        %v6649 = vunpack.c.l.b16 %v6301
        %v6650 = vunpack.c.l.b16 %v6302
        %v6651 = vunpack.c.l.b16 %v6303
        %v6652 = vunpack.c.l.b16 %v6304
        %v6653 = vunpack.c.l.b16 %v6305
        %v6654 = vunpack.c.l.b16 %v6306
        %v6655 = vunpack.c.l.b16 %v6307
        %v6656 = vunpack.c.l.b16 %v6308
        %v6657 = vunpack.c.l.b16 %v6309
        %v6658 = vunpack.c.l.b16 %v6310
        %v6659 = vunpack.c.l.b16 %v6311
        %v6660 = vunpack.c.l.b16 %v6312
        %v6661 = vunpack.c.l.b16 %v6313
        %v6662 = vunpack.c.l.b16 %v6314
        %v6663 = vunpack.c.l.b16 %v6315
        %v6664 = vunpack.c.l.b16 %v6316
        %v6665 = vunpack.c.l.b16 %v6317
        %v6666 = vunpack.c.l.b16 %v6318
        %v6667 = vunpack.c.l.b16 %v6319
        %v6668 = vunpack.c.l.b16 %v6320
        %v6669 = vunpack.c.l.b16 %v6321
        %v6670 = vunpack.c.l.b16 %v6322
        %v6671 = vunpack.c.l.b16 %v6323
        %v6672 = vunpack.c.l.b16 %v6324
        %v6673 = vunpack.c.l.b16 %v6325
        %v6674 = vunpack.c.l.b16 %v6326
        %v6675 = vunpack.c.l.b16 %v6327
        %v6676 = vunpack.c.l.b16 %v6328
        %v6677 = vunpack.c.l.b16 %v6329
        %v6678 = vunpack.c.l.b16 %v6330
        %v6679 = vunpack.c.l.b16 %v6331
        %v6680 = vunpack.c.l.b16 %v6332
        %v6681 = vunpack.c.l.b16 %v6333
        %v6682 = vunpack.c.l.b16 %v6334
        %v6683 = vunpack.c.l.b16 %v6335
        %v6684 = vunpack.c.l.b16 %v6336
        %v6685 = vunpack.c.l.b16 %v6337
        %v6686 = vunpack.c.l.b16 %v6338
        %v6687 = vunpack.c.l.b16 %v6339
        %v6688 = vunpack.c.l.b16 %v6340
        %v6689 = vunpack.c.l.b16 %v6341
        %v6690 = vunpack.c.l.b16 %v6342
        %v6691 = vunpack.c.l.b16 %v6343
        %v6692 = vunpack.c.l.b16 %v6344
        %v6693 = vunpack.c.l.b16 %v6345
        %v6694 = vunpack.c.l.b16 %v6346
        %v6695 = vunpack.c.l.b16 %v6347
        %v6696 = vunpack.c.l.b16 %v6348
        %v6697 = vunpack.c.l.b16 %v6349
        %v6698 = vunpack.c.l.b16 %v6350
        %v6699 = vunpack.c.l.b16 %v6351
        %v6700 = vunpack.c.l.b16 %v6352
        %v6701 = vunpack.c.l.b16 %v6353
        %v6702 = vunpack.c.l.b16 %v6354
        %v6703 = vunpack.c.l.b16 %v6355
        %v6704 = vunpack.c.l.b16 %v6356
        %v6705 = vunpack.c.l.b16 %v6357
        %v6706 = vunpack.c.l.b16 %v6358
        %v6707 = vunpack.c.l.b16 %v6359
        %v6708 = vunpack.c.l.b16 %v6360
        %v6709 = vunpack.c.l.b16 %v6361
        %v6710 = vunpack.c.l.b16 %v6362
        %v6711 = vunpack.c.l.b16 %v6363
        %v6712 = vunpack.c.l.b16 %v6364
        %v6713 = vunpack.c.l.b16 %v6365
        %v6714 = vunpack.c.l.b16 %v6366
        %v6715 = vunpack.c.l.b16 %v6367
        %v6716 = vunpack.c.l.b16 %v6368
        %v6717 = vunpack.c.l.b16 %v6369
        %v6718 = vunpack.c.l.b16 %v6370
        %v6719 = vunpack.c.l.b16 %v6371
        %v6720 = vunpack.c.l.b16 %v6372
        %v6721 = vunpack.c.l.b16 %v6373
        %v6722 = vunpack.c.l.b16 %v6374
        %v6723 = vunpack.c.l.b16 %v6375
        %v6724 = vunpack.c.l.b16 %v6376
        %v6725 = vunpack.c.l.b16 %v6377
        %v6726 = vunpack.c.l.b16 %v6378
        %v6727 = vunpack.c.l.b16 %v6379
        %v6728 = vunpack.c.l.b16 %v6380
        %v6729 = vunpack.c.l.b16 %v6381
        %v6730 = vunpack.c.l.b16 %v6382
        %v6731 = vunpack.c.l.b16 %v6383
        %v6732 = vunpack.c.l.b16 %v6384
        %v6733 = vunpack.c.l.b16 %v6385
        %v6734 = vunpack.c.l.b16 %v6386
        %v6735 = vunpack.c.l.b16 %v6387
        %v6736 = vunpack.c.l.b16 %v6388
        %v6737 = vunpack.c.l.b16 %v6389
        %v6738 = vunpack.c.l.b16 %v6390
        %v6739 = vunpack.c.l.b16 %v6391
        %v6740 = vunpack.c.l.b16 %v6392
        %v6741 = vunpack.c.l.b16 %v6393
        %v6742 = vunpack.c.l.b16 %v6394
        %v6743 = vunpack.c.l.b16 %v6395
        %v6744 = vunpack.c.l.b16 %v6396
        %v6745 = vunpack.c.l.b16 %v6397
        %v6746 = vunpack.c.l.b16 %v6398
        %v6747 = vunpack.c.l.b16 %v6399
        %v6748 = vunpack.c.l.b16 %v6400
        %v6749 = vunpack.c.l.b16 %v6401
        %v6750 = vunpack.c.l.b16 %v6402
        %v6751 = vunpack.c.l.b16 %v6403
        %v6752 = vunpack.c.l.b16 %v6404
        %v6753 = vunpack.c.l.b16 %v6405
        %v6754 = vunpack.c.l.b16 %v6406
        %v6755 = vunpack.c.l.b16 %v6407
        %v6756 = vunpack.c.l.b16 %v6408
        %v6757 = vpack.c.b16 %v6614, %v6613
        %v6758 = vpack.c.b16 %v6616, %v6615
        %v6759 = vpack.c.b16 %v6618, %v6617
        %v6760 = vpack.c.b16 %v6620, %v6619
        %v6761 = vpack.c.b16 %v6622, %v6621
        %v6762 = vpack.c.b16 %v6624, %v6623
        %v6763 = vpack.c.b16 %v6626, %v6625
        %v6764 = vpack.c.b16 %v6628, %v6627
        %v6765 = vpack.c.b16 %v6630, %v6629
        %v6766 = vpack.c.b16 %v6632, %v6631
        %v6767 = vpack.c.b16 %v6634, %v6633
        %v6768 = vpack.c.b16 %v6636, %v6635
        %v6769 = vpack.c.b16 %v6638, %v6637
        %v6770 = vpack.c.b16 %v6640, %v6639
        %v6771 = vpack.c.b16 %v6642, %v6641
        %v6772 = vpack.c.b16 %v6644, %v6643
        %v6773 = vpack.c.b16 %v6646, %v6645
        %v6774 = vpack.c.b16 %v6648, %v6647
        %v6775 = vpack.c.b16 %v6650, %v6649
        %v6776 = vpack.c.b16 %v6652, %v6651
        %v6777 = vpack.c.b16 %v6654, %v6653
        %v6778 = vpack.c.b16 %v6656, %v6655
        %v6779 = vpack.c.b16 %v6658, %v6657
        %v6780 = vpack.c.b16 %v6660, %v6659
        %v6781 = vpack.c.b16 %v6662, %v6661
        %v6782 = vpack.c.b16 %v6664, %v6663
        %v6783 = vpack.c.b16 %v6666, %v6665
        %v6784 = vpack.c.b16 %v6668, %v6667
        %v6785 = vpack.c.b16 %v6670, %v6669
        %v6786 = vpack.c.b16 %v6672, %v6671
        %v6787 = vpack.c.b16 %v6674, %v6673
        %v6788 = vpack.c.b16 %v6676, %v6675
        %v6789 = vpack.c.b16 %v6678, %v6677
        %v6790 = vpack.c.b16 %v6680, %v6679
        %v6791 = vpack.c.b16 %v6682, %v6681
        %v6792 = vpack.c.b16 %v6684, %v6683
        %v6793 = vpack.c.b16 %v6686, %v6685
        %v6794 = vpack.c.b16 %v6688, %v6687
        %v6795 = vpack.c.b16 %v6690, %v6689
        %v6796 = vpack.c.b16 %v6692, %v6691
        %v6797 = vpack.c.b16 %v6694, %v6693
        %v6798 = vpack.c.b16 %v6696, %v6695
        %v6799 = vpack.c.b16 %v6698, %v6697
        %v6800 = vpack.c.b16 %v6700, %v6699
        %v6801 = vpack.c.b16 %v6702, %v6701
        %v6802 = vpack.c.b16 %v6704, %v6703
        %v6803 = vpack.c.b16 %v6706, %v6705
        %v6804 = vpack.c.b16 %v6708, %v6707
        %v6805 = vpack.c.b16 %v6710, %v6709
        %v6806 = vpack.c.b16 %v6712, %v6711
        %v6807 = vpack.c.b16 %v6714, %v6713
        %v6808 = vpack.c.b16 %v6716, %v6715
        %v6809 = vpack.c.b16 %v6718, %v6717
        %v6810 = vpack.c.b16 %v6720, %v6719
        %v6811 = vpack.c.b16 %v6722, %v6721
        %v6812 = vpack.c.b16 %v6724, %v6723
        %v6813 = vpack.c.b16 %v6726, %v6725
        %v6814 = vpack.c.b16 %v6728, %v6727
        %v6815 = vpack.c.b16 %v6730, %v6729
        %v6816 = vpack.c.b16 %v6732, %v6731
        %v6817 = vpack.c.b16 %v6734, %v6733
        %v6818 = vpack.c.b16 %v6736, %v6735
        %v6819 = vpack.c.b16 %v6738, %v6737
        %v6820 = vpack.c.b16 %v6740, %v6739
        %v6821 = vpack.c.b16 %v6742, %v6741
        %v6822 = vpack.c.b16 %v6744, %v6743
        %v6823 = vpack.c.b16 %v6746, %v6745
        %v6824 = vpack.c.b16 %v6748, %v6747
        %v6825 = vpack.c.b16 %v6750, %v6749
        %v6826 = vpack.c.b16 %v6752, %v6751
        %v6827 = vpack.c.b16 %v6754, %v6753
        %v6828 = vpack.c.b16 %v6756, %v6755
        %6901 = vmatprep.subr.bf16.mxu0 0
        %6902 = vmatpush1.bf16.msra.mxu0 %v6764
        %6903 = vmatprep.subr.bf16.mxu0 0
        %6904 = vmatpush1.bf16.msra.mxu0 %v6763
        %6905 = vmatprep.subr.bf16.mxu0 0
        %6906 = vmatpush1.bf16.msra.mxu0 %v6762
        %6907 = vmatprep.subr.bf16.mxu0 0
        %6908 = vmatpush1.bf16.msra.mxu0 %v6761
        %6909 = vmatprep.subr.bf16.mxu0 0
        %6910 = vmatpush1.bf16.msra.mxu0 %v6760
        %6911 = vmatprep.subr.bf16.mxu0 0
        %6912 = vmatpush1.bf16.msra.mxu0 %v6759
        %6913 = vmatprep.subr.bf16.mxu0 0
        %6914 = vmatpush1.bf16.msra.mxu0 %v6758
        %6915 = vmatprep.subr.bf16.mxu0 0
        %6916 = vmatpush1.bf16.msra.mxu0 %v6757
        %6917 = vmatprep.subr.bf16.mxu0 0
        %6918 = vmatpush2.bf16.msra.mxu0 %v6772
        %6919 = vmatprep.subr.bf16.mxu0 0
        %6920 = vmatpush2.bf16.msra.mxu0 %v6771
        %6921 = vmatprep.subr.bf16.mxu0 0
        %6922 = vmatpush2.bf16.msra.mxu0 %v6770
        %6923 = vmatprep.subr.bf16.mxu0 0
        %6924 = vmatpush2.bf16.msra.mxu0 %v6769
        %6925 = vmatprep.subr.bf16.mxu0 0
        %6926 = vmatpush2.bf16.msra.mxu0 %v6768
        %6927 = vmatprep.subr.bf16.mxu0 0
        %6928 = vmatpush2.bf16.msra.mxu0 %v6767
        %6929 = vmatprep.subr.bf16.mxu0 0
        %6930 = vmatpush2.bf16.msra.mxu0 %v6766
        %6931 = vmatprep.subr.bf16.mxu0 0
        %6932 = vmatpush2.bf16.msra.mxu0 %v6765
        %6933 = vmatprep.mubr.bf16.mxu0 %v6434
        %6934 = vmatmul.mubr.bf16.gmra.mxu0 %v6426
        %v6935 = vpop.f32.mrf.mxu0
        %v6936 = vadd.f32 %v6414, %v6935
        %v6937 = vpop.f32.mrf.mxu0
        %v6938 = vpop.f32.mrf.mxu0
        %v6939 = vpop.f32.mrf.mxu0
        %6940 = vdwg.mxu0
        %6941 = vmatprep.subr.bf16.mxu0 0
        %6942 = vmatpush1.bf16.msra.mxu0 %v6780
        %6943 = vmatprep.subr.bf16.mxu0 0
        %6944 = vmatpush1.bf16.msra.mxu0 %v6779
        %6945 = vmatprep.subr.bf16.mxu0 0
        %6946 = vmatpush1.bf16.msra.mxu0 %v6778
        %6947 = vmatprep.subr.bf16.mxu0 0
        %6948 = vmatpush1.bf16.msra.mxu0 %v6777
        %6949 = vmatprep.subr.bf16.mxu0 0
        %6950 = vmatpush1.bf16.msra.mxu0 %v6776
        %6951 = vmatprep.subr.bf16.mxu0 0
        %6952 = vmatpush1.bf16.msra.mxu0 %v6775
        %6953 = vmatprep.subr.bf16.mxu0 0
        %6954 = vmatpush1.bf16.msra.mxu0 %v6774
        %6955 = vmatprep.subr.bf16.mxu0 0
        %6956 = vmatpush1.bf16.msra.mxu0 %v6773
        %6957 = vmatprep.subr.bf16.mxu0 0
        %6958 = vmatpush2.bf16.msra.mxu0 %v6788
        %6959 = vmatprep.subr.bf16.mxu0 0
        %6960 = vmatpush2.bf16.msra.mxu0 %v6787
        %6961 = vmatprep.subr.bf16.mxu0 0
        %6962 = vmatpush2.bf16.msra.mxu0 %v6786
        %6963 = vmatprep.subr.bf16.mxu0 0
        %6964 = vmatpush2.bf16.msra.mxu0 %v6785
        %6965 = vmatprep.subr.bf16.mxu0 0
        %6966 = vmatpush2.bf16.msra.mxu0 %v6784
        %6967 = vmatprep.subr.bf16.mxu0 0
        %6968 = vmatpush2.bf16.msra.mxu0 %v6783
        %6969 = vmatprep.subr.bf16.mxu0 0
        %6970 = vmatpush2.bf16.msra.mxu0 %v6782
        %6971 = vmatprep.subr.bf16.mxu0 0
        %6972 = vmatpush2.bf16.msra.mxu0 %v6781
        %6973 = vmatprep.mubr.bf16.mxu0 %v6435
        %6974 = vmatmul.mubr.bf16.gmra.mxu0 %v6433
        %v6975 = vpop.f32.mrf.mxu0
        %v6976 = vadd.f32 %v6936, %v6975
        %v6977 = vpop.f32.mrf.mxu0
        %v6978 = vpop.f32.mrf.mxu0
        %v6979 = vpop.f32.mrf.mxu0
        %6980 = vdwg.mxu0
        %6981 = vmatprep.subr.bf16.mxu0 0
        %6982 = vmatpush1.bf16.msra.mxu0 %v6796
        %6983 = vmatprep.subr.bf16.mxu0 0
        %6984 = vmatpush1.bf16.msra.mxu0 %v6795
        %6985 = vmatprep.subr.bf16.mxu0 0
        %6986 = vmatpush1.bf16.msra.mxu0 %v6794
        %6987 = vmatprep.subr.bf16.mxu0 0
        %6988 = vmatpush1.bf16.msra.mxu0 %v6793
        %6989 = vmatprep.subr.bf16.mxu0 0
        %6990 = vmatpush1.bf16.msra.mxu0 %v6792
        %6991 = vmatprep.subr.bf16.mxu0 0
        %6992 = vmatpush1.bf16.msra.mxu0 %v6791
        %6993 = vmatprep.subr.bf16.mxu0 0
        %6994 = vmatpush1.bf16.msra.mxu0 %v6790
        %6995 = vmatprep.subr.bf16.mxu0 0
        %6996 = vmatpush1.bf16.msra.mxu0 %v6789
        %6997 = vmatprep.subr.bf16.mxu0 0
        %6998 = vmatpush2.bf16.msra.mxu0 %v6804
        %6999 = vmatprep.subr.bf16.mxu0 0
        %7000 = vmatpush2.bf16.msra.mxu0 %v6803
        %7001 = vmatprep.subr.bf16.mxu0 0
        %7002 = vmatpush2.bf16.msra.mxu0 %v6802
        %7003 = vmatprep.subr.bf16.mxu0 0
        %7004 = vmatpush2.bf16.msra.mxu0 %v6801
        %7005 = vmatprep.subr.bf16.mxu0 0
        %7006 = vmatpush2.bf16.msra.mxu0 %v6800
        %7007 = vmatprep.subr.bf16.mxu0 0
        %7008 = vmatpush2.bf16.msra.mxu0 %v6799
        %7009 = vmatprep.subr.bf16.mxu0 0
        %7010 = vmatpush2.bf16.msra.mxu0 %v6798
        %7011 = vmatprep.subr.bf16.mxu0 0
        %7012 = vmatpush2.bf16.msra.mxu0 %v6797
        %7013 = vmatprep.mubr.bf16.mxu0 %v6451
        %7014 = vmatmul.mubr.bf16.gmra.mxu0 %v6443
        %v7015 = vpop.f32.mrf.mxu0
        %v7016 = vadd.f32 %v6976, %v7015
        %v7017 = vpop.f32.mrf.mxu0
        %v7018 = vpop.f32.mrf.mxu0
        %v7019 = vpop.f32.mrf.mxu0
        %7020 = vdwg.mxu0
        %7021 = vmatprep.subr.bf16.mxu0 0
        %7022 = vmatpush1.bf16.msra.mxu0 %v6812
        %7023 = vmatprep.subr.bf16.mxu0 0
        %7024 = vmatpush1.bf16.msra.mxu0 %v6811
        %7025 = vmatprep.subr.bf16.mxu0 0
        %7026 = vmatpush1.bf16.msra.mxu0 %v6810
        %7027 = vmatprep.subr.bf16.mxu0 0
        %7028 = vmatpush1.bf16.msra.mxu0 %v6809
        %7029 = vmatprep.subr.bf16.mxu0 0
        %7030 = vmatpush1.bf16.msra.mxu0 %v6808
        %7031 = vmatprep.subr.bf16.mxu0 0
        %7032 = vmatpush1.bf16.msra.mxu0 %v6807
        %7033 = vmatprep.subr.bf16.mxu0 0
        %7034 = vmatpush1.bf16.msra.mxu0 %v6806
        %7035 = vmatprep.subr.bf16.mxu0 0
        %7036 = vmatpush1.bf16.msra.mxu0 %v6805
        %7037 = vmatprep.subr.bf16.mxu0 0
        %7038 = vmatpush2.bf16.msra.mxu0 %v6820
        %7039 = vmatprep.subr.bf16.mxu0 0
        %7040 = vmatpush2.bf16.msra.mxu0 %v6819
        %7041 = vmatprep.subr.bf16.mxu0 0
        %7042 = vmatpush2.bf16.msra.mxu0 %v6818
        %7043 = vmatprep.subr.bf16.mxu0 0
        %7044 = vmatpush2.bf16.msra.mxu0 %v6817
        %7045 = vmatprep.subr.bf16.mxu0 0
        %7046 = vmatpush2.bf16.msra.mxu0 %v6816
        %7047 = vmatprep.subr.bf16.mxu0 0
        %7048 = vmatpush2.bf16.msra.mxu0 %v6815
        %7049 = vmatprep.subr.bf16.mxu0 0
        %7050 = vmatpush2.bf16.msra.mxu0 %v6814
        %7051 = vmatprep.subr.bf16.mxu0 0
        %7052 = vmatpush2.bf16.msra.mxu0 %v6813
        %7053 = vmatprep.mubr.bf16.mxu0 %v6452
        %7054 = vmatmul.mubr.bf16.gmra.mxu0 %v6450
        %v7055 = vpop.f32.mrf.mxu0
        %v7056 = vadd.f32 %v7016, %v7055
        %v7057 = vpop.f32.mrf.mxu0
        %v7058 = vpop.f32.mrf.mxu0
        %v7059 = vpop.f32.mrf.mxu0
        %7060 = vdwg.mxu0
        %7061 = vmatprep.subr.bf16.mxu0 0
        %7062 = vmatpush1.bf16.msra.mxu0 %v6828
        %7063 = vmatprep.subr.bf16.mxu0 0
        %7064 = vmatpush1.bf16.msra.mxu0 %v6827
        %7065 = vmatprep.subr.bf16.mxu0 0
        %7066 = vmatpush1.bf16.msra.mxu0 %v6826
        %7067 = vmatprep.subr.bf16.mxu0 0
        %7068 = vmatpush1.bf16.msra.mxu0 %v6825
        %7069 = vmatprep.subr.bf16.mxu0 0
        %7070 = vmatpush1.bf16.msra.mxu0 %v6824
        %7071 = vmatprep.subr.bf16.mxu0 0
        %7072 = vmatpush1.bf16.msra.mxu0 %v6823
        %7073 = vmatprep.subr.bf16.mxu0 0
        %7074 = vmatpush1.bf16.msra.mxu0 %v6822
        %7075 = vmatprep.subr.bf16.mxu0 0
        %7076 = vmatpush1.bf16.msra.mxu0 %v6821
        %7077 = vmatprep.subr.bf16.mxu0 0
        %7078 = vmatpush2.bf16.msra.mxu0 0
        %7079 = vmatprep.subr.bf16.mxu0 0
        %7080 = vmatpush2.bf16.msra.mxu0 0
        %7081 = vmatprep.subr.bf16.mxu0 0
        %7082 = vmatpush2.bf16.msra.mxu0 0
        %7083 = vmatprep.subr.bf16.mxu0 0
        %7084 = vmatpush2.bf16.msra.mxu0 0
        %7085 = vmatprep.subr.bf16.mxu0 0
        %7086 = vmatpush2.bf16.msra.mxu0 0
        %7087 = vmatprep.subr.bf16.mxu0 0
        %7088 = vmatpush2.bf16.msra.mxu0 0
        %7089 = vmatprep.subr.bf16.mxu0 0
        %7090 = vmatpush2.bf16.msra.mxu0 0
        %7091 = vmatprep.subr.bf16.mxu0 0
        %7092 = vmatpush2.bf16.msra.mxu0 0
        %7093 = vmatprep.mubr.bf16.mxu0 0
        %7094 = vmatmul.mubr.bf16.gmra.mxu0 %v6459
        %v7095 = vpop.f32.mrf.mxu0
        %v7096 = vadd.f32 %v7056, %v7095
        %v7097 = vpop.f32.mrf.mxu0
        %v7098 = vpop.f32.mrf.mxu0
        %v7099 = vpop.f32.mrf.mxu0
        %7100 = vdwg.mxu0
        %7101 = vst [vmem:[%s1001] sm:$0xf] %v7096
        %p7102 = scmp.lt.s32.totalorder %s45, 1
        %s7103 = scalar_select %p7102, %s45, 1
        %s7104 = smul.addr %s7103, 4
        %s7105 = scalar_lea.vmem %s28, %s7104
        // Predicated region
        $region177: #{discriminator_forward.1} parent=131 // pred_check
          %p7106 = pneg %p656
        $region178: #{discriminator_forward.1} parent=131 // pred_check_branch
          %7108 = sbr.rel (%p7106) target = $region180
        $region179: #{discriminator_forward.1} parent=131 // pred_region
          _
        $region180: #{discriminator_forward.1} parent=131 // pred_fallthru
          _
      $region132: #{discriminator_forward.1} parent=5 // pred_fallthru
        _
      %p7109 = scmp.le.s32.totalorder 2, %s40
      // Predicated region
      $region181: #{discriminator_forward.1} parent=5 // pred_check
        %p7110 = pneg %p7109
      $region182: #{discriminator_forward.1} parent=5 // pred_check_branch
        %7112 = sbr.rel (%p7110) target = $region184
      $region183: #{discriminator_forward.1} parent=5 // pred_region
        %s7113 = ssub.s32 %s40, 2
        // Predicated region
        $region185: #{discriminator_forward.1} parent=183 // pred_check
          %p7114 = pneg %p662
        $region186: #{discriminator_forward.1} parent=183 // pred_check_branch
          %7116 = sbr.rel (%p7114) target = $region188
        $region187: #{discriminator_forward.1} parent=183 // pred_region
          %p7117 = scmp.lt.s32.totalorder %s46, 1
          %s7118 = scalar_select %p7117, %s46, 1
          %s7119 = smul.addr %s7118, 4
          %s7120 = scalar_lea.vmem %s28, %s7119
        $region188: #{discriminator_forward.1} parent=183 // pred_fallthru
          _
      $region184: #{discriminator_forward.1} parent=5 // pred_fallthru
        _
    $region6: #{discriminator_forward.1} parent=1 // loop_footer
      %s44 = sadd.s32 1, %s40
    $region7: #{discriminator_forward.1} parent=1 // loop_footer_branch
      %39 = sbr.rel target = $region3
    $region8: #{discriminator_forward.1} parent=1 // loop_exit
      _
    %7121 = vsyncpa [#allocation8], 1
    %s7122 = scalar_lea.sflag [#allocation8], 1
    %7123 = vsyncpa %s7122, 1
    %7124 = vsyncpa [#allocation10], 1
    %7125 = vsyncpa [#allocation13], 1
    %7126 = vsyncpa [#allocation16], 1
    %7127 = vsyncpa [#allocation19], 1
    %7128 = vsyncpa [#allocation22], 1

</llo_original>
